<compile_context>
chip_gen: v5e
topology: v5e:2x2
jax: 0.10.0
libtpu: 0.0.40
codegen_flags: <defaults>
</compile_context>

<pallas_src>
import numpy as np
import jax
import jax.numpy as jnp
from jax import lax
from jax.experimental import pallas as pl
from jax.experimental.pallas import tpu as pltpu

VOCAB = np.asarray(['<sos>'] + list("ABCDEFGHIJKLMNOPQRSTUVWXYZ0123456789 .'+-_")
                   + ['<unk>'] + ['<eos>'])
VOCAB_SIZE = len(VOCAB)      # 45
MLP_HIDDEN = 256
V_PAD = 128                  # lane-dense padded vocab width


# ----------------------------------------------------------------------------------
# Pallas kernel: one (batch block, T chunk) grid cell of the teacher-forced decode.
# Grid = (num_batch_blocks, num_T_chunks); batch axis "parallel", T axis "arbitrary".
# Recurrent state / keys / values are carried in VMEM scratch across the T axis.
# ----------------------------------------------------------------------------------
def _speller_kernel(
    emb_ref,     # (Tc, bb, E)   embedded teacher-forced input chars (this T chunk)
    lf_ref,      # (bb, Lp, D)   listener features (padded L)
    mask_ref,    # (bb, Lp)      utterance mask (1/0)
    init_ref,    # (6, H)        rows: hx0, cx0, hx1, cx1, hx2, cx2
    w0x_ref,     # (E, 4H)       cell0 W_ih^T rows for the embedded-char part
    b0_ref,      # (1, 4H)       b_ih0 + b_hh0
    w0c_ref,     # (C, 4H)       cell0 W_ih^T rows for the context part
    w0h_ref,     # (H, 4H)       cell0 W_hh^T
    w1a_ref,     # (H, 4H)       cell1 W_ih^T
    w1b_ref,     # (H, 4H)       cell1 W_hh^T
    b1_ref,      # (1, 4H)
    w2a_ref,     # (H, 4H)       cell2 W_ih^T
    w2b_ref,     # (H, 4H)       cell2 W_hh^T
    b2_ref,      # (1, 4H)
    wq_ref,      # (H, C)        attention query_mlp (pre-transposed)
    bq_ref,      # (1, C)
    wkv_ref,     # (D, 2C)       fused key_mlp | value_mlp (pre-transposed)
    bkv_ref,     # (1, 2C)
    whh_ref,     # (H, 256)      "hidden" linear, hx2 half
    whc_ref,     # (C, 256)      "hidden" linear, context half
    bh_ref,      # (1, 256)
    wo_ref,      # (256, Vpad)   vocab_distribution, zero-padded to 128 lanes
    bo_ref,      # (1, Vpad)
    logits_ref,  # out: (Tc, bb, Vpad)
    attn_ref,    # out: (Tc, bb, Lp)
    keys_s,      # scratch (bb, Lp, C)
    vals_s,      # scratch (bb, Lp, C)
    state_s,     # scratch (6, bb, H)   hx0,cx0,hx1,cx1,hx2,cx2
    ctx_s,       # scratch (bb, C)
    eg_s,        # scratch (Tc, bb, 4H) cell-0 embedded-gate precompute
    hid_s,       # scratch (Tc, bb, 256) deferred output-head buffer
):
    Tc, bb, E = emb_ref.shape
    _, Lp, D = lf_ref.shape
    H, C = wq_ref.shape
    G = 4 * H
    MLPH = whh_ref.shape[1]
    VP = wo_ref.shape[1]
    f32 = jnp.float32

    def mm(x, w):
        return jnp.dot(x.astype(w.dtype), w, preferred_element_type=f32)

    mask = mask_ref[...]                                              # (bb, Lp)
    wq = wq_ref[...]
    bq = bq_ref[...]

    def attend(h2, keys, vals):
        q = mm(h2, wq) + bq                                           # (bb, C) f32
        # Batched MXU reductions (was VPU multiply + XLU reduce).
        energy = jnp.einsum('bqc,blc->bql', q.astype(keys.dtype)[:, None, :], keys,
                            preferred_element_type=f32)[:, 0, :]      # (bb, Lp)
        # Fused softmax + mask + L1 renorm; exact reciprocal (value recirculates into
        # the recurrent state, so no approx here). Equivalent to the reference whenever
        # a real row has >= 1 unmasked frame; fully-masked rows give attn == 0.
        p = jnp.exp(energy - jnp.max(energy, axis=-1, keepdims=True)) * mask
        denom = jnp.maximum(jnp.sum(p, axis=-1, keepdims=True), 1e-12)
        attn = p / denom
        ctx = jnp.einsum('bql,blc->bqc', attn.astype(vals.dtype)[:, None, :], vals,
                         preferred_element_type=f32)[:, 0, :]         # (bb, C)
        return attn, ctx

    # --- once per batch block (first T chunk): keys/values precompute + state init ---
    # TODO(synk): at very large L*D, stream lf from HBM (memory_space=pl.ANY) and tile
    # this precompute over L chunks with a manual double-buffered async copy.
    @pl.when(pl.program_id(1) == 0)
    def _init():
        lf2d = lf_ref[...].reshape(bb * Lp, D)
        kv = (mm(lf2d, wkv_ref[...]) + bkv_ref[...]).reshape(bb, Lp, 2 * C)
        keys0 = kv[:, :, :C].astype(keys_s.dtype)
        vals0 = kv[:, :, C:].astype(vals_s.dtype)
        keys_s[...] = keys0
        vals_s[...] = vals0
        init = init_ref[...]
        ones_b = jnp.ones((bb, 1), f32)
        for r in range(6):
            state_s[r] = ones_b * init[r:r + 1]
        # initial context from initial hx2 (the attention weights are discarded)
        _, ctx0 = attend(ones_b * init[4:5], keys0, vals0)
        ctx_s[...] = ctx0

    # --- hoisted per-chunk loads (outside the time loop) ---
    keys = keys_s[...]
    vals = vals_s[...]
    w0c = w0c_ref[...]; w0h = w0h_ref[...]
    w1a = w1a_ref[...]; w1b = w1b_ref[...]; b1 = b1_ref[...]
    w2a = w2a_ref[...]; w2b = w2b_ref[...]; b2 = b2_ref[...]
    whh = whh_ref[...]; whc = whc_ref[...]; bh = bh_ref[...]

    # --- cell-0 embedded-char gate contribution for the whole chunk (bias folded) ---
    emb2d = emb_ref[...].reshape(Tc * bb, E)
    eg_s[...] = (mm(emb2d, w0x_ref[...]) + b0_ref[...]).reshape(Tc, bb, G)

    def lstm(gates, c):
        if H % 128 == 0:
            # sliced transcendentals: only 4H (not 8H) EUP elements per cell
            if_g = jax.nn.sigmoid(gates[:, :2 * H])
            i_g = if_g[:, :H]; f_g = if_g[:, H:]
            g_g = jnp.tanh(gates[:, 2 * H:3 * H])
            o_g = jax.nn.sigmoid(gates[:, 3 * H:])
        else:
            # sub-128 H: full-vreg passes avoid lane-shuffle slices
            sg = jax.nn.sigmoid(gates)
            tg = jnp.tanh(gates)
            i_g = sg[:, :H]; f_g = sg[:, H:2 * H]
            g_g = tg[:, 2 * H:3 * H]; o_g = sg[:, 3 * H:]
        c_new = f_g * c + i_g * g_g
        return o_g * jnp.tanh(c_new), c_new

    def step(i, carry):
        hx0, cx0, hx1, cx1, hx2, cx2, context = carry
        # each cell: two accumulating MXU pushes (no lane concats on the serial chain)
        g0 = eg_s[i] + mm(context, w0c) + mm(hx0, w0h)
        hx0, cx0 = lstm(g0, cx0)
        g1 = mm(hx0, w1a) + mm(hx1, w1b) + b1
        hx1, cx1 = lstm(g1, cx1)
        g2 = mm(hx1, w2a) + mm(hx2, w2b) + b2
        hx2, cx2 = lstm(g2, cx2)

        attn, context = attend(hx2, keys, vals)

        # output head, part 1 (relu(cat) == cat(relu)); logits matmul deferred to chunk end
        hid_s[i] = mm(jax.nn.relu(hx2), whh) + mm(jax.nn.relu(context), whc) + bh
        attn_ref[i] = attn                                            # lane-dense (Lp%128==0)
        return (hx0, cx0, hx1, cx1, hx2, cx2, context)

    carry0 = (state_s[0], state_s[1], state_s[2],
              state_s[3], state_s[4], state_s[5], ctx_s[...])
    unroll = Tc if Tc <= 8 else 8                                     # bounded unroll
    hx0, cx0, hx1, cx1, hx2, cx2, context = lax.fori_loop(
        0, Tc, step, carry0, unroll=unroll)

    # carry the recurrent state to the next T chunk
    state_s[0] = hx0; state_s[1] = cx0; state_s[2] = hx1
    state_s[3] = cx1; state_s[4] = hx2; state_s[5] = cx2
    ctx_s[...] = context

    # --- deferred output head: one lane-dense matmul + one slab store per chunk ---
    hid_all = hid_s[...].reshape(Tc * bb, MLPH)
    logits_ref[...] = (mm(hid_all, wo_ref[...]) + bo_ref[...]).reshape(Tc, bb, VP)

    # TODO(synk): the free-running (gumbel-softmax sampling) branch and the
    # data-dependent '<eos>' early break are not implemented — this kernel covers the
    # teacher-forced path (transcript given, teacher_force=1.0), which is deterministic.


# ----------------------------------------------------------------------------------
# Parameter initialisation (deterministic, shapes from Speller.__init__)
# ----------------------------------------------------------------------------------
def init_speller_params(key, *, listener_dim, hidden_dim, context_dim, embedding_dim):
    assert hidden_dim == embedding_dim + context_dim, \
        "module's initial states require decoder_hidden_dim == embedding_dim + context_dim"
    H, C, E, D = hidden_dim, context_dim, embedding_dim, listener_dim
    ks = list(jax.random.split(key, 24))

    def unif(k, shape, fan_in):
        b = 1.0 / np.sqrt(fan_in)
        return jax.random.uniform(k, shape, jnp.float32, minval=-b, maxval=b)

    p = {}
    p["init_states"] = jnp.zeros((6, H), jnp.float32)   # hx0,cx0,hx1,cx1,hx2,cx2
    p["embedding"] = jax.random.normal(ks[0], (VOCAB_SIZE, E), jnp.float32)
    in_dims = [E + C, H, H]
    for i in range(3):
        p[f"w_ih{i}"] = unif(ks[1 + 4 * i], (4 * H, in_dims[i]), H)
        p[f"w_hh{i}"] = unif(ks[2 + 4 * i], (4 * H, H), H)
        p[f"b_ih{i}"] = unif(ks[3 + 4 * i], (4 * H,), H)
        p[f"b_hh{i}"] = unif(ks[4 + 4 * i], (4 * H,), H)
    p["wq"] = unif(ks[13], (C, H), H)
    p["bq"] = unif(ks[14], (C,), H)
    p["wk"] = unif(ks[15], (C, D), D)
    p["bk"] = unif(ks[16], (C,), D)
    p["wv"] = unif(ks[17], (C, D), D)
    p["bv"] = unif(ks[18], (C,), D)
    p["wh"] = unif(ks[19], (MLP_HIDDEN, H + C), H + C)
    p["bh"] = unif(ks[20], (MLP_HIDDEN,), H + C)
    p["wo"] = unif(ks[21], (VOCAB_SIZE, MLP_HIDDEN), MLP_HIDDEN)
    p["bo"] = unif(ks[22], (VOCAB_SIZE,), MLP_HIDDEN)
    return p


# ----------------------------------------------------------------------------------
# Hardware query helpers (generation-aware batch block / VMEM limit)
# ----------------------------------------------------------------------------------
def _tpu_kind_and_vmem_cap():
    kind = ""
    try:
        kind = jax.devices()[0].device_kind.lower()
    except Exception:
        pass
    cap = 64 * 1024 * 1024 if "v7" in kind else 128 * 1024 * 1024
    try:
        cap = int(pltpu.get_tpu_info().vmem_capacity_bytes)
    except Exception:
        pass
    return kind, cap


# ----------------------------------------------------------------------------------
# Wrapper: layout, embedding gather, weight fusion/splits, padding, pallas_call.
# ----------------------------------------------------------------------------------
def speller_forward_pallas(params, listener_features, utterance_lengths, transcript,
                           *, batch_block=None, t_block=8, matmul_dtype=jnp.float32):
    """Teacher-forced Speller forward.
    Returns (logits (T,B,V), attention (T,B,L), input_chars (T,B)).
    matmul_dtype: set jnp.bfloat16 on v6e/v7x to halve weight/lf footprint (recurrent
    state and softmax stay f32); keep f32 on v5e or for strict parity."""
    L, B, D = listener_features.shape
    T = transcript.shape[0]
    E = params["embedding"].shape[1]
    H = params["w_hh0"].shape[1]
    C = params["wq"].shape[0]
    f32 = jnp.float32
    md = matmul_dtype

    kind, vmem_cap = _tpu_kind_and_vmem_cap()
    lengths = jnp.asarray(utterance_lengths, jnp.int32)

    # Teacher-forced input characters: <sos> (index 0) first, then transcript[:-1].
    input_chars = jnp.concatenate(
        [jnp.zeros((1, B), jnp.int32), transcript[:-1].astype(jnp.int32)], axis=0)   # (T, B)

    # --- T chunking (second, "arbitrary" grid axis); padded steps read <sos> ---
    Tc = int(min(t_block, T))
    Tp = int(-(-T // Tc) * Tc)
    nT = Tp // Tc
    chars_p = jnp.pad(input_chars, ((0, Tp - T), (0, 0)))
    emb_seq = jnp.take(params["embedding"], chars_p, axis=0)                         # (Tp, B, E)

    lf = jnp.transpose(listener_features, (1, 0, 2))                                 # (B, L, D)

    # --- pad batch to x8 (f32 sublanes) and L to x128 (lane-dense attention stores) ---
    Bp = int(-(-B // 8) * 8)
    Lp = int(-(-L // 128) * 128)
    emb_seq = jnp.pad(emb_seq, ((0, 0), (0, Bp - B), (0, 0))).astype(md)
    lf = jnp.pad(lf, ((0, Bp - B), (0, Lp - L), (0, 0))).astype(md)
    lengths_p = jnp.pad(lengths, (0, Bp - B))                  # padded rows fully masked
    mask = (lax.broadcasted_iota(jnp.int32, (Bp, Lp), 1)
            < lengths_p[:, None]).astype(f32)                                        # (Bp, Lp)

    # --- fused / pre-transposed / pre-split weights (no in-kernel concats) ---
    w_ih0, w_hh0 = params["w_ih0"], params["w_hh0"]
    w0x = w_ih0[:, :E].T.astype(md)                                                  # (E, 4H)
    b0 = (params["b_ih0"] + params["b_hh0"])[None, :].astype(f32)
    w0c = w_ih0[:, E:E + C].T.astype(md)                                             # (C, 4H)
    w0h = w_hh0.T.astype(md)                                                         # (H, 4H)
    w1a = params["w_ih1"].T.astype(md); w1b = params["w_hh1"].T.astype(md)
    b1 = (params["b_ih1"] + params["b_hh1"])[None, :].astype(f32)
    w2a = params["w_ih2"].T.astype(md); w2b = params["w_hh2"].T.astype(md)
    b2 = (params["b_ih2"] + params["b_hh2"])[None, :].astype(f32)
    wq_t = params["wq"].T.astype(md)                                                 # (H, C)
    bq = params["bq"][None, :].astype(f32)
    wkv = jnp.concatenate([params["wk"].T, params["wv"].T], axis=1).astype(md)       # (D, 2C)
    bkv = jnp.concatenate([params["bk"], params["bv"]])[None, :].astype(f32)
    whh = params["wh"][:, :H].T.astype(md)                                           # (H, 256)
    whc = params["wh"][:, H:].T.astype(md)                                           # (C, 256)
    bh = params["bh"][None, :].astype(f32)
    wo = jnp.zeros((MLP_HIDDEN, V_PAD), f32).at[:, :VOCAB_SIZE].set(
        params["wo"].T).astype(md)
    bo = jnp.zeros((1, V_PAD), f32).at[:, :VOCAB_SIZE].set(params["bo"][None, :])

    # --- generation-aware batch block: split only on v7x (two TensorCores / chip) ---
    if batch_block is None:
        bb = Bp // 2 if ("v7" in kind and Bp % 16 == 0) else Bp
    else:
        bb = int(batch_block)
    assert Bp % bb == 0 and bb % 8 == 0, "batch_block must divide padded batch and be x8"
    nb = Bp // bb

    args = (emb_seq, lf, mask, params["init_states"].astype(f32),
            w0x, b0, w0c, w0h, w1a, w1b, b1, w2a, w2b, b2,
            wq_t, bq, wkv, bkv, whh, whc, bh, wo, bo)

    def _rep_spec(arr):
        zeros = (0,) * arr.ndim
        return pl.BlockSpec(arr.shape, lambda b, t, zeros=zeros: zeros)

    in_specs = [
        pl.BlockSpec((Tc, bb, E), lambda b, t: (t, b, 0)),    # emb_seq
        pl.BlockSpec((bb, Lp, D), lambda b, t: (b, 0, 0)),    # listener features
        pl.BlockSpec((bb, Lp), lambda b, t: (b, 0)),          # mask
    ] + [_rep_spec(a) for a in args[3:]]                      # weights / biases / init

    out_specs = (pl.BlockSpec((Tc, bb, V_PAD), lambda b, t: (t, b, 0)),
                 pl.BlockSpec((Tc, bb, Lp), lambda b, t: (t, b, 0)))

    scratch_shapes = [
        pltpu.VMEM((bb, Lp, C), md),                 # keys
        pltpu.VMEM((bb, Lp, C), md),                 # values
        pltpu.VMEM((6, bb, H), f32),                 # recurrent h/c state
        pltpu.VMEM((bb, C), f32),                    # context
        pltpu.VMEM((Tc, bb, 4 * H), f32),            # cell-0 embedded-gate chunk
        pltpu.VMEM((Tc, bb, MLP_HIDDEN), f32),       # deferred output-head buffer
    ]

    # --- VMEM limit sized from the actual block footprint (cap with headroom) ---
    def nbytes(shape, dt):
        return int(np.prod(shape)) * np.dtype(dt).itemsize
    blk = (nbytes((Tc, bb, E), md) + nbytes((bb, Lp, D), md) + nbytes((bb, Lp), f32)
           + sum(nbytes(a.shape, a.dtype) for a in args[3:])
           + nbytes((Tc, bb, V_PAD), f32) + nbytes((Tc, bb, Lp), f32))
    scr = (2 * nbytes((bb, Lp, C), md) + nbytes((6, bb, H), f32) + nbytes((bb, C), f32)
           + nbytes((Tc, bb, 4 * H), f32) + nbytes((Tc, bb, MLP_HIDDEN), f32))
    est = 2 * blk + scr + (8 << 20)                  # 2x: double-buffered pipeline
    vmem_limit = int(min(max(est, 32 << 20), int(vmem_cap * 0.85)))

    logits_p, attn_p = pl.pallas_call(
        _speller_kernel,
        grid=(nb, nT),
        out_shape=(jax.ShapeDtypeStruct((Tp, Bp, V_PAD), f32),
                   jax.ShapeDtypeStruct((Tp, Bp, Lp), f32)),
        in_specs=in_specs,
        out_specs=out_specs,
        scratch_shapes=scratch_shapes,
        compiler_params=pltpu.CompilerParams(
            dimension_semantics=("parallel", "arbitrary"),   # batch blocks -> v7x TCs
            vmem_limit_bytes=vmem_limit),
    )(*args)

    logits = logits_p[:T, :B, :VOCAB_SIZE]           # drop T / batch / vocab padding
    attn = attn_p[:T, :B, :L]                        # drop T / batch / L padding
    return logits, attn, input_chars


# ----------------------------------------------------------------------------------
# Pure-JAX reference mirroring the PyTorch forward (teacher-forced), for validation.
# ----------------------------------------------------------------------------------
def speller_forward_reference(params, listener_features, utterance_lengths, transcript):
    L, B, D = listener_features.shape
    T = transcript.shape[0]
    H = params["w_hh0"].shape[1]

    lengths = jnp.asarray(utterance_lengths, jnp.int32)
    mask = (jnp.arange(L)[None, :] < lengths[:, None]).astype(jnp.float32)           # (B, L)

    lin = lambda x, w, b: x @ w.T + b
    keys = lin(listener_features, params["wk"], params["bk"])                        # (L, B, C)
    vals = lin(listener_features, params["wv"], params["bv"])                        # (L, B, C)

    def attend(hx2):
        q = lin(hx2, params["wq"], params["bq"])                                     # (B, C)
        energy = jnp.einsum("bc,lbc->bl", q, keys)
        a = jax.nn.softmax(energy, axis=-1) * mask
        a = a / jnp.maximum(jnp.sum(jnp.abs(a), axis=-1, keepdims=True), 1e-12)
        ctx = jnp.einsum("bl,lbc->bc", a, vals)
        return a, ctx

    def lstm(x, h, c, i):
        gates = (x @ params[f"w_ih{i}"].T + params[f"b_ih{i}"]
                 + h @ params[f"w_hh{i}"].T + params[f"b_hh{i}"])
        ig, fg, gg, og = jnp.split(gates, 4, axis=-1)
        c_new = jax.nn.sigmoid(fg) * c + jax.nn.sigmoid(ig) * jnp.tanh(gg)
        return jax.nn.sigmoid(og) * jnp.tanh(c_new), c_new

    init = params["init_states"]
    hx0, cx0, hx1, cx1, hx2, cx2 = [jnp.broadcast_to(init[i], (B, H)) for i in range(6)]
    _, context = attend(hx2)

    input_char = jnp.zeros((B,), jnp.int32)
    logits_l, attn_l, char_l = [], [], []
    for t in range(T):
        x = params["embedding"][input_char]                                          # (B, E)
        rnn_in = jnp.concatenate([x, context], axis=-1)
        hx0, cx0 = lstm(rnn_in, hx0, cx0, 0)
        hx1, cx1 = lstm(hx0, hx1, cx1, 1)
        hx2, cx2 = lstm(hx1, hx2, cx2, 2)
        a, context = attend(hx2)
        out = jax.nn.relu(jnp.concatenate([hx2, context], axis=-1))
        hid = lin(out, params["wh"], params["bh"])
        logits = lin(hid, params["wo"], params["bo"])
        logits_l.append(logits)
        attn_l.append(a)
        char_l.append(input_char)
        input_char = transcript[t]                                                   # teacher forcing
    return jnp.stack(logits_l), jnp.stack(attn_l), jnp.stack(char_l)


if __name__ == "__main__":
    key = jax.random.PRNGKey(0)
    B, L, D = 2, 8, 32       # batch, max utterance length, listener feature dim
    C, E = 16, 16            # context_dim, embedding_dim
    H = E + C                # decoder_hidden_dim (forced equal to E + C by init states)
    T = 6                    # transcript length

    k_par, k_feat, k_tr = jax.random.split(key, 3)
    params = init_speller_params(k_par, listener_dim=D, hidden_dim=H,
                                 context_dim=C, embedding_dim=E)
    listener_features = jax.random.normal(k_feat, (L, B, D), jnp.float32)
    utterance_lengths = [8, 5]
    # avoid '<eos>' so the PyTorch loop would not early-break either
    transcript = jax.random.randint(k_tr, (T, B), 1, VOCAB_SIZE - 1, dtype=jnp.int32)

    logits, attn, chars = speller_forward_pallas(params, listener_features,
                                                 utterance_lengths, transcript)
    jax.block_until_ready((logits, attn))

    ref_logits, ref_attn, ref_chars = speller_forward_reference(
        params, listener_features, utterance_lengths, transcript)
    np.testing.assert_allclose(np.asarray(logits), np.asarray(ref_logits), rtol=2e-2, atol=2e-2)
    np.testing.assert_allclose(np.asarray(attn), np.asarray(ref_attn), rtol=2e-2, atol=2e-2)
    assert np.array_equal(np.asarray(chars), np.asarray(ref_chars))
    print("KERNEL_OK")
</pallas_src>

<mosaic_0001>
module attributes {stable_mosaic.version = 11 : i64} {
  func.func @_speller_kernel(%arg0: i32, %arg1: i32, %arg2: memref<6x8x16xf32, #tpu.memory_space<vmem>>, %arg3: memref<8x128x32xf32, #tpu.memory_space<vmem>>, %arg4: memref<8x128xf32, #tpu.memory_space<vmem>>, %arg5: memref<6x32xf32, #tpu.memory_space<vmem>>, %arg6: memref<16x128xf32, #tpu.memory_space<vmem>>, %arg7: memref<1x128xf32, #tpu.memory_space<vmem>>, %arg8: memref<16x128xf32, #tpu.memory_space<vmem>>, %arg9: memref<32x128xf32, #tpu.memory_space<vmem>>, %arg10: memref<32x128xf32, #tpu.memory_space<vmem>>, %arg11: memref<32x128xf32, #tpu.memory_space<vmem>>, %arg12: memref<1x128xf32, #tpu.memory_space<vmem>>, %arg13: memref<32x128xf32, #tpu.memory_space<vmem>>, %arg14: memref<32x128xf32, #tpu.memory_space<vmem>>, %arg15: memref<1x128xf32, #tpu.memory_space<vmem>>, %arg16: memref<32x16xf32, #tpu.memory_space<vmem>>, %arg17: memref<1x16xf32, #tpu.memory_space<vmem>>, %arg18: memref<32x32xf32, #tpu.memory_space<vmem>>, %arg19: memref<1x32xf32, #tpu.memory_space<vmem>>, %arg20: memref<32x256xf32, #tpu.memory_space<vmem>>, %arg21: memref<16x256xf32, #tpu.memory_space<vmem>>, %arg22: memref<1x256xf32, #tpu.memory_space<vmem>>, %arg23: memref<256x128xf32, #tpu.memory_space<vmem>>, %arg24: memref<1x128xf32, #tpu.memory_space<vmem>>, %arg25: memref<6x8x128xf32, #tpu.memory_space<vmem>>, %arg26: memref<6x8x128xf32, #tpu.memory_space<vmem>>, %arg27: memref<8x128x16xf32, #tpu.memory_space<vmem>>, %arg28: memref<8x128x16xf32, #tpu.memory_space<vmem>>, %arg29: memref<6x8x32xf32, #tpu.memory_space<vmem>>, %arg30: memref<8x16xf32, #tpu.memory_space<vmem>>, %arg31: memref<6x8x128xf32, #tpu.memory_space<vmem>>, %arg32: memref<6x8x256xf32, #tpu.memory_space<vmem>>) attributes {dimension_semantics = [#tpu.dimension_semantics<parallel>, #tpu.dimension_semantics<arbitrary>], iteration_bounds = array<i64: 1, 1>, scalar_prefetch = 0 : i64, scratch_operands = 6 : i64, tpu.core_type = #tpu.core_type<tc>, window_params = [{transform_indices = @transform_0, window_bounds = array<i64: 6, 8, 16>}, {transform_indices = @transform_1, window_bounds = array<i64: 8, 128, 32>}, {transform_indices = @transform_2, window_bounds = array<i64: 8, 128>}, {pipeline_mode = #tpu.pipeline_mode<synchronous>, transform_indices = @transform_3, window_bounds = array<i64: 6, 32>}, {pipeline_mode = #tpu.pipeline_mode<synchronous>, transform_indices = @transform_4, window_bounds = array<i64: 16, 128>}, {pipeline_mode = #tpu.pipeline_mode<synchronous>, transform_indices = @transform_5, window_bounds = array<i64: 1, 128>}, {pipeline_mode = #tpu.pipeline_mode<synchronous>, transform_indices = @transform_6, window_bounds = array<i64: 16, 128>}, {pipeline_mode = #tpu.pipeline_mode<synchronous>, transform_indices = @transform_7, window_bounds = array<i64: 32, 128>}, {pipeline_mode = #tpu.pipeline_mode<synchronous>, transform_indices = @transform_8, window_bounds = array<i64: 32, 128>}, {pipeline_mode = #tpu.pipeline_mode<synchronous>, transform_indices = @transform_9, window_bounds = array<i64: 32, 128>}, {pipeline_mode = #tpu.pipeline_mode<synchronous>, transform_indices = @transform_10, window_bounds = array<i64: 1, 128>}, {pipeline_mode = #tpu.pipeline_mode<synchronous>, transform_indices = @transform_11, window_bounds = array<i64: 32, 128>}, {pipeline_mode = #tpu.pipeline_mode<synchronous>, transform_indices = @transform_12, window_bounds = array<i64: 32, 128>}, {pipeline_mode = #tpu.pipeline_mode<synchronous>, transform_indices = @transform_13, window_bounds = array<i64: 1, 128>}, {pipeline_mode = #tpu.pipeline_mode<synchronous>, transform_indices = @transform_14, window_bounds = array<i64: 32, 16>}, {pipeline_mode = #tpu.pipeline_mode<synchronous>, transform_indices = @transform_15, window_bounds = array<i64: 1, 16>}, {pipeline_mode = #tpu.pipeline_mode<synchronous>, transform_indices = @transform_16, window_bounds = array<i64: 32, 32>}, {pipeline_mode = #tpu.pipeline_mode<synchronous>, transform_indices = @transform_17, window_bounds = array<i64: 1, 32>}, {pipeline_mode = #tpu.pipeline_mode<synchronous>, transform_indices = @transform_18, window_bounds = array<i64: 32, 256>}, {pipeline_mode = #tpu.pipeline_mode<synchronous>, transform_indices = @transform_19, window_bounds = array<i64: 16, 256>}, {pipeline_mode = #tpu.pipeline_mode<synchronous>, transform_indices = @transform_20, window_bounds = array<i64: 1, 256>}, {pipeline_mode = #tpu.pipeline_mode<synchronous>, transform_indices = @transform_21, window_bounds = array<i64: 256, 128>}, {pipeline_mode = #tpu.pipeline_mode<synchronous>, transform_indices = @transform_22, window_bounds = array<i64: 1, 128>}, {transform_indices = @transform_23, window_bounds = array<i64: 6, 8, 128>}, {transform_indices = @transform_24, window_bounds = array<i64: 6, 8, 128>}]} {
    %c0 = arith.constant 0 : index
    %c0_0 = arith.constant 0 : index
    %0 = vector.load %arg4[%c0, %c0_0] : memref<8x128xf32, #tpu.memory_space<vmem>>, vector<8x128xf32>
    %c0_1 = arith.constant 0 : index
    %c0_2 = arith.constant 0 : index
    %1 = vector.load %arg16[%c0_1, %c0_2] : memref<32x16xf32, #tpu.memory_space<vmem>>, vector<32x16xf32>
    %c0_3 = arith.constant 0 : index
    %c0_4 = arith.constant 0 : index
    %2 = vector.load %arg17[%c0_3, %c0_4] : memref<1x16xf32, #tpu.memory_space<vmem>>, vector<1x16xf32>
    %c0_i32 = arith.constant 0 : i32
    %3 = arith.cmpi eq, %arg1, %c0_i32 : i32
    %4 = arith.extui %3 : i1 to i32
    %c0_i32_5 = arith.constant 0 : i32
    %5 = arith.cmpi ne, %4, %c0_i32_5 : i32
    scf.if %5 {
      %c0_241 = arith.constant 0 : index
      %c0_242 = arith.constant 0 : index
      %c0_243 = arith.constant 0 : index
      %669 = vector.load %arg3[%c0_241, %c0_242, %c0_243] : memref<8x128x32xf32, #tpu.memory_space<vmem>>, vector<8x128x32xf32>
      %670 = vector.shape_cast %669 : vector<8x128x32xf32> to vector<1024x32xf32>
      %c0_244 = arith.constant 0 : index
      %c0_245 = arith.constant 0 : index
      %671 = vector.load %arg18[%c0_244, %c0_245] : memref<32x32xf32, #tpu.memory_space<vmem>>, vector<32x32xf32>
      %cst_246 = arith.constant dense<0.000000e+00> : vector<1024x32xf32>
      %672 = tpu.matmul %670, %671, %cst_246 {dimension_numbers = #tpu.dot_dimension_numbers<[1], [0], [0], [1], [0, 0, 1, 1], [], []>} : vector<1024x32xf32>, vector<32x32xf32>, vector<1024x32xf32> -> vector<1024x32xf32>
      %c0_247 = arith.constant 0 : index
      %c0_248 = arith.constant 0 : index
      %673 = vector.load %arg19[%c0_247, %c0_248] : memref<1x32xf32, #tpu.memory_space<vmem>>, vector<1x32xf32>
      %674 = vector.broadcast %673 : vector<1x32xf32> to vector<1024x32xf32>
      %675 = arith.addf %672, %674 : vector<1024x32xf32>
      %676 = vector.shape_cast %675 : vector<1024x32xf32> to vector<8x128x32xf32>
      %677 = vector.extract_strided_slice %676 {offsets = [0, 0, 0], sizes = [8, 128, 16], strides = [1, 1, 1]} : vector<8x128x32xf32> to vector<8x128x16xf32>
      %678 = vector.extract_strided_slice %676 {offsets = [0, 0, 16], sizes = [8, 128, 16], strides = [1, 1, 1]} : vector<8x128x32xf32> to vector<8x128x16xf32>
      %c0_249 = arith.constant 0 : index
      %c0_250 = arith.constant 0 : index
      %c0_251 = arith.constant 0 : index
      %679 = vector.load %arg27[%c0_249, %c0_250, %c0_251] : memref<8x128x16xf32, #tpu.memory_space<vmem>>, vector<8x128x16xf32>
      tpu.vector_store %arg27[%c0_249, %c0_250, %c0_251], %677 {strides = array<i32>} : memref<8x128x16xf32, #tpu.memory_space<vmem>>, vector<8x128x16xf32>,
      %c0_252 = arith.constant 0 : index
      %c0_253 = arith.constant 0 : index
      %c0_254 = arith.constant 0 : index
      %680 = vector.load %arg28[%c0_252, %c0_253, %c0_254] : memref<8x128x16xf32, #tpu.memory_space<vmem>>, vector<8x128x16xf32>
      tpu.vector_store %arg28[%c0_252, %c0_253, %c0_254], %678 {strides = array<i32>} : memref<8x128x16xf32, #tpu.memory_space<vmem>>, vector<8x128x16xf32>,
      %c0_255 = arith.constant 0 : index
      %c0_256 = arith.constant 0 : index
      %681 = vector.load %arg5[%c0_255, %c0_256] : memref<6x32xf32, #tpu.memory_space<vmem>>, vector<6x32xf32>
      %cst_257 = arith.constant 1.000000e+00 : f32
      %682 = vector.broadcast %cst_257 : f32 to vector<8x1xf32>
      %683 = vector.extract_strided_slice %681 {offsets = [0, 0], sizes = [1, 32], strides = [1, 1]} : vector<6x32xf32> to vector<1x32xf32>
      %684 = vector.broadcast %682 : vector<8x1xf32> to vector<8x32xf32>
      %685 = vector.broadcast %683 : vector<1x32xf32> to vector<8x32xf32>
      %686 = arith.mulf %684, %685 : vector<8x32xf32>
      %c0_258 = arith.constant 0 : index
      %c0_259 = arith.constant 0 : index
      %c0_260 = arith.constant 0 : index
      %687 = vector.load %arg29[%c0_258, %c0_259, %c0_260] : memref<6x8x32xf32, #tpu.memory_space<vmem>>, vector<1x8x32xf32>
      %688 = vector.shape_cast %687 : vector<1x8x32xf32> to vector<8x32xf32>
      %689 = vector.shape_cast %686 : vector<8x32xf32> to vector<1x8x32xf32>
      tpu.vector_store %arg29[%c0_258, %c0_259, %c0_260], %689 {strides = array<i32>} : memref<6x8x32xf32, #tpu.memory_space<vmem>>, vector<1x8x32xf32>,
      %690 = vector.extract_strided_slice %681 {offsets = [1, 0], sizes = [1, 32], strides = [1, 1]} : vector<6x32xf32> to vector<1x32xf32>
      %691 = vector.broadcast %682 : vector<8x1xf32> to vector<8x32xf32>
      %692 = vector.broadcast %690 : vector<1x32xf32> to vector<8x32xf32>
      %693 = arith.mulf %691, %692 : vector<8x32xf32>
      %c1_261 = arith.constant 1 : index
      %c0_262 = arith.constant 0 : index
      %c0_263 = arith.constant 0 : index
      %694 = vector.load %arg29[%c1_261, %c0_262, %c0_263] : memref<6x8x32xf32, #tpu.memory_space<vmem>>, vector<1x8x32xf32>
      %695 = vector.shape_cast %694 : vector<1x8x32xf32> to vector<8x32xf32>
      %696 = vector.shape_cast %693 : vector<8x32xf32> to vector<1x8x32xf32>
      tpu.vector_store %arg29[%c1_261, %c0_262, %c0_263], %696 {strides = array<i32>} : memref<6x8x32xf32, #tpu.memory_space<vmem>>, vector<1x8x32xf32>,
      %697 = vector.extract_strided_slice %681 {offsets = [2, 0], sizes = [1, 32], strides = [1, 1]} : vector<6x32xf32> to vector<1x32xf32>
      %698 = vector.broadcast %682 : vector<8x1xf32> to vector<8x32xf32>
      %699 = vector.broadcast %697 : vector<1x32xf32> to vector<8x32xf32>
      %700 = arith.mulf %698, %699 : vector<8x32xf32>
      %c2_264 = arith.constant 2 : index
      %c0_265 = arith.constant 0 : index
      %c0_266 = arith.constant 0 : index
      %701 = vector.load %arg29[%c2_264, %c0_265, %c0_266] : memref<6x8x32xf32, #tpu.memory_space<vmem>>, vector<1x8x32xf32>
      %702 = vector.shape_cast %701 : vector<1x8x32xf32> to vector<8x32xf32>
      %703 = vector.shape_cast %700 : vector<8x32xf32> to vector<1x8x32xf32>
      tpu.vector_store %arg29[%c2_264, %c0_265, %c0_266], %703 {strides = array<i32>} : memref<6x8x32xf32, #tpu.memory_space<vmem>>, vector<1x8x32xf32>,
      %704 = vector.extract_strided_slice %681 {offsets = [3, 0], sizes = [1, 32], strides = [1, 1]} : vector<6x32xf32> to vector<1x32xf32>
      %705 = vector.broadcast %682 : vector<8x1xf32> to vector<8x32xf32>
      %706 = vector.broadcast %704 : vector<1x32xf32> to vector<8x32xf32>
      %707 = arith.mulf %705, %706 : vector<8x32xf32>
      %c3_267 = arith.constant 3 : index
      %c0_268 = arith.constant 0 : index
      %c0_269 = arith.constant 0 : index
      %708 = vector.load %arg29[%c3_267, %c0_268, %c0_269] : memref<6x8x32xf32, #tpu.memory_space<vmem>>, vector<1x8x32xf32>
      %709 = vector.shape_cast %708 : vector<1x8x32xf32> to vector<8x32xf32>
      %710 = vector.shape_cast %707 : vector<8x32xf32> to vector<1x8x32xf32>
      tpu.vector_store %arg29[%c3_267, %c0_268, %c0_269], %710 {strides = array<i32>} : memref<6x8x32xf32, #tpu.memory_space<vmem>>, vector<1x8x32xf32>,
      %711 = vector.extract_strided_slice %681 {offsets = [4, 0], sizes = [1, 32], strides = [1, 1]} : vector<6x32xf32> to vector<1x32xf32>
      %712 = vector.broadcast %682 : vector<8x1xf32> to vector<8x32xf32>
      %713 = vector.broadcast %711 : vector<1x32xf32> to vector<8x32xf32>
      %714 = arith.mulf %712, %713 : vector<8x32xf32>
      %c4_270 = arith.constant 4 : index
      %c0_271 = arith.constant 0 : index
      %c0_272 = arith.constant 0 : index
      %715 = vector.load %arg29[%c4_270, %c0_271, %c0_272] : memref<6x8x32xf32, #tpu.memory_space<vmem>>, vector<1x8x32xf32>
      %716 = vector.shape_cast %715 : vector<1x8x32xf32> to vector<8x32xf32>
      %717 = vector.shape_cast %714 : vector<8x32xf32> to vector<1x8x32xf32>
      tpu.vector_store %arg29[%c4_270, %c0_271, %c0_272], %717 {strides = array<i32>} : memref<6x8x32xf32, #tpu.memory_space<vmem>>, vector<1x8x32xf32>,
      %718 = vector.extract_strided_slice %681 {offsets = [5, 0], sizes = [1, 32], strides = [1, 1]} : vector<6x32xf32> to vector<1x32xf32>
      %719 = vector.broadcast %682 : vector<8x1xf32> to vector<8x32xf32>
      %720 = vector.broadcast %718 : vector<1x32xf32> to vector<8x32xf32>
      %721 = arith.mulf %719, %720 : vector<8x32xf32>
      %c5_273 = arith.constant 5 : index
      %c0_274 = arith.constant 0 : index
      %c0_275 = arith.constant 0 : index
      %722 = vector.load %arg29[%c5_273, %c0_274, %c0_275] : memref<6x8x32xf32, #tpu.memory_space<vmem>>, vector<1x8x32xf32>
      %723 = vector.shape_cast %722 : vector<1x8x32xf32> to vector<8x32xf32>
      %724 = vector.shape_cast %721 : vector<8x32xf32> to vector<1x8x32xf32>
      tpu.vector_store %arg29[%c5_273, %c0_274, %c0_275], %724 {strides = array<i32>} : memref<6x8x32xf32, #tpu.memory_space<vmem>>, vector<1x8x32xf32>,
      %725 = vector.extract_strided_slice %681 {offsets = [4, 0], sizes = [1, 32], strides = [1, 1]} : vector<6x32xf32> to vector<1x32xf32>
      %726 = vector.broadcast %682 : vector<8x1xf32> to vector<8x32xf32>
      %727 = vector.broadcast %725 : vector<1x32xf32> to vector<8x32xf32>
      %728 = arith.mulf %726, %727 : vector<8x32xf32>
      %cst_276 = arith.constant dense<0.000000e+00> : vector<8x16xf32>
      %729 = tpu.matmul %728, %1, %cst_276 {dimension_numbers = #tpu.dot_dimension_numbers<[1], [0], [0], [1], [0, 0, 1, 1], [], []>} : vector<8x32xf32>, vector<32x16xf32>, vector<8x16xf32> -> vector<8x16xf32>
      %730 = vector.broadcast %2 : vector<1x16xf32> to vector<8x16xf32>
      %731 = arith.addf %729, %730 : vector<8x16xf32>
      %732 = vector.shape_cast %731 : vector<8x16xf32> to vector<8x1x16xf32>
      "tpu.trace_start"() <{level = 10 : i32, message = "bqc,blc->bql"}> : () -> ()
      %cst_277 = arith.constant dense<0.000000e+00> : vector<8x1x128xf32>
      %733 = tpu.matmul %732, %677, %cst_277 {dimension_numbers = #tpu.dot_dimension_numbers<[2], [2], [1], [1], [0, 0, 0, 1, 1, 1], [0], [0]>} : vector<8x1x16xf32>, vector<8x128x16xf32>, vector<8x1x128xf32> -> vector<8x1x128xf32>
      "tpu.trace_stop"() : () -> ()
      %734 = vector.shape_cast %733 : vector<8x1x128xf32> to vector<8x128xf32>
      %cst_278 = arith.constant dense<0xFF800000> : vector<8xf32>
      %735 = vector.multi_reduction <maximumf>, %734, %cst_278 [1] : vector<8x128xf32> to vector<8xf32>
      %736 = vector.shape_cast %735 : vector<8xf32> to vector<8x1xf32>
      %737 = vector.broadcast %736 : vector<8x1xf32> to vector<8x128xf32>
      %738 = arith.subf %734, %737 : vector<8x128xf32>
      %739 = math.exp %738 : vector<8x128xf32>
      %740 = arith.mulf %739, %0 : vector<8x128xf32>
      %cst_279 = arith.constant dense<0.000000e+00> : vector<8xf32>
      %741 = vector.multi_reduction <add>, %740, %cst_279 [1] : vector<8x128xf32> to vector<8xf32>
      %742 = vector.shape_cast %741 : vector<8xf32> to vector<8x1xf32>
      %cst_280 = arith.constant 9.99999996E-13 : f32
      %743 = vector.broadcast %cst_280 : f32 to vector<8x1xf32>
      %744 = arith.maximumf %742, %743 : vector<8x1xf32>
      %745 = vector.broadcast %744 : vector<8x1xf32> to vector<8x128xf32>
      %746 = arith.divf %740, %745 : vector<8x128xf32>
      %747 = vector.shape_cast %746 : vector<8x128xf32> to vector<8x1x128xf32>
      "tpu.trace_start"() <{level = 10 : i32, message = "bql,blc->bqc"}> : () -> ()
      %cst_281 = arith.constant dense<0.000000e+00> : vector<8x1x16xf32>
      %748 = tpu.matmul %747, %678, %cst_281 {dimension_numbers = #tpu.dot_dimension_numbers<[2], [1], [1], [2], [0, 0, 0, 1, 1, 2], [0], [0]>} : vector<8x1x128xf32>, vector<8x128x16xf32>, vector<8x1x16xf32> -> vector<8x1x16xf32>
      "tpu.trace_stop"() : () -> ()
      %749 = vector.shape_cast %748 : vector<8x1x16xf32> to vector<8x16xf32>
      %c0_282 = arith.constant 0 : index
      %c0_283 = arith.constant 0 : index
      %750 = vector.load %arg30[%c0_282, %c0_283] : memref<8x16xf32, #tpu.memory_space<vmem>>, vector<8x16xf32>
      tpu.vector_store %arg30[%c0_282, %c0_283], %749 {strides = array<i32>} : memref<8x16xf32, #tpu.memory_space<vmem>>, vector<8x16xf32>,
    } else {
    }
    %c0_6 = arith.constant 0 : index
    %c0_7 = arith.constant 0 : index
    %c0_8 = arith.constant 0 : index
    %6 = vector.load %arg27[%c0_6, %c0_7, %c0_8] : memref<8x128x16xf32, #tpu.memory_space<vmem>>, vector<8x128x16xf32>
    %c0_9 = arith.constant 0 : index
    %c0_10 = arith.constant 0 : index
    %c0_11 = arith.constant 0 : index
    %7 = vector.load %arg28[%c0_9, %c0_10, %c0_11] : memref<8x128x16xf32, #tpu.memory_space<vmem>>, vector<8x128x16xf32>
    %c0_12 = arith.constant 0 : index
    %c0_13 = arith.constant 0 : index
    %8 = vector.load %arg8[%c0_12, %c0_13] : memref<16x128xf32, #tpu.memory_space<vmem>>, vector<16x128xf32>
    %c0_14 = arith.constant 0 : index
    %c0_15 = arith.constant 0 : index
    %9 = vector.load %arg9[%c0_14, %c0_15] : memref<32x128xf32, #tpu.memory_space<vmem>>, vector<32x128xf32>
    %c0_16 = arith.constant 0 : index
    %c0_17 = arith.constant 0 : index
    %10 = vector.load %arg10[%c0_16, %c0_17] : memref<32x128xf32, #tpu.memory_space<vmem>>, vector<32x128xf32>
    %c0_18 = arith.constant 0 : index
    %c0_19 = arith.constant 0 : index
    %11 = vector.load %arg11[%c0_18, %c0_19] : memref<32x128xf32, #tpu.memory_space<vmem>>, vector<32x128xf32>
    %c0_20 = arith.constant 0 : index
    %c0_21 = arith.constant 0 : index
    %12 = vector.load %arg12[%c0_20, %c0_21] : memref<1x128xf32, #tpu.memory_space<vmem>>, vector<1x128xf32>
    %c0_22 = arith.constant 0 : index
    %c0_23 = arith.constant 0 : index
    %13 = vector.load %arg13[%c0_22, %c0_23] : memref<32x128xf32, #tpu.memory_space<vmem>>, vector<32x128xf32>
    %c0_24 = arith.constant 0 : index
    %c0_25 = arith.constant 0 : index
    %14 = vector.load %arg14[%c0_24, %c0_25] : memref<32x128xf32, #tpu.memory_space<vmem>>, vector<32x128xf32>
    %c0_26 = arith.constant 0 : index
    %c0_27 = arith.constant 0 : index
    %15 = vector.load %arg15[%c0_26, %c0_27] : memref<1x128xf32, #tpu.memory_space<vmem>>, vector<1x128xf32>
    %c0_28 = arith.constant 0 : index
    %c0_29 = arith.constant 0 : index
    %16 = vector.load %arg20[%c0_28, %c0_29] : memref<32x256xf32, #tpu.memory_space<vmem>>, vector<32x256xf32>
    %c0_30 = arith.constant 0 : index
    %c0_31 = arith.constant 0 : index
    %17 = vector.load %arg21[%c0_30, %c0_31] : memref<16x256xf32, #tpu.memory_space<vmem>>, vector<16x256xf32>
    %c0_32 = arith.constant 0 : index
    %c0_33 = arith.constant 0 : index
    %18 = vector.load %arg22[%c0_32, %c0_33] : memref<1x256xf32, #tpu.memory_space<vmem>>, vector<1x256xf32>
    %c0_34 = arith.constant 0 : index
    %c0_35 = arith.constant 0 : index
    %c0_36 = arith.constant 0 : index
    %19 = vector.load %arg2[%c0_34, %c0_35, %c0_36] : memref<6x8x16xf32, #tpu.memory_space<vmem>>, vector<6x8x16xf32>
    %20 = vector.shape_cast %19 : vector<6x8x16xf32> to vector<48x16xf32>
    %c0_37 = arith.constant 0 : index
    %c0_38 = arith.constant 0 : index
    %21 = vector.load %arg6[%c0_37, %c0_38] : memref<16x128xf32, #tpu.memory_space<vmem>>, vector<16x128xf32>
    %cst = arith.constant dense<0.000000e+00> : vector<48x128xf32>
    %22 = tpu.matmul %20, %21, %cst {dimension_numbers = #tpu.dot_dimension_numbers<[1], [0], [0], [1], [0, 0, 1, 1], [], []>} : vector<48x16xf32>, vector<16x128xf32>, vector<48x128xf32> -> vector<48x128xf32>
    %c0_39 = arith.constant 0 : index
    %c0_40 = arith.constant 0 : index
    %23 = vector.load %arg7[%c0_39, %c0_40] : memref<1x128xf32, #tpu.memory_space<vmem>>, vector<1x128xf32>
    %24 = vector.broadcast %23 : vector<1x128xf32> to vector<48x128xf32>
    %25 = arith.addf %22, %24 : vector<48x128xf32>
    %26 = vector.shape_cast %25 : vector<48x128xf32> to vector<6x8x128xf32>
    %c0_41 = arith.constant 0 : index
    %c0_42 = arith.constant 0 : index
    %c0_43 = arith.constant 0 : index
    %27 = vector.load %arg31[%c0_41, %c0_42, %c0_43] : memref<6x8x128xf32, #tpu.memory_space<vmem>>, vector<6x8x128xf32>
    tpu.vector_store %arg31[%c0_41, %c0_42, %c0_43], %26 {strides = array<i32>} : memref<6x8x128xf32, #tpu.memory_space<vmem>>, vector<6x8x128xf32>,
    %c0_44 = arith.constant 0 : index
    %c0_45 = arith.constant 0 : index
    %c0_46 = arith.constant 0 : index
    %28 = vector.load %arg29[%c0_44, %c0_45, %c0_46] : memref<6x8x32xf32, #tpu.memory_space<vmem>>, vector<1x8x32xf32>
    %29 = vector.shape_cast %28 : vector<1x8x32xf32> to vector<8x32xf32>
    %c1 = arith.constant 1 : index
    %c0_47 = arith.constant 0 : index
    %c0_48 = arith.constant 0 : index
    %30 = vector.load %arg29[%c1, %c0_47, %c0_48] : memref<6x8x32xf32, #tpu.memory_space<vmem>>, vector<1x8x32xf32>
    %31 = vector.shape_cast %30 : vector<1x8x32xf32> to vector<8x32xf32>
    %c2 = arith.constant 2 : index
    %c0_49 = arith.constant 0 : index
    %c0_50 = arith.constant 0 : index
    %32 = vector.load %arg29[%c2, %c0_49, %c0_50] : memref<6x8x32xf32, #tpu.memory_space<vmem>>, vector<1x8x32xf32>
    %33 = vector.shape_cast %32 : vector<1x8x32xf32> to vector<8x32xf32>
    %c3 = arith.constant 3 : index
    %c0_51 = arith.constant 0 : index
    %c0_52 = arith.constant 0 : index
    %34 = vector.load %arg29[%c3, %c0_51, %c0_52] : memref<6x8x32xf32, #tpu.memory_space<vmem>>, vector<1x8x32xf32>
    %35 = vector.shape_cast %34 : vector<1x8x32xf32> to vector<8x32xf32>
    %c4 = arith.constant 4 : index
    %c0_53 = arith.constant 0 : index
    %c0_54 = arith.constant 0 : index
    %36 = vector.load %arg29[%c4, %c0_53, %c0_54] : memref<6x8x32xf32, #tpu.memory_space<vmem>>, vector<1x8x32xf32>
    %37 = vector.shape_cast %36 : vector<1x8x32xf32> to vector<8x32xf32>
    %c5 = arith.constant 5 : index
    %c0_55 = arith.constant 0 : index
    %c0_56 = arith.constant 0 : index
    %38 = vector.load %arg29[%c5, %c0_55, %c0_56] : memref<6x8x32xf32, #tpu.memory_space<vmem>>, vector<1x8x32xf32>
    %39 = vector.shape_cast %38 : vector<1x8x32xf32> to vector<8x32xf32>
    %c0_57 = arith.constant 0 : index
    %c0_58 = arith.constant 0 : index
    %40 = vector.load %arg30[%c0_57, %c0_58] : memref<8x16xf32, #tpu.memory_space<vmem>>, vector<8x16xf32>
    %c0_i32_59 = arith.constant 0 : i32
    %41 = arith.index_cast %c0_i32_59 : i32 to index
    %c0_60 = arith.constant 0 : index
    %c0_61 = arith.constant 0 : index
    %42 = vector.load %arg31[%41, %c0_60, %c0_61] : memref<6x8x128xf32, #tpu.memory_space<vmem>>, vector<1x8x128xf32>
    %43 = vector.shape_cast %42 : vector<1x8x128xf32> to vector<8x128xf32>
    %cst_62 = arith.constant dense<0.000000e+00> : vector<8x128xf32>
    %44 = tpu.matmul %40, %8, %cst_62 {dimension_numbers = #tpu.dot_dimension_numbers<[1], [0], [0], [1], [0, 0, 1, 1], [], []>} : vector<8x16xf32>, vector<16x128xf32>, vector<8x128xf32> -> vector<8x128xf32>
    %45 = arith.addf %43, %44 : vector<8x128xf32>
    %cst_63 = arith.constant dense<0.000000e+00> : vector<8x128xf32>
    %46 = tpu.matmul %29, %9, %cst_63 {dimension_numbers = #tpu.dot_dimension_numbers<[1], [0], [0], [1], [0, 0, 1, 1], [], []>} : vector<8x32xf32>, vector<32x128xf32>, vector<8x128xf32> -> vector<8x128xf32>
    %47 = arith.addf %45, %46 : vector<8x128xf32>
    %48 = arith.negf %47 : vector<8x128xf32>
    %49 = math.exp %48 : vector<8x128xf32>
    %cst_64 = arith.constant 1.000000e+00 : f32
    %50 = vector.broadcast %cst_64 : f32 to vector<8x128xf32>
    %51 = arith.addf %50, %49 : vector<8x128xf32>
    %52 = arith.divf %50, %51 : vector<8x128xf32>
    %53 = math.tanh %47 : vector<8x128xf32>
    %54 = vector.extract_strided_slice %52 {offsets = [0, 0], sizes = [8, 32], strides = [1, 1]} : vector<8x128xf32> to vector<8x32xf32>
    %55 = vector.extract_strided_slice %52 {offsets = [0, 32], sizes = [8, 32], strides = [1, 1]} : vector<8x128xf32> to vector<8x32xf32>
    %56 = vector.extract_strided_slice %53 {offsets = [0, 64], sizes = [8, 32], strides = [1, 1]} : vector<8x128xf32> to vector<8x32xf32>
    %57 = vector.extract_strided_slice %52 {offsets = [0, 96], sizes = [8, 32], strides = [1, 1]} : vector<8x128xf32> to vector<8x32xf32>
    %58 = arith.mulf %55, %31 : vector<8x32xf32>
    %59 = arith.mulf %54, %56 : vector<8x32xf32>
    %60 = arith.addf %58, %59 : vector<8x32xf32>
    %61 = math.tanh %60 : vector<8x32xf32>
    %62 = arith.mulf %57, %61 : vector<8x32xf32>
    %cst_65 = arith.constant dense<0.000000e+00> : vector<8x128xf32>
    %63 = tpu.matmul %62, %10, %cst_65 {dimension_numbers = #tpu.dot_dimension_numbers<[1], [0], [0], [1], [0, 0, 1, 1], [], []>} : vector<8x32xf32>, vector<32x128xf32>, vector<8x128xf32> -> vector<8x128xf32>
    %cst_66 = arith.constant dense<0.000000e+00> : vector<8x128xf32>
    %64 = tpu.matmul %33, %11, %cst_66 {dimension_numbers = #tpu.dot_dimension_numbers<[1], [0], [0], [1], [0, 0, 1, 1], [], []>} : vector<8x32xf32>, vector<32x128xf32>, vector<8x128xf32> -> vector<8x128xf32>
    %65 = arith.addf %63, %64 : vector<8x128xf32>
    %66 = vector.broadcast %12 : vector<1x128xf32> to vector<8x128xf32>
    %67 = arith.addf %65, %66 : vector<8x128xf32>
    %68 = arith.negf %67 : vector<8x128xf32>
    %69 = math.exp %68 : vector<8x128xf32>
    %cst_67 = arith.constant 1.000000e+00 : f32
    %70 = vector.broadcast %cst_67 : f32 to vector<8x128xf32>
    %71 = arith.addf %70, %69 : vector<8x128xf32>
    %72 = arith.divf %70, %71 : vector<8x128xf32>
    %73 = math.tanh %67 : vector<8x128xf32>
    %74 = vector.extract_strided_slice %72 {offsets = [0, 0], sizes = [8, 32], strides = [1, 1]} : vector<8x128xf32> to vector<8x32xf32>
    %75 = vector.extract_strided_slice %72 {offsets = [0, 32], sizes = [8, 32], strides = [1, 1]} : vector<8x128xf32> to vector<8x32xf32>
    %76 = vector.extract_strided_slice %73 {offsets = [0, 64], sizes = [8, 32], strides = [1, 1]} : vector<8x128xf32> to vector<8x32xf32>
    %77 = vector.extract_strided_slice %72 {offsets = [0, 96], sizes = [8, 32], strides = [1, 1]} : vector<8x128xf32> to vector<8x32xf32>
    %78 = arith.mulf %75, %35 : vector<8x32xf32>
    %79 = arith.mulf %74, %76 : vector<8x32xf32>
    %80 = arith.addf %78, %79 : vector<8x32xf32>
    %81 = math.tanh %80 : vector<8x32xf32>
    %82 = arith.mulf %77, %81 : vector<8x32xf32>
    %cst_68 = arith.constant dense<0.000000e+00> : vector<8x128xf32>
    %83 = tpu.matmul %82, %13, %cst_68 {dimension_numbers = #tpu.dot_dimension_numbers<[1], [0], [0], [1], [0, 0, 1, 1], [], []>} : vector<8x32xf32>, vector<32x128xf32>, vector<8x128xf32> -> vector<8x128xf32>
    %cst_69 = arith.constant dense<0.000000e+00> : vector<8x128xf32>
    %84 = tpu.matmul %37, %14, %cst_69 {dimension_numbers = #tpu.dot_dimension_numbers<[1], [0], [0], [1], [0, 0, 1, 1], [], []>} : vector<8x32xf32>, vector<32x128xf32>, vector<8x128xf32> -> vector<8x128xf32>
    %85 = arith.addf %83, %84 : vector<8x128xf32>
    %86 = vector.broadcast %15 : vector<1x128xf32> to vector<8x128xf32>
    %87 = arith.addf %85, %86 : vector<8x128xf32>
    %88 = arith.negf %87 : vector<8x128xf32>
    %89 = math.exp %88 : vector<8x128xf32>
    %cst_70 = arith.constant 1.000000e+00 : f32
    %90 = vector.broadcast %cst_70 : f32 to vector<8x128xf32>
    %91 = arith.addf %90, %89 : vector<8x128xf32>
    %92 = arith.divf %90, %91 : vector<8x128xf32>
    %93 = math.tanh %87 : vector<8x128xf32>
    %94 = vector.extract_strided_slice %92 {offsets = [0, 0], sizes = [8, 32], strides = [1, 1]} : vector<8x128xf32> to vector<8x32xf32>
    %95 = vector.extract_strided_slice %92 {offsets = [0, 32], sizes = [8, 32], strides = [1, 1]} : vector<8x128xf32> to vector<8x32xf32>
    %96 = vector.extract_strided_slice %93 {offsets = [0, 64], sizes = [8, 32], strides = [1, 1]} : vector<8x128xf32> to vector<8x32xf32>
    %97 = vector.extract_strided_slice %92 {offsets = [0, 96], sizes = [8, 32], strides = [1, 1]} : vector<8x128xf32> to vector<8x32xf32>
    %98 = arith.mulf %95, %39 : vector<8x32xf32>
    %99 = arith.mulf %94, %96 : vector<8x32xf32>
    %100 = arith.addf %98, %99 : vector<8x32xf32>
    %101 = math.tanh %100 : vector<8x32xf32>
    %102 = arith.mulf %97, %101 : vector<8x32xf32>
    %cst_71 = arith.constant dense<0.000000e+00> : vector<8x16xf32>
    %103 = tpu.matmul %102, %1, %cst_71 {dimension_numbers = #tpu.dot_dimension_numbers<[1], [0], [0], [1], [0, 0, 1, 1], [], []>} : vector<8x32xf32>, vector<32x16xf32>, vector<8x16xf32> -> vector<8x16xf32>
    %104 = vector.broadcast %2 : vector<1x16xf32> to vector<8x16xf32>
    %105 = arith.addf %103, %104 : vector<8x16xf32>
    %106 = vector.shape_cast %105 : vector<8x16xf32> to vector<8x1x16xf32>
    "tpu.trace_start"() <{level = 10 : i32, message = "bqc,blc->bql"}> : () -> ()
    %cst_72 = arith.constant dense<0.000000e+00> : vector<8x1x128xf32>
    %107 = tpu.matmul %106, %6, %cst_72 {dimension_numbers = #tpu.dot_dimension_numbers<[2], [2], [1], [1], [0, 0, 0, 1, 1, 1], [0], [0]>} : vector<8x1x16xf32>, vector<8x128x16xf32>, vector<8x1x128xf32> -> vector<8x1x128xf32>
    "tpu.trace_stop"() : () -> ()
    %108 = vector.shape_cast %107 : vector<8x1x128xf32> to vector<8x128xf32>
    %cst_73 = arith.constant dense<0xFF800000> : vector<8xf32>
    %109 = vector.multi_reduction <maximumf>, %108, %cst_73 [1] : vector<8x128xf32> to vector<8xf32>
    %110 = vector.shape_cast %109 : vector<8xf32> to vector<8x1xf32>
    %111 = vector.broadcast %110 : vector<8x1xf32> to vector<8x128xf32>
    %112 = arith.subf %108, %111 : vector<8x128xf32>
    %113 = math.exp %112 : vector<8x128xf32>
    %114 = arith.mulf %113, %0 : vector<8x128xf32>
    %cst_74 = arith.constant dense<0.000000e+00> : vector<8xf32>
    %115 = vector.multi_reduction <add>, %114, %cst_74 [1] : vector<8x128xf32> to vector<8xf32>
    %116 = vector.shape_cast %115 : vector<8xf32> to vector<8x1xf32>
    %cst_75 = arith.constant 9.99999996E-13 : f32
    %117 = vector.broadcast %cst_75 : f32 to vector<8x1xf32>
    %118 = arith.maximumf %116, %117 : vector<8x1xf32>
    %119 = vector.broadcast %118 : vector<8x1xf32> to vector<8x128xf32>
    %120 = arith.divf %114, %119 : vector<8x128xf32>
    %121 = vector.shape_cast %120 : vector<8x128xf32> to vector<8x1x128xf32>
    "tpu.trace_start"() <{level = 10 : i32, message = "bql,blc->bqc"}> : () -> ()
    %cst_76 = arith.constant dense<0.000000e+00> : vector<8x1x16xf32>
    %122 = tpu.matmul %121, %7, %cst_76 {dimension_numbers = #tpu.dot_dimension_numbers<[2], [1], [1], [2], [0, 0, 0, 1, 1, 2], [0], [0]>} : vector<8x1x128xf32>, vector<8x128x16xf32>, vector<8x1x16xf32> -> vector<8x1x16xf32>
    "tpu.trace_stop"() : () -> ()
    %123 = vector.shape_cast %122 : vector<8x1x16xf32> to vector<8x16xf32>
    %cst_77 = arith.constant 0.000000e+00 : f32
    %124 = vector.broadcast %cst_77 : f32 to vector<8x32xf32>
    %125 = arith.maximumf %102, %124 : vector<8x32xf32>
    %cst_78 = arith.constant dense<0.000000e+00> : vector<8x256xf32>
    %126 = tpu.matmul %125, %16, %cst_78 {dimension_numbers = #tpu.dot_dimension_numbers<[1], [0], [0], [1], [0, 0, 1, 1], [], []>} : vector<8x32xf32>, vector<32x256xf32>, vector<8x256xf32> -> vector<8x256xf32>
    %cst_79 = arith.constant 0.000000e+00 : f32
    %127 = vector.broadcast %cst_79 : f32 to vector<8x16xf32>
    %128 = arith.maximumf %123, %127 : vector<8x16xf32>
    %cst_80 = arith.constant dense<0.000000e+00> : vector<8x256xf32>
    %129 = tpu.matmul %128, %17, %cst_80 {dimension_numbers = #tpu.dot_dimension_numbers<[1], [0], [0], [1], [0, 0, 1, 1], [], []>} : vector<8x16xf32>, vector<16x256xf32>, vector<8x256xf32> -> vector<8x256xf32>
    %130 = arith.addf %126, %129 : vector<8x256xf32>
    %131 = vector.broadcast %18 : vector<1x256xf32> to vector<8x256xf32>
    %132 = arith.addf %130, %131 : vector<8x256xf32>
    %133 = arith.index_cast %c0_i32_59 : i32 to index
    %c0_81 = arith.constant 0 : index
    %c0_82 = arith.constant 0 : index
    %134 = vector.load %arg32[%133, %c0_81, %c0_82] : memref<6x8x256xf32, #tpu.memory_space<vmem>>, vector<1x8x256xf32>
    %135 = vector.shape_cast %134 : vector<1x8x256xf32> to vector<8x256xf32>
    %136 = vector.shape_cast %132 : vector<8x256xf32> to vector<1x8x256xf32>
    tpu.vector_store %arg32[%133, %c0_81, %c0_82], %136 {strides = array<i32>} : memref<6x8x256xf32, #tpu.memory_space<vmem>>, vector<1x8x256xf32>,
    %137 = arith.index_cast %c0_i32_59 : i32 to index
    %c0_83 = arith.constant 0 : index
    %c0_84 = arith.constant 0 : index
    %138 = vector.load %arg26[%137, %c0_83, %c0_84] : memref<6x8x128xf32, #tpu.memory_space<vmem>>, vector<1x8x128xf32>
    %139 = vector.shape_cast %138 : vector<1x8x128xf32> to vector<8x128xf32>
    %140 = vector.shape_cast %120 : vector<8x128xf32> to vector<1x8x128xf32>
    tpu.vector_store %arg26[%137, %c0_83, %c0_84], %140 {strides = array<i32>} : memref<6x8x128xf32, #tpu.memory_space<vmem>>, vector<1x8x128xf32>,
    %c1_i32 = arith.constant 1 : i32
    %141 = arith.index_cast %c1_i32 : i32 to index
    %c0_85 = arith.constant 0 : index
    %c0_86 = arith.constant 0 : index
    %142 = vector.load %arg31[%141, %c0_85, %c0_86] : memref<6x8x128xf32, #tpu.memory_space<vmem>>, vector<1x8x128xf32>
    %143 = vector.shape_cast %142 : vector<1x8x128xf32> to vector<8x128xf32>
    %cst_87 = arith.constant dense<0.000000e+00> : vector<8x128xf32>
    %144 = tpu.matmul %123, %8, %cst_87 {dimension_numbers = #tpu.dot_dimension_numbers<[1], [0], [0], [1], [0, 0, 1, 1], [], []>} : vector<8x16xf32>, vector<16x128xf32>, vector<8x128xf32> -> vector<8x128xf32>
    %145 = arith.addf %143, %144 : vector<8x128xf32>
    %cst_88 = arith.constant dense<0.000000e+00> : vector<8x128xf32>
    %146 = tpu.matmul %62, %9, %cst_88 {dimension_numbers = #tpu.dot_dimension_numbers<[1], [0], [0], [1], [0, 0, 1, 1], [], []>} : vector<8x32xf32>, vector<32x128xf32>, vector<8x128xf32> -> vector<8x128xf32>
    %147 = arith.addf %145, %146 : vector<8x128xf32>
    %148 = arith.negf %147 : vector<8x128xf32>
    %149 = math.exp %148 : vector<8x128xf32>
    %cst_89 = arith.constant 1.000000e+00 : f32
    %150 = vector.broadcast %cst_89 : f32 to vector<8x128xf32>
    %151 = arith.addf %150, %149 : vector<8x128xf32>
    %152 = arith.divf %150, %151 : vector<8x128xf32>
    %153 = math.tanh %147 : vector<8x128xf32>
    %154 = vector.extract_strided_slice %152 {offsets = [0, 0], sizes = [8, 32], strides = [1, 1]} : vector<8x128xf32> to vector<8x32xf32>
    %155 = vector.extract_strided_slice %152 {offsets = [0, 32], sizes = [8, 32], strides = [1, 1]} : vector<8x128xf32> to vector<8x32xf32>
    %156 = vector.extract_strided_slice %153 {offsets = [0, 64], sizes = [8, 32], strides = [1, 1]} : vector<8x128xf32> to vector<8x32xf32>
    %157 = vector.extract_strided_slice %152 {offsets = [0, 96], sizes = [8, 32], strides = [1, 1]} : vector<8x128xf32> to vector<8x32xf32>
    %158 = arith.mulf %155, %60 : vector<8x32xf32>
    %159 = arith.mulf %154, %156 : vector<8x32xf32>
    %160 = arith.addf %158, %159 : vector<8x32xf32>
    %161 = math.tanh %160 : vector<8x32xf32>
    %162 = arith.mulf %157, %161 : vector<8x32xf32>
    %cst_90 = arith.constant dense<0.000000e+00> : vector<8x128xf32>
    %163 = tpu.matmul %162, %10, %cst_90 {dimension_numbers = #tpu.dot_dimension_numbers<[1], [0], [0], [1], [0, 0, 1, 1], [], []>} : vector<8x32xf32>, vector<32x128xf32>, vector<8x128xf32> -> vector<8x128xf32>
    %cst_91 = arith.constant dense<0.000000e+00> : vector<8x128xf32>
    %164 = tpu.matmul %82, %11, %cst_91 {dimension_numbers = #tpu.dot_dimension_numbers<[1], [0], [0], [1], [0, 0, 1, 1], [], []>} : vector<8x32xf32>, vector<32x128xf32>, vector<8x128xf32> -> vector<8x128xf32>
    %165 = arith.addf %163, %164 : vector<8x128xf32>
    %166 = vector.broadcast %12 : vector<1x128xf32> to vector<8x128xf32>
    %167 = arith.addf %165, %166 : vector<8x128xf32>
    %168 = arith.negf %167 : vector<8x128xf32>
    %169 = math.exp %168 : vector<8x128xf32>
    %cst_92 = arith.constant 1.000000e+00 : f32
    %170 = vector.broadcast %cst_92 : f32 to vector<8x128xf32>
    %171 = arith.addf %170, %169 : vector<8x128xf32>
    %172 = arith.divf %170, %171 : vector<8x128xf32>
    %173 = math.tanh %167 : vector<8x128xf32>
    %174 = vector.extract_strided_slice %172 {offsets = [0, 0], sizes = [8, 32], strides = [1, 1]} : vector<8x128xf32> to vector<8x32xf32>
    %175 = vector.extract_strided_slice %172 {offsets = [0, 32], sizes = [8, 32], strides = [1, 1]} : vector<8x128xf32> to vector<8x32xf32>
    %176 = vector.extract_strided_slice %173 {offsets = [0, 64], sizes = [8, 32], strides = [1, 1]} : vector<8x128xf32> to vector<8x32xf32>
    %177 = vector.extract_strided_slice %172 {offsets = [0, 96], sizes = [8, 32], strides = [1, 1]} : vector<8x128xf32> to vector<8x32xf32>
    %178 = arith.mulf %175, %80 : vector<8x32xf32>
    %179 = arith.mulf %174, %176 : vector<8x32xf32>
    %180 = arith.addf %178, %179 : vector<8x32xf32>
    %181 = math.tanh %180 : vector<8x32xf32>
    %182 = arith.mulf %177, %181 : vector<8x32xf32>
    %cst_93 = arith.constant dense<0.000000e+00> : vector<8x128xf32>
    %183 = tpu.matmul %182, %13, %cst_93 {dimension_numbers = #tpu.dot_dimension_numbers<[1], [0], [0], [1], [0, 0, 1, 1], [], []>} : vector<8x32xf32>, vector<32x128xf32>, vector<8x128xf32> -> vector<8x128xf32>
    %cst_94 = arith.constant dense<0.000000e+00> : vector<8x128xf32>
    %184 = tpu.matmul %102, %14, %cst_94 {dimension_numbers = #tpu.dot_dimension_numbers<[1], [0], [0], [1], [0, 0, 1, 1], [], []>} : vector<8x32xf32>, vector<32x128xf32>, vector<8x128xf32> -> vector<8x128xf32>
    %185 = arith.addf %183, %184 : vector<8x128xf32>
    %186 = vector.broadcast %15 : vector<1x128xf32> to vector<8x128xf32>
    %187 = arith.addf %185, %186 : vector<8x128xf32>
    %188 = arith.negf %187 : vector<8x128xf32>
    %189 = math.exp %188 : vector<8x128xf32>
    %cst_95 = arith.constant 1.000000e+00 : f32
    %190 = vector.broadcast %cst_95 : f32 to vector<8x128xf32>
    %191 = arith.addf %190, %189 : vector<8x128xf32>
    %192 = arith.divf %190, %191 : vector<8x128xf32>
    %193 = math.tanh %187 : vector<8x128xf32>
    %194 = vector.extract_strided_slice %192 {offsets = [0, 0], sizes = [8, 32], strides = [1, 1]} : vector<8x128xf32> to vector<8x32xf32>
    %195 = vector.extract_strided_slice %192 {offsets = [0, 32], sizes = [8, 32], strides = [1, 1]} : vector<8x128xf32> to vector<8x32xf32>
    %196 = vector.extract_strided_slice %193 {offsets = [0, 64], sizes = [8, 32], strides = [1, 1]} : vector<8x128xf32> to vector<8x32xf32>
    %197 = vector.extract_strided_slice %192 {offsets = [0, 96], sizes = [8, 32], strides = [1, 1]} : vector<8x128xf32> to vector<8x32xf32>
    %198 = arith.mulf %195, %100 : vector<8x32xf32>
    %199 = arith.mulf %194, %196 : vector<8x32xf32>
    %200 = arith.addf %198, %199 : vector<8x32xf32>
    %201 = math.tanh %200 : vector<8x32xf32>
    %202 = arith.mulf %197, %201 : vector<8x32xf32>
    %cst_96 = arith.constant dense<0.000000e+00> : vector<8x16xf32>
    %203 = tpu.matmul %202, %1, %cst_96 {dimension_numbers = #tpu.dot_dimension_numbers<[1], [0], [0], [1], [0, 0, 1, 1], [], []>} : vector<8x32xf32>, vector<32x16xf32>, vector<8x16xf32> -> vector<8x16xf32>
    %204 = vector.broadcast %2 : vector<1x16xf32> to vector<8x16xf32>
    %205 = arith.addf %203, %204 : vector<8x16xf32>
    %206 = vector.shape_cast %205 : vector<8x16xf32> to vector<8x1x16xf32>
    "tpu.trace_start"() <{level = 10 : i32, message = "bqc,blc->bql"}> : () -> ()
    %cst_97 = arith.constant dense<0.000000e+00> : vector<8x1x128xf32>
    %207 = tpu.matmul %206, %6, %cst_97 {dimension_numbers = #tpu.dot_dimension_numbers<[2], [2], [1], [1], [0, 0, 0, 1, 1, 1], [0], [0]>} : vector<8x1x16xf32>, vector<8x128x16xf32>, vector<8x1x128xf32> -> vector<8x1x128xf32>
    "tpu.trace_stop"() : () -> ()
    %208 = vector.shape_cast %207 : vector<8x1x128xf32> to vector<8x128xf32>
    %cst_98 = arith.constant dense<0xFF800000> : vector<8xf32>
    %209 = vector.multi_reduction <maximumf>, %208, %cst_98 [1] : vector<8x128xf32> to vector<8xf32>
    %210 = vector.shape_cast %209 : vector<8xf32> to vector<8x1xf32>
    %211 = vector.broadcast %210 : vector<8x1xf32> to vector<8x128xf32>
    %212 = arith.subf %208, %211 : vector<8x128xf32>
    %213 = math.exp %212 : vector<8x128xf32>
    %214 = arith.mulf %213, %0 : vector<8x128xf32>
    %cst_99 = arith.constant dense<0.000000e+00> : vector<8xf32>
    %215 = vector.multi_reduction <add>, %214, %cst_99 [1] : vector<8x128xf32> to vector<8xf32>
    %216 = vector.shape_cast %215 : vector<8xf32> to vector<8x1xf32>
    %cst_100 = arith.constant 9.99999996E-13 : f32
    %217 = vector.broadcast %cst_100 : f32 to vector<8x1xf32>
    %218 = arith.maximumf %216, %217 : vector<8x1xf32>
    %219 = vector.broadcast %218 : vector<8x1xf32> to vector<8x128xf32>
    %220 = arith.divf %214, %219 : vector<8x128xf32>
    %221 = vector.shape_cast %220 : vector<8x128xf32> to vector<8x1x128xf32>
    "tpu.trace_start"() <{level = 10 : i32, message = "bql,blc->bqc"}> : () -> ()
    %cst_101 = arith.constant dense<0.000000e+00> : vector<8x1x16xf32>
    %222 = tpu.matmul %221, %7, %cst_101 {dimension_numbers = #tpu.dot_dimension_numbers<[2], [1], [1], [2], [0, 0, 0, 1, 1, 2], [0], [0]>} : vector<8x1x128xf32>, vector<8x128x16xf32>, vector<8x1x16xf32> -> vector<8x1x16xf32>
    "tpu.trace_stop"() : () -> ()
    %223 = vector.shape_cast %222 : vector<8x1x16xf32> to vector<8x16xf32>
    %cst_102 = arith.constant 0.000000e+00 : f32
    %224 = vector.broadcast %cst_102 : f32 to vector<8x32xf32>
    %225 = arith.maximumf %202, %224 : vector<8x32xf32>
    %cst_103 = arith.constant dense<0.000000e+00> : vector<8x256xf32>
    %226 = tpu.matmul %225, %16, %cst_103 {dimension_numbers = #tpu.dot_dimension_numbers<[1], [0], [0], [1], [0, 0, 1, 1], [], []>} : vector<8x32xf32>, vector<32x256xf32>, vector<8x256xf32> -> vector<8x256xf32>
    %cst_104 = arith.constant 0.000000e+00 : f32
    %227 = vector.broadcast %cst_104 : f32 to vector<8x16xf32>
    %228 = arith.maximumf %223, %227 : vector<8x16xf32>
    %cst_105 = arith.constant dense<0.000000e+00> : vector<8x256xf32>
    %229 = tpu.matmul %228, %17, %cst_105 {dimension_numbers = #tpu.dot_dimension_numbers<[1], [0], [0], [1], [0, 0, 1, 1], [], []>} : vector<8x16xf32>, vector<16x256xf32>, vector<8x256xf32> -> vector<8x256xf32>
    %230 = arith.addf %226, %229 : vector<8x256xf32>
    %231 = vector.broadcast %18 : vector<1x256xf32> to vector<8x256xf32>
    %232 = arith.addf %230, %231 : vector<8x256xf32>
    %233 = arith.index_cast %c1_i32 : i32 to index
    %c0_106 = arith.constant 0 : index
    %c0_107 = arith.constant 0 : index
    %234 = vector.load %arg32[%233, %c0_106, %c0_107] : memref<6x8x256xf32, #tpu.memory_space<vmem>>, vector<1x8x256xf32>
    %235 = vector.shape_cast %234 : vector<1x8x256xf32> to vector<8x256xf32>
    %236 = vector.shape_cast %232 : vector<8x256xf32> to vector<1x8x256xf32>
    tpu.vector_store %arg32[%233, %c0_106, %c0_107], %236 {strides = array<i32>} : memref<6x8x256xf32, #tpu.memory_space<vmem>>, vector<1x8x256xf32>,
    %237 = arith.index_cast %c1_i32 : i32 to index
    %c0_108 = arith.constant 0 : index
    %c0_109 = arith.constant 0 : index
    %238 = vector.load %arg26[%237, %c0_108, %c0_109] : memref<6x8x128xf32, #tpu.memory_space<vmem>>, vector<1x8x128xf32>
    %239 = vector.shape_cast %238 : vector<1x8x128xf32> to vector<8x128xf32>
    %240 = vector.shape_cast %220 : vector<8x128xf32> to vector<1x8x128xf32>
    tpu.vector_store %arg26[%237, %c0_108, %c0_109], %240 {strides = array<i32>} : memref<6x8x128xf32, #tpu.memory_space<vmem>>, vector<1x8x128xf32>,
    %c2_i32 = arith.constant 2 : i32
    %241 = arith.index_cast %c2_i32 : i32 to index
    %c0_110 = arith.constant 0 : index
    %c0_111 = arith.constant 0 : index
    %242 = vector.load %arg31[%241, %c0_110, %c0_111] : memref<6x8x128xf32, #tpu.memory_space<vmem>>, vector<1x8x128xf32>
    %243 = vector.shape_cast %242 : vector<1x8x128xf32> to vector<8x128xf32>
    %cst_112 = arith.constant dense<0.000000e+00> : vector<8x128xf32>
    %244 = tpu.matmul %223, %8, %cst_112 {dimension_numbers = #tpu.dot_dimension_numbers<[1], [0], [0], [1], [0, 0, 1, 1], [], []>} : vector<8x16xf32>, vector<16x128xf32>, vector<8x128xf32> -> vector<8x128xf32>
    %245 = arith.addf %243, %244 : vector<8x128xf32>
    %cst_113 = arith.constant dense<0.000000e+00> : vector<8x128xf32>
    %246 = tpu.matmul %162, %9, %cst_113 {dimension_numbers = #tpu.dot_dimension_numbers<[1], [0], [0], [1], [0, 0, 1, 1], [], []>} : vector<8x32xf32>, vector<32x128xf32>, vector<8x128xf32> -> vector<8x128xf32>
    %247 = arith.addf %245, %246 : vector<8x128xf32>
    %248 = arith.negf %247 : vector<8x128xf32>
    %249 = math.exp %248 : vector<8x128xf32>
    %cst_114 = arith.constant 1.000000e+00 : f32
    %250 = vector.broadcast %cst_114 : f32 to vector<8x128xf32>
    %251 = arith.addf %250, %249 : vector<8x128xf32>
    %252 = arith.divf %250, %251 : vector<8x128xf32>
    %253 = math.tanh %247 : vector<8x128xf32>
    %254 = vector.extract_strided_slice %252 {offsets = [0, 0], sizes = [8, 32], strides = [1, 1]} : vector<8x128xf32> to vector<8x32xf32>
    %255 = vector.extract_strided_slice %252 {offsets = [0, 32], sizes = [8, 32], strides = [1, 1]} : vector<8x128xf32> to vector<8x32xf32>
    %256 = vector.extract_strided_slice %253 {offsets = [0, 64], sizes = [8, 32], strides = [1, 1]} : vector<8x128xf32> to vector<8x32xf32>
    %257 = vector.extract_strided_slice %252 {offsets = [0, 96], sizes = [8, 32], strides = [1, 1]} : vector<8x128xf32> to vector<8x32xf32>
    %258 = arith.mulf %255, %160 : vector<8x32xf32>
    %259 = arith.mulf %254, %256 : vector<8x32xf32>
    %260 = arith.addf %258, %259 : vector<8x32xf32>
    %261 = math.tanh %260 : vector<8x32xf32>
    %262 = arith.mulf %257, %261 : vector<8x32xf32>
    %cst_115 = arith.constant dense<0.000000e+00> : vector<8x128xf32>
    %263 = tpu.matmul %262, %10, %cst_115 {dimension_numbers = #tpu.dot_dimension_numbers<[1], [0], [0], [1], [0, 0, 1, 1], [], []>} : vector<8x32xf32>, vector<32x128xf32>, vector<8x128xf32> -> vector<8x128xf32>
    %cst_116 = arith.constant dense<0.000000e+00> : vector<8x128xf32>
    %264 = tpu.matmul %182, %11, %cst_116 {dimension_numbers = #tpu.dot_dimension_numbers<[1], [0], [0], [1], [0, 0, 1, 1], [], []>} : vector<8x32xf32>, vector<32x128xf32>, vector<8x128xf32> -> vector<8x128xf32>
    %265 = arith.addf %263, %264 : vector<8x128xf32>
    %266 = vector.broadcast %12 : vector<1x128xf32> to vector<8x128xf32>
    %267 = arith.addf %265, %266 : vector<8x128xf32>
    %268 = arith.negf %267 : vector<8x128xf32>
    %269 = math.exp %268 : vector<8x128xf32>
    %cst_117 = arith.constant 1.000000e+00 : f32
    %270 = vector.broadcast %cst_117 : f32 to vector<8x128xf32>
    %271 = arith.addf %270, %269 : vector<8x128xf32>
    %272 = arith.divf %270, %271 : vector<8x128xf32>
    %273 = math.tanh %267 : vector<8x128xf32>
    %274 = vector.extract_strided_slice %272 {offsets = [0, 0], sizes = [8, 32], strides = [1, 1]} : vector<8x128xf32> to vector<8x32xf32>
    %275 = vector.extract_strided_slice %272 {offsets = [0, 32], sizes = [8, 32], strides = [1, 1]} : vector<8x128xf32> to vector<8x32xf32>
    %276 = vector.extract_strided_slice %273 {offsets = [0, 64], sizes = [8, 32], strides = [1, 1]} : vector<8x128xf32> to vector<8x32xf32>
    %277 = vector.extract_strided_slice %272 {offsets = [0, 96], sizes = [8, 32], strides = [1, 1]} : vector<8x128xf32> to vector<8x32xf32>
    %278 = arith.mulf %275, %180 : vector<8x32xf32>
    %279 = arith.mulf %274, %276 : vector<8x32xf32>
    %280 = arith.addf %278, %279 : vector<8x32xf32>
    %281 = math.tanh %280 : vector<8x32xf32>
    %282 = arith.mulf %277, %281 : vector<8x32xf32>
    %cst_118 = arith.constant dense<0.000000e+00> : vector<8x128xf32>
    %283 = tpu.matmul %282, %13, %cst_118 {dimension_numbers = #tpu.dot_dimension_numbers<[1], [0], [0], [1], [0, 0, 1, 1], [], []>} : vector<8x32xf32>, vector<32x128xf32>, vector<8x128xf32> -> vector<8x128xf32>
    %cst_119 = arith.constant dense<0.000000e+00> : vector<8x128xf32>
    %284 = tpu.matmul %202, %14, %cst_119 {dimension_numbers = #tpu.dot_dimension_numbers<[1], [0], [0], [1], [0, 0, 1, 1], [], []>} : vector<8x32xf32>, vector<32x128xf32>, vector<8x128xf32> -> vector<8x128xf32>
    %285 = arith.addf %283, %284 : vector<8x128xf32>
    %286 = vector.broadcast %15 : vector<1x128xf32> to vector<8x128xf32>
    %287 = arith.addf %285, %286 : vector<8x128xf32>
    %288 = arith.negf %287 : vector<8x128xf32>
    %289 = math.exp %288 : vector<8x128xf32>
    %cst_120 = arith.constant 1.000000e+00 : f32
    %290 = vector.broadcast %cst_120 : f32 to vector<8x128xf32>
    %291 = arith.addf %290, %289 : vector<8x128xf32>
    %292 = arith.divf %290, %291 : vector<8x128xf32>
    %293 = math.tanh %287 : vector<8x128xf32>
    %294 = vector.extract_strided_slice %292 {offsets = [0, 0], sizes = [8, 32], strides = [1, 1]} : vector<8x128xf32> to vector<8x32xf32>
    %295 = vector.extract_strided_slice %292 {offsets = [0, 32], sizes = [8, 32], strides = [1, 1]} : vector<8x128xf32> to vector<8x32xf32>
    %296 = vector.extract_strided_slice %293 {offsets = [0, 64], sizes = [8, 32], strides = [1, 1]} : vector<8x128xf32> to vector<8x32xf32>
    %297 = vector.extract_strided_slice %292 {offsets = [0, 96], sizes = [8, 32], strides = [1, 1]} : vector<8x128xf32> to vector<8x32xf32>
    %298 = arith.mulf %295, %200 : vector<8x32xf32>
    %299 = arith.mulf %294, %296 : vector<8x32xf32>
    %300 = arith.addf %298, %299 : vector<8x32xf32>
    %301 = math.tanh %300 : vector<8x32xf32>
    %302 = arith.mulf %297, %301 : vector<8x32xf32>
    %cst_121 = arith.constant dense<0.000000e+00> : vector<8x16xf32>
    %303 = tpu.matmul %302, %1, %cst_121 {dimension_numbers = #tpu.dot_dimension_numbers<[1], [0], [0], [1], [0, 0, 1, 1], [], []>} : vector<8x32xf32>, vector<32x16xf32>, vector<8x16xf32> -> vector<8x16xf32>
    %304 = vector.broadcast %2 : vector<1x16xf32> to vector<8x16xf32>
    %305 = arith.addf %303, %304 : vector<8x16xf32>
    %306 = vector.shape_cast %305 : vector<8x16xf32> to vector<8x1x16xf32>
    "tpu.trace_start"() <{level = 10 : i32, message = "bqc,blc->bql"}> : () -> ()
    %cst_122 = arith.constant dense<0.000000e+00> : vector<8x1x128xf32>
    %307 = tpu.matmul %306, %6, %cst_122 {dimension_numbers = #tpu.dot_dimension_numbers<[2], [2], [1], [1], [0, 0, 0, 1, 1, 1], [0], [0]>} : vector<8x1x16xf32>, vector<8x128x16xf32>, vector<8x1x128xf32> -> vector<8x1x128xf32>
    "tpu.trace_stop"() : () -> ()
    %308 = vector.shape_cast %307 : vector<8x1x128xf32> to vector<8x128xf32>
    %cst_123 = arith.constant dense<0xFF800000> : vector<8xf32>
    %309 = vector.multi_reduction <maximumf>, %308, %cst_123 [1] : vector<8x128xf32> to vector<8xf32>
    %310 = vector.shape_cast %309 : vector<8xf32> to vector<8x1xf32>
    %311 = vector.broadcast %310 : vector<8x1xf32> to vector<8x128xf32>
    %312 = arith.subf %308, %311 : vector<8x128xf32>
    %313 = math.exp %312 : vector<8x128xf32>
    %314 = arith.mulf %313, %0 : vector<8x128xf32>
    %cst_124 = arith.constant dense<0.000000e+00> : vector<8xf32>
    %315 = vector.multi_reduction <add>, %314, %cst_124 [1] : vector<8x128xf32> to vector<8xf32>
    %316 = vector.shape_cast %315 : vector<8xf32> to vector<8x1xf32>
    %cst_125 = arith.constant 9.99999996E-13 : f32
    %317 = vector.broadcast %cst_125 : f32 to vector<8x1xf32>
    %318 = arith.maximumf %316, %317 : vector<8x1xf32>
    %319 = vector.broadcast %318 : vector<8x1xf32> to vector<8x128xf32>
    %320 = arith.divf %314, %319 : vector<8x128xf32>
    %321 = vector.shape_cast %320 : vector<8x128xf32> to vector<8x1x128xf32>
    "tpu.trace_start"() <{level = 10 : i32, message = "bql,blc->bqc"}> : () -> ()
    %cst_126 = arith.constant dense<0.000000e+00> : vector<8x1x16xf32>
    %322 = tpu.matmul %321, %7, %cst_126 {dimension_numbers = #tpu.dot_dimension_numbers<[2], [1], [1], [2], [0, 0, 0, 1, 1, 2], [0], [0]>} : vector<8x1x128xf32>, vector<8x128x16xf32>, vector<8x1x16xf32> -> vector<8x1x16xf32>
    "tpu.trace_stop"() : () -> ()
    %323 = vector.shape_cast %322 : vector<8x1x16xf32> to vector<8x16xf32>
    %cst_127 = arith.constant 0.000000e+00 : f32
    %324 = vector.broadcast %cst_127 : f32 to vector<8x32xf32>
    %325 = arith.maximumf %302, %324 : vector<8x32xf32>
    %cst_128 = arith.constant dense<0.000000e+00> : vector<8x256xf32>
    %326 = tpu.matmul %325, %16, %cst_128 {dimension_numbers = #tpu.dot_dimension_numbers<[1], [0], [0], [1], [0, 0, 1, 1], [], []>} : vector<8x32xf32>, vector<32x256xf32>, vector<8x256xf32> -> vector<8x256xf32>
    %cst_129 = arith.constant 0.000000e+00 : f32
    %327 = vector.broadcast %cst_129 : f32 to vector<8x16xf32>
    %328 = arith.maximumf %323, %327 : vector<8x16xf32>
    %cst_130 = arith.constant dense<0.000000e+00> : vector<8x256xf32>
    %329 = tpu.matmul %328, %17, %cst_130 {dimension_numbers = #tpu.dot_dimension_numbers<[1], [0], [0], [1], [0, 0, 1, 1], [], []>} : vector<8x16xf32>, vector<16x256xf32>, vector<8x256xf32> -> vector<8x256xf32>
    %330 = arith.addf %326, %329 : vector<8x256xf32>
    %331 = vector.broadcast %18 : vector<1x256xf32> to vector<8x256xf32>
    %332 = arith.addf %330, %331 : vector<8x256xf32>
    %333 = arith.index_cast %c2_i32 : i32 to index
    %c0_131 = arith.constant 0 : index
    %c0_132 = arith.constant 0 : index
    %334 = vector.load %arg32[%333, %c0_131, %c0_132] : memref<6x8x256xf32, #tpu.memory_space<vmem>>, vector<1x8x256xf32>
    %335 = vector.shape_cast %334 : vector<1x8x256xf32> to vector<8x256xf32>
    %336 = vector.shape_cast %332 : vector<8x256xf32> to vector<1x8x256xf32>
    tpu.vector_store %arg32[%333, %c0_131, %c0_132], %336 {strides = array<i32>} : memref<6x8x256xf32, #tpu.memory_space<vmem>>, vector<1x8x256xf32>,
    %337 = arith.index_cast %c2_i32 : i32 to index
    %c0_133 = arith.constant 0 : index
    %c0_134 = arith.constant 0 : index
    %338 = vector.load %arg26[%337, %c0_133, %c0_134] : memref<6x8x128xf32, #tpu.memory_space<vmem>>, vector<1x8x128xf32>
    %339 = vector.shape_cast %338 : vector<1x8x128xf32> to vector<8x128xf32>
    %340 = vector.shape_cast %320 : vector<8x128xf32> to vector<1x8x128xf32>
    tpu.vector_store %arg26[%337, %c0_133, %c0_134], %340 {strides = array<i32>} : memref<6x8x128xf32, #tpu.memory_space<vmem>>, vector<1x8x128xf32>,
    %c3_i32 = arith.constant 3 : i32
    %341 = arith.index_cast %c3_i32 : i32 to index
    %c0_135 = arith.constant 0 : index
    %c0_136 = arith.constant 0 : index
    %342 = vector.load %arg31[%341, %c0_135, %c0_136] : memref<6x8x128xf32, #tpu.memory_space<vmem>>, vector<1x8x128xf32>
    %343 = vector.shape_cast %342 : vector<1x8x128xf32> to vector<8x128xf32>
    %cst_137 = arith.constant dense<0.000000e+00> : vector<8x128xf32>
    %344 = tpu.matmul %323, %8, %cst_137 {dimension_numbers = #tpu.dot_dimension_numbers<[1], [0], [0], [1], [0, 0, 1, 1], [], []>} : vector<8x16xf32>, vector<16x128xf32>, vector<8x128xf32> -> vector<8x128xf32>
    %345 = arith.addf %343, %344 : vector<8x128xf32>
    %cst_138 = arith.constant dense<0.000000e+00> : vector<8x128xf32>
    %346 = tpu.matmul %262, %9, %cst_138 {dimension_numbers = #tpu.dot_dimension_numbers<[1], [0], [0], [1], [0, 0, 1, 1], [], []>} : vector<8x32xf32>, vector<32x128xf32>, vector<8x128xf32> -> vector<8x128xf32>
    %347 = arith.addf %345, %346 : vector<8x128xf32>
    %348 = arith.negf %347 : vector<8x128xf32>
    %349 = math.exp %348 : vector<8x128xf32>
    %cst_139 = arith.constant 1.000000e+00 : f32
    %350 = vector.broadcast %cst_139 : f32 to vector<8x128xf32>
    %351 = arith.addf %350, %349 : vector<8x128xf32>
    %352 = arith.divf %350, %351 : vector<8x128xf32>
    %353 = math.tanh %347 : vector<8x128xf32>
    %354 = vector.extract_strided_slice %352 {offsets = [0, 0], sizes = [8, 32], strides = [1, 1]} : vector<8x128xf32> to vector<8x32xf32>
    %355 = vector.extract_strided_slice %352 {offsets = [0, 32], sizes = [8, 32], strides = [1, 1]} : vector<8x128xf32> to vector<8x32xf32>
    %356 = vector.extract_strided_slice %353 {offsets = [0, 64], sizes = [8, 32], strides = [1, 1]} : vector<8x128xf32> to vector<8x32xf32>
    %357 = vector.extract_strided_slice %352 {offsets = [0, 96], sizes = [8, 32], strides = [1, 1]} : vector<8x128xf32> to vector<8x32xf32>
    %358 = arith.mulf %355, %260 : vector<8x32xf32>
    %359 = arith.mulf %354, %356 : vector<8x32xf32>
    %360 = arith.addf %358, %359 : vector<8x32xf32>
    %361 = math.tanh %360 : vector<8x32xf32>
    %362 = arith.mulf %357, %361 : vector<8x32xf32>
    %cst_140 = arith.constant dense<0.000000e+00> : vector<8x128xf32>
    %363 = tpu.matmul %362, %10, %cst_140 {dimension_numbers = #tpu.dot_dimension_numbers<[1], [0], [0], [1], [0, 0, 1, 1], [], []>} : vector<8x32xf32>, vector<32x128xf32>, vector<8x128xf32> -> vector<8x128xf32>
    %cst_141 = arith.constant dense<0.000000e+00> : vector<8x128xf32>
    %364 = tpu.matmul %282, %11, %cst_141 {dimension_numbers = #tpu.dot_dimension_numbers<[1], [0], [0], [1], [0, 0, 1, 1], [], []>} : vector<8x32xf32>, vector<32x128xf32>, vector<8x128xf32> -> vector<8x128xf32>
    %365 = arith.addf %363, %364 : vector<8x128xf32>
    %366 = vector.broadcast %12 : vector<1x128xf32> to vector<8x128xf32>
    %367 = arith.addf %365, %366 : vector<8x128xf32>
    %368 = arith.negf %367 : vector<8x128xf32>
    %369 = math.exp %368 : vector<8x128xf32>
    %cst_142 = arith.constant 1.000000e+00 : f32
    %370 = vector.broadcast %cst_142 : f32 to vector<8x128xf32>
    %371 = arith.addf %370, %369 : vector<8x128xf32>
    %372 = arith.divf %370, %371 : vector<8x128xf32>
    %373 = math.tanh %367 : vector<8x128xf32>
    %374 = vector.extract_strided_slice %372 {offsets = [0, 0], sizes = [8, 32], strides = [1, 1]} : vector<8x128xf32> to vector<8x32xf32>
    %375 = vector.extract_strided_slice %372 {offsets = [0, 32], sizes = [8, 32], strides = [1, 1]} : vector<8x128xf32> to vector<8x32xf32>
    %376 = vector.extract_strided_slice %373 {offsets = [0, 64], sizes = [8, 32], strides = [1, 1]} : vector<8x128xf32> to vector<8x32xf32>
    %377 = vector.extract_strided_slice %372 {offsets = [0, 96], sizes = [8, 32], strides = [1, 1]} : vector<8x128xf32> to vector<8x32xf32>
    %378 = arith.mulf %375, %280 : vector<8x32xf32>
    %379 = arith.mulf %374, %376 : vector<8x32xf32>
    %380 = arith.addf %378, %379 : vector<8x32xf32>
    %381 = math.tanh %380 : vector<8x32xf32>
    %382 = arith.mulf %377, %381 : vector<8x32xf32>
    %cst_143 = arith.constant dense<0.000000e+00> : vector<8x128xf32>
    %383 = tpu.matmul %382, %13, %cst_143 {dimension_numbers = #tpu.dot_dimension_numbers<[1], [0], [0], [1], [0, 0, 1, 1], [], []>} : vector<8x32xf32>, vector<32x128xf32>, vector<8x128xf32> -> vector<8x128xf32>
    %cst_144 = arith.constant dense<0.000000e+00> : vector<8x128xf32>
    %384 = tpu.matmul %302, %14, %cst_144 {dimension_numbers = #tpu.dot_dimension_numbers<[1], [0], [0], [1], [0, 0, 1, 1], [], []>} : vector<8x32xf32>, vector<32x128xf32>, vector<8x128xf32> -> vector<8x128xf32>
    %385 = arith.addf %383, %384 : vector<8x128xf32>
    %386 = vector.broadcast %15 : vector<1x128xf32> to vector<8x128xf32>
    %387 = arith.addf %385, %386 : vector<8x128xf32>
    %388 = arith.negf %387 : vector<8x128xf32>
    %389 = math.exp %388 : vector<8x128xf32>
    %cst_145 = arith.constant 1.000000e+00 : f32
    %390 = vector.broadcast %cst_145 : f32 to vector<8x128xf32>
    %391 = arith.addf %390, %389 : vector<8x128xf32>
    %392 = arith.divf %390, %391 : vector<8x128xf32>
    %393 = math.tanh %387 : vector<8x128xf32>
    %394 = vector.extract_strided_slice %392 {offsets = [0, 0], sizes = [8, 32], strides = [1, 1]} : vector<8x128xf32> to vector<8x32xf32>
    %395 = vector.extract_strided_slice %392 {offsets = [0, 32], sizes = [8, 32], strides = [1, 1]} : vector<8x128xf32> to vector<8x32xf32>
    %396 = vector.extract_strided_slice %393 {offsets = [0, 64], sizes = [8, 32], strides = [1, 1]} : vector<8x128xf32> to vector<8x32xf32>
    %397 = vector.extract_strided_slice %392 {offsets = [0, 96], sizes = [8, 32], strides = [1, 1]} : vector<8x128xf32> to vector<8x32xf32>
    %398 = arith.mulf %395, %300 : vector<8x32xf32>
    %399 = arith.mulf %394, %396 : vector<8x32xf32>
    %400 = arith.addf %398, %399 : vector<8x32xf32>
    %401 = math.tanh %400 : vector<8x32xf32>
    %402 = arith.mulf %397, %401 : vector<8x32xf32>
    %cst_146 = arith.constant dense<0.000000e+00> : vector<8x16xf32>
    %403 = tpu.matmul %402, %1, %cst_146 {dimension_numbers = #tpu.dot_dimension_numbers<[1], [0], [0], [1], [0, 0, 1, 1], [], []>} : vector<8x32xf32>, vector<32x16xf32>, vector<8x16xf32> -> vector<8x16xf32>
    %404 = vector.broadcast %2 : vector<1x16xf32> to vector<8x16xf32>
    %405 = arith.addf %403, %404 : vector<8x16xf32>
    %406 = vector.shape_cast %405 : vector<8x16xf32> to vector<8x1x16xf32>
    "tpu.trace_start"() <{level = 10 : i32, message = "bqc,blc->bql"}> : () -> ()
    %cst_147 = arith.constant dense<0.000000e+00> : vector<8x1x128xf32>
    %407 = tpu.matmul %406, %6, %cst_147 {dimension_numbers = #tpu.dot_dimension_numbers<[2], [2], [1], [1], [0, 0, 0, 1, 1, 1], [0], [0]>} : vector<8x1x16xf32>, vector<8x128x16xf32>, vector<8x1x128xf32> -> vector<8x1x128xf32>
    "tpu.trace_stop"() : () -> ()
    %408 = vector.shape_cast %407 : vector<8x1x128xf32> to vector<8x128xf32>
    %cst_148 = arith.constant dense<0xFF800000> : vector<8xf32>
    %409 = vector.multi_reduction <maximumf>, %408, %cst_148 [1] : vector<8x128xf32> to vector<8xf32>
    %410 = vector.shape_cast %409 : vector<8xf32> to vector<8x1xf32>
    %411 = vector.broadcast %410 : vector<8x1xf32> to vector<8x128xf32>
    %412 = arith.subf %408, %411 : vector<8x128xf32>
    %413 = math.exp %412 : vector<8x128xf32>
    %414 = arith.mulf %413, %0 : vector<8x128xf32>
    %cst_149 = arith.constant dense<0.000000e+00> : vector<8xf32>
    %415 = vector.multi_reduction <add>, %414, %cst_149 [1] : vector<8x128xf32> to vector<8xf32>
    %416 = vector.shape_cast %415 : vector<8xf32> to vector<8x1xf32>
    %cst_150 = arith.constant 9.99999996E-13 : f32
    %417 = vector.broadcast %cst_150 : f32 to vector<8x1xf32>
    %418 = arith.maximumf %416, %417 : vector<8x1xf32>
    %419 = vector.broadcast %418 : vector<8x1xf32> to vector<8x128xf32>
    %420 = arith.divf %414, %419 : vector<8x128xf32>
    %421 = vector.shape_cast %420 : vector<8x128xf32> to vector<8x1x128xf32>
    "tpu.trace_start"() <{level = 10 : i32, message = "bql,blc->bqc"}> : () -> ()
    %cst_151 = arith.constant dense<0.000000e+00> : vector<8x1x16xf32>
    %422 = tpu.matmul %421, %7, %cst_151 {dimension_numbers = #tpu.dot_dimension_numbers<[2], [1], [1], [2], [0, 0, 0, 1, 1, 2], [0], [0]>} : vector<8x1x128xf32>, vector<8x128x16xf32>, vector<8x1x16xf32> -> vector<8x1x16xf32>
    "tpu.trace_stop"() : () -> ()
    %423 = vector.shape_cast %422 : vector<8x1x16xf32> to vector<8x16xf32>
    %cst_152 = arith.constant 0.000000e+00 : f32
    %424 = vector.broadcast %cst_152 : f32 to vector<8x32xf32>
    %425 = arith.maximumf %402, %424 : vector<8x32xf32>
    %cst_153 = arith.constant dense<0.000000e+00> : vector<8x256xf32>
    %426 = tpu.matmul %425, %16, %cst_153 {dimension_numbers = #tpu.dot_dimension_numbers<[1], [0], [0], [1], [0, 0, 1, 1], [], []>} : vector<8x32xf32>, vector<32x256xf32>, vector<8x256xf32> -> vector<8x256xf32>
    %cst_154 = arith.constant 0.000000e+00 : f32
    %427 = vector.broadcast %cst_154 : f32 to vector<8x16xf32>
    %428 = arith.maximumf %423, %427 : vector<8x16xf32>
    %cst_155 = arith.constant dense<0.000000e+00> : vector<8x256xf32>
    %429 = tpu.matmul %428, %17, %cst_155 {dimension_numbers = #tpu.dot_dimension_numbers<[1], [0], [0], [1], [0, 0, 1, 1], [], []>} : vector<8x16xf32>, vector<16x256xf32>, vector<8x256xf32> -> vector<8x256xf32>
    %430 = arith.addf %426, %429 : vector<8x256xf32>
    %431 = vector.broadcast %18 : vector<1x256xf32> to vector<8x256xf32>
    %432 = arith.addf %430, %431 : vector<8x256xf32>
    %433 = arith.index_cast %c3_i32 : i32 to index
    %c0_156 = arith.constant 0 : index
    %c0_157 = arith.constant 0 : index
    %434 = vector.load %arg32[%433, %c0_156, %c0_157] : memref<6x8x256xf32, #tpu.memory_space<vmem>>, vector<1x8x256xf32>
    %435 = vector.shape_cast %434 : vector<1x8x256xf32> to vector<8x256xf32>
    %436 = vector.shape_cast %432 : vector<8x256xf32> to vector<1x8x256xf32>
    tpu.vector_store %arg32[%433, %c0_156, %c0_157], %436 {strides = array<i32>} : memref<6x8x256xf32, #tpu.memory_space<vmem>>, vector<1x8x256xf32>,
    %437 = arith.index_cast %c3_i32 : i32 to index
    %c0_158 = arith.constant 0 : index
    %c0_159 = arith.constant 0 : index
    %438 = vector.load %arg26[%437, %c0_158, %c0_159] : memref<6x8x128xf32, #tpu.memory_space<vmem>>, vector<1x8x128xf32>
    %439 = vector.shape_cast %438 : vector<1x8x128xf32> to vector<8x128xf32>
    %440 = vector.shape_cast %420 : vector<8x128xf32> to vector<1x8x128xf32>
    tpu.vector_store %arg26[%437, %c0_158, %c0_159], %440 {strides = array<i32>} : memref<6x8x128xf32, #tpu.memory_space<vmem>>, vector<1x8x128xf32>,
    %c4_i32 = arith.constant 4 : i32
    %441 = arith.index_cast %c4_i32 : i32 to index
    %c0_160 = arith.constant 0 : index
    %c0_161 = arith.constant 0 : index
    %442 = vector.load %arg31[%441, %c0_160, %c0_161] : memref<6x8x128xf32, #tpu.memory_space<vmem>>, vector<1x8x128xf32>
    %443 = vector.shape_cast %442 : vector<1x8x128xf32> to vector<8x128xf32>
    %cst_162 = arith.constant dense<0.000000e+00> : vector<8x128xf32>
    %444 = tpu.matmul %423, %8, %cst_162 {dimension_numbers = #tpu.dot_dimension_numbers<[1], [0], [0], [1], [0, 0, 1, 1], [], []>} : vector<8x16xf32>, vector<16x128xf32>, vector<8x128xf32> -> vector<8x128xf32>
    %445 = arith.addf %443, %444 : vector<8x128xf32>
    %cst_163 = arith.constant dense<0.000000e+00> : vector<8x128xf32>
    %446 = tpu.matmul %362, %9, %cst_163 {dimension_numbers = #tpu.dot_dimension_numbers<[1], [0], [0], [1], [0, 0, 1, 1], [], []>} : vector<8x32xf32>, vector<32x128xf32>, vector<8x128xf32> -> vector<8x128xf32>
    %447 = arith.addf %445, %446 : vector<8x128xf32>
    %448 = arith.negf %447 : vector<8x128xf32>
    %449 = math.exp %448 : vector<8x128xf32>
    %cst_164 = arith.constant 1.000000e+00 : f32
    %450 = vector.broadcast %cst_164 : f32 to vector<8x128xf32>
    %451 = arith.addf %450, %449 : vector<8x128xf32>
    %452 = arith.divf %450, %451 : vector<8x128xf32>
    %453 = math.tanh %447 : vector<8x128xf32>
    %454 = vector.extract_strided_slice %452 {offsets = [0, 0], sizes = [8, 32], strides = [1, 1]} : vector<8x128xf32> to vector<8x32xf32>
    %455 = vector.extract_strided_slice %452 {offsets = [0, 32], sizes = [8, 32], strides = [1, 1]} : vector<8x128xf32> to vector<8x32xf32>
    %456 = vector.extract_strided_slice %453 {offsets = [0, 64], sizes = [8, 32], strides = [1, 1]} : vector<8x128xf32> to vector<8x32xf32>
    %457 = vector.extract_strided_slice %452 {offsets = [0, 96], sizes = [8, 32], strides = [1, 1]} : vector<8x128xf32> to vector<8x32xf32>
    %458 = arith.mulf %455, %360 : vector<8x32xf32>
    %459 = arith.mulf %454, %456 : vector<8x32xf32>
    %460 = arith.addf %458, %459 : vector<8x32xf32>
    %461 = math.tanh %460 : vector<8x32xf32>
    %462 = arith.mulf %457, %461 : vector<8x32xf32>
    %cst_165 = arith.constant dense<0.000000e+00> : vector<8x128xf32>
    %463 = tpu.matmul %462, %10, %cst_165 {dimension_numbers = #tpu.dot_dimension_numbers<[1], [0], [0], [1], [0, 0, 1, 1], [], []>} : vector<8x32xf32>, vector<32x128xf32>, vector<8x128xf32> -> vector<8x128xf32>
    %cst_166 = arith.constant dense<0.000000e+00> : vector<8x128xf32>
    %464 = tpu.matmul %382, %11, %cst_166 {dimension_numbers = #tpu.dot_dimension_numbers<[1], [0], [0], [1], [0, 0, 1, 1], [], []>} : vector<8x32xf32>, vector<32x128xf32>, vector<8x128xf32> -> vector<8x128xf32>
    %465 = arith.addf %463, %464 : vector<8x128xf32>
    %466 = vector.broadcast %12 : vector<1x128xf32> to vector<8x128xf32>
    %467 = arith.addf %465, %466 : vector<8x128xf32>
    %468 = arith.negf %467 : vector<8x128xf32>
    %469 = math.exp %468 : vector<8x128xf32>
    %cst_167 = arith.constant 1.000000e+00 : f32
    %470 = vector.broadcast %cst_167 : f32 to vector<8x128xf32>
    %471 = arith.addf %470, %469 : vector<8x128xf32>
    %472 = arith.divf %470, %471 : vector<8x128xf32>
    %473 = math.tanh %467 : vector<8x128xf32>
    %474 = vector.extract_strided_slice %472 {offsets = [0, 0], sizes = [8, 32], strides = [1, 1]} : vector<8x128xf32> to vector<8x32xf32>
    %475 = vector.extract_strided_slice %472 {offsets = [0, 32], sizes = [8, 32], strides = [1, 1]} : vector<8x128xf32> to vector<8x32xf32>
    %476 = vector.extract_strided_slice %473 {offsets = [0, 64], sizes = [8, 32], strides = [1, 1]} : vector<8x128xf32> to vector<8x32xf32>
    %477 = vector.extract_strided_slice %472 {offsets = [0, 96], sizes = [8, 32], strides = [1, 1]} : vector<8x128xf32> to vector<8x32xf32>
    %478 = arith.mulf %475, %380 : vector<8x32xf32>
    %479 = arith.mulf %474, %476 : vector<8x32xf32>
    %480 = arith.addf %478, %479 : vector<8x32xf32>
    %481 = math.tanh %480 : vector<8x32xf32>
    %482 = arith.mulf %477, %481 : vector<8x32xf32>
    %cst_168 = arith.constant dense<0.000000e+00> : vector<8x128xf32>
    %483 = tpu.matmul %482, %13, %cst_168 {dimension_numbers = #tpu.dot_dimension_numbers<[1], [0], [0], [1], [0, 0, 1, 1], [], []>} : vector<8x32xf32>, vector<32x128xf32>, vector<8x128xf32> -> vector<8x128xf32>
    %cst_169 = arith.constant dense<0.000000e+00> : vector<8x128xf32>
    %484 = tpu.matmul %402, %14, %cst_169 {dimension_numbers = #tpu.dot_dimension_numbers<[1], [0], [0], [1], [0, 0, 1, 1], [], []>} : vector<8x32xf32>, vector<32x128xf32>, vector<8x128xf32> -> vector<8x128xf32>
    %485 = arith.addf %483, %484 : vector<8x128xf32>
    %486 = vector.broadcast %15 : vector<1x128xf32> to vector<8x128xf32>
    %487 = arith.addf %485, %486 : vector<8x128xf32>
    %488 = arith.negf %487 : vector<8x128xf32>
    %489 = math.exp %488 : vector<8x128xf32>
    %cst_170 = arith.constant 1.000000e+00 : f32
    %490 = vector.broadcast %cst_170 : f32 to vector<8x128xf32>
    %491 = arith.addf %490, %489 : vector<8x128xf32>
    %492 = arith.divf %490, %491 : vector<8x128xf32>
    %493 = math.tanh %487 : vector<8x128xf32>
    %494 = vector.extract_strided_slice %492 {offsets = [0, 0], sizes = [8, 32], strides = [1, 1]} : vector<8x128xf32> to vector<8x32xf32>
    %495 = vector.extract_strided_slice %492 {offsets = [0, 32], sizes = [8, 32], strides = [1, 1]} : vector<8x128xf32> to vector<8x32xf32>
    %496 = vector.extract_strided_slice %493 {offsets = [0, 64], sizes = [8, 32], strides = [1, 1]} : vector<8x128xf32> to vector<8x32xf32>
    %497 = vector.extract_strided_slice %492 {offsets = [0, 96], sizes = [8, 32], strides = [1, 1]} : vector<8x128xf32> to vector<8x32xf32>
    %498 = arith.mulf %495, %400 : vector<8x32xf32>
    %499 = arith.mulf %494, %496 : vector<8x32xf32>
    %500 = arith.addf %498, %499 : vector<8x32xf32>
    %501 = math.tanh %500 : vector<8x32xf32>
    %502 = arith.mulf %497, %501 : vector<8x32xf32>
    %cst_171 = arith.constant dense<0.000000e+00> : vector<8x16xf32>
    %503 = tpu.matmul %502, %1, %cst_171 {dimension_numbers = #tpu.dot_dimension_numbers<[1], [0], [0], [1], [0, 0, 1, 1], [], []>} : vector<8x32xf32>, vector<32x16xf32>, vector<8x16xf32> -> vector<8x16xf32>
    %504 = vector.broadcast %2 : vector<1x16xf32> to vector<8x16xf32>
    %505 = arith.addf %503, %504 : vector<8x16xf32>
    %506 = vector.shape_cast %505 : vector<8x16xf32> to vector<8x1x16xf32>
    "tpu.trace_start"() <{level = 10 : i32, message = "bqc,blc->bql"}> : () -> ()
    %cst_172 = arith.constant dense<0.000000e+00> : vector<8x1x128xf32>
    %507 = tpu.matmul %506, %6, %cst_172 {dimension_numbers = #tpu.dot_dimension_numbers<[2], [2], [1], [1], [0, 0, 0, 1, 1, 1], [0], [0]>} : vector<8x1x16xf32>, vector<8x128x16xf32>, vector<8x1x128xf32> -> vector<8x1x128xf32>
    "tpu.trace_stop"() : () -> ()
    %508 = vector.shape_cast %507 : vector<8x1x128xf32> to vector<8x128xf32>
    %cst_173 = arith.constant dense<0xFF800000> : vector<8xf32>
    %509 = vector.multi_reduction <maximumf>, %508, %cst_173 [1] : vector<8x128xf32> to vector<8xf32>
    %510 = vector.shape_cast %509 : vector<8xf32> to vector<8x1xf32>
    %511 = vector.broadcast %510 : vector<8x1xf32> to vector<8x128xf32>
    %512 = arith.subf %508, %511 : vector<8x128xf32>
    %513 = math.exp %512 : vector<8x128xf32>
    %514 = arith.mulf %513, %0 : vector<8x128xf32>
    %cst_174 = arith.constant dense<0.000000e+00> : vector<8xf32>
    %515 = vector.multi_reduction <add>, %514, %cst_174 [1] : vector<8x128xf32> to vector<8xf32>
    %516 = vector.shape_cast %515 : vector<8xf32> to vector<8x1xf32>
    %cst_175 = arith.constant 9.99999996E-13 : f32
    %517 = vector.broadcast %cst_175 : f32 to vector<8x1xf32>
    %518 = arith.maximumf %516, %517 : vector<8x1xf32>
    %519 = vector.broadcast %518 : vector<8x1xf32> to vector<8x128xf32>
    %520 = arith.divf %514, %519 : vector<8x128xf32>
    %521 = vector.shape_cast %520 : vector<8x128xf32> to vector<8x1x128xf32>
    "tpu.trace_start"() <{level = 10 : i32, message = "bql,blc->bqc"}> : () -> ()
    %cst_176 = arith.constant dense<0.000000e+00> : vector<8x1x16xf32>
    %522 = tpu.matmul %521, %7, %cst_176 {dimension_numbers = #tpu.dot_dimension_numbers<[2], [1], [1], [2], [0, 0, 0, 1, 1, 2], [0], [0]>} : vector<8x1x128xf32>, vector<8x128x16xf32>, vector<8x1x16xf32> -> vector<8x1x16xf32>
    "tpu.trace_stop"() : () -> ()
    %523 = vector.shape_cast %522 : vector<8x1x16xf32> to vector<8x16xf32>
    %cst_177 = arith.constant 0.000000e+00 : f32
    %524 = vector.broadcast %cst_177 : f32 to vector<8x32xf32>
    %525 = arith.maximumf %502, %524 : vector<8x32xf32>
    %cst_178 = arith.constant dense<0.000000e+00> : vector<8x256xf32>
    %526 = tpu.matmul %525, %16, %cst_178 {dimension_numbers = #tpu.dot_dimension_numbers<[1], [0], [0], [1], [0, 0, 1, 1], [], []>} : vector<8x32xf32>, vector<32x256xf32>, vector<8x256xf32> -> vector<8x256xf32>
    %cst_179 = arith.constant 0.000000e+00 : f32
    %527 = vector.broadcast %cst_179 : f32 to vector<8x16xf32>
    %528 = arith.maximumf %523, %527 : vector<8x16xf32>
    %cst_180 = arith.constant dense<0.000000e+00> : vector<8x256xf32>
    %529 = tpu.matmul %528, %17, %cst_180 {dimension_numbers = #tpu.dot_dimension_numbers<[1], [0], [0], [1], [0, 0, 1, 1], [], []>} : vector<8x16xf32>, vector<16x256xf32>, vector<8x256xf32> -> vector<8x256xf32>
    %530 = arith.addf %526, %529 : vector<8x256xf32>
    %531 = vector.broadcast %18 : vector<1x256xf32> to vector<8x256xf32>
    %532 = arith.addf %530, %531 : vector<8x256xf32>
    %533 = arith.index_cast %c4_i32 : i32 to index
    %c0_181 = arith.constant 0 : index
    %c0_182 = arith.constant 0 : index
    %534 = vector.load %arg32[%533, %c0_181, %c0_182] : memref<6x8x256xf32, #tpu.memory_space<vmem>>, vector<1x8x256xf32>
    %535 = vector.shape_cast %534 : vector<1x8x256xf32> to vector<8x256xf32>
    %536 = vector.shape_cast %532 : vector<8x256xf32> to vector<1x8x256xf32>
    tpu.vector_store %arg32[%533, %c0_181, %c0_182], %536 {strides = array<i32>} : memref<6x8x256xf32, #tpu.memory_space<vmem>>, vector<1x8x256xf32>,
    %537 = arith.index_cast %c4_i32 : i32 to index
    %c0_183 = arith.constant 0 : index
    %c0_184 = arith.constant 0 : index
    %538 = vector.load %arg26[%537, %c0_183, %c0_184] : memref<6x8x128xf32, #tpu.memory_space<vmem>>, vector<1x8x128xf32>
    %539 = vector.shape_cast %538 : vector<1x8x128xf32> to vector<8x128xf32>
    %540 = vector.shape_cast %520 : vector<8x128xf32> to vector<1x8x128xf32>
    tpu.vector_store %arg26[%537, %c0_183, %c0_184], %540 {strides = array<i32>} : memref<6x8x128xf32, #tpu.memory_space<vmem>>, vector<1x8x128xf32>,
    %c5_i32 = arith.constant 5 : i32
    %541 = arith.index_cast %c5_i32 : i32 to index
    %c0_185 = arith.constant 0 : index
    %c0_186 = arith.constant 0 : index
    %542 = vector.load %arg31[%541, %c0_185, %c0_186] : memref<6x8x128xf32, #tpu.memory_space<vmem>>, vector<1x8x128xf32>
    %543 = vector.shape_cast %542 : vector<1x8x128xf32> to vector<8x128xf32>
    %cst_187 = arith.constant dense<0.000000e+00> : vector<8x128xf32>
    %544 = tpu.matmul %523, %8, %cst_187 {dimension_numbers = #tpu.dot_dimension_numbers<[1], [0], [0], [1], [0, 0, 1, 1], [], []>} : vector<8x16xf32>, vector<16x128xf32>, vector<8x128xf32> -> vector<8x128xf32>
    %545 = arith.addf %543, %544 : vector<8x128xf32>
    %cst_188 = arith.constant dense<0.000000e+00> : vector<8x128xf32>
    %546 = tpu.matmul %462, %9, %cst_188 {dimension_numbers = #tpu.dot_dimension_numbers<[1], [0], [0], [1], [0, 0, 1, 1], [], []>} : vector<8x32xf32>, vector<32x128xf32>, vector<8x128xf32> -> vector<8x128xf32>
    %547 = arith.addf %545, %546 : vector<8x128xf32>
    %548 = arith.negf %547 : vector<8x128xf32>
    %549 = math.exp %548 : vector<8x128xf32>
    %cst_189 = arith.constant 1.000000e+00 : f32
    %550 = vector.broadcast %cst_189 : f32 to vector<8x128xf32>
    %551 = arith.addf %550, %549 : vector<8x128xf32>
    %552 = arith.divf %550, %551 : vector<8x128xf32>
    %553 = math.tanh %547 : vector<8x128xf32>
    %554 = vector.extract_strided_slice %552 {offsets = [0, 0], sizes = [8, 32], strides = [1, 1]} : vector<8x128xf32> to vector<8x32xf32>
    %555 = vector.extract_strided_slice %552 {offsets = [0, 32], sizes = [8, 32], strides = [1, 1]} : vector<8x128xf32> to vector<8x32xf32>
    %556 = vector.extract_strided_slice %553 {offsets = [0, 64], sizes = [8, 32], strides = [1, 1]} : vector<8x128xf32> to vector<8x32xf32>
    %557 = vector.extract_strided_slice %552 {offsets = [0, 96], sizes = [8, 32], strides = [1, 1]} : vector<8x128xf32> to vector<8x32xf32>
    %558 = arith.mulf %555, %460 : vector<8x32xf32>
    %559 = arith.mulf %554, %556 : vector<8x32xf32>
    %560 = arith.addf %558, %559 : vector<8x32xf32>
    %561 = math.tanh %560 : vector<8x32xf32>
    %562 = arith.mulf %557, %561 : vector<8x32xf32>
    %cst_190 = arith.constant dense<0.000000e+00> : vector<8x128xf32>
    %563 = tpu.matmul %562, %10, %cst_190 {dimension_numbers = #tpu.dot_dimension_numbers<[1], [0], [0], [1], [0, 0, 1, 1], [], []>} : vector<8x32xf32>, vector<32x128xf32>, vector<8x128xf32> -> vector<8x128xf32>
    %cst_191 = arith.constant dense<0.000000e+00> : vector<8x128xf32>
    %564 = tpu.matmul %482, %11, %cst_191 {dimension_numbers = #tpu.dot_dimension_numbers<[1], [0], [0], [1], [0, 0, 1, 1], [], []>} : vector<8x32xf32>, vector<32x128xf32>, vector<8x128xf32> -> vector<8x128xf32>
    %565 = arith.addf %563, %564 : vector<8x128xf32>
    %566 = vector.broadcast %12 : vector<1x128xf32> to vector<8x128xf32>
    %567 = arith.addf %565, %566 : vector<8x128xf32>
    %568 = arith.negf %567 : vector<8x128xf32>
    %569 = math.exp %568 : vector<8x128xf32>
    %cst_192 = arith.constant 1.000000e+00 : f32
    %570 = vector.broadcast %cst_192 : f32 to vector<8x128xf32>
    %571 = arith.addf %570, %569 : vector<8x128xf32>
    %572 = arith.divf %570, %571 : vector<8x128xf32>
    %573 = math.tanh %567 : vector<8x128xf32>
    %574 = vector.extract_strided_slice %572 {offsets = [0, 0], sizes = [8, 32], strides = [1, 1]} : vector<8x128xf32> to vector<8x32xf32>
    %575 = vector.extract_strided_slice %572 {offsets = [0, 32], sizes = [8, 32], strides = [1, 1]} : vector<8x128xf32> to vector<8x32xf32>
    %576 = vector.extract_strided_slice %573 {offsets = [0, 64], sizes = [8, 32], strides = [1, 1]} : vector<8x128xf32> to vector<8x32xf32>
    %577 = vector.extract_strided_slice %572 {offsets = [0, 96], sizes = [8, 32], strides = [1, 1]} : vector<8x128xf32> to vector<8x32xf32>
    %578 = arith.mulf %575, %480 : vector<8x32xf32>
    %579 = arith.mulf %574, %576 : vector<8x32xf32>
    %580 = arith.addf %578, %579 : vector<8x32xf32>
    %581 = math.tanh %580 : vector<8x32xf32>
    %582 = arith.mulf %577, %581 : vector<8x32xf32>
    %cst_193 = arith.constant dense<0.000000e+00> : vector<8x128xf32>
    %583 = tpu.matmul %582, %13, %cst_193 {dimension_numbers = #tpu.dot_dimension_numbers<[1], [0], [0], [1], [0, 0, 1, 1], [], []>} : vector<8x32xf32>, vector<32x128xf32>, vector<8x128xf32> -> vector<8x128xf32>
    %cst_194 = arith.constant dense<0.000000e+00> : vector<8x128xf32>
    %584 = tpu.matmul %502, %14, %cst_194 {dimension_numbers = #tpu.dot_dimension_numbers<[1], [0], [0], [1], [0, 0, 1, 1], [], []>} : vector<8x32xf32>, vector<32x128xf32>, vector<8x128xf32> -> vector<8x128xf32>
    %585 = arith.addf %583, %584 : vector<8x128xf32>
    %586 = vector.broadcast %15 : vector<1x128xf32> to vector<8x128xf32>
    %587 = arith.addf %585, %586 : vector<8x128xf32>
    %588 = arith.negf %587 : vector<8x128xf32>
    %589 = math.exp %588 : vector<8x128xf32>
    %cst_195 = arith.constant 1.000000e+00 : f32
    %590 = vector.broadcast %cst_195 : f32 to vector<8x128xf32>
    %591 = arith.addf %590, %589 : vector<8x128xf32>
    %592 = arith.divf %590, %591 : vector<8x128xf32>
    %593 = math.tanh %587 : vector<8x128xf32>
    %594 = vector.extract_strided_slice %592 {offsets = [0, 0], sizes = [8, 32], strides = [1, 1]} : vector<8x128xf32> to vector<8x32xf32>
    %595 = vector.extract_strided_slice %592 {offsets = [0, 32], sizes = [8, 32], strides = [1, 1]} : vector<8x128xf32> to vector<8x32xf32>
    %596 = vector.extract_strided_slice %593 {offsets = [0, 64], sizes = [8, 32], strides = [1, 1]} : vector<8x128xf32> to vector<8x32xf32>
    %597 = vector.extract_strided_slice %592 {offsets = [0, 96], sizes = [8, 32], strides = [1, 1]} : vector<8x128xf32> to vector<8x32xf32>
    %598 = arith.mulf %595, %500 : vector<8x32xf32>
    %599 = arith.mulf %594, %596 : vector<8x32xf32>
    %600 = arith.addf %598, %599 : vector<8x32xf32>
    %601 = math.tanh %600 : vector<8x32xf32>
    %602 = arith.mulf %597, %601 : vector<8x32xf32>
    %cst_196 = arith.constant dense<0.000000e+00> : vector<8x16xf32>
    %603 = tpu.matmul %602, %1, %cst_196 {dimension_numbers = #tpu.dot_dimension_numbers<[1], [0], [0], [1], [0, 0, 1, 1], [], []>} : vector<8x32xf32>, vector<32x16xf32>, vector<8x16xf32> -> vector<8x16xf32>
    %604 = vector.broadcast %2 : vector<1x16xf32> to vector<8x16xf32>
    %605 = arith.addf %603, %604 : vector<8x16xf32>
    %606 = vector.shape_cast %605 : vector<8x16xf32> to vector<8x1x16xf32>
    "tpu.trace_start"() <{level = 10 : i32, message = "bqc,blc->bql"}> : () -> ()
    %cst_197 = arith.constant dense<0.000000e+00> : vector<8x1x128xf32>
    %607 = tpu.matmul %606, %6, %cst_197 {dimension_numbers = #tpu.dot_dimension_numbers<[2], [2], [1], [1], [0, 0, 0, 1, 1, 1], [0], [0]>} : vector<8x1x16xf32>, vector<8x128x16xf32>, vector<8x1x128xf32> -> vector<8x1x128xf32>
    "tpu.trace_stop"() : () -> ()
    %608 = vector.shape_cast %607 : vector<8x1x128xf32> to vector<8x128xf32>
    %cst_198 = arith.constant dense<0xFF800000> : vector<8xf32>
    %609 = vector.multi_reduction <maximumf>, %608, %cst_198 [1] : vector<8x128xf32> to vector<8xf32>
    %610 = vector.shape_cast %609 : vector<8xf32> to vector<8x1xf32>
    %611 = vector.broadcast %610 : vector<8x1xf32> to vector<8x128xf32>
    %612 = arith.subf %608, %611 : vector<8x128xf32>
    %613 = math.exp %612 : vector<8x128xf32>
    %614 = arith.mulf %613, %0 : vector<8x128xf32>
    %cst_199 = arith.constant dense<0.000000e+00> : vector<8xf32>
    %615 = vector.multi_reduction <add>, %614, %cst_199 [1] : vector<8x128xf32> to vector<8xf32>
    %616 = vector.shape_cast %615 : vector<8xf32> to vector<8x1xf32>
    %cst_200 = arith.constant 9.99999996E-13 : f32
    %617 = vector.broadcast %cst_200 : f32 to vector<8x1xf32>
    %618 = arith.maximumf %616, %617 : vector<8x1xf32>
    %619 = vector.broadcast %618 : vector<8x1xf32> to vector<8x128xf32>
    %620 = arith.divf %614, %619 : vector<8x128xf32>
    %621 = vector.shape_cast %620 : vector<8x128xf32> to vector<8x1x128xf32>
    "tpu.trace_start"() <{level = 10 : i32, message = "bql,blc->bqc"}> : () -> ()
    %cst_201 = arith.constant dense<0.000000e+00> : vector<8x1x16xf32>
    %622 = tpu.matmul %621, %7, %cst_201 {dimension_numbers = #tpu.dot_dimension_numbers<[2], [1], [1], [2], [0, 0, 0, 1, 1, 2], [0], [0]>} : vector<8x1x128xf32>, vector<8x128x16xf32>, vector<8x1x16xf32> -> vector<8x1x16xf32>
    "tpu.trace_stop"() : () -> ()
    %623 = vector.shape_cast %622 : vector<8x1x16xf32> to vector<8x16xf32>
    %cst_202 = arith.constant 0.000000e+00 : f32
    %624 = vector.broadcast %cst_202 : f32 to vector<8x32xf32>
    %625 = arith.maximumf %602, %624 : vector<8x32xf32>
    %cst_203 = arith.constant dense<0.000000e+00> : vector<8x256xf32>
    %626 = tpu.matmul %625, %16, %cst_203 {dimension_numbers = #tpu.dot_dimension_numbers<[1], [0], [0], [1], [0, 0, 1, 1], [], []>} : vector<8x32xf32>, vector<32x256xf32>, vector<8x256xf32> -> vector<8x256xf32>
    %cst_204 = arith.constant 0.000000e+00 : f32
    %627 = vector.broadcast %cst_204 : f32 to vector<8x16xf32>
    %628 = arith.maximumf %623, %627 : vector<8x16xf32>
    %cst_205 = arith.constant dense<0.000000e+00> : vector<8x256xf32>
    %629 = tpu.matmul %628, %17, %cst_205 {dimension_numbers = #tpu.dot_dimension_numbers<[1], [0], [0], [1], [0, 0, 1, 1], [], []>} : vector<8x16xf32>, vector<16x256xf32>, vector<8x256xf32> -> vector<8x256xf32>
    %630 = arith.addf %626, %629 : vector<8x256xf32>
    %631 = vector.broadcast %18 : vector<1x256xf32> to vector<8x256xf32>
    %632 = arith.addf %630, %631 : vector<8x256xf32>
    %633 = arith.index_cast %c5_i32 : i32 to index
    %c0_206 = arith.constant 0 : index
    %c0_207 = arith.constant 0 : index
    %634 = vector.load %arg32[%633, %c0_206, %c0_207] : memref<6x8x256xf32, #tpu.memory_space<vmem>>, vector<1x8x256xf32>
    %635 = vector.shape_cast %634 : vector<1x8x256xf32> to vector<8x256xf32>
    %636 = vector.shape_cast %632 : vector<8x256xf32> to vector<1x8x256xf32>
    tpu.vector_store %arg32[%633, %c0_206, %c0_207], %636 {strides = array<i32>} : memref<6x8x256xf32, #tpu.memory_space<vmem>>, vector<1x8x256xf32>,
    %637 = arith.index_cast %c5_i32 : i32 to index
    %c0_208 = arith.constant 0 : index
    %c0_209 = arith.constant 0 : index
    %638 = vector.load %arg26[%637, %c0_208, %c0_209] : memref<6x8x128xf32, #tpu.memory_space<vmem>>, vector<1x8x128xf32>
    %639 = vector.shape_cast %638 : vector<1x8x128xf32> to vector<8x128xf32>
    %640 = vector.shape_cast %620 : vector<8x128xf32> to vector<1x8x128xf32>
    tpu.vector_store %arg26[%637, %c0_208, %c0_209], %640 {strides = array<i32>} : memref<6x8x128xf32, #tpu.memory_space<vmem>>, vector<1x8x128xf32>,
    %c6_i32 = arith.constant 6 : i32
    %c0_210 = arith.constant 0 : index
    %c0_211 = arith.constant 0 : index
    %c0_212 = arith.constant 0 : index
    %641 = vector.load %arg29[%c0_210, %c0_211, %c0_212] : memref<6x8x32xf32, #tpu.memory_space<vmem>>, vector<1x8x32xf32>
    %642 = vector.shape_cast %641 : vector<1x8x32xf32> to vector<8x32xf32>
    %643 = vector.shape_cast %562 : vector<8x32xf32> to vector<1x8x32xf32>
    tpu.vector_store %arg29[%c0_210, %c0_211, %c0_212], %643 {strides = array<i32>} : memref<6x8x32xf32, #tpu.memory_space<vmem>>, vector<1x8x32xf32>,
    %c1_213 = arith.constant 1 : index
    %c0_214 = arith.constant 0 : index
    %c0_215 = arith.constant 0 : index
    %644 = vector.load %arg29[%c1_213, %c0_214, %c0_215] : memref<6x8x32xf32, #tpu.memory_space<vmem>>, vector<1x8x32xf32>
    %645 = vector.shape_cast %644 : vector<1x8x32xf32> to vector<8x32xf32>
    %646 = vector.shape_cast %560 : vector<8x32xf32> to vector<1x8x32xf32>
    tpu.vector_store %arg29[%c1_213, %c0_214, %c0_215], %646 {strides = array<i32>} : memref<6x8x32xf32, #tpu.memory_space<vmem>>, vector<1x8x32xf32>,
    %c2_216 = arith.constant 2 : index
    %c0_217 = arith.constant 0 : index
    %c0_218 = arith.constant 0 : index
    %647 = vector.load %arg29[%c2_216, %c0_217, %c0_218] : memref<6x8x32xf32, #tpu.memory_space<vmem>>, vector<1x8x32xf32>
    %648 = vector.shape_cast %647 : vector<1x8x32xf32> to vector<8x32xf32>
    %649 = vector.shape_cast %582 : vector<8x32xf32> to vector<1x8x32xf32>
    tpu.vector_store %arg29[%c2_216, %c0_217, %c0_218], %649 {strides = array<i32>} : memref<6x8x32xf32, #tpu.memory_space<vmem>>, vector<1x8x32xf32>,
    %c3_219 = arith.constant 3 : index
    %c0_220 = arith.constant 0 : index
    %c0_221 = arith.constant 0 : index
    %650 = vector.load %arg29[%c3_219, %c0_220, %c0_221] : memref<6x8x32xf32, #tpu.memory_space<vmem>>, vector<1x8x32xf32>
    %651 = vector.shape_cast %650 : vector<1x8x32xf32> to vector<8x32xf32>
    %652 = vector.shape_cast %580 : vector<8x32xf32> to vector<1x8x32xf32>
    tpu.vector_store %arg29[%c3_219, %c0_220, %c0_221], %652 {strides = array<i32>} : memref<6x8x32xf32, #tpu.memory_space<vmem>>, vector<1x8x32xf32>,
    %c4_222 = arith.constant 4 : index
    %c0_223 = arith.constant 0 : index
    %c0_224 = arith.constant 0 : index
    %653 = vector.load %arg29[%c4_222, %c0_223, %c0_224] : memref<6x8x32xf32, #tpu.memory_space<vmem>>, vector<1x8x32xf32>
    %654 = vector.shape_cast %653 : vector<1x8x32xf32> to vector<8x32xf32>
    %655 = vector.shape_cast %602 : vector<8x32xf32> to vector<1x8x32xf32>
    tpu.vector_store %arg29[%c4_222, %c0_223, %c0_224], %655 {strides = array<i32>} : memref<6x8x32xf32, #tpu.memory_space<vmem>>, vector<1x8x32xf32>,
    %c5_225 = arith.constant 5 : index
    %c0_226 = arith.constant 0 : index
    %c0_227 = arith.constant 0 : index
    %656 = vector.load %arg29[%c5_225, %c0_226, %c0_227] : memref<6x8x32xf32, #tpu.memory_space<vmem>>, vector<1x8x32xf32>
    %657 = vector.shape_cast %656 : vector<1x8x32xf32> to vector<8x32xf32>
    %658 = vector.shape_cast %600 : vector<8x32xf32> to vector<1x8x32xf32>
    tpu.vector_store %arg29[%c5_225, %c0_226, %c0_227], %658 {strides = array<i32>} : memref<6x8x32xf32, #tpu.memory_space<vmem>>, vector<1x8x32xf32>,
    %c0_228 = arith.constant 0 : index
    %c0_229 = arith.constant 0 : index
    %659 = vector.load %arg30[%c0_228, %c0_229] : memref<8x16xf32, #tpu.memory_space<vmem>>, vector<8x16xf32>
    tpu.vector_store %arg30[%c0_228, %c0_229], %623 {strides = array<i32>} : memref<8x16xf32, #tpu.memory_space<vmem>>, vector<8x16xf32>,
    %c0_230 = arith.constant 0 : index
    %c0_231 = arith.constant 0 : index
    %c0_232 = arith.constant 0 : index
    %660 = vector.load %arg32[%c0_230, %c0_231, %c0_232] : memref<6x8x256xf32, #tpu.memory_space<vmem>>, vector<6x8x256xf32>
    %661 = vector.shape_cast %660 : vector<6x8x256xf32> to vector<48x256xf32>
    %c0_233 = arith.constant 0 : index
    %c0_234 = arith.constant 0 : index
    %662 = vector.load %arg23[%c0_233, %c0_234] : memref<256x128xf32, #tpu.memory_space<vmem>>, vector<256x128xf32>
    %cst_235 = arith.constant dense<0.000000e+00> : vector<48x128xf32>
    %663 = tpu.matmul %661, %662, %cst_235 {dimension_numbers = #tpu.dot_dimension_numbers<[1], [0], [0], [1], [0, 0, 1, 1], [], []>} : vector<48x256xf32>, vector<256x128xf32>, vector<48x128xf32> -> vector<48x128xf32>
    %c0_236 = arith.constant 0 : index
    %c0_237 = arith.constant 0 : index
    %664 = vector.load %arg24[%c0_236, %c0_237] : memref<1x128xf32, #tpu.memory_space<vmem>>, vector<1x128xf32>
    %665 = vector.broadcast %664 : vector<1x128xf32> to vector<48x128xf32>
    %666 = arith.addf %663, %665 : vector<48x128xf32>
    %667 = vector.shape_cast %666 : vector<48x128xf32> to vector<6x8x128xf32>
    %c0_238 = arith.constant 0 : index
    %c0_239 = arith.constant 0 : index
    %c0_240 = arith.constant 0 : index
    %668 = vector.load %arg25[%c0_238, %c0_239, %c0_240] : memref<6x8x128xf32, #tpu.memory_space<vmem>>, vector<6x8x128xf32>
    tpu.vector_store %arg25[%c0_238, %c0_239, %c0_240], %667 {strides = array<i32>} : memref<6x8x128xf32, #tpu.memory_space<vmem>>, vector<6x8x128xf32>,
    return
  }
  func.func @transform_0(%arg0: i32, %arg1: i32) -> (i32, i32, i32) {
    %c0_i32 = arith.constant 0 : i32
    %c0_i32_0 = arith.constant 0 : i32
    return %arg1, %arg0, %c0_i32 : i32, i32, i32
  }
  func.func @transform_1(%arg0: i32, %arg1: i32) -> (i32, i32, i32) {
    %c0_i32 = arith.constant 0 : i32
    %c0_i32_0 = arith.constant 0 : i32
    %c0_i32_1 = arith.constant 0 : i32
    return %arg0, %c0_i32, %c0_i32_0 : i32, i32, i32
  }
  func.func @transform_2(%arg0: i32, %arg1: i32) -> (i32, i32) {
    %c0_i32 = arith.constant 0 : i32
    %c0_i32_0 = arith.constant 0 : i32
    return %arg0, %c0_i32 : i32, i32
  }
  func.func @transform_3(%arg0: i32, %arg1: i32) -> (i32, i32) {
    %c0_i32 = arith.constant 0 : i32
    %c0_i32_0 = arith.constant 0 : i32
    %c0_i32_1 = arith.constant 0 : i32
    return %c0_i32, %c0_i32_0 : i32, i32
  }
  func.func @transform_4(%arg0: i32, %arg1: i32) -> (i32, i32) {
    %c0_i32 = arith.constant 0 : i32
    %c0_i32_0 = arith.constant 0 : i32
    %c0_i32_1 = arith.constant 0 : i32
    return %c0_i32, %c0_i32_0 : i32, i32
  }
  func.func @transform_5(%arg0: i32, %arg1: i32) -> (i32, i32) {
    %c0_i32 = arith.constant 0 : i32
    %c0_i32_0 = arith.constant 0 : i32
    %c0_i32_1 = arith.constant 0 : i32
    return %c0_i32, %c0_i32_0 : i32, i32
  }
  func.func @transform_6(%arg0: i32, %arg1: i32) -> (i32, i32) {
    %c0_i32 = arith.constant 0 : i32
    %c0_i32_0 = arith.constant 0 : i32
    %c0_i32_1 = arith.constant 0 : i32
    return %c0_i32, %c0_i32_0 : i32, i32
  }
  func.func @transform_7(%arg0: i32, %arg1: i32) -> (i32, i32) {
    %c0_i32 = arith.constant 0 : i32
    %c0_i32_0 = arith.constant 0 : i32
    %c0_i32_1 = arith.constant 0 : i32
    return %c0_i32, %c0_i32_0 : i32, i32
  }
  func.func @transform_8(%arg0: i32, %arg1: i32) -> (i32, i32) {
    %c0_i32 = arith.constant 0 : i32
    %c0_i32_0 = arith.constant 0 : i32
    %c0_i32_1 = arith.constant 0 : i32
    return %c0_i32, %c0_i32_0 : i32, i32
  }
  func.func @transform_9(%arg0: i32, %arg1: i32) -> (i32, i32) {
    %c0_i32 = arith.constant 0 : i32
    %c0_i32_0 = arith.constant 0 : i32
    %c0_i32_1 = arith.constant 0 : i32
    return %c0_i32, %c0_i32_0 : i32, i32
  }
  func.func @transform_10(%arg0: i32, %arg1: i32) -> (i32, i32) {
    %c0_i32 = arith.constant 0 : i32
    %c0_i32_0 = arith.constant 0 : i32
    %c0_i32_1 = arith.constant 0 : i32
    return %c0_i32, %c0_i32_0 : i32, i32
  }
  func.func @transform_11(%arg0: i32, %arg1: i32) -> (i32, i32) {
    %c0_i32 = arith.constant 0 : i32
    %c0_i32_0 = arith.constant 0 : i32
    %c0_i32_1 = arith.constant 0 : i32
    return %c0_i32, %c0_i32_0 : i32, i32
  }
  func.func @transform_12(%arg0: i32, %arg1: i32) -> (i32, i32) {
    %c0_i32 = arith.constant 0 : i32
    %c0_i32_0 = arith.constant 0 : i32
    %c0_i32_1 = arith.constant 0 : i32
    return %c0_i32, %c0_i32_0 : i32, i32
  }
  func.func @transform_13(%arg0: i32, %arg1: i32) -> (i32, i32) {
    %c0_i32 = arith.constant 0 : i32
    %c0_i32_0 = arith.constant 0 : i32
    %c0_i32_1 = arith.constant 0 : i32
    return %c0_i32, %c0_i32_0 : i32, i32
  }
  func.func @transform_14(%arg0: i32, %arg1: i32) -> (i32, i32) {
    %c0_i32 = arith.constant 0 : i32
    %c0_i32_0 = arith.constant 0 : i32
    %c0_i32_1 = arith.constant 0 : i32
    return %c0_i32, %c0_i32_0 : i32, i32
  }
  func.func @transform_15(%arg0: i32, %arg1: i32) -> (i32, i32) {
    %c0_i32 = arith.constant 0 : i32
    %c0_i32_0 = arith.constant 0 : i32
    %c0_i32_1 = arith.constant 0 : i32
    return %c0_i32, %c0_i32_0 : i32, i32
  }
  func.func @transform_16(%arg0: i32, %arg1: i32) -> (i32, i32) {
    %c0_i32 = arith.constant 0 : i32
    %c0_i32_0 = arith.constant 0 : i32
    %c0_i32_1 = arith.constant 0 : i32
    return %c0_i32, %c0_i32_0 : i32, i32
  }
  func.func @transform_17(%arg0: i32, %arg1: i32) -> (i32, i32) {
    %c0_i32 = arith.constant 0 : i32
    %c0_i32_0 = arith.constant 0 : i32
    %c0_i32_1 = arith.constant 0 : i32
    return %c0_i32, %c0_i32_0 : i32, i32
  }
  func.func @transform_18(%arg0: i32, %arg1: i32) -> (i32, i32) {
    %c0_i32 = arith.constant 0 : i32
    %c0_i32_0 = arith.constant 0 : i32
    %c0_i32_1 = arith.constant 0 : i32
    return %c0_i32, %c0_i32_0 : i32, i32
  }
  func.func @transform_19(%arg0: i32, %arg1: i32) -> (i32, i32) {
    %c0_i32 = arith.constant 0 : i32
    %c0_i32_0 = arith.constant 0 : i32
    %c0_i32_1 = arith.constant 0 : i32
    return %c0_i32, %c0_i32_0 : i32, i32
  }
  func.func @transform_20(%arg0: i32, %arg1: i32) -> (i32, i32) {
    %c0_i32 = arith.constant 0 : i32
    %c0_i32_0 = arith.constant 0 : i32
    %c0_i32_1 = arith.constant 0 : i32
    return %c0_i32, %c0_i32_0 : i32, i32
  }
  func.func @transform_21(%arg0: i32, %arg1: i32) -> (i32, i32) {
    %c0_i32 = arith.constant 0 : i32
    %c0_i32_0 = arith.constant 0 : i32
    %c0_i32_1 = arith.constant 0 : i32
    return %c0_i32, %c0_i32_0 : i32, i32
  }
  func.func @transform_22(%arg0: i32, %arg1: i32) -> (i32, i32) {
    %c0_i32 = arith.constant 0 : i32
    %c0_i32_0 = arith.constant 0 : i32
    %c0_i32_1 = arith.constant 0 : i32
    return %c0_i32, %c0_i32_0 : i32, i32
  }
  func.func @transform_23(%arg0: i32, %arg1: i32) -> (i32, i32, i32) {
    %c0_i32 = arith.constant 0 : i32
    %c0_i32_0 = arith.constant 0 : i32
    return %arg1, %arg0, %c0_i32 : i32, i32, i32
  }
  func.func @transform_24(%arg0: i32, %arg1: i32) -> (i32, i32, i32) {
    %c0_i32 = arith.constant 0 : i32
    %c0_i32_0 = arith.constant 0 : i32
    return %arg1, %arg0, %c0_i32 : i32, i32, i32
  }
}

</mosaic_0001>

<llo_original>
// kernel: tpu_custom_call.1
$region0: #{tpu_custom_call.1}
  #allocation0 [shape = 'u32[]', space=smem, size = 0x4, offset = 0x4, fixed_abs, tag = 'smem constant byte address 0x4 - core index']
  #allocation1 [shape = 'u32[72,128]{1,0:T(1,128)}', space=vmem, size = 0x9000, scoped, tag = 'internal scratch']
  #allocation2 [shape = 'f32[8,128,16]{2,1,0:T(8,128)}', space=vmem, size = 0x80000, scoped, tag = 'scratch operand']
  #allocation3 [shape = 'f32[8,128,16]{2,1,0:T(8,128)}', space=vmem, size = 0x80000, scoped, tag = 'scratch operand']
  #allocation4 [shape = 'f32[6,8,32]{2,1,0:T(8,128)}', space=vmem, size = 0x6000, scoped, tag = 'scratch operand']
  #allocation5 [shape = 'f32[8,16]{1,0:T(8,128)}', space=vmem, size = 0x1000, scoped, tag = 'scratch operand']
  #allocation6 [shape = 'f32[6,8,128]{2,1,0:T(8,128)}', space=vmem, size = 0x6000, scoped, tag = 'scratch operand']
  #allocation7 [shape = 'f32[6,8,256]{2,1,0:T(8,128)}', space=vmem, size = 0xc000, scoped, tag = 'scratch operand']
  %s0 = inlined_call_operand.vmem [shape: f32[6,8,16], index: 0, kind: input, shape index: {}]
  %s1 = inlined_call_operand.vmem [shape: f32[8,128,32], index: 1, kind: input, shape index: {}]
  %s2 = inlined_call_operand.vmem [shape: f32[8,128], index: 2, kind: input, shape index: {}]
  %s3 = inlined_call_operand.vmem [shape: f32[6,32], index: 3, kind: input, shape index: {}]
  %s4 = inlined_call_operand.vmem [shape: f32[16,128], index: 4, kind: input, shape index: {}]
  %s5 = inlined_call_operand.vmem [shape: f32[1,128], index: 5, kind: input, shape index: {}]
  %s6 = inlined_call_operand.vmem [shape: f32[16,128], index: 6, kind: input, shape index: {}]
  %s7 = inlined_call_operand.vmem [shape: f32[32,128], index: 7, kind: input, shape index: {}]
  %s8 = inlined_call_operand.vmem [shape: f32[32,128], index: 8, kind: input, shape index: {}]
  %s9 = inlined_call_operand.vmem [shape: f32[32,128], index: 9, kind: input, shape index: {}]
  %s10 = inlined_call_operand.vmem [shape: f32[1,128], index: 10, kind: input, shape index: {}]
  %s11 = inlined_call_operand.vmem [shape: f32[32,128], index: 11, kind: input, shape index: {}]
  %s12 = inlined_call_operand.vmem [shape: f32[32,128], index: 12, kind: input, shape index: {}]
  %s13 = inlined_call_operand.vmem [shape: f32[1,128], index: 13, kind: input, shape index: {}]
  %s14 = inlined_call_operand.vmem [shape: f32[32,16], index: 14, kind: input, shape index: {}]
  %s15 = inlined_call_operand.vmem [shape: f32[1,16], index: 15, kind: input, shape index: {}]
  %s16 = inlined_call_operand.vmem [shape: f32[32,32], index: 16, kind: input, shape index: {}]
  %s17 = inlined_call_operand.vmem [shape: f32[1,32], index: 17, kind: input, shape index: {}]
  %s18 = inlined_call_operand.vmem [shape: f32[32,256], index: 18, kind: input, shape index: {}]
  %s19 = inlined_call_operand.vmem [shape: f32[16,256], index: 19, kind: input, shape index: {}]
  %s20 = inlined_call_operand.vmem [shape: f32[1,256], index: 20, kind: input, shape index: {}]
  %s21 = inlined_call_operand.vmem [shape: f32[256,128], index: 21, kind: input, shape index: {}]
  %s22 = inlined_call_operand.vmem [shape: f32[1,128], index: 22, kind: input, shape index: {}]
  %s23 = inlined_call_operand.hbm [shape: f32[6,8,128], index: 23, kind: output, shape index: {0}]
  %s24 = inlined_call_operand.hbm [shape: f32[6,8,128], index: 24, kind: output, shape index: {1}]
  %25 = xla_tuple %s23, %s24
  %s26 = sld [smem:[#allocation0]]
  $region114: #{tpu_custom_call.1} parent=0
    _
  %s28 = ssub.s32 1, %s26
  %s29 = scalar_select 0, %s28, %s26
  $region1: #{tpu_custom_call.1} parent=0
    #allocation8 [shape = 'u8[24576]{0}', space=vmem, size = 0x6000, scoped, tag = 'output window, operand 0, single buffered']
    #allocation9 [shape = 's32[1]{0}', space=sflag, size = 0x4, scoped, tag = 'scoped memory for tpu_custom_call.1']
    #allocation10 [shape = 'u8[24576]{0}', space=vmem, size = 0x6000, scoped, tag = 'output window, operand 1, single buffered']
    #allocation11 [shape = 's32[1]{0}', space=sflag, size = 0x4, scoped, tag = 'scoped memory for tpu_custom_call.1']
    %30 = vsyncpa [#allocation9], 0
    %31 = vsyncpa [#allocation11], 0
    // Predicated region
    $region2: #{tpu_custom_call.1} parent=1 // pred_check
      _
    $region3: #{tpu_custom_call.1} parent=1 // pred_check_branch
      %33 = sbr.rel (0) target = $region5
    $region4: #{tpu_custom_call.1} parent=1 // pred_region
      _
    $region5: #{tpu_custom_call.1} parent=1 // pred_fallthru
      _
    // Predicated region
    $region6: #{tpu_custom_call.1} parent=1 // pred_check
      _
    $region7: #{tpu_custom_call.1} parent=1 // pred_check_branch
      %35 = sbr.rel (0) target = $region9
    $region8: #{tpu_custom_call.1} parent=1 // pred_region
      _
    $region9: #{tpu_custom_call.1} parent=1 // pred_fallthru
      _
    // Predicated region
    $region10: #{tpu_custom_call.1} parent=1 // pred_check
      _
    $region11: #{tpu_custom_call.1} parent=1 // pred_check_branch
      %37 = sbr.rel (0) target = $region13
    $region12: #{tpu_custom_call.1} parent=1 // pred_region
      _
    $region13: #{tpu_custom_call.1} parent=1 // pred_fallthru
      _
    // Predicated region
    $region14: #{tpu_custom_call.1} parent=1 // pred_check
      _
    $region15: #{tpu_custom_call.1} parent=1 // pred_check_branch
      %39 = sbr.rel (0) target = $region17
    $region16: #{tpu_custom_call.1} parent=1 // pred_region
      _
    $region17: #{tpu_custom_call.1} parent=1 // pred_fallthru
      _
    // Predicated region
    $region18: #{tpu_custom_call.1} parent=1 // pred_check
      _
    $region19: #{tpu_custom_call.1} parent=1 // pred_check_branch
      %41 = sbr.rel (0) target = $region21
    $region20: #{tpu_custom_call.1} parent=1 // pred_region
      _
    $region21: #{tpu_custom_call.1} parent=1 // pred_fallthru
      _
    // Predicated region
    $region22: #{tpu_custom_call.1} parent=1 // pred_check
      _
    $region23: #{tpu_custom_call.1} parent=1 // pred_check_branch
      %43 = sbr.rel (0) target = $region25
    $region24: #{tpu_custom_call.1} parent=1 // pred_region
      _
    $region25: #{tpu_custom_call.1} parent=1 // pred_fallthru
      _
    // Predicated region
    $region26: #{tpu_custom_call.1} parent=1 // pred_check
      _
    $region27: #{tpu_custom_call.1} parent=1 // pred_check_branch
      %45 = sbr.rel (0) target = $region29
    $region28: #{tpu_custom_call.1} parent=1 // pred_region
      _
    $region29: #{tpu_custom_call.1} parent=1 // pred_fallthru
      _
    // Predicated region
    $region30: #{tpu_custom_call.1} parent=1 // pred_check
      _
    $region31: #{tpu_custom_call.1} parent=1 // pred_check_branch
      %47 = sbr.rel (0) target = $region33
    $region32: #{tpu_custom_call.1} parent=1 // pred_region
      _
    $region33: #{tpu_custom_call.1} parent=1 // pred_fallthru
      _
    // Predicated region
    $region34: #{tpu_custom_call.1} parent=1 // pred_check
      _
    $region35: #{tpu_custom_call.1} parent=1 // pred_check_branch
      %49 = sbr.rel (0) target = $region37
    $region36: #{tpu_custom_call.1} parent=1 // pred_region
      _
    $region37: #{tpu_custom_call.1} parent=1 // pred_fallthru
      _
    // Predicated region
    $region38: #{tpu_custom_call.1} parent=1 // pred_check
      _
    $region39: #{tpu_custom_call.1} parent=1 // pred_check_branch
      %51 = sbr.rel (0) target = $region41
    $region40: #{tpu_custom_call.1} parent=1 // pred_region
      _
    $region41: #{tpu_custom_call.1} parent=1 // pred_fallthru
      _
    // Predicated region
    $region42: #{tpu_custom_call.1} parent=1 // pred_check
      _
    $region43: #{tpu_custom_call.1} parent=1 // pred_check_branch
      %53 = sbr.rel (0) target = $region45
    $region44: #{tpu_custom_call.1} parent=1 // pred_region
      _
    $region45: #{tpu_custom_call.1} parent=1 // pred_fallthru
      _
    // Predicated region
    $region46: #{tpu_custom_call.1} parent=1 // pred_check
      _
    $region47: #{tpu_custom_call.1} parent=1 // pred_check_branch
      %55 = sbr.rel (0) target = $region49
    $region48: #{tpu_custom_call.1} parent=1 // pred_region
      _
    $region49: #{tpu_custom_call.1} parent=1 // pred_fallthru
      _
    // Predicated region
    $region50: #{tpu_custom_call.1} parent=1 // pred_check
      _
    $region51: #{tpu_custom_call.1} parent=1 // pred_check_branch
      %57 = sbr.rel (0) target = $region53
    $region52: #{tpu_custom_call.1} parent=1 // pred_region
      _
    $region53: #{tpu_custom_call.1} parent=1 // pred_fallthru
      _
    // Predicated region
    $region54: #{tpu_custom_call.1} parent=1 // pred_check
      _
    $region55: #{tpu_custom_call.1} parent=1 // pred_check_branch
      %59 = sbr.rel (0) target = $region57
    $region56: #{tpu_custom_call.1} parent=1 // pred_region
      _
    $region57: #{tpu_custom_call.1} parent=1 // pred_fallthru
      _
    // Predicated region
    $region58: #{tpu_custom_call.1} parent=1 // pred_check
      _
    $region59: #{tpu_custom_call.1} parent=1 // pred_check_branch
      %61 = sbr.rel (0) target = $region61
    $region60: #{tpu_custom_call.1} parent=1 // pred_region
      _
    $region61: #{tpu_custom_call.1} parent=1 // pred_fallthru
      _
    // Predicated region
    $region62: #{tpu_custom_call.1} parent=1 // pred_check
      _
    $region63: #{tpu_custom_call.1} parent=1 // pred_check_branch
      %63 = sbr.rel (0) target = $region65
    $region64: #{tpu_custom_call.1} parent=1 // pred_region
      _
    $region65: #{tpu_custom_call.1} parent=1 // pred_fallthru
      _
    // Predicated region
    $region66: #{tpu_custom_call.1} parent=1 // pred_check
      _
    $region67: #{tpu_custom_call.1} parent=1 // pred_check_branch
      %65 = sbr.rel (0) target = $region69
    $region68: #{tpu_custom_call.1} parent=1 // pred_region
      _
    $region69: #{tpu_custom_call.1} parent=1 // pred_fallthru
      _
    // Predicated region
    $region70: #{tpu_custom_call.1} parent=1 // pred_check
      _
    $region71: #{tpu_custom_call.1} parent=1 // pred_check_branch
      %67 = sbr.rel (0) target = $region73
    $region72: #{tpu_custom_call.1} parent=1 // pred_region
      _
    $region73: #{tpu_custom_call.1} parent=1 // pred_fallthru
      _
    // Predicated region
    $region74: #{tpu_custom_call.1} parent=1 // pred_check
      _
    $region75: #{tpu_custom_call.1} parent=1 // pred_check_branch
      %69 = sbr.rel (0) target = $region77
    $region76: #{tpu_custom_call.1} parent=1 // pred_region
      _
    $region77: #{tpu_custom_call.1} parent=1 // pred_fallthru
      _
    // Predicated region
    $region78: #{tpu_custom_call.1} parent=1 // pred_check
      _
    $region79: #{tpu_custom_call.1} parent=1 // pred_check_branch
      %71 = sbr.rel (0) target = $region81
    $region80: #{tpu_custom_call.1} parent=1 // pred_region
      _
    $region81: #{tpu_custom_call.1} parent=1 // pred_fallthru
      _
    // Predicated region
    $region82: #{tpu_custom_call.1} parent=1 // pred_check
      _
    $region83: #{tpu_custom_call.1} parent=1 // pred_check_branch
      %73 = sbr.rel (0) target = $region85
    $region84: #{tpu_custom_call.1} parent=1 // pred_region
      _
    $region85: #{tpu_custom_call.1} parent=1 // pred_fallthru
      _
    // Predicated region
    $region86: #{tpu_custom_call.1} parent=1 // pred_check
      _
    $region87: #{tpu_custom_call.1} parent=1 // pred_check_branch
      %75 = sbr.rel (0) target = $region89
    $region88: #{tpu_custom_call.1} parent=1 // pred_region
      _
    $region89: #{tpu_custom_call.1} parent=1 // pred_fallthru
      _
    // Predicated region
    $region90: #{tpu_custom_call.1} parent=1 // pred_check
      _
    $region91: #{tpu_custom_call.1} parent=1 // pred_check_branch
      %77 = sbr.rel (0) target = $region93
    $region92: #{tpu_custom_call.1} parent=1 // pred_region
      _
    $region93: #{tpu_custom_call.1} parent=1 // pred_fallthru
      _
    %v78 = vld [vmem:[%s2] sm:$0xff]
    %v79 = vld [vmem:[%s14] sm:$0xff]
    %v80 = vld [vmem:[%s14 + $0x8] sm:$0xff]
    %v81 = vld [vmem:[%s14 + $0x10] sm:$0xff]
    %v82 = vld [vmem:[%s14 + $0x18] sm:$0xff]
    %v83 = vld [vmem:[%s15] sm:$0x1]
    %p84 = scmp.eq.s32.totalorder 0, 0
    // Predicated region
    $region94: #{tpu_custom_call.1} parent=1 // pred_check
      %p85 = pneg %p84
    $region95: #{tpu_custom_call.1} parent=1 // pred_check_branch
      %87 = sbr.rel (%p85) target = $region97
    $region96: #{tpu_custom_call.1} parent=1 // pred_region
      %v88 = vld [vmem:[%s1] sm:$0xff]
      %v89 = vld [vmem:[%s1 + $0x8] sm:$0xff]
      %v90 = vld [vmem:[%s1 + $0x10] sm:$0xff]
      %v91 = vld [vmem:[%s1 + $0x18] sm:$0xff]
      %v92 = vld [vmem:[%s1 + $0x20] sm:$0xff]
      %v93 = vld [vmem:[%s1 + $0x28] sm:$0xff]
      %v94 = vld [vmem:[%s1 + $0x30] sm:$0xff]
      %v95 = vld [vmem:[%s1 + $0x38] sm:$0xff]
      %v96 = vld [vmem:[%s1 + $0x40] sm:$0xff]
      %v97 = vld [vmem:[%s1 + $0x48] sm:$0xff]
      %v98 = vld [vmem:[%s1 + $0x50] sm:$0xff]
      %v99 = vld [vmem:[%s1 + $0x58] sm:$0xff]
      %v100 = vld [vmem:[%s1 + $0x60] sm:$0xff]
      %v101 = vld [vmem:[%s1 + $0x68] sm:$0xff]
      %v102 = vld [vmem:[%s1 + $0x70] sm:$0xff]
      %v103 = vld [vmem:[%s1 + $0x78] sm:$0xff]
      %v104 = vld [vmem:[%s1 + $0x80] sm:$0xff]
      %v105 = vld [vmem:[%s1 + $0x88] sm:$0xff]
      %v106 = vld [vmem:[%s1 + $0x90] sm:$0xff]
      %v107 = vld [vmem:[%s1 + $0x98] sm:$0xff]
      %v108 = vld [vmem:[%s1 + $0xa0] sm:$0xff]
      %v109 = vld [vmem:[%s1 + $0xa8] sm:$0xff]
      %v110 = vld [vmem:[%s1 + $0xb0] sm:$0xff]
      %v111 = vld [vmem:[%s1 + $0xb8] sm:$0xff]
      %v112 = vld [vmem:[%s1 + $0xc0] sm:$0xff]
      %v113 = vld [vmem:[%s1 + $0xc8] sm:$0xff]
      %v114 = vld [vmem:[%s1 + $0xd0] sm:$0xff]
      %v115 = vld [vmem:[%s1 + $0xd8] sm:$0xff]
      %v116 = vld [vmem:[%s1 + $0xe0] sm:$0xff]
      %v117 = vld [vmem:[%s1 + $0xe8] sm:$0xff]
      %v118 = vld [vmem:[%s1 + $0xf0] sm:$0xff]
      %v119 = vld [vmem:[%s1 + $0xf8] sm:$0xff]
      %v120 = vld [vmem:[%s1 + $0x100] sm:$0xff]
      %v121 = vld [vmem:[%s1 + $0x108] sm:$0xff]
      %v122 = vld [vmem:[%s1 + $0x110] sm:$0xff]
      %v123 = vld [vmem:[%s1 + $0x118] sm:$0xff]
      %v124 = vld [vmem:[%s1 + $0x120] sm:$0xff]
      %v125 = vld [vmem:[%s1 + $0x128] sm:$0xff]
      %v126 = vld [vmem:[%s1 + $0x130] sm:$0xff]
      %v127 = vld [vmem:[%s1 + $0x138] sm:$0xff]
      %v128 = vld [vmem:[%s1 + $0x140] sm:$0xff]
      %v129 = vld [vmem:[%s1 + $0x148] sm:$0xff]
      %v130 = vld [vmem:[%s1 + $0x150] sm:$0xff]
      %v131 = vld [vmem:[%s1 + $0x158] sm:$0xff]
      %v132 = vld [vmem:[%s1 + $0x160] sm:$0xff]
      %v133 = vld [vmem:[%s1 + $0x168] sm:$0xff]
      %v134 = vld [vmem:[%s1 + $0x170] sm:$0xff]
      %v135 = vld [vmem:[%s1 + $0x178] sm:$0xff]
      %v136 = vld [vmem:[%s1 + $0x180] sm:$0xff]
      %v137 = vld [vmem:[%s1 + $0x188] sm:$0xff]
      %v138 = vld [vmem:[%s1 + $0x190] sm:$0xff]
      %v139 = vld [vmem:[%s1 + $0x198] sm:$0xff]
      %v140 = vld [vmem:[%s1 + $0x1a0] sm:$0xff]
      %v141 = vld [vmem:[%s1 + $0x1a8] sm:$0xff]
      %v142 = vld [vmem:[%s1 + $0x1b0] sm:$0xff]
      %v143 = vld [vmem:[%s1 + $0x1b8] sm:$0xff]
      %v144 = vld [vmem:[%s1 + $0x1c0] sm:$0xff]
      %v145 = vld [vmem:[%s1 + $0x1c8] sm:$0xff]
      %v146 = vld [vmem:[%s1 + $0x1d0] sm:$0xff]
      %v147 = vld [vmem:[%s1 + $0x1d8] sm:$0xff]
      %v148 = vld [vmem:[%s1 + $0x1e0] sm:$0xff]
      %v149 = vld [vmem:[%s1 + $0x1e8] sm:$0xff]
      %v150 = vld [vmem:[%s1 + $0x1f0] sm:$0xff]
      %v151 = vld [vmem:[%s1 + $0x1f8] sm:$0xff]
      %v152 = vld [vmem:[%s1 + $0x200] sm:$0xff]
      %v153 = vld [vmem:[%s1 + $0x208] sm:$0xff]
      %v154 = vld [vmem:[%s1 + $0x210] sm:$0xff]
      %v155 = vld [vmem:[%s1 + $0x218] sm:$0xff]
      %v156 = vld [vmem:[%s1 + $0x220] sm:$0xff]
      %v157 = vld [vmem:[%s1 + $0x228] sm:$0xff]
      %v158 = vld [vmem:[%s1 + $0x230] sm:$0xff]
      %v159 = vld [vmem:[%s1 + $0x238] sm:$0xff]
      %v160 = vld [vmem:[%s1 + $0x240] sm:$0xff]
      %v161 = vld [vmem:[%s1 + $0x248] sm:$0xff]
      %v162 = vld [vmem:[%s1 + $0x250] sm:$0xff]
      %v163 = vld [vmem:[%s1 + $0x258] sm:$0xff]
      %v164 = vld [vmem:[%s1 + $0x260] sm:$0xff]
      %v165 = vld [vmem:[%s1 + $0x268] sm:$0xff]
      %v166 = vld [vmem:[%s1 + $0x270] sm:$0xff]
      %v167 = vld [vmem:[%s1 + $0x278] sm:$0xff]
      %v168 = vld [vmem:[%s1 + $0x280] sm:$0xff]
      %v169 = vld [vmem:[%s1 + $0x288] sm:$0xff]
      %v170 = vld [vmem:[%s1 + $0x290] sm:$0xff]
      %v171 = vld [vmem:[%s1 + $0x298] sm:$0xff]
      %v172 = vld [vmem:[%s1 + $0x2a0] sm:$0xff]
      %v173 = vld [vmem:[%s1 + $0x2a8] sm:$0xff]
      %v174 = vld [vmem:[%s1 + $0x2b0] sm:$0xff]
      %v175 = vld [vmem:[%s1 + $0x2b8] sm:$0xff]
      %v176 = vld [vmem:[%s1 + $0x2c0] sm:$0xff]
      %v177 = vld [vmem:[%s1 + $0x2c8] sm:$0xff]
      %v178 = vld [vmem:[%s1 + $0x2d0] sm:$0xff]
      %v179 = vld [vmem:[%s1 + $0x2d8] sm:$0xff]
      %v180 = vld [vmem:[%s1 + $0x2e0] sm:$0xff]
      %v181 = vld [vmem:[%s1 + $0x2e8] sm:$0xff]
      %v182 = vld [vmem:[%s1 + $0x2f0] sm:$0xff]
      %v183 = vld [vmem:[%s1 + $0x2f8] sm:$0xff]
      %v184 = vld [vmem:[%s1 + $0x300] sm:$0xff]
      %v185 = vld [vmem:[%s1 + $0x308] sm:$0xff]
      %v186 = vld [vmem:[%s1 + $0x310] sm:$0xff]
      %v187 = vld [vmem:[%s1 + $0x318] sm:$0xff]
      %v188 = vld [vmem:[%s1 + $0x320] sm:$0xff]
      %v189 = vld [vmem:[%s1 + $0x328] sm:$0xff]
      %v190 = vld [vmem:[%s1 + $0x330] sm:$0xff]
      %v191 = vld [vmem:[%s1 + $0x338] sm:$0xff]
      %v192 = vld [vmem:[%s1 + $0x340] sm:$0xff]
      %v193 = vld [vmem:[%s1 + $0x348] sm:$0xff]
      %v194 = vld [vmem:[%s1 + $0x350] sm:$0xff]
      %v195 = vld [vmem:[%s1 + $0x358] sm:$0xff]
      %v196 = vld [vmem:[%s1 + $0x360] sm:$0xff]
      %v197 = vld [vmem:[%s1 + $0x368] sm:$0xff]
      %v198 = vld [vmem:[%s1 + $0x370] sm:$0xff]
      %v199 = vld [vmem:[%s1 + $0x378] sm:$0xff]
      %v200 = vld [vmem:[%s1 + $0x380] sm:$0xff]
      %v201 = vld [vmem:[%s1 + $0x388] sm:$0xff]
      %v202 = vld [vmem:[%s1 + $0x390] sm:$0xff]
      %v203 = vld [vmem:[%s1 + $0x398] sm:$0xff]
      %v204 = vld [vmem:[%s1 + $0x3a0] sm:$0xff]
      %v205 = vld [vmem:[%s1 + $0x3a8] sm:$0xff]
      %v206 = vld [vmem:[%s1 + $0x3b0] sm:$0xff]
      %v207 = vld [vmem:[%s1 + $0x3b8] sm:$0xff]
      %v208 = vld [vmem:[%s1 + $0x3c0] sm:$0xff]
      %v209 = vld [vmem:[%s1 + $0x3c8] sm:$0xff]
      %v210 = vld [vmem:[%s1 + $0x3d0] sm:$0xff]
      %v211 = vld [vmem:[%s1 + $0x3d8] sm:$0xff]
      %v212 = vld [vmem:[%s1 + $0x3e0] sm:$0xff]
      %v213 = vld [vmem:[%s1 + $0x3e8] sm:$0xff]
      %v214 = vld [vmem:[%s1 + $0x3f0] sm:$0xff]
      %v215 = vld [vmem:[%s1 + $0x3f8] sm:$0xff]
      %v216 = vld [vmem:[%s16] sm:$0xff]
      %v217 = vld [vmem:[%s16 + $0x8] sm:$0xff]
      %v218 = vld [vmem:[%s16 + $0x10] sm:$0xff]
      %v219 = vld [vmem:[%s16 + $0x18] sm:$0xff]
      %v220 = vld [vmem:[%s17] sm:$0x1]
      %v222 = vperm.slane %v220, 0
      %vm224 = vcmask 261120
      %v226 = vsel %vm224, %v88, 0
      %v229 = vsel %vm224, %v89, 0
      %v232 = vsel %vm224, %v90, 0
      %v235 = vsel %vm224, %v91, 0
      %v238 = vsel %vm224, %v92, 0
      %v241 = vsel %vm224, %v93, 0
      %v244 = vsel %vm224, %v94, 0
      %v247 = vsel %vm224, %v95, 0
      %v250 = vsel %vm224, %v96, 0
      %v253 = vsel %vm224, %v97, 0
      %v256 = vsel %vm224, %v98, 0
      %v259 = vsel %vm224, %v99, 0
      %v262 = vsel %vm224, %v100, 0
      %v265 = vsel %vm224, %v101, 0
      %v268 = vsel %vm224, %v102, 0
      %v271 = vsel %vm224, %v103, 0
      %v274 = vsel %vm224, %v104, 0
      %v277 = vsel %vm224, %v105, 0
      %v280 = vsel %vm224, %v106, 0
      %v283 = vsel %vm224, %v107, 0
      %v286 = vsel %vm224, %v108, 0
      %v289 = vsel %vm224, %v109, 0
      %v292 = vsel %vm224, %v110, 0
      %v295 = vsel %vm224, %v111, 0
      %v298 = vsel %vm224, %v112, 0
      %v301 = vsel %vm224, %v113, 0
      %v304 = vsel %vm224, %v114, 0
      %v307 = vsel %vm224, %v115, 0
      %v310 = vsel %vm224, %v116, 0
      %v313 = vsel %vm224, %v117, 0
      %v316 = vsel %vm224, %v118, 0
      %v319 = vsel %vm224, %v119, 0
      %v322 = vsel %vm224, %v120, 0
      %v325 = vsel %vm224, %v121, 0
      %v328 = vsel %vm224, %v122, 0
      %v331 = vsel %vm224, %v123, 0
      %v334 = vsel %vm224, %v124, 0
      %v337 = vsel %vm224, %v125, 0
      %v340 = vsel %vm224, %v126, 0
      %v343 = vsel %vm224, %v127, 0
      %v346 = vsel %vm224, %v128, 0
      %v349 = vsel %vm224, %v129, 0
      %v352 = vsel %vm224, %v130, 0
      %v355 = vsel %vm224, %v131, 0
      %v358 = vsel %vm224, %v132, 0
      %v361 = vsel %vm224, %v133, 0
      %v364 = vsel %vm224, %v134, 0
      %v367 = vsel %vm224, %v135, 0
      %v370 = vsel %vm224, %v136, 0
      %v373 = vsel %vm224, %v137, 0
      %v376 = vsel %vm224, %v138, 0
      %v379 = vsel %vm224, %v139, 0
      %v382 = vsel %vm224, %v140, 0
      %v385 = vsel %vm224, %v141, 0
      %v388 = vsel %vm224, %v142, 0
      %v391 = vsel %vm224, %v143, 0
      %v394 = vsel %vm224, %v144, 0
      %v397 = vsel %vm224, %v145, 0
      %v400 = vsel %vm224, %v146, 0
      %v403 = vsel %vm224, %v147, 0
      %v406 = vsel %vm224, %v148, 0
      %v409 = vsel %vm224, %v149, 0
      %v412 = vsel %vm224, %v150, 0
      %v415 = vsel %vm224, %v151, 0
      %v418 = vsel %vm224, %v152, 0
      %v421 = vsel %vm224, %v153, 0
      %v424 = vsel %vm224, %v154, 0
      %v427 = vsel %vm224, %v155, 0
      %v430 = vsel %vm224, %v156, 0
      %v433 = vsel %vm224, %v157, 0
      %v436 = vsel %vm224, %v158, 0
      %v439 = vsel %vm224, %v159, 0
      %v442 = vsel %vm224, %v160, 0
      %v445 = vsel %vm224, %v161, 0
      %v448 = vsel %vm224, %v162, 0
      %v451 = vsel %vm224, %v163, 0
      %v454 = vsel %vm224, %v164, 0
      %v457 = vsel %vm224, %v165, 0
      %v460 = vsel %vm224, %v166, 0
      %v463 = vsel %vm224, %v167, 0
      %v466 = vsel %vm224, %v168, 0
      %v469 = vsel %vm224, %v169, 0
      %v472 = vsel %vm224, %v170, 0
      %v475 = vsel %vm224, %v171, 0
      %v478 = vsel %vm224, %v172, 0
      %v481 = vsel %vm224, %v173, 0
      %v484 = vsel %vm224, %v174, 0
      %v487 = vsel %vm224, %v175, 0
      %v490 = vsel %vm224, %v176, 0
      %v493 = vsel %vm224, %v177, 0
      %v496 = vsel %vm224, %v178, 0
      %v499 = vsel %vm224, %v179, 0
      %v502 = vsel %vm224, %v180, 0
      %v505 = vsel %vm224, %v181, 0
      %v508 = vsel %vm224, %v182, 0
      %v511 = vsel %vm224, %v183, 0
      %v514 = vsel %vm224, %v184, 0
      %v517 = vsel %vm224, %v185, 0
      %v520 = vsel %vm224, %v186, 0
      %v523 = vsel %vm224, %v187, 0
      %v526 = vsel %vm224, %v188, 0
      %v529 = vsel %vm224, %v189, 0
      %v532 = vsel %vm224, %v190, 0
      %v535 = vsel %vm224, %v191, 0
      %v538 = vsel %vm224, %v192, 0
      %v541 = vsel %vm224, %v193, 0
      %v544 = vsel %vm224, %v194, 0
      %v547 = vsel %vm224, %v195, 0
      %v550 = vsel %vm224, %v196, 0
      %v553 = vsel %vm224, %v197, 0
      %v556 = vsel %vm224, %v198, 0
      %v559 = vsel %vm224, %v199, 0
      %v562 = vsel %vm224, %v200, 0
      %v565 = vsel %vm224, %v201, 0
      %v568 = vsel %vm224, %v202, 0
      %v571 = vsel %vm224, %v203, 0
      %v574 = vsel %vm224, %v204, 0
      %v577 = vsel %vm224, %v205, 0
      %v580 = vsel %vm224, %v206, 0
      %v583 = vsel %vm224, %v207, 0
      %v586 = vsel %vm224, %v208, 0
      %v589 = vsel %vm224, %v209, 0
      %v592 = vsel %vm224, %v210, 0
      %v595 = vsel %vm224, %v211, 0
      %v598 = vsel %vm224, %v212, 0
      %v601 = vsel %vm224, %v213, 0
      %v604 = vsel %vm224, %v214, 0
      %v607 = vsel %vm224, %v215, 0
      %609 = vmatpush.msra.mxu0 0.0
      %610 = vmatpush.msra.mxu0 0.0
      %611 = vmatpush.msra.mxu0 0.0
      %612 = vmatpush.msra.mxu0 0.0
      %613 = vmatpush.msra.mxu0 0.0
      %614 = vmatpush.msra.mxu0 0.0
      %615 = vmatpush.msra.mxu0 0.0
      %616 = vmatpush.msra.mxu0 0.0
      %617 = vmatpush.msra.mxu0 0.0
      %618 = vmatpush.msra.mxu0 0.0
      %619 = vmatpush.msra.mxu0 0.0
      %620 = vmatpush.msra.mxu0 0.0
      %621 = vmatpush.msra.mxu0 %v219
      %622 = vmatpush.msra.mxu0 %v218
      %623 = vmatpush.msra.mxu0 %v217
      %624 = vmatpush.msra.mxu0 %v216
      %625 = vmatmul.f32.gmra.mxu0 %v226
      %v626 = vpop.f32.mrf.mxu0
      %v627 = vadd.f32 %v222, %v626
      %628 = vmatmul.f32.gmra.mxu0 %v229
      %v629 = vpop.f32.mrf.mxu0
      %v630 = vadd.f32 %v222, %v629
      %631 = vmatmul.f32.gmra.mxu0 %v232
      %v632 = vpop.f32.mrf.mxu0
      %v633 = vadd.f32 %v222, %v632
      %634 = vmatmul.f32.gmra.mxu0 %v235
      %v635 = vpop.f32.mrf.mxu0
      %v636 = vadd.f32 %v222, %v635
      %637 = vmatmul.f32.gmra.mxu0 %v238
      %v638 = vpop.f32.mrf.mxu0
      %v639 = vadd.f32 %v222, %v638
      %640 = vmatmul.f32.gmra.mxu0 %v241
      %v641 = vpop.f32.mrf.mxu0
      %v642 = vadd.f32 %v222, %v641
      %643 = vmatmul.f32.gmra.mxu0 %v244
      %v644 = vpop.f32.mrf.mxu0
      %v645 = vadd.f32 %v222, %v644
      %646 = vmatmul.f32.gmra.mxu0 %v247
      %v647 = vpop.f32.mrf.mxu0
      %v648 = vadd.f32 %v222, %v647
      %649 = vmatmul.f32.gmra.mxu0 %v250
      %v650 = vpop.f32.mrf.mxu0
      %v651 = vadd.f32 %v222, %v650
      %652 = vmatmul.f32.gmra.mxu0 %v253
      %v653 = vpop.f32.mrf.mxu0
      %v654 = vadd.f32 %v222, %v653
      %655 = vmatmul.f32.gmra.mxu0 %v256
      %v656 = vpop.f32.mrf.mxu0
      %v657 = vadd.f32 %v222, %v656
      %658 = vmatmul.f32.gmra.mxu0 %v259
      %v659 = vpop.f32.mrf.mxu0
      %v660 = vadd.f32 %v222, %v659
      %661 = vmatmul.f32.gmra.mxu0 %v262
      %v662 = vpop.f32.mrf.mxu0
      %v663 = vadd.f32 %v222, %v662
      %664 = vmatmul.f32.gmra.mxu0 %v265
      %v665 = vpop.f32.mrf.mxu0
      %v666 = vadd.f32 %v222, %v665
      %667 = vmatmul.f32.gmra.mxu0 %v268
      %v668 = vpop.f32.mrf.mxu0
      %v669 = vadd.f32 %v222, %v668
      %670 = vmatmul.f32.gmra.mxu0 %v271
      %v671 = vpop.f32.mrf.mxu0
      %v672 = vadd.f32 %v222, %v671
      %673 = vmatmul.f32.gmra.mxu0 %v274
      %v674 = vpop.f32.mrf.mxu0
      %v675 = vadd.f32 %v222, %v674
      %676 = vmatmul.f32.gmra.mxu0 %v277
      %v677 = vpop.f32.mrf.mxu0
      %v678 = vadd.f32 %v222, %v677
      %679 = vmatmul.f32.gmra.mxu0 %v280
      %v680 = vpop.f32.mrf.mxu0
      %v681 = vadd.f32 %v222, %v680
      %682 = vmatmul.f32.gmra.mxu0 %v283
      %v683 = vpop.f32.mrf.mxu0
      %v684 = vadd.f32 %v222, %v683
      %685 = vmatmul.f32.gmra.mxu0 %v286
      %v686 = vpop.f32.mrf.mxu0
      %v687 = vadd.f32 %v222, %v686
      %688 = vmatmul.f32.gmra.mxu0 %v289
      %v689 = vpop.f32.mrf.mxu0
      %v690 = vadd.f32 %v222, %v689
      %691 = vmatmul.f32.gmra.mxu0 %v292
      %v692 = vpop.f32.mrf.mxu0
      %v693 = vadd.f32 %v222, %v692
      %694 = vmatmul.f32.gmra.mxu0 %v295
      %v695 = vpop.f32.mrf.mxu0
      %v696 = vadd.f32 %v222, %v695
      %697 = vmatmul.f32.gmra.mxu0 %v298
      %v698 = vpop.f32.mrf.mxu0
      %v699 = vadd.f32 %v222, %v698
      %700 = vmatmul.f32.gmra.mxu0 %v301
      %v701 = vpop.f32.mrf.mxu0
      %v702 = vadd.f32 %v222, %v701
      %703 = vmatmul.f32.gmra.mxu0 %v304
      %v704 = vpop.f32.mrf.mxu0
      %v705 = vadd.f32 %v222, %v704
      %706 = vmatmul.f32.gmra.mxu0 %v307
      %v707 = vpop.f32.mrf.mxu0
      %v708 = vadd.f32 %v222, %v707
      %709 = vmatmul.f32.gmra.mxu0 %v310
      %v710 = vpop.f32.mrf.mxu0
      %v711 = vadd.f32 %v222, %v710
      %712 = vmatmul.f32.gmra.mxu0 %v313
      %v713 = vpop.f32.mrf.mxu0
      %v714 = vadd.f32 %v222, %v713
      %715 = vmatmul.f32.gmra.mxu0 %v316
      %v716 = vpop.f32.mrf.mxu0
      %v717 = vadd.f32 %v222, %v716
      %718 = vmatmul.f32.gmra.mxu0 %v319
      %v719 = vpop.f32.mrf.mxu0
      %v720 = vadd.f32 %v222, %v719
      %721 = vmatmul.f32.gmra.mxu0 %v322
      %v722 = vpop.f32.mrf.mxu0
      %v723 = vadd.f32 %v222, %v722
      %724 = vmatmul.f32.gmra.mxu0 %v325
      %v725 = vpop.f32.mrf.mxu0
      %v726 = vadd.f32 %v222, %v725
      %727 = vmatmul.f32.gmra.mxu0 %v328
      %v728 = vpop.f32.mrf.mxu0
      %v729 = vadd.f32 %v222, %v728
      %730 = vmatmul.f32.gmra.mxu0 %v331
      %v731 = vpop.f32.mrf.mxu0
      %v732 = vadd.f32 %v222, %v731
      %733 = vmatmul.f32.gmra.mxu0 %v334
      %v734 = vpop.f32.mrf.mxu0
      %v735 = vadd.f32 %v222, %v734
      %736 = vmatmul.f32.gmra.mxu0 %v337
      %v737 = vpop.f32.mrf.mxu0
      %v738 = vadd.f32 %v222, %v737
      %739 = vmatmul.f32.gmra.mxu0 %v340
      %v740 = vpop.f32.mrf.mxu0
      %v741 = vadd.f32 %v222, %v740
      %742 = vmatmul.f32.gmra.mxu0 %v343
      %v743 = vpop.f32.mrf.mxu0
      %v744 = vadd.f32 %v222, %v743
      %745 = vmatmul.f32.gmra.mxu0 %v346
      %v746 = vpop.f32.mrf.mxu0
      %v747 = vadd.f32 %v222, %v746
      %748 = vmatmul.f32.gmra.mxu0 %v349
      %v749 = vpop.f32.mrf.mxu0
      %v750 = vadd.f32 %v222, %v749
      %751 = vmatmul.f32.gmra.mxu0 %v352
      %v752 = vpop.f32.mrf.mxu0
      %v753 = vadd.f32 %v222, %v752
      %754 = vmatmul.f32.gmra.mxu0 %v355
      %v755 = vpop.f32.mrf.mxu0
      %v756 = vadd.f32 %v222, %v755
      %757 = vmatmul.f32.gmra.mxu0 %v358
      %v758 = vpop.f32.mrf.mxu0
      %v759 = vadd.f32 %v222, %v758
      %760 = vmatmul.f32.gmra.mxu0 %v361
      %v761 = vpop.f32.mrf.mxu0
      %v762 = vadd.f32 %v222, %v761
      %763 = vmatmul.f32.gmra.mxu0 %v364
      %v764 = vpop.f32.mrf.mxu0
      %v765 = vadd.f32 %v222, %v764
      %766 = vmatmul.f32.gmra.mxu0 %v367
      %v767 = vpop.f32.mrf.mxu0
      %v768 = vadd.f32 %v222, %v767
      %769 = vmatmul.f32.gmra.mxu0 %v370
      %v770 = vpop.f32.mrf.mxu0
      %v771 = vadd.f32 %v222, %v770
      %772 = vmatmul.f32.gmra.mxu0 %v373
      %v773 = vpop.f32.mrf.mxu0
      %v774 = vadd.f32 %v222, %v773
      %775 = vmatmul.f32.gmra.mxu0 %v376
      %v776 = vpop.f32.mrf.mxu0
      %v777 = vadd.f32 %v222, %v776
      %778 = vmatmul.f32.gmra.mxu0 %v379
      %v779 = vpop.f32.mrf.mxu0
      %v780 = vadd.f32 %v222, %v779
      %781 = vmatmul.f32.gmra.mxu0 %v382
      %v782 = vpop.f32.mrf.mxu0
      %v783 = vadd.f32 %v222, %v782
      %784 = vmatmul.f32.gmra.mxu0 %v385
      %v785 = vpop.f32.mrf.mxu0
      %v786 = vadd.f32 %v222, %v785
      %787 = vmatmul.f32.gmra.mxu0 %v388
      %v788 = vpop.f32.mrf.mxu0
      %v789 = vadd.f32 %v222, %v788
      %790 = vmatmul.f32.gmra.mxu0 %v391
      %v791 = vpop.f32.mrf.mxu0
      %v792 = vadd.f32 %v222, %v791
      %793 = vmatmul.f32.gmra.mxu0 %v394
      %v794 = vpop.f32.mrf.mxu0
      %v795 = vadd.f32 %v222, %v794
      %796 = vmatmul.f32.gmra.mxu0 %v397
      %v797 = vpop.f32.mrf.mxu0
      %v798 = vadd.f32 %v222, %v797
      %799 = vmatmul.f32.gmra.mxu0 %v400
      %v800 = vpop.f32.mrf.mxu0
      %v801 = vadd.f32 %v222, %v800
      %802 = vmatmul.f32.gmra.mxu0 %v403
      %v803 = vpop.f32.mrf.mxu0
      %v804 = vadd.f32 %v222, %v803
      %805 = vmatmul.f32.gmra.mxu0 %v406
      %v806 = vpop.f32.mrf.mxu0
      %v807 = vadd.f32 %v222, %v806
      %808 = vmatmul.f32.gmra.mxu0 %v409
      %v809 = vpop.f32.mrf.mxu0
      %v810 = vadd.f32 %v222, %v809
      %811 = vmatmul.f32.gmra.mxu0 %v412
      %v812 = vpop.f32.mrf.mxu0
      %v813 = vadd.f32 %v222, %v812
      %814 = vmatmul.f32.gmra.mxu0 %v415
      %v815 = vpop.f32.mrf.mxu0
      %v816 = vadd.f32 %v222, %v815
      %817 = vmatmul.f32.gmra.mxu0 %v418
      %v818 = vpop.f32.mrf.mxu0
      %v819 = vadd.f32 %v222, %v818
      %820 = vmatmul.f32.gmra.mxu0 %v421
      %v821 = vpop.f32.mrf.mxu0
      %v822 = vadd.f32 %v222, %v821
      %823 = vmatmul.f32.gmra.mxu0 %v424
      %v824 = vpop.f32.mrf.mxu0
      %v825 = vadd.f32 %v222, %v824
      %826 = vmatmul.f32.gmra.mxu0 %v427
      %v827 = vpop.f32.mrf.mxu0
      %v828 = vadd.f32 %v222, %v827
      %829 = vmatmul.f32.gmra.mxu0 %v430
      %v830 = vpop.f32.mrf.mxu0
      %v831 = vadd.f32 %v222, %v830
      %832 = vmatmul.f32.gmra.mxu0 %v433
      %v833 = vpop.f32.mrf.mxu0
      %v834 = vadd.f32 %v222, %v833
      %835 = vmatmul.f32.gmra.mxu0 %v436
      %v836 = vpop.f32.mrf.mxu0
      %v837 = vadd.f32 %v222, %v836
      %838 = vmatmul.f32.gmra.mxu0 %v439
      %v839 = vpop.f32.mrf.mxu0
      %v840 = vadd.f32 %v222, %v839
      %841 = vmatmul.f32.gmra.mxu0 %v442
      %v842 = vpop.f32.mrf.mxu0
      %v843 = vadd.f32 %v222, %v842
      %844 = vmatmul.f32.gmra.mxu0 %v445
      %v845 = vpop.f32.mrf.mxu0
      %v846 = vadd.f32 %v222, %v845
      %847 = vmatmul.f32.gmra.mxu0 %v448
      %v848 = vpop.f32.mrf.mxu0
      %v849 = vadd.f32 %v222, %v848
      %850 = vmatmul.f32.gmra.mxu0 %v451
      %v851 = vpop.f32.mrf.mxu0
      %v852 = vadd.f32 %v222, %v851
      %853 = vmatmul.f32.gmra.mxu0 %v454
      %v854 = vpop.f32.mrf.mxu0
      %v855 = vadd.f32 %v222, %v854
      %856 = vmatmul.f32.gmra.mxu0 %v457
      %v857 = vpop.f32.mrf.mxu0
      %v858 = vadd.f32 %v222, %v857
      %859 = vmatmul.f32.gmra.mxu0 %v460
      %v860 = vpop.f32.mrf.mxu0
      %v861 = vadd.f32 %v222, %v860
      %862 = vmatmul.f32.gmra.mxu0 %v463
      %v863 = vpop.f32.mrf.mxu0
      %v864 = vadd.f32 %v222, %v863
      %865 = vmatmul.f32.gmra.mxu0 %v466
      %v866 = vpop.f32.mrf.mxu0
      %v867 = vadd.f32 %v222, %v866
      %868 = vmatmul.f32.gmra.mxu0 %v469
      %v869 = vpop.f32.mrf.mxu0
      %v870 = vadd.f32 %v222, %v869
      %871 = vmatmul.f32.gmra.mxu0 %v472
      %v872 = vpop.f32.mrf.mxu0
      %v873 = vadd.f32 %v222, %v872
      %874 = vmatmul.f32.gmra.mxu0 %v475
      %v875 = vpop.f32.mrf.mxu0
      %v876 = vadd.f32 %v222, %v875
      %877 = vmatmul.f32.gmra.mxu0 %v478
      %v878 = vpop.f32.mrf.mxu0
      %v879 = vadd.f32 %v222, %v878
      %880 = vmatmul.f32.gmra.mxu0 %v481
      %v881 = vpop.f32.mrf.mxu0
      %v882 = vadd.f32 %v222, %v881
      %883 = vmatmul.f32.gmra.mxu0 %v484
      %v884 = vpop.f32.mrf.mxu0
      %v885 = vadd.f32 %v222, %v884
      %886 = vmatmul.f32.gmra.mxu0 %v487
      %v887 = vpop.f32.mrf.mxu0
      %v888 = vadd.f32 %v222, %v887
      %889 = vmatmul.f32.gmra.mxu0 %v490
      %v890 = vpop.f32.mrf.mxu0
      %v891 = vadd.f32 %v222, %v890
      %892 = vmatmul.f32.gmra.mxu0 %v493
      %v893 = vpop.f32.mrf.mxu0
      %v894 = vadd.f32 %v222, %v893
      %895 = vmatmul.f32.gmra.mxu0 %v496
      %v896 = vpop.f32.mrf.mxu0
      %v897 = vadd.f32 %v222, %v896
      %898 = vmatmul.f32.gmra.mxu0 %v499
      %v899 = vpop.f32.mrf.mxu0
      %v900 = vadd.f32 %v222, %v899
      %901 = vmatmul.f32.gmra.mxu0 %v502
      %v902 = vpop.f32.mrf.mxu0
      %v903 = vadd.f32 %v222, %v902
      %904 = vmatmul.f32.gmra.mxu0 %v505
      %v905 = vpop.f32.mrf.mxu0
      %v906 = vadd.f32 %v222, %v905
      %907 = vmatmul.f32.gmra.mxu0 %v508
      %v908 = vpop.f32.mrf.mxu0
      %v909 = vadd.f32 %v222, %v908
      %910 = vmatmul.f32.gmra.mxu0 %v511
      %v911 = vpop.f32.mrf.mxu0
      %v912 = vadd.f32 %v222, %v911
      %913 = vmatmul.f32.gmra.mxu0 %v514
      %v914 = vpop.f32.mrf.mxu0
      %v915 = vadd.f32 %v222, %v914
      %916 = vmatmul.f32.gmra.mxu0 %v517
      %v917 = vpop.f32.mrf.mxu0
      %v918 = vadd.f32 %v222, %v917
      %919 = vmatmul.f32.gmra.mxu0 %v520
      %v920 = vpop.f32.mrf.mxu0
      %v921 = vadd.f32 %v222, %v920
      %922 = vmatmul.f32.gmra.mxu0 %v523
      %v923 = vpop.f32.mrf.mxu0
      %v924 = vadd.f32 %v222, %v923
      %925 = vmatmul.f32.gmra.mxu0 %v526
      %v926 = vpop.f32.mrf.mxu0
      %v927 = vadd.f32 %v222, %v926
      %928 = vmatmul.f32.gmra.mxu0 %v529
      %v929 = vpop.f32.mrf.mxu0
      %v930 = vadd.f32 %v222, %v929
      %931 = vmatmul.f32.gmra.mxu0 %v532
      %v932 = vpop.f32.mrf.mxu0
      %v933 = vadd.f32 %v222, %v932
      %934 = vmatmul.f32.gmra.mxu0 %v535
      %v935 = vpop.f32.mrf.mxu0
      %v936 = vadd.f32 %v222, %v935
      %937 = vmatmul.f32.gmra.mxu0 %v538
      %v938 = vpop.f32.mrf.mxu0
      %v939 = vadd.f32 %v222, %v938
      %940 = vmatmul.f32.gmra.mxu0 %v541
      %v941 = vpop.f32.mrf.mxu0
      %v942 = vadd.f32 %v222, %v941
      %943 = vmatmul.f32.gmra.mxu0 %v544
      %v944 = vpop.f32.mrf.mxu0
      %v945 = vadd.f32 %v222, %v944
      %946 = vmatmul.f32.gmra.mxu0 %v547
      %v947 = vpop.f32.mrf.mxu0
      %v948 = vadd.f32 %v222, %v947
      %949 = vmatmul.f32.gmra.mxu0 %v550
      %v950 = vpop.f32.mrf.mxu0
      %v951 = vadd.f32 %v222, %v950
      %952 = vmatmul.f32.gmra.mxu0 %v553
      %v953 = vpop.f32.mrf.mxu0
      %v954 = vadd.f32 %v222, %v953
      %955 = vmatmul.f32.gmra.mxu0 %v556
      %v956 = vpop.f32.mrf.mxu0
      %v957 = vadd.f32 %v222, %v956
      %958 = vmatmul.f32.gmra.mxu0 %v559
      %v959 = vpop.f32.mrf.mxu0
      %v960 = vadd.f32 %v222, %v959
      %961 = vmatmul.f32.gmra.mxu0 %v562
      %v962 = vpop.f32.mrf.mxu0
      %v963 = vadd.f32 %v222, %v962
      %964 = vmatmul.f32.gmra.mxu0 %v565
      %v965 = vpop.f32.mrf.mxu0
      %v966 = vadd.f32 %v222, %v965
      %967 = vmatmul.f32.gmra.mxu0 %v568
      %v968 = vpop.f32.mrf.mxu0
      %v969 = vadd.f32 %v222, %v968
      %970 = vmatmul.f32.gmra.mxu0 %v571
      %v971 = vpop.f32.mrf.mxu0
      %v972 = vadd.f32 %v222, %v971
      %973 = vmatmul.f32.gmra.mxu0 %v574
      %v974 = vpop.f32.mrf.mxu0
      %v975 = vadd.f32 %v222, %v974
      %976 = vmatmul.f32.gmra.mxu0 %v577
      %v977 = vpop.f32.mrf.mxu0
      %v978 = vadd.f32 %v222, %v977
      %979 = vmatmul.f32.gmra.mxu0 %v580
      %v980 = vpop.f32.mrf.mxu0
      %v981 = vadd.f32 %v222, %v980
      %982 = vmatmul.f32.gmra.mxu0 %v583
      %v983 = vpop.f32.mrf.mxu0
      %v984 = vadd.f32 %v222, %v983
      %985 = vmatmul.f32.gmra.mxu0 %v586
      %v986 = vpop.f32.mrf.mxu0
      %v987 = vadd.f32 %v222, %v986
      %988 = vmatmul.f32.gmra.mxu0 %v589
      %v989 = vpop.f32.mrf.mxu0
      %v990 = vadd.f32 %v222, %v989
      %991 = vmatmul.f32.gmra.mxu0 %v592
      %v992 = vpop.f32.mrf.mxu0
      %v993 = vadd.f32 %v222, %v992
      %994 = vmatmul.f32.gmra.mxu0 %v595
      %v995 = vpop.f32.mrf.mxu0
      %v996 = vadd.f32 %v222, %v995
      %997 = vmatmul.f32.gmra.mxu0 %v598
      %v998 = vpop.f32.mrf.mxu0
      %v999 = vadd.f32 %v222, %v998
      %1000 = vmatmul.f32.gmra.mxu0 %v601
      %v1001 = vpop.f32.mrf.mxu0
      %v1002 = vadd.f32 %v222, %v1001
      %1003 = vmatmul.f32.gmra.mxu0 %v604
      %v1004 = vpop.f32.mrf.mxu0
      %v1005 = vadd.f32 %v222, %v1004
      %1006 = vmatmul.f32.gmra.mxu0 %v607
      %v1007 = vpop.f32.mrf.mxu0
      %v1008 = vadd.f32 %v222, %v1007
      %1009 = vdwg.mxu0
      %vm1010 = vcmask 130048
      %1011 = vst.msk [vmem:[#allocation2] sm:$0xff] %vm1010, %v627
      %1012 = vst.msk [vmem:[#allocation2 + $0x8] sm:$0xff] %vm1010, %v630
      %1013 = vst.msk [vmem:[#allocation2 + $0x10] sm:$0xff] %vm1010, %v633
      %1014 = vst.msk [vmem:[#allocation2 + $0x18] sm:$0xff] %vm1010, %v636
      %1015 = vst.msk [vmem:[#allocation2 + $0x20] sm:$0xff] %vm1010, %v639
      %1016 = vst.msk [vmem:[#allocation2 + $0x28] sm:$0xff] %vm1010, %v642
      %1017 = vst.msk [vmem:[#allocation2 + $0x30] sm:$0xff] %vm1010, %v645
      %1018 = vst.msk [vmem:[#allocation2 + $0x38] sm:$0xff] %vm1010, %v648
      %1019 = vst.msk [vmem:[#allocation2 + $0x40] sm:$0xff] %vm1010, %v651
      %1020 = vst.msk [vmem:[#allocation2 + $0x48] sm:$0xff] %vm1010, %v654
      %1021 = vst.msk [vmem:[#allocation2 + $0x50] sm:$0xff] %vm1010, %v657
      %1022 = vst.msk [vmem:[#allocation2 + $0x58] sm:$0xff] %vm1010, %v660
      %1023 = vst.msk [vmem:[#allocation2 + $0x60] sm:$0xff] %vm1010, %v663
      %1024 = vst.msk [vmem:[#allocation2 + $0x68] sm:$0xff] %vm1010, %v666
      %1025 = vst.msk [vmem:[#allocation2 + $0x70] sm:$0xff] %vm1010, %v669
      %1026 = vst.msk [vmem:[#allocation2 + $0x78] sm:$0xff] %vm1010, %v672
      %1027 = vst.msk [vmem:[#allocation2 + $0x80] sm:$0xff] %vm1010, %v675
      %1028 = vst.msk [vmem:[#allocation2 + $0x88] sm:$0xff] %vm1010, %v678
      %1029 = vst.msk [vmem:[#allocation2 + $0x90] sm:$0xff] %vm1010, %v681
      %1030 = vst.msk [vmem:[#allocation2 + $0x98] sm:$0xff] %vm1010, %v684
      %1031 = vst.msk [vmem:[#allocation2 + $0xa0] sm:$0xff] %vm1010, %v687
      %1032 = vst.msk [vmem:[#allocation2 + $0xa8] sm:$0xff] %vm1010, %v690
      %1033 = vst.msk [vmem:[#allocation2 + $0xb0] sm:$0xff] %vm1010, %v693
      %1034 = vst.msk [vmem:[#allocation2 + $0xb8] sm:$0xff] %vm1010, %v696
      %1035 = vst.msk [vmem:[#allocation2 + $0xc0] sm:$0xff] %vm1010, %v699
      %1036 = vst.msk [vmem:[#allocation2 + $0xc8] sm:$0xff] %vm1010, %v702
      %1037 = vst.msk [vmem:[#allocation2 + $0xd0] sm:$0xff] %vm1010, %v705
      %1038 = vst.msk [vmem:[#allocation2 + $0xd8] sm:$0xff] %vm1010, %v708
      %1039 = vst.msk [vmem:[#allocation2 + $0xe0] sm:$0xff] %vm1010, %v711
      %1040 = vst.msk [vmem:[#allocation2 + $0xe8] sm:$0xff] %vm1010, %v714
      %1041 = vst.msk [vmem:[#allocation2 + $0xf0] sm:$0xff] %vm1010, %v717
      %1042 = vst.msk [vmem:[#allocation2 + $0xf8] sm:$0xff] %vm1010, %v720
      %1043 = vst.msk [vmem:[#allocation2 + $0x100] sm:$0xff] %vm1010, %v723
      %1044 = vst.msk [vmem:[#allocation2 + $0x108] sm:$0xff] %vm1010, %v726
      %1045 = vst.msk [vmem:[#allocation2 + $0x110] sm:$0xff] %vm1010, %v729
      %1046 = vst.msk [vmem:[#allocation2 + $0x118] sm:$0xff] %vm1010, %v732
      %1047 = vst.msk [vmem:[#allocation2 + $0x120] sm:$0xff] %vm1010, %v735
      %1048 = vst.msk [vmem:[#allocation2 + $0x128] sm:$0xff] %vm1010, %v738
      %1049 = vst.msk [vmem:[#allocation2 + $0x130] sm:$0xff] %vm1010, %v741
      %1050 = vst.msk [vmem:[#allocation2 + $0x138] sm:$0xff] %vm1010, %v744
      %1051 = vst.msk [vmem:[#allocation2 + $0x140] sm:$0xff] %vm1010, %v747
      %1052 = vst.msk [vmem:[#allocation2 + $0x148] sm:$0xff] %vm1010, %v750
      %1053 = vst.msk [vmem:[#allocation2 + $0x150] sm:$0xff] %vm1010, %v753
      %1054 = vst.msk [vmem:[#allocation2 + $0x158] sm:$0xff] %vm1010, %v756
      %1055 = vst.msk [vmem:[#allocation2 + $0x160] sm:$0xff] %vm1010, %v759
      %1056 = vst.msk [vmem:[#allocation2 + $0x168] sm:$0xff] %vm1010, %v762
      %1057 = vst.msk [vmem:[#allocation2 + $0x170] sm:$0xff] %vm1010, %v765
      %1058 = vst.msk [vmem:[#allocation2 + $0x178] sm:$0xff] %vm1010, %v768
      %1059 = vst.msk [vmem:[#allocation2 + $0x180] sm:$0xff] %vm1010, %v771
      %1060 = vst.msk [vmem:[#allocation2 + $0x188] sm:$0xff] %vm1010, %v774
      %1061 = vst.msk [vmem:[#allocation2 + $0x190] sm:$0xff] %vm1010, %v777
      %1062 = vst.msk [vmem:[#allocation2 + $0x198] sm:$0xff] %vm1010, %v780
      %1063 = vst.msk [vmem:[#allocation2 + $0x1a0] sm:$0xff] %vm1010, %v783
      %1064 = vst.msk [vmem:[#allocation2 + $0x1a8] sm:$0xff] %vm1010, %v786
      %1065 = vst.msk [vmem:[#allocation2 + $0x1b0] sm:$0xff] %vm1010, %v789
      %1066 = vst.msk [vmem:[#allocation2 + $0x1b8] sm:$0xff] %vm1010, %v792
      %1067 = vst.msk [vmem:[#allocation2 + $0x1c0] sm:$0xff] %vm1010, %v795
      %1068 = vst.msk [vmem:[#allocation2 + $0x1c8] sm:$0xff] %vm1010, %v798
      %1069 = vst.msk [vmem:[#allocation2 + $0x1d0] sm:$0xff] %vm1010, %v801
      %1070 = vst.msk [vmem:[#allocation2 + $0x1d8] sm:$0xff] %vm1010, %v804
      %1071 = vst.msk [vmem:[#allocation2 + $0x1e0] sm:$0xff] %vm1010, %v807
      %1072 = vst.msk [vmem:[#allocation2 + $0x1e8] sm:$0xff] %vm1010, %v810
      %1073 = vst.msk [vmem:[#allocation2 + $0x1f0] sm:$0xff] %vm1010, %v813
      %1074 = vst.msk [vmem:[#allocation2 + $0x1f8] sm:$0xff] %vm1010, %v816
      %1075 = vst.msk [vmem:[#allocation2 + $0x200] sm:$0xff] %vm1010, %v819
      %1076 = vst.msk [vmem:[#allocation2 + $0x208] sm:$0xff] %vm1010, %v822
      %1077 = vst.msk [vmem:[#allocation2 + $0x210] sm:$0xff] %vm1010, %v825
      %1078 = vst.msk [vmem:[#allocation2 + $0x218] sm:$0xff] %vm1010, %v828
      %1079 = vst.msk [vmem:[#allocation2 + $0x220] sm:$0xff] %vm1010, %v831
      %1080 = vst.msk [vmem:[#allocation2 + $0x228] sm:$0xff] %vm1010, %v834
      %1081 = vst.msk [vmem:[#allocation2 + $0x230] sm:$0xff] %vm1010, %v837
      %1082 = vst.msk [vmem:[#allocation2 + $0x238] sm:$0xff] %vm1010, %v840
      %1083 = vst.msk [vmem:[#allocation2 + $0x240] sm:$0xff] %vm1010, %v843
      %1084 = vst.msk [vmem:[#allocation2 + $0x248] sm:$0xff] %vm1010, %v846
      %1085 = vst.msk [vmem:[#allocation2 + $0x250] sm:$0xff] %vm1010, %v849
      %1086 = vst.msk [vmem:[#allocation2 + $0x258] sm:$0xff] %vm1010, %v852
      %1087 = vst.msk [vmem:[#allocation2 + $0x260] sm:$0xff] %vm1010, %v855
      %1088 = vst.msk [vmem:[#allocation2 + $0x268] sm:$0xff] %vm1010, %v858
      %1089 = vst.msk [vmem:[#allocation2 + $0x270] sm:$0xff] %vm1010, %v861
      %1090 = vst.msk [vmem:[#allocation2 + $0x278] sm:$0xff] %vm1010, %v864
      %1091 = vst.msk [vmem:[#allocation2 + $0x280] sm:$0xff] %vm1010, %v867
      %1092 = vst.msk [vmem:[#allocation2 + $0x288] sm:$0xff] %vm1010, %v870
      %1093 = vst.msk [vmem:[#allocation2 + $0x290] sm:$0xff] %vm1010, %v873
      %1094 = vst.msk [vmem:[#allocation2 + $0x298] sm:$0xff] %vm1010, %v876
      %1095 = vst.msk [vmem:[#allocation2 + $0x2a0] sm:$0xff] %vm1010, %v879
      %1096 = vst.msk [vmem:[#allocation2 + $0x2a8] sm:$0xff] %vm1010, %v882
      %1097 = vst.msk [vmem:[#allocation2 + $0x2b0] sm:$0xff] %vm1010, %v885
      %1098 = vst.msk [vmem:[#allocation2 + $0x2b8] sm:$0xff] %vm1010, %v888
      %1099 = vst.msk [vmem:[#allocation2 + $0x2c0] sm:$0xff] %vm1010, %v891
      %1100 = vst.msk [vmem:[#allocation2 + $0x2c8] sm:$0xff] %vm1010, %v894
      %1101 = vst.msk [vmem:[#allocation2 + $0x2d0] sm:$0xff] %vm1010, %v897
      %1102 = vst.msk [vmem:[#allocation2 + $0x2d8] sm:$0xff] %vm1010, %v900
      %1103 = vst.msk [vmem:[#allocation2 + $0x2e0] sm:$0xff] %vm1010, %v903
      %1104 = vst.msk [vmem:[#allocation2 + $0x2e8] sm:$0xff] %vm1010, %v906
      %1105 = vst.msk [vmem:[#allocation2 + $0x2f0] sm:$0xff] %vm1010, %v909
      %1106 = vst.msk [vmem:[#allocation2 + $0x2f8] sm:$0xff] %vm1010, %v912
      %1107 = vst.msk [vmem:[#allocation2 + $0x300] sm:$0xff] %vm1010, %v915
      %1108 = vst.msk [vmem:[#allocation2 + $0x308] sm:$0xff] %vm1010, %v918
      %1109 = vst.msk [vmem:[#allocation2 + $0x310] sm:$0xff] %vm1010, %v921
      %1110 = vst.msk [vmem:[#allocation2 + $0x318] sm:$0xff] %vm1010, %v924
      %1111 = vst.msk [vmem:[#allocation2 + $0x320] sm:$0xff] %vm1010, %v927
      %1112 = vst.msk [vmem:[#allocation2 + $0x328] sm:$0xff] %vm1010, %v930
      %1113 = vst.msk [vmem:[#allocation2 + $0x330] sm:$0xff] %vm1010, %v933
      %1114 = vst.msk [vmem:[#allocation2 + $0x338] sm:$0xff] %vm1010, %v936
      %1115 = vst.msk [vmem:[#allocation2 + $0x340] sm:$0xff] %vm1010, %v939
      %1116 = vst.msk [vmem:[#allocation2 + $0x348] sm:$0xff] %vm1010, %v942
      %1117 = vst.msk [vmem:[#allocation2 + $0x350] sm:$0xff] %vm1010, %v945
      %1118 = vst.msk [vmem:[#allocation2 + $0x358] sm:$0xff] %vm1010, %v948
      %1119 = vst.msk [vmem:[#allocation2 + $0x360] sm:$0xff] %vm1010, %v951
      %1120 = vst.msk [vmem:[#allocation2 + $0x368] sm:$0xff] %vm1010, %v954
      %1121 = vst.msk [vmem:[#allocation2 + $0x370] sm:$0xff] %vm1010, %v957
      %1122 = vst.msk [vmem:[#allocation2 + $0x378] sm:$0xff] %vm1010, %v960
      %1123 = vst.msk [vmem:[#allocation2 + $0x380] sm:$0xff] %vm1010, %v963
      %1124 = vst.msk [vmem:[#allocation2 + $0x388] sm:$0xff] %vm1010, %v966
      %1125 = vst.msk [vmem:[#allocation2 + $0x390] sm:$0xff] %vm1010, %v969
      %1126 = vst.msk [vmem:[#allocation2 + $0x398] sm:$0xff] %vm1010, %v972
      %1127 = vst.msk [vmem:[#allocation2 + $0x3a0] sm:$0xff] %vm1010, %v975
      %1128 = vst.msk [vmem:[#allocation2 + $0x3a8] sm:$0xff] %vm1010, %v978
      %1129 = vst.msk [vmem:[#allocation2 + $0x3b0] sm:$0xff] %vm1010, %v981
      %1130 = vst.msk [vmem:[#allocation2 + $0x3b8] sm:$0xff] %vm1010, %v984
      %1131 = vst.msk [vmem:[#allocation2 + $0x3c0] sm:$0xff] %vm1010, %v987
      %1132 = vst.msk [vmem:[#allocation2 + $0x3c8] sm:$0xff] %vm1010, %v990
      %1133 = vst.msk [vmem:[#allocation2 + $0x3d0] sm:$0xff] %vm1010, %v993
      %1134 = vst.msk [vmem:[#allocation2 + $0x3d8] sm:$0xff] %vm1010, %v996
      %1135 = vst.msk [vmem:[#allocation2 + $0x3e0] sm:$0xff] %vm1010, %v999
      %1136 = vst.msk [vmem:[#allocation2 + $0x3e8] sm:$0xff] %vm1010, %v1002
      %1137 = vst.msk [vmem:[#allocation2 + $0x3f0] sm:$0xff] %vm1010, %v1005
      %1138 = vst.msk [vmem:[#allocation2 + $0x3f8] sm:$0xff] %vm1010, %v1008
      %1267 = vrot.lane.b32.xlu0 %v627, 112
      %v1268 = vpop.permute.xlu0 %1267
      %1269 = vrot.lane.b32.xlu0 %v630, 112
      %v1270 = vpop.permute.xlu0 %1269
      %1271 = vrot.lane.b32.xlu0 %v633, 112
      %v1272 = vpop.permute.xlu0 %1271
      %1273 = vrot.lane.b32.xlu0 %v636, 112
      %v1274 = vpop.permute.xlu0 %1273
      %1275 = vrot.lane.b32.xlu0 %v639, 112
      %v1276 = vpop.permute.xlu0 %1275
      %1277 = vrot.lane.b32.xlu0 %v642, 112
      %v1278 = vpop.permute.xlu0 %1277
      %1279 = vrot.lane.b32.xlu0 %v645, 112
      %v1280 = vpop.permute.xlu0 %1279
      %1281 = vrot.lane.b32.xlu0 %v648, 112
      %v1282 = vpop.permute.xlu0 %1281
      %1283 = vrot.lane.b32.xlu0 %v651, 112
      %v1284 = vpop.permute.xlu0 %1283
      %1285 = vrot.lane.b32.xlu0 %v654, 112
      %v1286 = vpop.permute.xlu0 %1285
      %1287 = vrot.lane.b32.xlu0 %v657, 112
      %v1288 = vpop.permute.xlu0 %1287
      %1289 = vrot.lane.b32.xlu0 %v660, 112
      %v1290 = vpop.permute.xlu0 %1289
      %1291 = vrot.lane.b32.xlu0 %v663, 112
      %v1292 = vpop.permute.xlu0 %1291
      %1293 = vrot.lane.b32.xlu0 %v666, 112
      %v1294 = vpop.permute.xlu0 %1293
      %1295 = vrot.lane.b32.xlu0 %v669, 112
      %v1296 = vpop.permute.xlu0 %1295
      %1297 = vrot.lane.b32.xlu0 %v672, 112
      %v1298 = vpop.permute.xlu0 %1297
      %1299 = vrot.lane.b32.xlu0 %v675, 112
      %v1300 = vpop.permute.xlu0 %1299
      %1301 = vrot.lane.b32.xlu0 %v678, 112
      %v1302 = vpop.permute.xlu0 %1301
      %1303 = vrot.lane.b32.xlu0 %v681, 112
      %v1304 = vpop.permute.xlu0 %1303
      %1305 = vrot.lane.b32.xlu0 %v684, 112
      %v1306 = vpop.permute.xlu0 %1305
      %1307 = vrot.lane.b32.xlu0 %v687, 112
      %v1308 = vpop.permute.xlu0 %1307
      %1309 = vrot.lane.b32.xlu0 %v690, 112
      %v1310 = vpop.permute.xlu0 %1309
      %1311 = vrot.lane.b32.xlu0 %v693, 112
      %v1312 = vpop.permute.xlu0 %1311
      %1313 = vrot.lane.b32.xlu0 %v696, 112
      %v1314 = vpop.permute.xlu0 %1313
      %1315 = vrot.lane.b32.xlu0 %v699, 112
      %v1316 = vpop.permute.xlu0 %1315
      %1317 = vrot.lane.b32.xlu0 %v702, 112
      %v1318 = vpop.permute.xlu0 %1317
      %1319 = vrot.lane.b32.xlu0 %v705, 112
      %v1320 = vpop.permute.xlu0 %1319
      %1321 = vrot.lane.b32.xlu0 %v708, 112
      %v1322 = vpop.permute.xlu0 %1321
      %1323 = vrot.lane.b32.xlu0 %v711, 112
      %v1324 = vpop.permute.xlu0 %1323
      %1325 = vrot.lane.b32.xlu0 %v714, 112
      %v1326 = vpop.permute.xlu0 %1325
      %1327 = vrot.lane.b32.xlu0 %v717, 112
      %v1328 = vpop.permute.xlu0 %1327
      %1329 = vrot.lane.b32.xlu0 %v720, 112
      %v1330 = vpop.permute.xlu0 %1329
      %1331 = vrot.lane.b32.xlu0 %v723, 112
      %v1332 = vpop.permute.xlu0 %1331
      %1333 = vrot.lane.b32.xlu0 %v726, 112
      %v1334 = vpop.permute.xlu0 %1333
      %1335 = vrot.lane.b32.xlu0 %v729, 112
      %v1336 = vpop.permute.xlu0 %1335
      %1337 = vrot.lane.b32.xlu0 %v732, 112
      %v1338 = vpop.permute.xlu0 %1337
      %1339 = vrot.lane.b32.xlu0 %v735, 112
      %v1340 = vpop.permute.xlu0 %1339
      %1341 = vrot.lane.b32.xlu0 %v738, 112
      %v1342 = vpop.permute.xlu0 %1341
      %1343 = vrot.lane.b32.xlu0 %v741, 112
      %v1344 = vpop.permute.xlu0 %1343
      %1345 = vrot.lane.b32.xlu0 %v744, 112
      %v1346 = vpop.permute.xlu0 %1345
      %1347 = vrot.lane.b32.xlu0 %v747, 112
      %v1348 = vpop.permute.xlu0 %1347
      %1349 = vrot.lane.b32.xlu0 %v750, 112
      %v1350 = vpop.permute.xlu0 %1349
      %1351 = vrot.lane.b32.xlu0 %v753, 112
      %v1352 = vpop.permute.xlu0 %1351
      %1353 = vrot.lane.b32.xlu0 %v756, 112
      %v1354 = vpop.permute.xlu0 %1353
      %1355 = vrot.lane.b32.xlu0 %v759, 112
      %v1356 = vpop.permute.xlu0 %1355
      %1357 = vrot.lane.b32.xlu0 %v762, 112
      %v1358 = vpop.permute.xlu0 %1357
      %1359 = vrot.lane.b32.xlu0 %v765, 112
      %v1360 = vpop.permute.xlu0 %1359
      %1361 = vrot.lane.b32.xlu0 %v768, 112
      %v1362 = vpop.permute.xlu0 %1361
      %1363 = vrot.lane.b32.xlu0 %v771, 112
      %v1364 = vpop.permute.xlu0 %1363
      %1365 = vrot.lane.b32.xlu0 %v774, 112
      %v1366 = vpop.permute.xlu0 %1365
      %1367 = vrot.lane.b32.xlu0 %v777, 112
      %v1368 = vpop.permute.xlu0 %1367
      %1369 = vrot.lane.b32.xlu0 %v780, 112
      %v1370 = vpop.permute.xlu0 %1369
      %1371 = vrot.lane.b32.xlu0 %v783, 112
      %v1372 = vpop.permute.xlu0 %1371
      %1373 = vrot.lane.b32.xlu0 %v786, 112
      %v1374 = vpop.permute.xlu0 %1373
      %1375 = vrot.lane.b32.xlu0 %v789, 112
      %v1376 = vpop.permute.xlu0 %1375
      %1377 = vrot.lane.b32.xlu0 %v792, 112
      %v1378 = vpop.permute.xlu0 %1377
      %1379 = vrot.lane.b32.xlu0 %v795, 112
      %v1380 = vpop.permute.xlu0 %1379
      %1381 = vrot.lane.b32.xlu0 %v798, 112
      %v1382 = vpop.permute.xlu0 %1381
      %1383 = vrot.lane.b32.xlu0 %v801, 112
      %v1384 = vpop.permute.xlu0 %1383
      %1385 = vrot.lane.b32.xlu0 %v804, 112
      %v1386 = vpop.permute.xlu0 %1385
      %1387 = vrot.lane.b32.xlu0 %v807, 112
      %v1388 = vpop.permute.xlu0 %1387
      %1389 = vrot.lane.b32.xlu0 %v810, 112
      %v1390 = vpop.permute.xlu0 %1389
      %1391 = vrot.lane.b32.xlu0 %v813, 112
      %v1392 = vpop.permute.xlu0 %1391
      %1393 = vrot.lane.b32.xlu0 %v816, 112
      %v1394 = vpop.permute.xlu0 %1393
      %1395 = vrot.lane.b32.xlu0 %v819, 112
      %v1396 = vpop.permute.xlu0 %1395
      %1397 = vrot.lane.b32.xlu0 %v822, 112
      %v1398 = vpop.permute.xlu0 %1397
      %1399 = vrot.lane.b32.xlu0 %v825, 112
      %v1400 = vpop.permute.xlu0 %1399
      %1401 = vrot.lane.b32.xlu0 %v828, 112
      %v1402 = vpop.permute.xlu0 %1401
      %1403 = vrot.lane.b32.xlu0 %v831, 112
      %v1404 = vpop.permute.xlu0 %1403
      %1405 = vrot.lane.b32.xlu0 %v834, 112
      %v1406 = vpop.permute.xlu0 %1405
      %1407 = vrot.lane.b32.xlu0 %v837, 112
      %v1408 = vpop.permute.xlu0 %1407
      %1409 = vrot.lane.b32.xlu0 %v840, 112
      %v1410 = vpop.permute.xlu0 %1409
      %1411 = vrot.lane.b32.xlu0 %v843, 112
      %v1412 = vpop.permute.xlu0 %1411
      %1413 = vrot.lane.b32.xlu0 %v846, 112
      %v1414 = vpop.permute.xlu0 %1413
      %1415 = vrot.lane.b32.xlu0 %v849, 112
      %v1416 = vpop.permute.xlu0 %1415
      %1417 = vrot.lane.b32.xlu0 %v852, 112
      %v1418 = vpop.permute.xlu0 %1417
      %1419 = vrot.lane.b32.xlu0 %v855, 112
      %v1420 = vpop.permute.xlu0 %1419
      %1421 = vrot.lane.b32.xlu0 %v858, 112
      %v1422 = vpop.permute.xlu0 %1421
      %1423 = vrot.lane.b32.xlu0 %v861, 112
      %v1424 = vpop.permute.xlu0 %1423
      %1425 = vrot.lane.b32.xlu0 %v864, 112
      %v1426 = vpop.permute.xlu0 %1425
      %1427 = vrot.lane.b32.xlu0 %v867, 112
      %v1428 = vpop.permute.xlu0 %1427
      %1429 = vrot.lane.b32.xlu0 %v870, 112
      %v1430 = vpop.permute.xlu0 %1429
      %1431 = vrot.lane.b32.xlu0 %v873, 112
      %v1432 = vpop.permute.xlu0 %1431
      %1433 = vrot.lane.b32.xlu0 %v876, 112
      %v1434 = vpop.permute.xlu0 %1433
      %1435 = vrot.lane.b32.xlu0 %v879, 112
      %v1436 = vpop.permute.xlu0 %1435
      %1437 = vrot.lane.b32.xlu0 %v882, 112
      %v1438 = vpop.permute.xlu0 %1437
      %1439 = vrot.lane.b32.xlu0 %v885, 112
      %v1440 = vpop.permute.xlu0 %1439
      %1441 = vrot.lane.b32.xlu0 %v888, 112
      %v1442 = vpop.permute.xlu0 %1441
      %1443 = vrot.lane.b32.xlu0 %v891, 112
      %v1444 = vpop.permute.xlu0 %1443
      %1445 = vrot.lane.b32.xlu0 %v894, 112
      %v1446 = vpop.permute.xlu0 %1445
      %1447 = vrot.lane.b32.xlu0 %v897, 112
      %v1448 = vpop.permute.xlu0 %1447
      %1449 = vrot.lane.b32.xlu0 %v900, 112
      %v1450 = vpop.permute.xlu0 %1449
      %1451 = vrot.lane.b32.xlu0 %v903, 112
      %v1452 = vpop.permute.xlu0 %1451
      %1453 = vrot.lane.b32.xlu0 %v906, 112
      %v1454 = vpop.permute.xlu0 %1453
      %1455 = vrot.lane.b32.xlu0 %v909, 112
      %v1456 = vpop.permute.xlu0 %1455
      %1457 = vrot.lane.b32.xlu0 %v912, 112
      %v1458 = vpop.permute.xlu0 %1457
      %1459 = vrot.lane.b32.xlu0 %v915, 112
      %v1460 = vpop.permute.xlu0 %1459
      %1461 = vrot.lane.b32.xlu0 %v918, 112
      %v1462 = vpop.permute.xlu0 %1461
      %1463 = vrot.lane.b32.xlu0 %v921, 112
      %v1464 = vpop.permute.xlu0 %1463
      %1465 = vrot.lane.b32.xlu0 %v924, 112
      %v1466 = vpop.permute.xlu0 %1465
      %1467 = vrot.lane.b32.xlu0 %v927, 112
      %v1468 = vpop.permute.xlu0 %1467
      %1469 = vrot.lane.b32.xlu0 %v930, 112
      %v1470 = vpop.permute.xlu0 %1469
      %1471 = vrot.lane.b32.xlu0 %v933, 112
      %v1472 = vpop.permute.xlu0 %1471
      %1473 = vrot.lane.b32.xlu0 %v936, 112
      %v1474 = vpop.permute.xlu0 %1473
      %1475 = vrot.lane.b32.xlu0 %v939, 112
      %v1476 = vpop.permute.xlu0 %1475
      %1477 = vrot.lane.b32.xlu0 %v942, 112
      %v1478 = vpop.permute.xlu0 %1477
      %1479 = vrot.lane.b32.xlu0 %v945, 112
      %v1480 = vpop.permute.xlu0 %1479
      %1481 = vrot.lane.b32.xlu0 %v948, 112
      %v1482 = vpop.permute.xlu0 %1481
      %1483 = vrot.lane.b32.xlu0 %v951, 112
      %v1484 = vpop.permute.xlu0 %1483
      %1485 = vrot.lane.b32.xlu0 %v954, 112
      %v1486 = vpop.permute.xlu0 %1485
      %1487 = vrot.lane.b32.xlu0 %v957, 112
      %v1488 = vpop.permute.xlu0 %1487
      %1489 = vrot.lane.b32.xlu0 %v960, 112
      %v1490 = vpop.permute.xlu0 %1489
      %1491 = vrot.lane.b32.xlu0 %v963, 112
      %v1492 = vpop.permute.xlu0 %1491
      %1493 = vrot.lane.b32.xlu0 %v966, 112
      %v1494 = vpop.permute.xlu0 %1493
      %1495 = vrot.lane.b32.xlu0 %v969, 112
      %v1496 = vpop.permute.xlu0 %1495
      %1497 = vrot.lane.b32.xlu0 %v972, 112
      %v1498 = vpop.permute.xlu0 %1497
      %1499 = vrot.lane.b32.xlu0 %v975, 112
      %v1500 = vpop.permute.xlu0 %1499
      %1501 = vrot.lane.b32.xlu0 %v978, 112
      %v1502 = vpop.permute.xlu0 %1501
      %1503 = vrot.lane.b32.xlu0 %v981, 112
      %v1504 = vpop.permute.xlu0 %1503
      %1505 = vrot.lane.b32.xlu0 %v984, 112
      %v1506 = vpop.permute.xlu0 %1505
      %1507 = vrot.lane.b32.xlu0 %v987, 112
      %v1508 = vpop.permute.xlu0 %1507
      %1509 = vrot.lane.b32.xlu0 %v990, 112
      %v1510 = vpop.permute.xlu0 %1509
      %1511 = vrot.lane.b32.xlu0 %v993, 112
      %v1512 = vpop.permute.xlu0 %1511
      %1513 = vrot.lane.b32.xlu0 %v996, 112
      %v1514 = vpop.permute.xlu0 %1513
      %1515 = vrot.lane.b32.xlu0 %v999, 112
      %v1516 = vpop.permute.xlu0 %1515
      %1517 = vrot.lane.b32.xlu0 %v1002, 112
      %v1518 = vpop.permute.xlu0 %1517
      %1519 = vrot.lane.b32.xlu0 %v1005, 112
      %v1520 = vpop.permute.xlu0 %1519
      %1521 = vrot.lane.b32.xlu0 %v1008, 112
      %v1522 = vpop.permute.xlu0 %1521
      %1651 = vst.msk [vmem:[#allocation3] sm:$0xff] %vm1010, %v1268
      %1652 = vst.msk [vmem:[#allocation3 + $0x8] sm:$0xff] %vm1010, %v1270
      %1653 = vst.msk [vmem:[#allocation3 + $0x10] sm:$0xff] %vm1010, %v1272
      %1654 = vst.msk [vmem:[#allocation3 + $0x18] sm:$0xff] %vm1010, %v1274
      %1655 = vst.msk [vmem:[#allocation3 + $0x20] sm:$0xff] %vm1010, %v1276
      %1656 = vst.msk [vmem:[#allocation3 + $0x28] sm:$0xff] %vm1010, %v1278
      %1657 = vst.msk [vmem:[#allocation3 + $0x30] sm:$0xff] %vm1010, %v1280
      %1658 = vst.msk [vmem:[#allocation3 + $0x38] sm:$0xff] %vm1010, %v1282
      %1659 = vst.msk [vmem:[#allocation3 + $0x40] sm:$0xff] %vm1010, %v1284
      %1660 = vst.msk [vmem:[#allocation3 + $0x48] sm:$0xff] %vm1010, %v1286
      %1661 = vst.msk [vmem:[#allocation3 + $0x50] sm:$0xff] %vm1010, %v1288
      %1662 = vst.msk [vmem:[#allocation3 + $0x58] sm:$0xff] %vm1010, %v1290
      %1663 = vst.msk [vmem:[#allocation3 + $0x60] sm:$0xff] %vm1010, %v1292
      %1664 = vst.msk [vmem:[#allocation3 + $0x68] sm:$0xff] %vm1010, %v1294
      %1665 = vst.msk [vmem:[#allocation3 + $0x70] sm:$0xff] %vm1010, %v1296
      %1666 = vst.msk [vmem:[#allocation3 + $0x78] sm:$0xff] %vm1010, %v1298
      %1667 = vst.msk [vmem:[#allocation3 + $0x80] sm:$0xff] %vm1010, %v1300
      %1668 = vst.msk [vmem:[#allocation3 + $0x88] sm:$0xff] %vm1010, %v1302
      %1669 = vst.msk [vmem:[#allocation3 + $0x90] sm:$0xff] %vm1010, %v1304
      %1670 = vst.msk [vmem:[#allocation3 + $0x98] sm:$0xff] %vm1010, %v1306
      %1671 = vst.msk [vmem:[#allocation3 + $0xa0] sm:$0xff] %vm1010, %v1308
      %1672 = vst.msk [vmem:[#allocation3 + $0xa8] sm:$0xff] %vm1010, %v1310
      %1673 = vst.msk [vmem:[#allocation3 + $0xb0] sm:$0xff] %vm1010, %v1312
      %1674 = vst.msk [vmem:[#allocation3 + $0xb8] sm:$0xff] %vm1010, %v1314
      %1675 = vst.msk [vmem:[#allocation3 + $0xc0] sm:$0xff] %vm1010, %v1316
      %1676 = vst.msk [vmem:[#allocation3 + $0xc8] sm:$0xff] %vm1010, %v1318
      %1677 = vst.msk [vmem:[#allocation3 + $0xd0] sm:$0xff] %vm1010, %v1320
      %1678 = vst.msk [vmem:[#allocation3 + $0xd8] sm:$0xff] %vm1010, %v1322
      %1679 = vst.msk [vmem:[#allocation3 + $0xe0] sm:$0xff] %vm1010, %v1324
      %1680 = vst.msk [vmem:[#allocation3 + $0xe8] sm:$0xff] %vm1010, %v1326
      %1681 = vst.msk [vmem:[#allocation3 + $0xf0] sm:$0xff] %vm1010, %v1328
      %1682 = vst.msk [vmem:[#allocation3 + $0xf8] sm:$0xff] %vm1010, %v1330
      %1683 = vst.msk [vmem:[#allocation3 + $0x100] sm:$0xff] %vm1010, %v1332
      %1684 = vst.msk [vmem:[#allocation3 + $0x108] sm:$0xff] %vm1010, %v1334
      %1685 = vst.msk [vmem:[#allocation3 + $0x110] sm:$0xff] %vm1010, %v1336
      %1686 = vst.msk [vmem:[#allocation3 + $0x118] sm:$0xff] %vm1010, %v1338
      %1687 = vst.msk [vmem:[#allocation3 + $0x120] sm:$0xff] %vm1010, %v1340
      %1688 = vst.msk [vmem:[#allocation3 + $0x128] sm:$0xff] %vm1010, %v1342
      %1689 = vst.msk [vmem:[#allocation3 + $0x130] sm:$0xff] %vm1010, %v1344
      %1690 = vst.msk [vmem:[#allocation3 + $0x138] sm:$0xff] %vm1010, %v1346
      %1691 = vst.msk [vmem:[#allocation3 + $0x140] sm:$0xff] %vm1010, %v1348
      %1692 = vst.msk [vmem:[#allocation3 + $0x148] sm:$0xff] %vm1010, %v1350
      %1693 = vst.msk [vmem:[#allocation3 + $0x150] sm:$0xff] %vm1010, %v1352
      %1694 = vst.msk [vmem:[#allocation3 + $0x158] sm:$0xff] %vm1010, %v1354
      %1695 = vst.msk [vmem:[#allocation3 + $0x160] sm:$0xff] %vm1010, %v1356
      %1696 = vst.msk [vmem:[#allocation3 + $0x168] sm:$0xff] %vm1010, %v1358
      %1697 = vst.msk [vmem:[#allocation3 + $0x170] sm:$0xff] %vm1010, %v1360
      %1698 = vst.msk [vmem:[#allocation3 + $0x178] sm:$0xff] %vm1010, %v1362
      %1699 = vst.msk [vmem:[#allocation3 + $0x180] sm:$0xff] %vm1010, %v1364
      %1700 = vst.msk [vmem:[#allocation3 + $0x188] sm:$0xff] %vm1010, %v1366
      %1701 = vst.msk [vmem:[#allocation3 + $0x190] sm:$0xff] %vm1010, %v1368
      %1702 = vst.msk [vmem:[#allocation3 + $0x198] sm:$0xff] %vm1010, %v1370
      %1703 = vst.msk [vmem:[#allocation3 + $0x1a0] sm:$0xff] %vm1010, %v1372
      %1704 = vst.msk [vmem:[#allocation3 + $0x1a8] sm:$0xff] %vm1010, %v1374
      %1705 = vst.msk [vmem:[#allocation3 + $0x1b0] sm:$0xff] %vm1010, %v1376
      %1706 = vst.msk [vmem:[#allocation3 + $0x1b8] sm:$0xff] %vm1010, %v1378
      %1707 = vst.msk [vmem:[#allocation3 + $0x1c0] sm:$0xff] %vm1010, %v1380
      %1708 = vst.msk [vmem:[#allocation3 + $0x1c8] sm:$0xff] %vm1010, %v1382
      %1709 = vst.msk [vmem:[#allocation3 + $0x1d0] sm:$0xff] %vm1010, %v1384
      %1710 = vst.msk [vmem:[#allocation3 + $0x1d8] sm:$0xff] %vm1010, %v1386
      %1711 = vst.msk [vmem:[#allocation3 + $0x1e0] sm:$0xff] %vm1010, %v1388
      %1712 = vst.msk [vmem:[#allocation3 + $0x1e8] sm:$0xff] %vm1010, %v1390
      %1713 = vst.msk [vmem:[#allocation3 + $0x1f0] sm:$0xff] %vm1010, %v1392
      %1714 = vst.msk [vmem:[#allocation3 + $0x1f8] sm:$0xff] %vm1010, %v1394
      %1715 = vst.msk [vmem:[#allocation3 + $0x200] sm:$0xff] %vm1010, %v1396
      %1716 = vst.msk [vmem:[#allocation3 + $0x208] sm:$0xff] %vm1010, %v1398
      %1717 = vst.msk [vmem:[#allocation3 + $0x210] sm:$0xff] %vm1010, %v1400
      %1718 = vst.msk [vmem:[#allocation3 + $0x218] sm:$0xff] %vm1010, %v1402
      %1719 = vst.msk [vmem:[#allocation3 + $0x220] sm:$0xff] %vm1010, %v1404
      %1720 = vst.msk [vmem:[#allocation3 + $0x228] sm:$0xff] %vm1010, %v1406
      %1721 = vst.msk [vmem:[#allocation3 + $0x230] sm:$0xff] %vm1010, %v1408
      %1722 = vst.msk [vmem:[#allocation3 + $0x238] sm:$0xff] %vm1010, %v1410
      %1723 = vst.msk [vmem:[#allocation3 + $0x240] sm:$0xff] %vm1010, %v1412
      %1724 = vst.msk [vmem:[#allocation3 + $0x248] sm:$0xff] %vm1010, %v1414
      %1725 = vst.msk [vmem:[#allocation3 + $0x250] sm:$0xff] %vm1010, %v1416
      %1726 = vst.msk [vmem:[#allocation3 + $0x258] sm:$0xff] %vm1010, %v1418
      %1727 = vst.msk [vmem:[#allocation3 + $0x260] sm:$0xff] %vm1010, %v1420
      %1728 = vst.msk [vmem:[#allocation3 + $0x268] sm:$0xff] %vm1010, %v1422
      %1729 = vst.msk [vmem:[#allocation3 + $0x270] sm:$0xff] %vm1010, %v1424
      %1730 = vst.msk [vmem:[#allocation3 + $0x278] sm:$0xff] %vm1010, %v1426
      %1731 = vst.msk [vmem:[#allocation3 + $0x280] sm:$0xff] %vm1010, %v1428
      %1732 = vst.msk [vmem:[#allocation3 + $0x288] sm:$0xff] %vm1010, %v1430
      %1733 = vst.msk [vmem:[#allocation3 + $0x290] sm:$0xff] %vm1010, %v1432
      %1734 = vst.msk [vmem:[#allocation3 + $0x298] sm:$0xff] %vm1010, %v1434
      %1735 = vst.msk [vmem:[#allocation3 + $0x2a0] sm:$0xff] %vm1010, %v1436
      %1736 = vst.msk [vmem:[#allocation3 + $0x2a8] sm:$0xff] %vm1010, %v1438
      %1737 = vst.msk [vmem:[#allocation3 + $0x2b0] sm:$0xff] %vm1010, %v1440
      %1738 = vst.msk [vmem:[#allocation3 + $0x2b8] sm:$0xff] %vm1010, %v1442
      %1739 = vst.msk [vmem:[#allocation3 + $0x2c0] sm:$0xff] %vm1010, %v1444
      %1740 = vst.msk [vmem:[#allocation3 + $0x2c8] sm:$0xff] %vm1010, %v1446
      %1741 = vst.msk [vmem:[#allocation3 + $0x2d0] sm:$0xff] %vm1010, %v1448
      %1742 = vst.msk [vmem:[#allocation3 + $0x2d8] sm:$0xff] %vm1010, %v1450
      %1743 = vst.msk [vmem:[#allocation3 + $0x2e0] sm:$0xff] %vm1010, %v1452
      %1744 = vst.msk [vmem:[#allocation3 + $0x2e8] sm:$0xff] %vm1010, %v1454
      %1745 = vst.msk [vmem:[#allocation3 + $0x2f0] sm:$0xff] %vm1010, %v1456
      %1746 = vst.msk [vmem:[#allocation3 + $0x2f8] sm:$0xff] %vm1010, %v1458
      %1747 = vst.msk [vmem:[#allocation3 + $0x300] sm:$0xff] %vm1010, %v1460
      %1748 = vst.msk [vmem:[#allocation3 + $0x308] sm:$0xff] %vm1010, %v1462
      %1749 = vst.msk [vmem:[#allocation3 + $0x310] sm:$0xff] %vm1010, %v1464
      %1750 = vst.msk [vmem:[#allocation3 + $0x318] sm:$0xff] %vm1010, %v1466
      %1751 = vst.msk [vmem:[#allocation3 + $0x320] sm:$0xff] %vm1010, %v1468
      %1752 = vst.msk [vmem:[#allocation3 + $0x328] sm:$0xff] %vm1010, %v1470
      %1753 = vst.msk [vmem:[#allocation3 + $0x330] sm:$0xff] %vm1010, %v1472
      %1754 = vst.msk [vmem:[#allocation3 + $0x338] sm:$0xff] %vm1010, %v1474
      %1755 = vst.msk [vmem:[#allocation3 + $0x340] sm:$0xff] %vm1010, %v1476
      %1756 = vst.msk [vmem:[#allocation3 + $0x348] sm:$0xff] %vm1010, %v1478
      %1757 = vst.msk [vmem:[#allocation3 + $0x350] sm:$0xff] %vm1010, %v1480
      %1758 = vst.msk [vmem:[#allocation3 + $0x358] sm:$0xff] %vm1010, %v1482
      %1759 = vst.msk [vmem:[#allocation3 + $0x360] sm:$0xff] %vm1010, %v1484
      %1760 = vst.msk [vmem:[#allocation3 + $0x368] sm:$0xff] %vm1010, %v1486
      %1761 = vst.msk [vmem:[#allocation3 + $0x370] sm:$0xff] %vm1010, %v1488
      %1762 = vst.msk [vmem:[#allocation3 + $0x378] sm:$0xff] %vm1010, %v1490
      %1763 = vst.msk [vmem:[#allocation3 + $0x380] sm:$0xff] %vm1010, %v1492
      %1764 = vst.msk [vmem:[#allocation3 + $0x388] sm:$0xff] %vm1010, %v1494
      %1765 = vst.msk [vmem:[#allocation3 + $0x390] sm:$0xff] %vm1010, %v1496
      %1766 = vst.msk [vmem:[#allocation3 + $0x398] sm:$0xff] %vm1010, %v1498
      %1767 = vst.msk [vmem:[#allocation3 + $0x3a0] sm:$0xff] %vm1010, %v1500
      %1768 = vst.msk [vmem:[#allocation3 + $0x3a8] sm:$0xff] %vm1010, %v1502
      %1769 = vst.msk [vmem:[#allocation3 + $0x3b0] sm:$0xff] %vm1010, %v1504
      %1770 = vst.msk [vmem:[#allocation3 + $0x3b8] sm:$0xff] %vm1010, %v1506
      %1771 = vst.msk [vmem:[#allocation3 + $0x3c0] sm:$0xff] %vm1010, %v1508
      %1772 = vst.msk [vmem:[#allocation3 + $0x3c8] sm:$0xff] %vm1010, %v1510
      %1773 = vst.msk [vmem:[#allocation3 + $0x3d0] sm:$0xff] %vm1010, %v1512
      %1774 = vst.msk [vmem:[#allocation3 + $0x3d8] sm:$0xff] %vm1010, %v1514
      %1775 = vst.msk [vmem:[#allocation3 + $0x3e0] sm:$0xff] %vm1010, %v1516
      %1776 = vst.msk [vmem:[#allocation3 + $0x3e8] sm:$0xff] %vm1010, %v1518
      %1777 = vst.msk [vmem:[#allocation3 + $0x3f0] sm:$0xff] %vm1010, %v1520
      %1778 = vst.msk [vmem:[#allocation3 + $0x3f8] sm:$0xff] %vm1010, %v1522
      %v1779 = vld [vmem:[%s3] sm:$0x3f]
      %v1780 = vperm.slane %v1779, 0
      %1781 = vst.msk [vmem:[#allocation4] sm:$0xff] %vm224, %v1780
      %v1782 = vperm.slane %v1779, 1
      %s1783 = scalar_lea.vmem [#allocation4], 8
      %1784 = vst.msk [vmem:[%s1783] sm:$0xff] %vm224, %v1782
      %v1785 = vperm.slane %v1779, 2
      %s1786 = scalar_lea.vmem [#allocation4], 16
      %1787 = vst.msk [vmem:[%s1786] sm:$0xff] %vm224, %v1785
      %v1788 = vperm.slane %v1779, 3
      %s1789 = scalar_lea.vmem [#allocation4], 24
      %1790 = vst.msk [vmem:[%s1789] sm:$0xff] %vm224, %v1788
      %v1791 = vperm.slane %v1779, 4
      %s1792 = scalar_lea.vmem [#allocation4], 32
      %1793 = vst.msk [vmem:[%s1792] sm:$0xff] %vm224, %v1791
      %v1794 = vperm.slane %v1779, 5
      %s1795 = scalar_lea.vmem [#allocation4], 40
      %1796 = vst.msk [vmem:[%s1795] sm:$0xff] %vm224, %v1794
      %v1798 = vperm.slane %v83, 0
      %v1801 = vsel %vm224, %v1791, 0
      %1803 = vmatpush.msra.mxu0 0.0
      %1804 = vmatpush.msra.mxu0 0.0
      %1805 = vmatpush.msra.mxu0 0.0
      %1806 = vmatpush.msra.mxu0 0.0
      %1807 = vmatpush.msra.mxu0 0.0
      %1808 = vmatpush.msra.mxu0 0.0
      %1809 = vmatpush.msra.mxu0 0.0
      %1810 = vmatpush.msra.mxu0 0.0
      %1811 = vmatpush.msra.mxu0 0.0
      %1812 = vmatpush.msra.mxu0 0.0
      %1813 = vmatpush.msra.mxu0 0.0
      %1814 = vmatpush.msra.mxu0 0.0
      %1815 = vmatpush.msra.mxu0 %v82
      %1816 = vmatpush.msra.mxu0 %v81
      %1817 = vmatpush.msra.mxu0 %v80
      %1818 = vmatpush.msra.mxu0 %v79
      %1819 = vmatmul.f32.gmra.mxu0 %v1801
      %v1820 = vpop.f32.mrf.mxu0
      %v1821 = vadd.f32 %v1798, %v1820
      %1822 = vdwg.mxu0
      %v1824 = vrot.slane %v1821, 1
      %v1825 = vrot.slane %v1821, 2
      %v1826 = vrot.slane %v1821, 3
      %v1827 = vrot.slane %v1821, 4
      %v1828 = vrot.slane %v1821, 5
      %v1829 = vrot.slane %v1821, 6
      %v1830 = vrot.slane %v1821, 7
      %v1831 = vsel %vm1010, %v1821, 0
      %v1833 = vsel %vm1010, %v627, 0
      %v1835 = vsel %vm1010, %v630, 0
      %v1837 = vsel %vm1010, %v633, 0
      %v1839 = vsel %vm1010, %v636, 0
      %v1841 = vsel %vm1010, %v639, 0
      %v1843 = vsel %vm1010, %v642, 0
      %v1845 = vsel %vm1010, %v645, 0
      %v1847 = vsel %vm1010, %v648, 0
      %v1849 = vsel %vm1010, %v651, 0
      %v1851 = vsel %vm1010, %v654, 0
      %v1853 = vsel %vm1010, %v657, 0
      %v1855 = vsel %vm1010, %v660, 0
      %v1857 = vsel %vm1010, %v663, 0
      %v1859 = vsel %vm1010, %v666, 0
      %v1861 = vsel %vm1010, %v669, 0
      %v1863 = vsel %vm1010, %v672, 0
      %1865 = vmatpush.xpose.msra.mxu0 %v1863
      %1866 = vmatpush.xpose.msra.mxu0 %v1861
      %1867 = vmatpush.xpose.msra.mxu0 %v1859
      %1868 = vmatpush.xpose.msra.mxu0 %v1857
      %1869 = vmatpush.xpose.msra.mxu0 %v1855
      %1870 = vmatpush.xpose.msra.mxu0 %v1853
      %1871 = vmatpush.xpose.msra.mxu0 %v1851
      %1872 = vmatpush.xpose.msra.mxu0 %v1849
      %1873 = vmatpush.xpose.msra.mxu0 %v1847
      %1874 = vmatpush.xpose.msra.mxu0 %v1845
      %1875 = vmatpush.xpose.msra.mxu0 %v1843
      %1876 = vmatpush.xpose.msra.mxu0 %v1841
      %1877 = vmatpush.xpose.msra.mxu0 %v1839
      %1878 = vmatpush.xpose.msra.mxu0 %v1837
      %1879 = vmatpush.xpose.msra.mxu0 %v1835
      %1880 = vmatpush.xpose.msra.mxu0 %v1833
      %1881 = vmatmul.f32.gmra.mxu0 %v1831
      %v1882 = vpop.f32.mrf.mxu0
      %v1883 = vadd.f32 0.0, %v1882
      %1884 = vdwg.mxu0
      %v1885 = vsel %vm1010, %v1824, 0
      %v1887 = vsel %vm1010, %v675, 0
      %v1889 = vsel %vm1010, %v678, 0
      %v1891 = vsel %vm1010, %v681, 0
      %v1893 = vsel %vm1010, %v684, 0
      %v1895 = vsel %vm1010, %v687, 0
      %v1897 = vsel %vm1010, %v690, 0
      %v1899 = vsel %vm1010, %v693, 0
      %v1901 = vsel %vm1010, %v696, 0
      %v1903 = vsel %vm1010, %v699, 0
      %v1905 = vsel %vm1010, %v702, 0
      %v1907 = vsel %vm1010, %v705, 0
      %v1909 = vsel %vm1010, %v708, 0
      %v1911 = vsel %vm1010, %v711, 0
      %v1913 = vsel %vm1010, %v714, 0
      %v1915 = vsel %vm1010, %v717, 0
      %v1917 = vsel %vm1010, %v720, 0
      %1919 = vmatpush.xpose.msra.mxu0 %v1917
      %1920 = vmatpush.xpose.msra.mxu0 %v1915
      %1921 = vmatpush.xpose.msra.mxu0 %v1913
      %1922 = vmatpush.xpose.msra.mxu0 %v1911
      %1923 = vmatpush.xpose.msra.mxu0 %v1909
      %1924 = vmatpush.xpose.msra.mxu0 %v1907
      %1925 = vmatpush.xpose.msra.mxu0 %v1905
      %1926 = vmatpush.xpose.msra.mxu0 %v1903
      %1927 = vmatpush.xpose.msra.mxu0 %v1901
      %1928 = vmatpush.xpose.msra.mxu0 %v1899
      %1929 = vmatpush.xpose.msra.mxu0 %v1897
      %1930 = vmatpush.xpose.msra.mxu0 %v1895
      %1931 = vmatpush.xpose.msra.mxu0 %v1893
      %1932 = vmatpush.xpose.msra.mxu0 %v1891
      %1933 = vmatpush.xpose.msra.mxu0 %v1889
      %1934 = vmatpush.xpose.msra.mxu0 %v1887
      %1935 = vmatmul.f32.gmra.mxu0 %v1885
      %v1936 = vpop.f32.mrf.mxu0
      %v1937 = vadd.f32 0.0, %v1936
      %1938 = vdwg.mxu0
      %v1939 = vsel %vm1010, %v1825, 0
      %v1941 = vsel %vm1010, %v723, 0
      %v1943 = vsel %vm1010, %v726, 0
      %v1945 = vsel %vm1010, %v729, 0
      %v1947 = vsel %vm1010, %v732, 0
      %v1949 = vsel %vm1010, %v735, 0
      %v1951 = vsel %vm1010, %v738, 0
      %v1953 = vsel %vm1010, %v741, 0
      %v1955 = vsel %vm1010, %v744, 0
      %v1957 = vsel %vm1010, %v747, 0
      %v1959 = vsel %vm1010, %v750, 0
      %v1961 = vsel %vm1010, %v753, 0
      %v1963 = vsel %vm1010, %v756, 0
      %v1965 = vsel %vm1010, %v759, 0
      %v1967 = vsel %vm1010, %v762, 0
      %v1969 = vsel %vm1010, %v765, 0
      %v1971 = vsel %vm1010, %v768, 0
      %1973 = vmatpush.xpose.msra.mxu0 %v1971
      %1974 = vmatpush.xpose.msra.mxu0 %v1969
      %1975 = vmatpush.xpose.msra.mxu0 %v1967
      %1976 = vmatpush.xpose.msra.mxu0 %v1965
      %1977 = vmatpush.xpose.msra.mxu0 %v1963
      %1978 = vmatpush.xpose.msra.mxu0 %v1961
      %1979 = vmatpush.xpose.msra.mxu0 %v1959
      %1980 = vmatpush.xpose.msra.mxu0 %v1957
      %1981 = vmatpush.xpose.msra.mxu0 %v1955
      %1982 = vmatpush.xpose.msra.mxu0 %v1953
      %1983 = vmatpush.xpose.msra.mxu0 %v1951
      %1984 = vmatpush.xpose.msra.mxu0 %v1949
      %1985 = vmatpush.xpose.msra.mxu0 %v1947
      %1986 = vmatpush.xpose.msra.mxu0 %v1945
      %1987 = vmatpush.xpose.msra.mxu0 %v1943
      %1988 = vmatpush.xpose.msra.mxu0 %v1941
      %1989 = vmatmul.f32.gmra.mxu0 %v1939
      %v1990 = vpop.f32.mrf.mxu0
      %v1991 = vadd.f32 0.0, %v1990
      %1992 = vdwg.mxu0
      %v1993 = vsel %vm1010, %v1826, 0
      %v1995 = vsel %vm1010, %v771, 0
      %v1997 = vsel %vm1010, %v774, 0
      %v1999 = vsel %vm1010, %v777, 0
      %v2001 = vsel %vm1010, %v780, 0
      %v2003 = vsel %vm1010, %v783, 0
      %v2005 = vsel %vm1010, %v786, 0
      %v2007 = vsel %vm1010, %v789, 0
      %v2009 = vsel %vm1010, %v792, 0
      %v2011 = vsel %vm1010, %v795, 0
      %v2013 = vsel %vm1010, %v798, 0
      %v2015 = vsel %vm1010, %v801, 0
      %v2017 = vsel %vm1010, %v804, 0
      %v2019 = vsel %vm1010, %v807, 0
      %v2021 = vsel %vm1010, %v810, 0
      %v2023 = vsel %vm1010, %v813, 0
      %v2025 = vsel %vm1010, %v816, 0
      %2027 = vmatpush.xpose.msra.mxu0 %v2025
      %2028 = vmatpush.xpose.msra.mxu0 %v2023
      %2029 = vmatpush.xpose.msra.mxu0 %v2021
      %2030 = vmatpush.xpose.msra.mxu0 %v2019
      %2031 = vmatpush.xpose.msra.mxu0 %v2017
      %2032 = vmatpush.xpose.msra.mxu0 %v2015
      %2033 = vmatpush.xpose.msra.mxu0 %v2013
      %2034 = vmatpush.xpose.msra.mxu0 %v2011
      %2035 = vmatpush.xpose.msra.mxu0 %v2009
      %2036 = vmatpush.xpose.msra.mxu0 %v2007
      %2037 = vmatpush.xpose.msra.mxu0 %v2005
      %2038 = vmatpush.xpose.msra.mxu0 %v2003
      %2039 = vmatpush.xpose.msra.mxu0 %v2001
      %2040 = vmatpush.xpose.msra.mxu0 %v1999
      %2041 = vmatpush.xpose.msra.mxu0 %v1997
      %2042 = vmatpush.xpose.msra.mxu0 %v1995
      %2043 = vmatmul.f32.gmra.mxu0 %v1993
      %v2044 = vpop.f32.mrf.mxu0
      %v2045 = vadd.f32 0.0, %v2044
      %2046 = vdwg.mxu0
      %v2047 = vsel %vm1010, %v1827, 0
      %v2049 = vsel %vm1010, %v819, 0
      %v2051 = vsel %vm1010, %v822, 0
      %v2053 = vsel %vm1010, %v825, 0
      %v2055 = vsel %vm1010, %v828, 0
      %v2057 = vsel %vm1010, %v831, 0
      %v2059 = vsel %vm1010, %v834, 0
      %v2061 = vsel %vm1010, %v837, 0
      %v2063 = vsel %vm1010, %v840, 0
      %v2065 = vsel %vm1010, %v843, 0
      %v2067 = vsel %vm1010, %v846, 0
      %v2069 = vsel %vm1010, %v849, 0
      %v2071 = vsel %vm1010, %v852, 0
      %v2073 = vsel %vm1010, %v855, 0
      %v2075 = vsel %vm1010, %v858, 0
      %v2077 = vsel %vm1010, %v861, 0
      %v2079 = vsel %vm1010, %v864, 0
      %2081 = vmatpush.xpose.msra.mxu0 %v2079
      %2082 = vmatpush.xpose.msra.mxu0 %v2077
      %2083 = vmatpush.xpose.msra.mxu0 %v2075
      %2084 = vmatpush.xpose.msra.mxu0 %v2073
      %2085 = vmatpush.xpose.msra.mxu0 %v2071
      %2086 = vmatpush.xpose.msra.mxu0 %v2069
      %2087 = vmatpush.xpose.msra.mxu0 %v2067
      %2088 = vmatpush.xpose.msra.mxu0 %v2065
      %2089 = vmatpush.xpose.msra.mxu0 %v2063
      %2090 = vmatpush.xpose.msra.mxu0 %v2061
      %2091 = vmatpush.xpose.msra.mxu0 %v2059
      %2092 = vmatpush.xpose.msra.mxu0 %v2057
      %2093 = vmatpush.xpose.msra.mxu0 %v2055
      %2094 = vmatpush.xpose.msra.mxu0 %v2053
      %2095 = vmatpush.xpose.msra.mxu0 %v2051
      %2096 = vmatpush.xpose.msra.mxu0 %v2049
      %2097 = vmatmul.f32.gmra.mxu0 %v2047
      %v2098 = vpop.f32.mrf.mxu0
      %v2099 = vadd.f32 0.0, %v2098
      %2100 = vdwg.mxu0
      %v2101 = vsel %vm1010, %v1828, 0
      %v2103 = vsel %vm1010, %v867, 0
      %v2105 = vsel %vm1010, %v870, 0
      %v2107 = vsel %vm1010, %v873, 0
      %v2109 = vsel %vm1010, %v876, 0
      %v2111 = vsel %vm1010, %v879, 0
      %v2113 = vsel %vm1010, %v882, 0
      %v2115 = vsel %vm1010, %v885, 0
      %v2117 = vsel %vm1010, %v888, 0
      %v2119 = vsel %vm1010, %v891, 0
      %v2121 = vsel %vm1010, %v894, 0
      %v2123 = vsel %vm1010, %v897, 0
      %v2125 = vsel %vm1010, %v900, 0
      %v2127 = vsel %vm1010, %v903, 0
      %v2129 = vsel %vm1010, %v906, 0
      %v2131 = vsel %vm1010, %v909, 0
      %v2133 = vsel %vm1010, %v912, 0
      %2135 = vmatpush.xpose.msra.mxu0 %v2133
      %2136 = vmatpush.xpose.msra.mxu0 %v2131
      %2137 = vmatpush.xpose.msra.mxu0 %v2129
      %2138 = vmatpush.xpose.msra.mxu0 %v2127
      %2139 = vmatpush.xpose.msra.mxu0 %v2125
      %2140 = vmatpush.xpose.msra.mxu0 %v2123
      %2141 = vmatpush.xpose.msra.mxu0 %v2121
      %2142 = vmatpush.xpose.msra.mxu0 %v2119
      %2143 = vmatpush.xpose.msra.mxu0 %v2117
      %2144 = vmatpush.xpose.msra.mxu0 %v2115
      %2145 = vmatpush.xpose.msra.mxu0 %v2113
      %2146 = vmatpush.xpose.msra.mxu0 %v2111
      %2147 = vmatpush.xpose.msra.mxu0 %v2109
      %2148 = vmatpush.xpose.msra.mxu0 %v2107
      %2149 = vmatpush.xpose.msra.mxu0 %v2105
      %2150 = vmatpush.xpose.msra.mxu0 %v2103
      %2151 = vmatmul.f32.gmra.mxu0 %v2101
      %v2152 = vpop.f32.mrf.mxu0
      %v2153 = vadd.f32 0.0, %v2152
      %2154 = vdwg.mxu0
      %v2155 = vsel %vm1010, %v1829, 0
      %v2157 = vsel %vm1010, %v915, 0
      %v2159 = vsel %vm1010, %v918, 0
      %v2161 = vsel %vm1010, %v921, 0
      %v2163 = vsel %vm1010, %v924, 0
      %v2165 = vsel %vm1010, %v927, 0
      %v2167 = vsel %vm1010, %v930, 0
      %v2169 = vsel %vm1010, %v933, 0
      %v2171 = vsel %vm1010, %v936, 0
      %v2173 = vsel %vm1010, %v939, 0
      %v2175 = vsel %vm1010, %v942, 0
      %v2177 = vsel %vm1010, %v945, 0
      %v2179 = vsel %vm1010, %v948, 0
      %v2181 = vsel %vm1010, %v951, 0
      %v2183 = vsel %vm1010, %v954, 0
      %v2185 = vsel %vm1010, %v957, 0
      %v2187 = vsel %vm1010, %v960, 0
      %2189 = vmatpush.xpose.msra.mxu0 %v2187
      %2190 = vmatpush.xpose.msra.mxu0 %v2185
      %2191 = vmatpush.xpose.msra.mxu0 %v2183
      %2192 = vmatpush.xpose.msra.mxu0 %v2181
      %2193 = vmatpush.xpose.msra.mxu0 %v2179
      %2194 = vmatpush.xpose.msra.mxu0 %v2177
      %2195 = vmatpush.xpose.msra.mxu0 %v2175
      %2196 = vmatpush.xpose.msra.mxu0 %v2173
      %2197 = vmatpush.xpose.msra.mxu0 %v2171
      %2198 = vmatpush.xpose.msra.mxu0 %v2169
      %2199 = vmatpush.xpose.msra.mxu0 %v2167
      %2200 = vmatpush.xpose.msra.mxu0 %v2165
      %2201 = vmatpush.xpose.msra.mxu0 %v2163
      %2202 = vmatpush.xpose.msra.mxu0 %v2161
      %2203 = vmatpush.xpose.msra.mxu0 %v2159
      %2204 = vmatpush.xpose.msra.mxu0 %v2157
      %2205 = vmatmul.f32.gmra.mxu0 %v2155
      %v2206 = vpop.f32.mrf.mxu0
      %v2207 = vadd.f32 0.0, %v2206
      %2208 = vdwg.mxu0
      %v2209 = vsel %vm1010, %v1830, 0
      %v2211 = vsel %vm1010, %v963, 0
      %v2213 = vsel %vm1010, %v966, 0
      %v2215 = vsel %vm1010, %v969, 0
      %v2217 = vsel %vm1010, %v972, 0
      %v2219 = vsel %vm1010, %v975, 0
      %v2221 = vsel %vm1010, %v978, 0
      %v2223 = vsel %vm1010, %v981, 0
      %v2225 = vsel %vm1010, %v984, 0
      %v2227 = vsel %vm1010, %v987, 0
      %v2229 = vsel %vm1010, %v990, 0
      %v2231 = vsel %vm1010, %v993, 0
      %v2233 = vsel %vm1010, %v996, 0
      %v2235 = vsel %vm1010, %v999, 0
      %v2237 = vsel %vm1010, %v1002, 0
      %v2239 = vsel %vm1010, %v1005, 0
      %v2241 = vsel %vm1010, %v1008, 0
      %2243 = vmatpush.xpose.msra.mxu0 %v2241
      %2244 = vmatpush.xpose.msra.mxu0 %v2239
      %2245 = vmatpush.xpose.msra.mxu0 %v2237
      %2246 = vmatpush.xpose.msra.mxu0 %v2235
      %2247 = vmatpush.xpose.msra.mxu0 %v2233
      %2248 = vmatpush.xpose.msra.mxu0 %v2231
      %2249 = vmatpush.xpose.msra.mxu0 %v2229
      %2250 = vmatpush.xpose.msra.mxu0 %v2227
      %2251 = vmatpush.xpose.msra.mxu0 %v2225
      %2252 = vmatpush.xpose.msra.mxu0 %v2223
      %2253 = vmatpush.xpose.msra.mxu0 %v2221
      %2254 = vmatpush.xpose.msra.mxu0 %v2219
      %2255 = vmatpush.xpose.msra.mxu0 %v2217
      %2256 = vmatpush.xpose.msra.mxu0 %v2215
      %2257 = vmatpush.xpose.msra.mxu0 %v2213
      %2258 = vmatpush.xpose.msra.mxu0 %v2211
      %2259 = vmatmul.f32.gmra.mxu0 %v2209
      %v2260 = vpop.f32.mrf.mxu0
      %v2261 = vadd.f32 0.0, %v2260
      %2262 = vdwg.mxu0
      %v2271 = vrot.slane %v1937, 7
      %vm2272 = vcmask 1041409
      %v2273 = vsel %vm2272, %v2271, %v1883
      %v2274 = vrot.slane %v1991, 6
      %vm2275 = vcmask 1042434
      %v2276 = vsel %vm2275, %v2274, %v2273
      %v2277 = vrot.slane %v2045, 5
      %vm2278 = vcmask 1043459
      %v2279 = vsel %vm2278, %v2277, %v2276
      %v2280 = vrot.slane %v2099, 4
      %vm2281 = vcmask 1044484
      %v2282 = vsel %vm2281, %v2280, %v2279
      %v2283 = vrot.slane %v2153, 3
      %vm2284 = vcmask 1045509
      %v2285 = vsel %vm2284, %v2283, %v2282
      %v2286 = vrot.slane %v2207, 2
      %vm2287 = vcmask 1046534
      %v2288 = vsel %vm2287, %v2286, %v2285
      %v2289 = vrot.slane %v2261, 1
      %vm2290 = vcmask 1047559
      %v2291 = vsel %vm2290, %v2289, %v2288
      %2293 = vmax.xlane.f32.xlu0 %v2291
      %v2294 = vpop.xlane.xlu0 %2293
      %v2296 = vrot.slane %v2294, 1
      %v2297 = vrot.slane %v2294, 2
      %v2298 = vrot.slane %v2294, 3
      %v2299 = vrot.slane %v2294, 4
      %v2300 = vrot.slane %v2294, 5
      %v2301 = vrot.slane %v2294, 6
      %v2302 = vrot.slane %v2294, 7
      %v2311 = vsub.f32 %v1883, %v2294
      %v2312 = vsub.f32 %v1937, %v2296
      %v2313 = vsub.f32 %v1991, %v2297
      %v2314 = vsub.f32 %v2045, %v2298
      %v2315 = vsub.f32 %v2099, %v2299
      %v2316 = vsub.f32 %v2153, %v2300
      %v2317 = vsub.f32 %v2207, %v2301
      %v2318 = vsub.f32 %v2261, %v2302
      %v2319 = vmul.f32 %v2311, 1.442695
      %v2320 = vpow.pop %v2319
      %v2321 = vmul.f32 %v2312, 1.442695
      %v2322 = vpow.pop %v2321
      %v2323 = vmul.f32 %v2313, 1.442695
      %v2324 = vpow.pop %v2323
      %v2325 = vmul.f32 %v2314, 1.442695
      %v2326 = vpow.pop %v2325
      %v2327 = vmul.f32 %v2315, 1.442695
      %v2328 = vpow.pop %v2327
      %v2329 = vmul.f32 %v2316, 1.442695
      %v2330 = vpow.pop %v2329
      %v2331 = vmul.f32 %v2317, 1.442695
      %v2332 = vpow.pop %v2331
      %v2333 = vmul.f32 %v2318, 1.442695
      %v2334 = vpow.pop %v2333
      %v2336 = vrot.slane %v78, 1
      %v2337 = vrot.slane %v78, 2
      %v2338 = vrot.slane %v78, 3
      %v2339 = vrot.slane %v78, 4
      %v2340 = vrot.slane %v78, 5
      %v2341 = vrot.slane %v78, 6
      %v2342 = vrot.slane %v78, 7
      %v2351 = vmul.f32 %v2320, %v78
      %v2352 = vmul.f32 %v2322, %v2336
      %v2353 = vmul.f32 %v2324, %v2337
      %v2354 = vmul.f32 %v2326, %v2338
      %v2355 = vmul.f32 %v2328, %v2339
      %v2356 = vmul.f32 %v2330, %v2340
      %v2357 = vmul.f32 %v2332, %v2341
      %v2358 = vmul.f32 %v2334, %v2342
      %v2367 = vrot.slane %v2352, 7
      %v2368 = vsel %vm2272, %v2367, %v2351
      %v2369 = vrot.slane %v2353, 6
      %v2370 = vsel %vm2275, %v2369, %v2368
      %v2371 = vrot.slane %v2354, 5
      %v2372 = vsel %vm2278, %v2371, %v2370
      %v2373 = vrot.slane %v2355, 4
      %v2374 = vsel %vm2281, %v2373, %v2372
      %v2375 = vrot.slane %v2356, 3
      %v2376 = vsel %vm2284, %v2375, %v2374
      %v2377 = vrot.slane %v2357, 2
      %v2378 = vsel %vm2287, %v2377, %v2376
      %v2379 = vrot.slane %v2358, 1
      %v2380 = vsel %vm2290, %v2379, %v2378
      %2382 = vadd.xlane.f32.xlu0 %v2380
      %v2383 = vpop.xlane.xlu0 %2382
      %v2384 = vmax.f32 %v2383, 1e-12
      %v2386 = vrot.slane %v2384, 1
      %v2387 = vrot.slane %v2384, 2
      %v2388 = vrot.slane %v2384, 3
      %v2389 = vrot.slane %v2384, 4
      %v2390 = vrot.slane %v2384, 5
      %v2391 = vrot.slane %v2384, 6
      %v2392 = vrot.slane %v2384, 7
      %v2401 = vrcp.pop %v2384
      %v2402 = vmul.f32 %v2384, %v2401
      %v2403 = vsub.f32 1.0, %v2402
      %v2404 = vmul.f32 %v2401, %v2403
      %v2405 = vadd.f32 %v2401, %v2404
      %vm2406 = vweird.f32 %v2384
      %vm2407 = vweird.f32 %v2401
      %vm2408 = vmor %vm2406, %vm2407
      %v2409 = vsel %vm2408, %v2401, %v2405
      %v2410 = vand.u32 2147483647, %v2384
      %vm2411 = vcmp.eq.f32.partialorder %v2410, 8.507059e+37
      %v2412 = vand.u32 %v2384, 2147483648
      %v2413 = vor.u32 1.1754944e-38, %v2412
      %v2414 = vsel %vm2411, %v2413, %v2409
      %v2415 = vmul.f32 %v2351, %v2414
      %v2416 = vrcp.pop %v2386
      %v2417 = vmul.f32 %v2386, %v2416
      %v2418 = vsub.f32 1.0, %v2417
      %v2419 = vmul.f32 %v2416, %v2418
      %v2420 = vadd.f32 %v2416, %v2419
      %vm2421 = vweird.f32 %v2386
      %vm2422 = vweird.f32 %v2416
      %vm2423 = vmor %vm2421, %vm2422
      %v2424 = vsel %vm2423, %v2416, %v2420
      %v2425 = vand.u32 2147483647, %v2386
      %vm2426 = vcmp.eq.f32.partialorder %v2425, 8.507059e+37
      %v2427 = vand.u32 %v2386, 2147483648
      %v2428 = vor.u32 1.1754944e-38, %v2427
      %v2429 = vsel %vm2426, %v2428, %v2424
      %v2430 = vmul.f32 %v2352, %v2429
      %v2431 = vrcp.pop %v2387
      %v2432 = vmul.f32 %v2387, %v2431
      %v2433 = vsub.f32 1.0, %v2432
      %v2434 = vmul.f32 %v2431, %v2433
      %v2435 = vadd.f32 %v2431, %v2434
      %vm2436 = vweird.f32 %v2387
      %vm2437 = vweird.f32 %v2431
      %vm2438 = vmor %vm2436, %vm2437
      %v2439 = vsel %vm2438, %v2431, %v2435
      %v2440 = vand.u32 2147483647, %v2387
      %vm2441 = vcmp.eq.f32.partialorder %v2440, 8.507059e+37
      %v2442 = vand.u32 %v2387, 2147483648
      %v2443 = vor.u32 1.1754944e-38, %v2442
      %v2444 = vsel %vm2441, %v2443, %v2439
      %v2445 = vmul.f32 %v2353, %v2444
      %v2446 = vrcp.pop %v2388
      %v2447 = vmul.f32 %v2388, %v2446
      %v2448 = vsub.f32 1.0, %v2447
      %v2449 = vmul.f32 %v2446, %v2448
      %v2450 = vadd.f32 %v2446, %v2449
      %vm2451 = vweird.f32 %v2388
      %vm2452 = vweird.f32 %v2446
      %vm2453 = vmor %vm2451, %vm2452
      %v2454 = vsel %vm2453, %v2446, %v2450
      %v2455 = vand.u32 2147483647, %v2388
      %vm2456 = vcmp.eq.f32.partialorder %v2455, 8.507059e+37
      %v2457 = vand.u32 %v2388, 2147483648
      %v2458 = vor.u32 1.1754944e-38, %v2457
      %v2459 = vsel %vm2456, %v2458, %v2454
      %v2460 = vmul.f32 %v2354, %v2459
      %v2461 = vrcp.pop %v2389
      %v2462 = vmul.f32 %v2389, %v2461
      %v2463 = vsub.f32 1.0, %v2462
      %v2464 = vmul.f32 %v2461, %v2463
      %v2465 = vadd.f32 %v2461, %v2464
      %vm2466 = vweird.f32 %v2389
      %vm2467 = vweird.f32 %v2461
      %vm2468 = vmor %vm2466, %vm2467
      %v2469 = vsel %vm2468, %v2461, %v2465
      %v2470 = vand.u32 2147483647, %v2389
      %vm2471 = vcmp.eq.f32.partialorder %v2470, 8.507059e+37
      %v2472 = vand.u32 %v2389, 2147483648
      %v2473 = vor.u32 1.1754944e-38, %v2472
      %v2474 = vsel %vm2471, %v2473, %v2469
      %v2475 = vmul.f32 %v2355, %v2474
      %v2476 = vrcp.pop %v2390
      %v2477 = vmul.f32 %v2390, %v2476
      %v2478 = vsub.f32 1.0, %v2477
      %v2479 = vmul.f32 %v2476, %v2478
      %v2480 = vadd.f32 %v2476, %v2479
      %vm2481 = vweird.f32 %v2390
      %vm2482 = vweird.f32 %v2476
      %vm2483 = vmor %vm2481, %vm2482
      %v2484 = vsel %vm2483, %v2476, %v2480
      %v2485 = vand.u32 2147483647, %v2390
      %vm2486 = vcmp.eq.f32.partialorder %v2485, 8.507059e+37
      %v2487 = vand.u32 %v2390, 2147483648
      %v2488 = vor.u32 1.1754944e-38, %v2487
      %v2489 = vsel %vm2486, %v2488, %v2484
      %v2490 = vmul.f32 %v2356, %v2489
      %v2491 = vrcp.pop %v2391
      %v2492 = vmul.f32 %v2391, %v2491
      %v2493 = vsub.f32 1.0, %v2492
      %v2494 = vmul.f32 %v2491, %v2493
      %v2495 = vadd.f32 %v2491, %v2494
      %vm2496 = vweird.f32 %v2391
      %vm2497 = vweird.f32 %v2491
      %vm2498 = vmor %vm2496, %vm2497
      %v2499 = vsel %vm2498, %v2491, %v2495
      %v2500 = vand.u32 2147483647, %v2391
      %vm2501 = vcmp.eq.f32.partialorder %v2500, 8.507059e+37
      %v2502 = vand.u32 %v2391, 2147483648
      %v2503 = vor.u32 1.1754944e-38, %v2502
      %v2504 = vsel %vm2501, %v2503, %v2499
      %v2505 = vmul.f32 %v2357, %v2504
      %v2506 = vrcp.pop %v2392
      %v2507 = vmul.f32 %v2392, %v2506
      %v2508 = vsub.f32 1.0, %v2507
      %v2509 = vmul.f32 %v2506, %v2508
      %v2510 = vadd.f32 %v2506, %v2509
      %vm2511 = vweird.f32 %v2392
      %vm2512 = vweird.f32 %v2506
      %vm2513 = vmor %vm2511, %vm2512
      %v2514 = vsel %vm2513, %v2506, %v2510
      %v2515 = vand.u32 2147483647, %v2392
      %vm2516 = vcmp.eq.f32.partialorder %v2515, 8.507059e+37
      %v2517 = vand.u32 %v2392, 2147483648
      %v2518 = vor.u32 1.1754944e-38, %v2517
      %v2519 = vsel %vm2516, %v2518, %v2514
      %v2520 = vmul.f32 %v2358, %v2519
      %2521 = vmatpush.msra.mxu0 %v1298
      %2522 = vmatpush.msra.mxu0 %v1296
      %2523 = vmatpush.msra.mxu0 %v1294
      %2524 = vmatpush.msra.mxu0 %v1292
      %2525 = vmatpush.msra.mxu0 %v1290
      %2526 = vmatpush.msra.mxu0 %v1288
      %2527 = vmatpush.msra.mxu0 %v1286
      %2528 = vmatpush.msra.mxu0 %v1284
      %2529 = vmatpush.msra.mxu0 %v1282
      %2530 = vmatpush.msra.mxu0 %v1280
      %2531 = vmatpush.msra.mxu0 %v1278
      %2532 = vmatpush.msra.mxu0 %v1276
      %2533 = vmatpush.msra.mxu0 %v1274
      %2534 = vmatpush.msra.mxu0 %v1272
      %2535 = vmatpush.msra.mxu0 %v1270
      %2536 = vmatpush.msra.mxu0 %v1268
      %2537 = vmatmul.f32.gmra.mxu0 %v2415
      %v2538 = vpop.f32.mrf.mxu0
      %v2539 = vadd.f32 0.0, %v2538
      %2540 = vdwg.mxu0
      %2541 = vmatpush.msra.mxu0 %v1330
      %2542 = vmatpush.msra.mxu0 %v1328
      %2543 = vmatpush.msra.mxu0 %v1326
      %2544 = vmatpush.msra.mxu0 %v1324
      %2545 = vmatpush.msra.mxu0 %v1322
      %2546 = vmatpush.msra.mxu0 %v1320
      %2547 = vmatpush.msra.mxu0 %v1318
      %2548 = vmatpush.msra.mxu0 %v1316
      %2549 = vmatpush.msra.mxu0 %v1314
      %2550 = vmatpush.msra.mxu0 %v1312
      %2551 = vmatpush.msra.mxu0 %v1310
      %2552 = vmatpush.msra.mxu0 %v1308
      %2553 = vmatpush.msra.mxu0 %v1306
      %2554 = vmatpush.msra.mxu0 %v1304
      %2555 = vmatpush.msra.mxu0 %v1302
      %2556 = vmatpush.msra.mxu0 %v1300
      %2557 = vmatmul.f32.gmra.mxu0 %v2430
      %v2558 = vpop.f32.mrf.mxu0
      %v2559 = vadd.f32 0.0, %v2558
      %2560 = vdwg.mxu0
      %2561 = vmatpush.msra.mxu0 %v1362
      %2562 = vmatpush.msra.mxu0 %v1360
      %2563 = vmatpush.msra.mxu0 %v1358
      %2564 = vmatpush.msra.mxu0 %v1356
      %2565 = vmatpush.msra.mxu0 %v1354
      %2566 = vmatpush.msra.mxu0 %v1352
      %2567 = vmatpush.msra.mxu0 %v1350
      %2568 = vmatpush.msra.mxu0 %v1348
      %2569 = vmatpush.msra.mxu0 %v1346
      %2570 = vmatpush.msra.mxu0 %v1344
      %2571 = vmatpush.msra.mxu0 %v1342
      %2572 = vmatpush.msra.mxu0 %v1340
      %2573 = vmatpush.msra.mxu0 %v1338
      %2574 = vmatpush.msra.mxu0 %v1336
      %2575 = vmatpush.msra.mxu0 %v1334
      %2576 = vmatpush.msra.mxu0 %v1332
      %2577 = vmatmul.f32.gmra.mxu0 %v2445
      %v2578 = vpop.f32.mrf.mxu0
      %v2579 = vadd.f32 0.0, %v2578
      %2580 = vdwg.mxu0
      %2581 = vmatpush.msra.mxu0 %v1394
      %2582 = vmatpush.msra.mxu0 %v1392
      %2583 = vmatpush.msra.mxu0 %v1390
      %2584 = vmatpush.msra.mxu0 %v1388
      %2585 = vmatpush.msra.mxu0 %v1386
      %2586 = vmatpush.msra.mxu0 %v1384
      %2587 = vmatpush.msra.mxu0 %v1382
      %2588 = vmatpush.msra.mxu0 %v1380
      %2589 = vmatpush.msra.mxu0 %v1378
      %2590 = vmatpush.msra.mxu0 %v1376
      %2591 = vmatpush.msra.mxu0 %v1374
      %2592 = vmatpush.msra.mxu0 %v1372
      %2593 = vmatpush.msra.mxu0 %v1370
      %2594 = vmatpush.msra.mxu0 %v1368
      %2595 = vmatpush.msra.mxu0 %v1366
      %2596 = vmatpush.msra.mxu0 %v1364
      %2597 = vmatmul.f32.gmra.mxu0 %v2460
      %v2598 = vpop.f32.mrf.mxu0
      %v2599 = vadd.f32 0.0, %v2598
      %2600 = vdwg.mxu0
      %2601 = vmatpush.msra.mxu0 %v1426
      %2602 = vmatpush.msra.mxu0 %v1424
      %2603 = vmatpush.msra.mxu0 %v1422
      %2604 = vmatpush.msra.mxu0 %v1420
      %2605 = vmatpush.msra.mxu0 %v1418
      %2606 = vmatpush.msra.mxu0 %v1416
      %2607 = vmatpush.msra.mxu0 %v1414
      %2608 = vmatpush.msra.mxu0 %v1412
      %2609 = vmatpush.msra.mxu0 %v1410
      %2610 = vmatpush.msra.mxu0 %v1408
      %2611 = vmatpush.msra.mxu0 %v1406
      %2612 = vmatpush.msra.mxu0 %v1404
      %2613 = vmatpush.msra.mxu0 %v1402
      %2614 = vmatpush.msra.mxu0 %v1400
      %2615 = vmatpush.msra.mxu0 %v1398
      %2616 = vmatpush.msra.mxu0 %v1396
      %2617 = vmatmul.f32.gmra.mxu0 %v2475
      %v2618 = vpop.f32.mrf.mxu0
      %v2619 = vadd.f32 0.0, %v2618
      %2620 = vdwg.mxu0
      %2621 = vmatpush.msra.mxu0 %v1458
      %2622 = vmatpush.msra.mxu0 %v1456
      %2623 = vmatpush.msra.mxu0 %v1454
      %2624 = vmatpush.msra.mxu0 %v1452
      %2625 = vmatpush.msra.mxu0 %v1450
      %2626 = vmatpush.msra.mxu0 %v1448
      %2627 = vmatpush.msra.mxu0 %v1446
      %2628 = vmatpush.msra.mxu0 %v1444
      %2629 = vmatpush.msra.mxu0 %v1442
      %2630 = vmatpush.msra.mxu0 %v1440
      %2631 = vmatpush.msra.mxu0 %v1438
      %2632 = vmatpush.msra.mxu0 %v1436
      %2633 = vmatpush.msra.mxu0 %v1434
      %2634 = vmatpush.msra.mxu0 %v1432
      %2635 = vmatpush.msra.mxu0 %v1430
      %2636 = vmatpush.msra.mxu0 %v1428
      %2637 = vmatmul.f32.gmra.mxu0 %v2490
      %v2638 = vpop.f32.mrf.mxu0
      %v2639 = vadd.f32 0.0, %v2638
      %2640 = vdwg.mxu0
      %2641 = vmatpush.msra.mxu0 %v1490
      %2642 = vmatpush.msra.mxu0 %v1488
      %2643 = vmatpush.msra.mxu0 %v1486
      %2644 = vmatpush.msra.mxu0 %v1484
      %2645 = vmatpush.msra.mxu0 %v1482
      %2646 = vmatpush.msra.mxu0 %v1480
      %2647 = vmatpush.msra.mxu0 %v1478
      %2648 = vmatpush.msra.mxu0 %v1476
      %2649 = vmatpush.msra.mxu0 %v1474
      %2650 = vmatpush.msra.mxu0 %v1472
      %2651 = vmatpush.msra.mxu0 %v1470
      %2652 = vmatpush.msra.mxu0 %v1468
      %2653 = vmatpush.msra.mxu0 %v1466
      %2654 = vmatpush.msra.mxu0 %v1464
      %2655 = vmatpush.msra.mxu0 %v1462
      %2656 = vmatpush.msra.mxu0 %v1460
      %2657 = vmatmul.f32.gmra.mxu0 %v2505
      %v2658 = vpop.f32.mrf.mxu0
      %v2659 = vadd.f32 0.0, %v2658
      %2660 = vdwg.mxu0
      %2661 = vmatpush.msra.mxu0 %v1522
      %2662 = vmatpush.msra.mxu0 %v1520
      %2663 = vmatpush.msra.mxu0 %v1518
      %2664 = vmatpush.msra.mxu0 %v1516
      %2665 = vmatpush.msra.mxu0 %v1514
      %2666 = vmatpush.msra.mxu0 %v1512
      %2667 = vmatpush.msra.mxu0 %v1510
      %2668 = vmatpush.msra.mxu0 %v1508
      %2669 = vmatpush.msra.mxu0 %v1506
      %2670 = vmatpush.msra.mxu0 %v1504
      %2671 = vmatpush.msra.mxu0 %v1502
      %2672 = vmatpush.msra.mxu0 %v1500
      %2673 = vmatpush.msra.mxu0 %v1498
      %2674 = vmatpush.msra.mxu0 %v1496
      %2675 = vmatpush.msra.mxu0 %v1494
      %2676 = vmatpush.msra.mxu0 %v1492
      %2677 = vmatmul.f32.gmra.mxu0 %v2520
      %v2678 = vpop.f32.mrf.mxu0
      %v2679 = vadd.f32 0.0, %v2678
      %2680 = vdwg.mxu0
      %v2689 = vrot.slane %v2559, 7
      %v2690 = vsel %vm2272, %v2689, %v2539
      %v2691 = vrot.slane %v2579, 6
      %v2692 = vsel %vm2275, %v2691, %v2690
      %v2693 = vrot.slane %v2599, 5
      %v2694 = vsel %vm2278, %v2693, %v2692
      %v2695 = vrot.slane %v2619, 4
      %v2696 = vsel %vm2281, %v2695, %v2694
      %v2697 = vrot.slane %v2639, 3
      %v2698 = vsel %vm2284, %v2697, %v2696
      %v2699 = vrot.slane %v2659, 2
      %v2700 = vsel %vm2287, %v2699, %v2698
      %v2701 = vrot.slane %v2679, 1
      %v2702 = vsel %vm2290, %v2701, %v2700
      %2704 = vst.msk [vmem:[#allocation5] sm:$0xff] %vm1010, %v2702
    $region97: #{tpu_custom_call.1} parent=1 // pred_fallthru
      _
    %v2705 = vld [vmem:[#allocation2] sm:$0xff]
    %v2706 = vld [vmem:[#allocation2 + $0x8] sm:$0xff]
    %v2707 = vld [vmem:[#allocation2 + $0x10] sm:$0xff]
    %v2708 = vld [vmem:[#allocation2 + $0x18] sm:$0xff]
    %v2709 = vld [vmem:[#allocation2 + $0x20] sm:$0xff]
    %v2710 = vld [vmem:[#allocation2 + $0x28] sm:$0xff]
    %v2711 = vld [vmem:[#allocation2 + $0x30] sm:$0xff]
    %v2712 = vld [vmem:[#allocation2 + $0x38] sm:$0xff]
    %v2713 = vld [vmem:[#allocation2 + $0x40] sm:$0xff]
    %v2714 = vld [vmem:[#allocation2 + $0x48] sm:$0xff]
    %v2715 = vld [vmem:[#allocation2 + $0x50] sm:$0xff]
    %v2716 = vld [vmem:[#allocation2 + $0x58] sm:$0xff]
    %v2717 = vld [vmem:[#allocation2 + $0x60] sm:$0xff]
    %v2718 = vld [vmem:[#allocation2 + $0x68] sm:$0xff]
    %v2719 = vld [vmem:[#allocation2 + $0x70] sm:$0xff]
    %v2720 = vld [vmem:[#allocation2 + $0x78] sm:$0xff]
    %v2721 = vld [vmem:[#allocation2 + $0x80] sm:$0xff]
    %v2722 = vld [vmem:[#allocation2 + $0x88] sm:$0xff]
    %v2723 = vld [vmem:[#allocation2 + $0x90] sm:$0xff]
    %v2724 = vld [vmem:[#allocation2 + $0x98] sm:$0xff]
    %v2725 = vld [vmem:[#allocation2 + $0xa0] sm:$0xff]
    %v2726 = vld [vmem:[#allocation2 + $0xa8] sm:$0xff]
    %v2727 = vld [vmem:[#allocation2 + $0xb0] sm:$0xff]
    %v2728 = vld [vmem:[#allocation2 + $0xb8] sm:$0xff]
    %v2729 = vld [vmem:[#allocation2 + $0xc0] sm:$0xff]
    %v2730 = vld [vmem:[#allocation2 + $0xc8] sm:$0xff]
    %v2731 = vld [vmem:[#allocation2 + $0xd0] sm:$0xff]
    %v2732 = vld [vmem:[#allocation2 + $0xd8] sm:$0xff]
    %v2733 = vld [vmem:[#allocation2 + $0xe0] sm:$0xff]
    %v2734 = vld [vmem:[#allocation2 + $0xe8] sm:$0xff]
    %v2735 = vld [vmem:[#allocation2 + $0xf0] sm:$0xff]
    %v2736 = vld [vmem:[#allocation2 + $0xf8] sm:$0xff]
    %v2737 = vld [vmem:[#allocation2 + $0x100] sm:$0xff]
    %v2738 = vld [vmem:[#allocation2 + $0x108] sm:$0xff]
    %v2739 = vld [vmem:[#allocation2 + $0x110] sm:$0xff]
    %v2740 = vld [vmem:[#allocation2 + $0x118] sm:$0xff]
    %v2741 = vld [vmem:[#allocation2 + $0x120] sm:$0xff]
    %v2742 = vld [vmem:[#allocation2 + $0x128] sm:$0xff]
    %v2743 = vld [vmem:[#allocation2 + $0x130] sm:$0xff]
    %v2744 = vld [vmem:[#allocation2 + $0x138] sm:$0xff]
    %v2745 = vld [vmem:[#allocation2 + $0x140] sm:$0xff]
    %v2746 = vld [vmem:[#allocation2 + $0x148] sm:$0xff]
    %v2747 = vld [vmem:[#allocation2 + $0x150] sm:$0xff]
    %v2748 = vld [vmem:[#allocation2 + $0x158] sm:$0xff]
    %v2749 = vld [vmem:[#allocation2 + $0x160] sm:$0xff]
    %v2750 = vld [vmem:[#allocation2 + $0x168] sm:$0xff]
    %v2751 = vld [vmem:[#allocation2 + $0x170] sm:$0xff]
    %v2752 = vld [vmem:[#allocation2 + $0x178] sm:$0xff]
    %v2753 = vld [vmem:[#allocation2 + $0x180] sm:$0xff]
    %v2754 = vld [vmem:[#allocation2 + $0x188] sm:$0xff]
    %v2755 = vld [vmem:[#allocation2 + $0x190] sm:$0xff]
    %v2756 = vld [vmem:[#allocation2 + $0x198] sm:$0xff]
    %v2757 = vld [vmem:[#allocation2 + $0x1a0] sm:$0xff]
    %v2758 = vld [vmem:[#allocation2 + $0x1a8] sm:$0xff]
    %v2759 = vld [vmem:[#allocation2 + $0x1b0] sm:$0xff]
    %v2760 = vld [vmem:[#allocation2 + $0x1b8] sm:$0xff]
    %v2761 = vld [vmem:[#allocation2 + $0x1c0] sm:$0xff]
    %v2762 = vld [vmem:[#allocation2 + $0x1c8] sm:$0xff]
    %v2763 = vld [vmem:[#allocation2 + $0x1d0] sm:$0xff]
    %v2764 = vld [vmem:[#allocation2 + $0x1d8] sm:$0xff]
    %v2765 = vld [vmem:[#allocation2 + $0x1e0] sm:$0xff]
    %v2766 = vld [vmem:[#allocation2 + $0x1e8] sm:$0xff]
    %v2767 = vld [vmem:[#allocation2 + $0x1f0] sm:$0xff]
    %v2768 = vld [vmem:[#allocation2 + $0x1f8] sm:$0xff]
    %v2769 = vld [vmem:[#allocation2 + $0x200] sm:$0xff]
    %v2770 = vld [vmem:[#allocation2 + $0x208] sm:$0xff]
    %v2771 = vld [vmem:[#allocation2 + $0x210] sm:$0xff]
    %v2772 = vld [vmem:[#allocation2 + $0x218] sm:$0xff]
    %v2773 = vld [vmem:[#allocation2 + $0x220] sm:$0xff]
    %v2774 = vld [vmem:[#allocation2 + $0x228] sm:$0xff]
    %v2775 = vld [vmem:[#allocation2 + $0x230] sm:$0xff]
    %v2776 = vld [vmem:[#allocation2 + $0x238] sm:$0xff]
    %v2777 = vld [vmem:[#allocation2 + $0x240] sm:$0xff]
    %v2778 = vld [vmem:[#allocation2 + $0x248] sm:$0xff]
    %v2779 = vld [vmem:[#allocation2 + $0x250] sm:$0xff]
    %v2780 = vld [vmem:[#allocation2 + $0x258] sm:$0xff]
    %v2781 = vld [vmem:[#allocation2 + $0x260] sm:$0xff]
    %v2782 = vld [vmem:[#allocation2 + $0x268] sm:$0xff]
    %v2783 = vld [vmem:[#allocation2 + $0x270] sm:$0xff]
    %v2784 = vld [vmem:[#allocation2 + $0x278] sm:$0xff]
    %v2785 = vld [vmem:[#allocation2 + $0x280] sm:$0xff]
    %v2786 = vld [vmem:[#allocation2 + $0x288] sm:$0xff]
    %v2787 = vld [vmem:[#allocation2 + $0x290] sm:$0xff]
    %v2788 = vld [vmem:[#allocation2 + $0x298] sm:$0xff]
    %v2789 = vld [vmem:[#allocation2 + $0x2a0] sm:$0xff]
    %v2790 = vld [vmem:[#allocation2 + $0x2a8] sm:$0xff]
    %v2791 = vld [vmem:[#allocation2 + $0x2b0] sm:$0xff]
    %v2792 = vld [vmem:[#allocation2 + $0x2b8] sm:$0xff]
    %v2793 = vld [vmem:[#allocation2 + $0x2c0] sm:$0xff]
    %v2794 = vld [vmem:[#allocation2 + $0x2c8] sm:$0xff]
    %v2795 = vld [vmem:[#allocation2 + $0x2d0] sm:$0xff]
    %v2796 = vld [vmem:[#allocation2 + $0x2d8] sm:$0xff]
    %v2797 = vld [vmem:[#allocation2 + $0x2e0] sm:$0xff]
    %v2798 = vld [vmem:[#allocation2 + $0x2e8] sm:$0xff]
    %v2799 = vld [vmem:[#allocation2 + $0x2f0] sm:$0xff]
    %v2800 = vld [vmem:[#allocation2 + $0x2f8] sm:$0xff]
    %v2801 = vld [vmem:[#allocation2 + $0x300] sm:$0xff]
    %v2802 = vld [vmem:[#allocation2 + $0x308] sm:$0xff]
    %v2803 = vld [vmem:[#allocation2 + $0x310] sm:$0xff]
    %v2804 = vld [vmem:[#allocation2 + $0x318] sm:$0xff]
    %v2805 = vld [vmem:[#allocation2 + $0x320] sm:$0xff]
    %v2806 = vld [vmem:[#allocation2 + $0x328] sm:$0xff]
    %v2807 = vld [vmem:[#allocation2 + $0x330] sm:$0xff]
    %v2808 = vld [vmem:[#allocation2 + $0x338] sm:$0xff]
    %v2809 = vld [vmem:[#allocation2 + $0x340] sm:$0xff]
    %v2810 = vld [vmem:[#allocation2 + $0x348] sm:$0xff]
    %v2811 = vld [vmem:[#allocation2 + $0x350] sm:$0xff]
    %v2812 = vld [vmem:[#allocation2 + $0x358] sm:$0xff]
    %v2813 = vld [vmem:[#allocation2 + $0x360] sm:$0xff]
    %v2814 = vld [vmem:[#allocation2 + $0x368] sm:$0xff]
    %v2815 = vld [vmem:[#allocation2 + $0x370] sm:$0xff]
    %v2816 = vld [vmem:[#allocation2 + $0x378] sm:$0xff]
    %v2817 = vld [vmem:[#allocation2 + $0x380] sm:$0xff]
    %v2818 = vld [vmem:[#allocation2 + $0x388] sm:$0xff]
    %v2819 = vld [vmem:[#allocation2 + $0x390] sm:$0xff]
    %v2820 = vld [vmem:[#allocation2 + $0x398] sm:$0xff]
    %v2821 = vld [vmem:[#allocation2 + $0x3a0] sm:$0xff]
    %v2822 = vld [vmem:[#allocation2 + $0x3a8] sm:$0xff]
    %v2823 = vld [vmem:[#allocation2 + $0x3b0] sm:$0xff]
    %v2824 = vld [vmem:[#allocation2 + $0x3b8] sm:$0xff]
    %v2825 = vld [vmem:[#allocation2 + $0x3c0] sm:$0xff]
    %v2826 = vld [vmem:[#allocation2 + $0x3c8] sm:$0xff]
    %v2827 = vld [vmem:[#allocation2 + $0x3d0] sm:$0xff]
    %v2828 = vld [vmem:[#allocation2 + $0x3d8] sm:$0xff]
    %v2829 = vld [vmem:[#allocation2 + $0x3e0] sm:$0xff]
    %v2830 = vld [vmem:[#allocation2 + $0x3e8] sm:$0xff]
    %v2831 = vld [vmem:[#allocation2 + $0x3f0] sm:$0xff]
    %v2832 = vld [vmem:[#allocation2 + $0x3f8] sm:$0xff]
    %v2833 = vld [vmem:[#allocation3] sm:$0xff]
    %v2834 = vld [vmem:[#allocation3 + $0x8] sm:$0xff]
    %v2835 = vld [vmem:[#allocation3 + $0x10] sm:$0xff]
    %v2836 = vld [vmem:[#allocation3 + $0x18] sm:$0xff]
    %v2837 = vld [vmem:[#allocation3 + $0x20] sm:$0xff]
    %v2838 = vld [vmem:[#allocation3 + $0x28] sm:$0xff]
    %v2839 = vld [vmem:[#allocation3 + $0x30] sm:$0xff]
    %v2840 = vld [vmem:[#allocation3 + $0x38] sm:$0xff]
    %v2841 = vld [vmem:[#allocation3 + $0x40] sm:$0xff]
    %v2842 = vld [vmem:[#allocation3 + $0x48] sm:$0xff]
    %v2843 = vld [vmem:[#allocation3 + $0x50] sm:$0xff]
    %v2844 = vld [vmem:[#allocation3 + $0x58] sm:$0xff]
    %v2845 = vld [vmem:[#allocation3 + $0x60] sm:$0xff]
    %v2846 = vld [vmem:[#allocation3 + $0x68] sm:$0xff]
    %v2847 = vld [vmem:[#allocation3 + $0x70] sm:$0xff]
    %v2848 = vld [vmem:[#allocation3 + $0x78] sm:$0xff]
    %v2849 = vld [vmem:[#allocation3 + $0x80] sm:$0xff]
    %v2850 = vld [vmem:[#allocation3 + $0x88] sm:$0xff]
    %v2851 = vld [vmem:[#allocation3 + $0x90] sm:$0xff]
    %v2852 = vld [vmem:[#allocation3 + $0x98] sm:$0xff]
    %v2853 = vld [vmem:[#allocation3 + $0xa0] sm:$0xff]
    %v2854 = vld [vmem:[#allocation3 + $0xa8] sm:$0xff]
    %v2855 = vld [vmem:[#allocation3 + $0xb0] sm:$0xff]
    %v2856 = vld [vmem:[#allocation3 + $0xb8] sm:$0xff]
    %v2857 = vld [vmem:[#allocation3 + $0xc0] sm:$0xff]
    %v2858 = vld [vmem:[#allocation3 + $0xc8] sm:$0xff]
    %v2859 = vld [vmem:[#allocation3 + $0xd0] sm:$0xff]
    %v2860 = vld [vmem:[#allocation3 + $0xd8] sm:$0xff]
    %v2861 = vld [vmem:[#allocation3 + $0xe0] sm:$0xff]
    %v2862 = vld [vmem:[#allocation3 + $0xe8] sm:$0xff]
    %v2863 = vld [vmem:[#allocation3 + $0xf0] sm:$0xff]
    %v2864 = vld [vmem:[#allocation3 + $0xf8] sm:$0xff]
    %v2865 = vld [vmem:[#allocation3 + $0x100] sm:$0xff]
    %v2866 = vld [vmem:[#allocation3 + $0x108] sm:$0xff]
    %v2867 = vld [vmem:[#allocation3 + $0x110] sm:$0xff]
    %v2868 = vld [vmem:[#allocation3 + $0x118] sm:$0xff]
    %v2869 = vld [vmem:[#allocation3 + $0x120] sm:$0xff]
    %v2870 = vld [vmem:[#allocation3 + $0x128] sm:$0xff]
    %v2871 = vld [vmem:[#allocation3 + $0x130] sm:$0xff]
    %v2872 = vld [vmem:[#allocation3 + $0x138] sm:$0xff]
    %v2873 = vld [vmem:[#allocation3 + $0x140] sm:$0xff]
    %v2874 = vld [vmem:[#allocation3 + $0x148] sm:$0xff]
    %v2875 = vld [vmem:[#allocation3 + $0x150] sm:$0xff]
    %v2876 = vld [vmem:[#allocation3 + $0x158] sm:$0xff]
    %v2877 = vld [vmem:[#allocation3 + $0x160] sm:$0xff]
    %v2878 = vld [vmem:[#allocation3 + $0x168] sm:$0xff]
    %v2879 = vld [vmem:[#allocation3 + $0x170] sm:$0xff]
    %v2880 = vld [vmem:[#allocation3 + $0x178] sm:$0xff]
    %v2881 = vld [vmem:[#allocation3 + $0x180] sm:$0xff]
    %v2882 = vld [vmem:[#allocation3 + $0x188] sm:$0xff]
    %v2883 = vld [vmem:[#allocation3 + $0x190] sm:$0xff]
    %v2884 = vld [vmem:[#allocation3 + $0x198] sm:$0xff]
    %v2885 = vld [vmem:[#allocation3 + $0x1a0] sm:$0xff]
    %v2886 = vld [vmem:[#allocation3 + $0x1a8] sm:$0xff]
    %v2887 = vld [vmem:[#allocation3 + $0x1b0] sm:$0xff]
    %v2888 = vld [vmem:[#allocation3 + $0x1b8] sm:$0xff]
    %v2889 = vld [vmem:[#allocation3 + $0x1c0] sm:$0xff]
    %v2890 = vld [vmem:[#allocation3 + $0x1c8] sm:$0xff]
    %v2891 = vld [vmem:[#allocation3 + $0x1d0] sm:$0xff]
    %v2892 = vld [vmem:[#allocation3 + $0x1d8] sm:$0xff]
    %v2893 = vld [vmem:[#allocation3 + $0x1e0] sm:$0xff]
    %v2894 = vld [vmem:[#allocation3 + $0x1e8] sm:$0xff]
    %v2895 = vld [vmem:[#allocation3 + $0x1f0] sm:$0xff]
    %v2896 = vld [vmem:[#allocation3 + $0x1f8] sm:$0xff]
    %v2897 = vld [vmem:[#allocation3 + $0x200] sm:$0xff]
    %v2898 = vld [vmem:[#allocation3 + $0x208] sm:$0xff]
    %v2899 = vld [vmem:[#allocation3 + $0x210] sm:$0xff]
    %v2900 = vld [vmem:[#allocation3 + $0x218] sm:$0xff]
    %v2901 = vld [vmem:[#allocation3 + $0x220] sm:$0xff]
    %v2902 = vld [vmem:[#allocation3 + $0x228] sm:$0xff]
    %v2903 = vld [vmem:[#allocation3 + $0x230] sm:$0xff]
    %v2904 = vld [vmem:[#allocation3 + $0x238] sm:$0xff]
    %v2905 = vld [vmem:[#allocation3 + $0x240] sm:$0xff]
    %v2906 = vld [vmem:[#allocation3 + $0x248] sm:$0xff]
    %v2907 = vld [vmem:[#allocation3 + $0x250] sm:$0xff]
    %v2908 = vld [vmem:[#allocation3 + $0x258] sm:$0xff]
    %v2909 = vld [vmem:[#allocation3 + $0x260] sm:$0xff]
    %v2910 = vld [vmem:[#allocation3 + $0x268] sm:$0xff]
    %v2911 = vld [vmem:[#allocation3 + $0x270] sm:$0xff]
    %v2912 = vld [vmem:[#allocation3 + $0x278] sm:$0xff]
    %v2913 = vld [vmem:[#allocation3 + $0x280] sm:$0xff]
    %v2914 = vld [vmem:[#allocation3 + $0x288] sm:$0xff]
    %v2915 = vld [vmem:[#allocation3 + $0x290] sm:$0xff]
    %v2916 = vld [vmem:[#allocation3 + $0x298] sm:$0xff]
    %v2917 = vld [vmem:[#allocation3 + $0x2a0] sm:$0xff]
    %v2918 = vld [vmem:[#allocation3 + $0x2a8] sm:$0xff]
    %v2919 = vld [vmem:[#allocation3 + $0x2b0] sm:$0xff]
    %v2920 = vld [vmem:[#allocation3 + $0x2b8] sm:$0xff]
    %v2921 = vld [vmem:[#allocation3 + $0x2c0] sm:$0xff]
    %v2922 = vld [vmem:[#allocation3 + $0x2c8] sm:$0xff]
    %v2923 = vld [vmem:[#allocation3 + $0x2d0] sm:$0xff]
    %v2924 = vld [vmem:[#allocation3 + $0x2d8] sm:$0xff]
    %v2925 = vld [vmem:[#allocation3 + $0x2e0] sm:$0xff]
    %v2926 = vld [vmem:[#allocation3 + $0x2e8] sm:$0xff]
    %v2927 = vld [vmem:[#allocation3 + $0x2f0] sm:$0xff]
    %v2928 = vld [vmem:[#allocation3 + $0x2f8] sm:$0xff]
    %v2929 = vld [vmem:[#allocation3 + $0x300] sm:$0xff]
    %v2930 = vld [vmem:[#allocation3 + $0x308] sm:$0xff]
    %v2931 = vld [vmem:[#allocation3 + $0x310] sm:$0xff]
    %v2932 = vld [vmem:[#allocation3 + $0x318] sm:$0xff]
    %v2933 = vld [vmem:[#allocation3 + $0x320] sm:$0xff]
    %v2934 = vld [vmem:[#allocation3 + $0x328] sm:$0xff]
    %v2935 = vld [vmem:[#allocation3 + $0x330] sm:$0xff]
    %v2936 = vld [vmem:[#allocation3 + $0x338] sm:$0xff]
    %v2937 = vld [vmem:[#allocation3 + $0x340] sm:$0xff]
    %v2938 = vld [vmem:[#allocation3 + $0x348] sm:$0xff]
    %v2939 = vld [vmem:[#allocation3 + $0x350] sm:$0xff]
    %v2940 = vld [vmem:[#allocation3 + $0x358] sm:$0xff]
    %v2941 = vld [vmem:[#allocation3 + $0x360] sm:$0xff]
    %v2942 = vld [vmem:[#allocation3 + $0x368] sm:$0xff]
    %v2943 = vld [vmem:[#allocation3 + $0x370] sm:$0xff]
    %v2944 = vld [vmem:[#allocation3 + $0x378] sm:$0xff]
    %v2945 = vld [vmem:[#allocation3 + $0x380] sm:$0xff]
    %v2946 = vld [vmem:[#allocation3 + $0x388] sm:$0xff]
    %v2947 = vld [vmem:[#allocation3 + $0x390] sm:$0xff]
    %v2948 = vld [vmem:[#allocation3 + $0x398] sm:$0xff]
    %v2949 = vld [vmem:[#allocation3 + $0x3a0] sm:$0xff]
    %v2950 = vld [vmem:[#allocation3 + $0x3a8] sm:$0xff]
    %v2951 = vld [vmem:[#allocation3 + $0x3b0] sm:$0xff]
    %v2952 = vld [vmem:[#allocation3 + $0x3b8] sm:$0xff]
    %v2953 = vld [vmem:[#allocation3 + $0x3c0] sm:$0xff]
    %v2954 = vld [vmem:[#allocation3 + $0x3c8] sm:$0xff]
    %v2955 = vld [vmem:[#allocation3 + $0x3d0] sm:$0xff]
    %v2956 = vld [vmem:[#allocation3 + $0x3d8] sm:$0xff]
    %v2957 = vld [vmem:[#allocation3 + $0x3e0] sm:$0xff]
    %v2958 = vld [vmem:[#allocation3 + $0x3e8] sm:$0xff]
    %v2959 = vld [vmem:[#allocation3 + $0x3f0] sm:$0xff]
    %v2960 = vld [vmem:[#allocation3 + $0x3f8] sm:$0xff]
    %v2961 = vld [vmem:[%s6] sm:$0xff]
    %v2962 = vld [vmem:[%s6 + $0x8] sm:$0xff]
    %v2963 = vld [vmem:[%s7] sm:$0xff]
    %v2964 = vld [vmem:[%s7 + $0x8] sm:$0xff]
    %v2965 = vld [vmem:[%s7 + $0x10] sm:$0xff]
    %v2966 = vld [vmem:[%s7 + $0x18] sm:$0xff]
    %v2967 = vld [vmem:[%s8] sm:$0xff]
    %v2968 = vld [vmem:[%s8 + $0x8] sm:$0xff]
    %v2969 = vld [vmem:[%s8 + $0x10] sm:$0xff]
    %v2970 = vld [vmem:[%s8 + $0x18] sm:$0xff]
    %v2971 = vld [vmem:[%s9] sm:$0xff]
    %v2972 = vld [vmem:[%s9 + $0x8] sm:$0xff]
    %v2973 = vld [vmem:[%s9 + $0x10] sm:$0xff]
    %v2974 = vld [vmem:[%s9 + $0x18] sm:$0xff]
    %v2975 = vld [vmem:[%s10] sm:$0x1]
    %v2976 = vld [vmem:[%s11] sm:$0xff]
    %v2977 = vld [vmem:[%s11 + $0x8] sm:$0xff]
    %v2978 = vld [vmem:[%s11 + $0x10] sm:$0xff]
    %v2979 = vld [vmem:[%s11 + $0x18] sm:$0xff]
    %v2980 = vld [vmem:[%s12] sm:$0xff]
    %v2981 = vld [vmem:[%s12 + $0x8] sm:$0xff]
    %v2982 = vld [vmem:[%s12 + $0x10] sm:$0xff]
    %v2983 = vld [vmem:[%s12 + $0x18] sm:$0xff]
    %v2984 = vld [vmem:[%s13] sm:$0x1]
    %v2985 = vld [vmem:[%s18] sm:$0xff]
    %v2986 = vld [vmem:[%s18 + $0x8] sm:$0xff]
    %v2987 = vld [vmem:[%s18 + $0x10] sm:$0xff]
    %v2988 = vld [vmem:[%s18 + $0x18] sm:$0xff]
    %v2989 = vld [vmem:[%s18 + $0x20] sm:$0xff]
    %v2990 = vld [vmem:[%s18 + $0x28] sm:$0xff]
    %v2991 = vld [vmem:[%s18 + $0x30] sm:$0xff]
    %v2992 = vld [vmem:[%s18 + $0x38] sm:$0xff]
    %v2993 = vld [vmem:[%s19] sm:$0xff]
    %v2994 = vld [vmem:[%s19 + $0x8] sm:$0xff]
    %v2995 = vld [vmem:[%s19 + $0x10] sm:$0xff]
    %v2996 = vld [vmem:[%s19 + $0x18] sm:$0xff]
    %v2997 = vld [vmem:[%s20] sm:$0x3]
    %v2998 = vld [vmem:[%s0] sm:$0xff]
    %v2999 = vld [vmem:[%s0 + $0x8] sm:$0xff]
    %v3000 = vld [vmem:[%s0 + $0x10] sm:$0xff]
    %v3001 = vld [vmem:[%s0 + $0x18] sm:$0xff]
    %v3002 = vld [vmem:[%s0 + $0x20] sm:$0xff]
    %v3003 = vld [vmem:[%s0 + $0x28] sm:$0xff]
    %v3004 = vld [vmem:[%s4] sm:$0xff]
    %v3005 = vld [vmem:[%s4 + $0x8] sm:$0xff]
    %v3006 = vld [vmem:[%s5] sm:$0x1]
    %v3008 = vperm.slane %v3006, 0
    %vm3010 = vcmask 130048
    %v3012 = vsel %vm3010, %v2998, 0
    %v3015 = vsel %vm3010, %v2999, 0
    %v3018 = vsel %vm3010, %v3000, 0
    %v3021 = vsel %vm3010, %v3001, 0
    %v3024 = vsel %vm3010, %v3002, 0
    %v3027 = vsel %vm3010, %v3003, 0
    %3029 = vmatpush.msra.mxu0 0.0
    %3030 = vmatpush.msra.mxu0 0.0
    %3031 = vmatpush.msra.mxu0 0.0
    %3032 = vmatpush.msra.mxu0 0.0
    %3033 = vmatpush.msra.mxu0 0.0
    %3034 = vmatpush.msra.mxu0 0.0
    %3035 = vmatpush.msra.mxu0 0.0
    %3036 = vmatpush.msra.mxu0 0.0
    %3037 = vmatpush.msra.mxu0 0.0
    %3038 = vmatpush.msra.mxu0 0.0
    %3039 = vmatpush.msra.mxu0 0.0
    %3040 = vmatpush.msra.mxu0 0.0
    %3041 = vmatpush.msra.mxu0 0.0
    %3042 = vmatpush.msra.mxu0 0.0
    %3043 = vmatpush.msra.mxu0 %v3005
    %3044 = vmatpush.msra.mxu0 %v3004
    %3045 = vmatmul.f32.gmra.mxu0 %v3012
    %v3046 = vpop.f32.mrf.mxu0
    %v3047 = vadd.f32 %v3008, %v3046
    %3048 = vmatmul.f32.gmra.mxu0 %v3015
    %v3049 = vpop.f32.mrf.mxu0
    %v3050 = vadd.f32 %v3008, %v3049
    %3051 = vmatmul.f32.gmra.mxu0 %v3018
    %v3052 = vpop.f32.mrf.mxu0
    %v3053 = vadd.f32 %v3008, %v3052
    %3054 = vmatmul.f32.gmra.mxu0 %v3021
    %v3055 = vpop.f32.mrf.mxu0
    %v3056 = vadd.f32 %v3008, %v3055
    %3057 = vmatmul.f32.gmra.mxu0 %v3024
    %v3058 = vpop.f32.mrf.mxu0
    %v3059 = vadd.f32 %v3008, %v3058
    %3060 = vmatmul.f32.gmra.mxu0 %v3027
    %v3061 = vpop.f32.mrf.mxu0
    %v3062 = vadd.f32 %v3008, %v3061
    %3063 = vdwg.mxu0
    %3064 = vst [vmem:[#allocation6] sm:$0xff] %v3047
    %3065 = vst [vmem:[#allocation6 + $0x8] sm:$0xff] %v3050
    %3066 = vst [vmem:[#allocation6 + $0x10] sm:$0xff] %v3053
    %3067 = vst [vmem:[#allocation6 + $0x18] sm:$0xff] %v3056
    %3068 = vst [vmem:[#allocation6 + $0x20] sm:$0xff] %v3059
    %3069 = vst [vmem:[#allocation6 + $0x28] sm:$0xff] %v3062
    %v3070 = vld [vmem:[#allocation4] sm:$0xff]
    %s3071 = scalar_lea.vmem [#allocation4], 8
    %v3072 = vld [vmem:[%s3071] sm:$0xff]
    %s3073 = scalar_lea.vmem [#allocation4], 16
    %v3074 = vld [vmem:[%s3073] sm:$0xff]
    %s3075 = scalar_lea.vmem [#allocation4], 24
    %v3076 = vld [vmem:[%s3075] sm:$0xff]
    %s3077 = scalar_lea.vmem [#allocation4], 32
    %v3078 = vld [vmem:[%s3077] sm:$0xff]
    %s3079 = scalar_lea.vmem [#allocation4], 40
    %v3080 = vld [vmem:[%s3079] sm:$0xff]
    %v3081 = vld [vmem:[#allocation5] sm:$0xff]
    %v3082 = vld [vmem:[#allocation6] sm:$0xff]
    %v3084 = vsel %vm3010, %v3081, 0
    %3086 = vmatpush.msra.mxu0 0.0
    %3087 = vmatpush.msra.mxu0 0.0
    %3088 = vmatpush.msra.mxu0 0.0
    %3089 = vmatpush.msra.mxu0 0.0
    %3090 = vmatpush.msra.mxu0 0.0
    %3091 = vmatpush.msra.mxu0 0.0
    %3092 = vmatpush.msra.mxu0 0.0
    %3093 = vmatpush.msra.mxu0 0.0
    %3094 = vmatpush.msra.mxu0 0.0
    %3095 = vmatpush.msra.mxu0 0.0
    %3096 = vmatpush.msra.mxu0 0.0
    %3097 = vmatpush.msra.mxu0 0.0
    %3098 = vmatpush.msra.mxu0 0.0
    %3099 = vmatpush.msra.mxu0 0.0
    %3100 = vmatpush.msra.mxu0 %v2962
    %3101 = vmatpush.msra.mxu0 %v2961
    %3102 = vmatmul.f32.gmra.mxu0 %v3084
    %v3103 = vpop.f32.mrf.mxu0
    %v3104 = vadd.f32 0.0, %v3103
    %3105 = vdwg.mxu0
    %v3106 = vadd.f32 %v3082, %v3104
    %vm3107 = vcmask 261120
    %v3109 = vsel %vm3107, %v3070, 0
    %3111 = vmatpush.msra.mxu0 0.0
    %3112 = vmatpush.msra.mxu0 0.0
    %3113 = vmatpush.msra.mxu0 0.0
    %3114 = vmatpush.msra.mxu0 0.0
    %3115 = vmatpush.msra.mxu0 0.0
    %3116 = vmatpush.msra.mxu0 0.0
    %3117 = vmatpush.msra.mxu0 0.0
    %3118 = vmatpush.msra.mxu0 0.0
    %3119 = vmatpush.msra.mxu0 0.0
    %3120 = vmatpush.msra.mxu0 0.0
    %3121 = vmatpush.msra.mxu0 0.0
    %3122 = vmatpush.msra.mxu0 0.0
    %3123 = vmatpush.msra.mxu0 %v2966
    %3124 = vmatpush.msra.mxu0 %v2965
    %3125 = vmatpush.msra.mxu0 %v2964
    %3126 = vmatpush.msra.mxu0 %v2963
    %3127 = vmatmul.f32.gmra.mxu0 %v3109
    %v3128 = vpop.f32.mrf.mxu0
    %v3129 = vadd.f32 0.0, %v3128
    %3130 = vdwg.mxu0
    %v3131 = vadd.f32 %v3106, %v3129
    %v3132 = vxor.u32 %v3131, 2147483648
    %v3133 = vmul.f32 %v3132, 1.442695
    %v3134 = vpow.pop %v3133
    %v3135 = vadd.f32 %v3134, 1.0
    %v3136 = vrcp.pop %v3135
    %v3137 = vmul.f32 %v3135, %v3136
    %v3138 = vsub.f32 1.0, %v3137
    %v3139 = vmul.f32 %v3136, %v3138
    %v3140 = vadd.f32 %v3136, %v3139
    %vm3141 = vweird.f32 %v3135
    %vm3142 = vweird.f32 %v3136
    %vm3143 = vmor %vm3141, %vm3142
    %v3144 = vsel %vm3143, %v3136, %v3140
    %v3145 = vand.u32 2147483647, %v3135
    %vm3146 = vcmp.eq.f32.partialorder %v3145, 8.507059e+37
    %v3147 = vand.u32 %v3135, 2147483648
    %v3148 = vor.u32 1.1754944e-38, %v3147
    %v3149 = vsel %vm3146, %v3148, %v3144
    %v3150 = vmul.f32 1.0, %v3149
    %v3151 = vtanh.pop %v3131
    %3153 = vrot.lane.b32.xlu0 %v3072, 32
    %v3154 = vpop.permute.xlu0 %3153
    %v3156 = vmul.f32 %v3150, %v3154
    %3158 = vrot.lane.b32.xlu0 %v3151, 64
    %v3159 = vpop.permute.xlu0 %3158
    %v3161 = vmul.f32 %v3150, %v3159
    %3163 = vrot.lane.b32.xlu0 %v3161, 32
    %v3164 = vpop.permute.xlu0 %3163
    %v3166 = vadd.f32 %v3156, %v3164
    %v3167 = vtanh.pop %v3166
    %3169 = vrot.lane.b32.xlu0 %v3167, 64
    %v3170 = vpop.permute.xlu0 %3169
    %v3172 = vmul.f32 %v3150, %v3170
    %v3174 = vsel %vm3107, %v3074, 0
    %3176 = vmatpush.msra.mxu0 0.0
    %3177 = vmatpush.msra.mxu0 0.0
    %3178 = vmatpush.msra.mxu0 0.0
    %3179 = vmatpush.msra.mxu0 0.0
    %3180 = vmatpush.msra.mxu0 0.0
    %3181 = vmatpush.msra.mxu0 0.0
    %3182 = vmatpush.msra.mxu0 0.0
    %3183 = vmatpush.msra.mxu0 0.0
    %3184 = vmatpush.msra.mxu0 0.0
    %3185 = vmatpush.msra.mxu0 0.0
    %3186 = vmatpush.msra.mxu0 0.0
    %3187 = vmatpush.msra.mxu0 0.0
    %3188 = vmatpush.msra.mxu0 %v2974
    %3189 = vmatpush.msra.mxu0 %v2973
    %3190 = vmatpush.msra.mxu0 %v2972
    %3191 = vmatpush.msra.mxu0 %v2971
    %3192 = vmatmul.f32.gmra.mxu0 %v3174
    %v3193 = vpop.f32.mrf.mxu0
    %v3194 = vadd.f32 0.0, %v3193
    %3195 = vdwg.mxu0
    %3197 = vrot.lane.b32.xlu0 %v3172, 32
    %v3198 = vpop.permute.xlu0 %3197
    %v3199 = vsel %vm3107, %v3198, 0
    %3201 = vmatpush.msra.mxu0 0.0
    %3202 = vmatpush.msra.mxu0 0.0
    %3203 = vmatpush.msra.mxu0 0.0
    %3204 = vmatpush.msra.mxu0 0.0
    %3205 = vmatpush.msra.mxu0 0.0
    %3206 = vmatpush.msra.mxu0 0.0
    %3207 = vmatpush.msra.mxu0 0.0
    %3208 = vmatpush.msra.mxu0 0.0
    %3209 = vmatpush.msra.mxu0 0.0
    %3210 = vmatpush.msra.mxu0 0.0
    %3211 = vmatpush.msra.mxu0 0.0
    %3212 = vmatpush.msra.mxu0 0.0
    %3213 = vmatpush.msra.mxu0 %v2970
    %3214 = vmatpush.msra.mxu0 %v2969
    %3215 = vmatpush.msra.mxu0 %v2968
    %3216 = vmatpush.msra.mxu0 %v2967
    %3217 = vmatmul.f32.gmra.mxu0 %v3199
    %v3218 = vpop.f32.mrf.mxu0
    %v3219 = vadd.f32 %v3194, %v3218
    %3220 = vdwg.mxu0
    %v3222 = vperm.slane %v2975, 0
    %v3224 = vadd.f32 %v3219, %v3222
    %v3225 = vxor.u32 %v3224, 2147483648
    %v3226 = vmul.f32 %v3225, 1.442695
    %v3227 = vpow.pop %v3226
    %v3228 = vadd.f32 %v3227, 1.0
    %v3229 = vrcp.pop %v3228
    %v3230 = vmul.f32 %v3228, %v3229
    %v3231 = vsub.f32 1.0, %v3230
    %v3232 = vmul.f32 %v3229, %v3231
    %v3233 = vadd.f32 %v3229, %v3232
    %vm3234 = vweird.f32 %v3228
    %vm3235 = vweird.f32 %v3229
    %vm3236 = vmor %vm3234, %vm3235
    %v3237 = vsel %vm3236, %v3229, %v3233
    %v3238 = vand.u32 2147483647, %v3228
    %vm3239 = vcmp.eq.f32.partialorder %v3238, 8.507059e+37
    %v3240 = vand.u32 %v3228, 2147483648
    %v3241 = vor.u32 1.1754944e-38, %v3240
    %v3242 = vsel %vm3239, %v3241, %v3237
    %v3243 = vmul.f32 1.0, %v3242
    %v3244 = vtanh.pop %v3224
    %3246 = vrot.lane.b32.xlu0 %v3076, 32
    %v3247 = vpop.permute.xlu0 %3246
    %v3249 = vmul.f32 %v3243, %v3247
    %3251 = vrot.lane.b32.xlu0 %v3244, 64
    %v3252 = vpop.permute.xlu0 %3251
    %v3254 = vmul.f32 %v3243, %v3252
    %3256 = vrot.lane.b32.xlu0 %v3254, 32
    %v3257 = vpop.permute.xlu0 %3256
    %v3259 = vadd.f32 %v3249, %v3257
    %v3260 = vtanh.pop %v3259
    %3262 = vrot.lane.b32.xlu0 %v3260, 64
    %v3263 = vpop.permute.xlu0 %3262
    %v3265 = vmul.f32 %v3243, %v3263
    %v3267 = vsel %vm3107, %v3078, 0
    %3269 = vmatpush.msra.mxu0 0.0
    %3270 = vmatpush.msra.mxu0 0.0
    %3271 = vmatpush.msra.mxu0 0.0
    %3272 = vmatpush.msra.mxu0 0.0
    %3273 = vmatpush.msra.mxu0 0.0
    %3274 = vmatpush.msra.mxu0 0.0
    %3275 = vmatpush.msra.mxu0 0.0
    %3276 = vmatpush.msra.mxu0 0.0
    %3277 = vmatpush.msra.mxu0 0.0
    %3278 = vmatpush.msra.mxu0 0.0
    %3279 = vmatpush.msra.mxu0 0.0
    %3280 = vmatpush.msra.mxu0 0.0
    %3281 = vmatpush.msra.mxu0 %v2983
    %3282 = vmatpush.msra.mxu0 %v2982
    %3283 = vmatpush.msra.mxu0 %v2981
    %3284 = vmatpush.msra.mxu0 %v2980
    %3285 = vmatmul.f32.gmra.mxu0 %v3267
    %v3286 = vpop.f32.mrf.mxu0
    %v3287 = vadd.f32 0.0, %v3286
    %3288 = vdwg.mxu0
    %3290 = vrot.lane.b32.xlu0 %v3265, 32
    %v3291 = vpop.permute.xlu0 %3290
    %v3292 = vsel %vm3107, %v3291, 0
    %3294 = vmatpush.msra.mxu0 0.0
    %3295 = vmatpush.msra.mxu0 0.0
    %3296 = vmatpush.msra.mxu0 0.0
    %3297 = vmatpush.msra.mxu0 0.0
    %3298 = vmatpush.msra.mxu0 0.0
    %3299 = vmatpush.msra.mxu0 0.0
    %3300 = vmatpush.msra.mxu0 0.0
    %3301 = vmatpush.msra.mxu0 0.0
    %3302 = vmatpush.msra.mxu0 0.0
    %3303 = vmatpush.msra.mxu0 0.0
    %3304 = vmatpush.msra.mxu0 0.0
    %3305 = vmatpush.msra.mxu0 0.0
    %3306 = vmatpush.msra.mxu0 %v2979
    %3307 = vmatpush.msra.mxu0 %v2978
    %3308 = vmatpush.msra.mxu0 %v2977
    %3309 = vmatpush.msra.mxu0 %v2976
    %3310 = vmatmul.f32.gmra.mxu0 %v3292
    %v3311 = vpop.f32.mrf.mxu0
    %v3312 = vadd.f32 %v3287, %v3311
    %3313 = vdwg.mxu0
    %v3315 = vperm.slane %v2984, 0
    %v3317 = vadd.f32 %v3312, %v3315
    %v3318 = vxor.u32 %v3317, 2147483648
    %v3319 = vmul.f32 %v3318, 1.442695
    %v3320 = vpow.pop %v3319
    %v3321 = vadd.f32 %v3320, 1.0
    %v3322 = vrcp.pop %v3321
    %v3323 = vmul.f32 %v3321, %v3322
    %v3324 = vsub.f32 1.0, %v3323
    %v3325 = vmul.f32 %v3322, %v3324
    %v3326 = vadd.f32 %v3322, %v3325
    %vm3327 = vweird.f32 %v3321
    %vm3328 = vweird.f32 %v3322
    %vm3329 = vmor %vm3327, %vm3328
    %v3330 = vsel %vm3329, %v3322, %v3326
    %v3331 = vand.u32 2147483647, %v3321
    %vm3332 = vcmp.eq.f32.partialorder %v3331, 8.507059e+37
    %v3333 = vand.u32 %v3321, 2147483648
    %v3334 = vor.u32 1.1754944e-38, %v3333
    %v3335 = vsel %vm3332, %v3334, %v3330
    %v3336 = vmul.f32 1.0, %v3335
    %v3337 = vtanh.pop %v3317
    %3339 = vrot.lane.b32.xlu0 %v3080, 32
    %v3340 = vpop.permute.xlu0 %3339
    %v3342 = vmul.f32 %v3336, %v3340
    %3344 = vrot.lane.b32.xlu0 %v3337, 64
    %v3345 = vpop.permute.xlu0 %3344
    %v3347 = vmul.f32 %v3336, %v3345
    %3349 = vrot.lane.b32.xlu0 %v3347, 32
    %v3350 = vpop.permute.xlu0 %3349
    %v3352 = vadd.f32 %v3342, %v3350
    %v3353 = vtanh.pop %v3352
    %3355 = vrot.lane.b32.xlu0 %v3353, 64
    %v3356 = vpop.permute.xlu0 %3355
    %v3358 = vmul.f32 %v3336, %v3356
    %v3360 = vperm.slane %v83, 0
    %3363 = vrot.lane.b32.xlu0 %v3358, 32
    %v3364 = vpop.permute.xlu0 %3363
    %v3365 = vsel %vm3107, %v3364, 0
    %3367 = vmatpush.msra.mxu0 0.0
    %3368 = vmatpush.msra.mxu0 0.0
    %3369 = vmatpush.msra.mxu0 0.0
    %3370 = vmatpush.msra.mxu0 0.0
    %3371 = vmatpush.msra.mxu0 0.0
    %3372 = vmatpush.msra.mxu0 0.0
    %3373 = vmatpush.msra.mxu0 0.0
    %3374 = vmatpush.msra.mxu0 0.0
    %3375 = vmatpush.msra.mxu0 0.0
    %3376 = vmatpush.msra.mxu0 0.0
    %3377 = vmatpush.msra.mxu0 0.0
    %3378 = vmatpush.msra.mxu0 0.0
    %3379 = vmatpush.msra.mxu0 %v82
    %3380 = vmatpush.msra.mxu0 %v81
    %3381 = vmatpush.msra.mxu0 %v80
    %3382 = vmatpush.msra.mxu0 %v79
    %3383 = vmatmul.f32.gmra.mxu0 %v3365
    %v3384 = vpop.f32.mrf.mxu0
    %v3385 = vadd.f32 %v3360, %v3384
    %3386 = vdwg.mxu0
    %v3388 = vrot.slane %v3385, 1
    %v3389 = vrot.slane %v3385, 2
    %v3390 = vrot.slane %v3385, 3
    %v3391 = vrot.slane %v3385, 4
    %v3392 = vrot.slane %v3385, 5
    %v3393 = vrot.slane %v3385, 6
    %v3394 = vrot.slane %v3385, 7
    %v3395 = vsel %vm3010, %v3385, 0
    %v3398 = vsel %vm3010, %v2705, 0
    %v3401 = vsel %vm3010, %v2706, 0
    %v3404 = vsel %vm3010, %v2707, 0
    %v3407 = vsel %vm3010, %v2708, 0
    %v3410 = vsel %vm3010, %v2709, 0
    %v3413 = vsel %vm3010, %v2710, 0
    %v3416 = vsel %vm3010, %v2711, 0
    %v3419 = vsel %vm3010, %v2712, 0
    %v3422 = vsel %vm3010, %v2713, 0
    %v3425 = vsel %vm3010, %v2714, 0
    %v3428 = vsel %vm3010, %v2715, 0
    %v3431 = vsel %vm3010, %v2716, 0
    %v3434 = vsel %vm3010, %v2717, 0
    %v3437 = vsel %vm3010, %v2718, 0
    %v3440 = vsel %vm3010, %v2719, 0
    %v3443 = vsel %vm3010, %v2720, 0
    %3445 = vmatpush.xpose.msra.mxu0 %v3443
    %3446 = vmatpush.xpose.msra.mxu0 %v3440
    %3447 = vmatpush.xpose.msra.mxu0 %v3437
    %3448 = vmatpush.xpose.msra.mxu0 %v3434
    %3449 = vmatpush.xpose.msra.mxu0 %v3431
    %3450 = vmatpush.xpose.msra.mxu0 %v3428
    %3451 = vmatpush.xpose.msra.mxu0 %v3425
    %3452 = vmatpush.xpose.msra.mxu0 %v3422
    %3453 = vmatpush.xpose.msra.mxu0 %v3419
    %3454 = vmatpush.xpose.msra.mxu0 %v3416
    %3455 = vmatpush.xpose.msra.mxu0 %v3413
    %3456 = vmatpush.xpose.msra.mxu0 %v3410
    %3457 = vmatpush.xpose.msra.mxu0 %v3407
    %3458 = vmatpush.xpose.msra.mxu0 %v3404
    %3459 = vmatpush.xpose.msra.mxu0 %v3401
    %3460 = vmatpush.xpose.msra.mxu0 %v3398
    %3461 = vmatmul.f32.gmra.mxu0 %v3395
    %v3462 = vpop.f32.mrf.mxu0
    %v3463 = vadd.f32 0.0, %v3462
    %3464 = vdwg.mxu0
    %v3465 = vsel %vm3010, %v3388, 0
    %v3468 = vsel %vm3010, %v2721, 0
    %v3471 = vsel %vm3010, %v2722, 0
    %v3474 = vsel %vm3010, %v2723, 0
    %v3477 = vsel %vm3010, %v2724, 0
    %v3480 = vsel %vm3010, %v2725, 0
    %v3483 = vsel %vm3010, %v2726, 0
    %v3486 = vsel %vm3010, %v2727, 0
    %v3489 = vsel %vm3010, %v2728, 0
    %v3492 = vsel %vm3010, %v2729, 0
    %v3495 = vsel %vm3010, %v2730, 0
    %v3498 = vsel %vm3010, %v2731, 0
    %v3501 = vsel %vm3010, %v2732, 0
    %v3504 = vsel %vm3010, %v2733, 0
    %v3507 = vsel %vm3010, %v2734, 0
    %v3510 = vsel %vm3010, %v2735, 0
    %v3513 = vsel %vm3010, %v2736, 0
    %3515 = vmatpush.xpose.msra.mxu0 %v3513
    %3516 = vmatpush.xpose.msra.mxu0 %v3510
    %3517 = vmatpush.xpose.msra.mxu0 %v3507
    %3518 = vmatpush.xpose.msra.mxu0 %v3504
    %3519 = vmatpush.xpose.msra.mxu0 %v3501
    %3520 = vmatpush.xpose.msra.mxu0 %v3498
    %3521 = vmatpush.xpose.msra.mxu0 %v3495
    %3522 = vmatpush.xpose.msra.mxu0 %v3492
    %3523 = vmatpush.xpose.msra.mxu0 %v3489
    %3524 = vmatpush.xpose.msra.mxu0 %v3486
    %3525 = vmatpush.xpose.msra.mxu0 %v3483
    %3526 = vmatpush.xpose.msra.mxu0 %v3480
    %3527 = vmatpush.xpose.msra.mxu0 %v3477
    %3528 = vmatpush.xpose.msra.mxu0 %v3474
    %3529 = vmatpush.xpose.msra.mxu0 %v3471
    %3530 = vmatpush.xpose.msra.mxu0 %v3468
    %3531 = vmatmul.f32.gmra.mxu0 %v3465
    %v3532 = vpop.f32.mrf.mxu0
    %v3533 = vadd.f32 0.0, %v3532
    %3534 = vdwg.mxu0
    %v3535 = vsel %vm3010, %v3389, 0
    %v3538 = vsel %vm3010, %v2737, 0
    %v3541 = vsel %vm3010, %v2738, 0
    %v3544 = vsel %vm3010, %v2739, 0
    %v3547 = vsel %vm3010, %v2740, 0
    %v3550 = vsel %vm3010, %v2741, 0
    %v3553 = vsel %vm3010, %v2742, 0
    %v3556 = vsel %vm3010, %v2743, 0
    %v3559 = vsel %vm3010, %v2744, 0
    %v3562 = vsel %vm3010, %v2745, 0
    %v3565 = vsel %vm3010, %v2746, 0
    %v3568 = vsel %vm3010, %v2747, 0
    %v3571 = vsel %vm3010, %v2748, 0
    %v3574 = vsel %vm3010, %v2749, 0
    %v3577 = vsel %vm3010, %v2750, 0
    %v3580 = vsel %vm3010, %v2751, 0
    %v3583 = vsel %vm3010, %v2752, 0
    %3585 = vmatpush.xpose.msra.mxu0 %v3583
    %3586 = vmatpush.xpose.msra.mxu0 %v3580
    %3587 = vmatpush.xpose.msra.mxu0 %v3577
    %3588 = vmatpush.xpose.msra.mxu0 %v3574
    %3589 = vmatpush.xpose.msra.mxu0 %v3571
    %3590 = vmatpush.xpose.msra.mxu0 %v3568
    %3591 = vmatpush.xpose.msra.mxu0 %v3565
    %3592 = vmatpush.xpose.msra.mxu0 %v3562
    %3593 = vmatpush.xpose.msra.mxu0 %v3559
    %3594 = vmatpush.xpose.msra.mxu0 %v3556
    %3595 = vmatpush.xpose.msra.mxu0 %v3553
    %3596 = vmatpush.xpose.msra.mxu0 %v3550
    %3597 = vmatpush.xpose.msra.mxu0 %v3547
    %3598 = vmatpush.xpose.msra.mxu0 %v3544
    %3599 = vmatpush.xpose.msra.mxu0 %v3541
    %3600 = vmatpush.xpose.msra.mxu0 %v3538
    %3601 = vmatmul.f32.gmra.mxu0 %v3535
    %v3602 = vpop.f32.mrf.mxu0
    %v3603 = vadd.f32 0.0, %v3602
    %3604 = vdwg.mxu0
    %v3605 = vsel %vm3010, %v3390, 0
    %v3608 = vsel %vm3010, %v2753, 0
    %v3611 = vsel %vm3010, %v2754, 0
    %v3614 = vsel %vm3010, %v2755, 0
    %v3617 = vsel %vm3010, %v2756, 0
    %v3620 = vsel %vm3010, %v2757, 0
    %v3623 = vsel %vm3010, %v2758, 0
    %v3626 = vsel %vm3010, %v2759, 0
    %v3629 = vsel %vm3010, %v2760, 0
    %v3632 = vsel %vm3010, %v2761, 0
    %v3635 = vsel %vm3010, %v2762, 0
    %v3638 = vsel %vm3010, %v2763, 0
    %v3641 = vsel %vm3010, %v2764, 0
    %v3644 = vsel %vm3010, %v2765, 0
    %v3647 = vsel %vm3010, %v2766, 0
    %v3650 = vsel %vm3010, %v2767, 0
    %v3653 = vsel %vm3010, %v2768, 0
    %3655 = vmatpush.xpose.msra.mxu0 %v3653
    %3656 = vmatpush.xpose.msra.mxu0 %v3650
    %3657 = vmatpush.xpose.msra.mxu0 %v3647
    %3658 = vmatpush.xpose.msra.mxu0 %v3644
    %3659 = vmatpush.xpose.msra.mxu0 %v3641
    %3660 = vmatpush.xpose.msra.mxu0 %v3638
    %3661 = vmatpush.xpose.msra.mxu0 %v3635
    %3662 = vmatpush.xpose.msra.mxu0 %v3632
    %3663 = vmatpush.xpose.msra.mxu0 %v3629
    %3664 = vmatpush.xpose.msra.mxu0 %v3626
    %3665 = vmatpush.xpose.msra.mxu0 %v3623
    %3666 = vmatpush.xpose.msra.mxu0 %v3620
    %3667 = vmatpush.xpose.msra.mxu0 %v3617
    %3668 = vmatpush.xpose.msra.mxu0 %v3614
    %3669 = vmatpush.xpose.msra.mxu0 %v3611
    %3670 = vmatpush.xpose.msra.mxu0 %v3608
    %3671 = vmatmul.f32.gmra.mxu0 %v3605
    %v3672 = vpop.f32.mrf.mxu0
    %v3673 = vadd.f32 0.0, %v3672
    %3674 = vdwg.mxu0
    %v3675 = vsel %vm3010, %v3391, 0
    %v3678 = vsel %vm3010, %v2769, 0
    %v3681 = vsel %vm3010, %v2770, 0
    %v3684 = vsel %vm3010, %v2771, 0
    %v3687 = vsel %vm3010, %v2772, 0
    %v3690 = vsel %vm3010, %v2773, 0
    %v3693 = vsel %vm3010, %v2774, 0
    %v3696 = vsel %vm3010, %v2775, 0
    %v3699 = vsel %vm3010, %v2776, 0
    %v3702 = vsel %vm3010, %v2777, 0
    %v3705 = vsel %vm3010, %v2778, 0
    %v3708 = vsel %vm3010, %v2779, 0
    %v3711 = vsel %vm3010, %v2780, 0
    %v3714 = vsel %vm3010, %v2781, 0
    %v3717 = vsel %vm3010, %v2782, 0
    %v3720 = vsel %vm3010, %v2783, 0
    %v3723 = vsel %vm3010, %v2784, 0
    %3725 = vmatpush.xpose.msra.mxu0 %v3723
    %3726 = vmatpush.xpose.msra.mxu0 %v3720
    %3727 = vmatpush.xpose.msra.mxu0 %v3717
    %3728 = vmatpush.xpose.msra.mxu0 %v3714
    %3729 = vmatpush.xpose.msra.mxu0 %v3711
    %3730 = vmatpush.xpose.msra.mxu0 %v3708
    %3731 = vmatpush.xpose.msra.mxu0 %v3705
    %3732 = vmatpush.xpose.msra.mxu0 %v3702
    %3733 = vmatpush.xpose.msra.mxu0 %v3699
    %3734 = vmatpush.xpose.msra.mxu0 %v3696
    %3735 = vmatpush.xpose.msra.mxu0 %v3693
    %3736 = vmatpush.xpose.msra.mxu0 %v3690
    %3737 = vmatpush.xpose.msra.mxu0 %v3687
    %3738 = vmatpush.xpose.msra.mxu0 %v3684
    %3739 = vmatpush.xpose.msra.mxu0 %v3681
    %3740 = vmatpush.xpose.msra.mxu0 %v3678
    %3741 = vmatmul.f32.gmra.mxu0 %v3675
    %v3742 = vpop.f32.mrf.mxu0
    %v3743 = vadd.f32 0.0, %v3742
    %3744 = vdwg.mxu0
    %v3745 = vsel %vm3010, %v3392, 0
    %v3748 = vsel %vm3010, %v2785, 0
    %v3751 = vsel %vm3010, %v2786, 0
    %v3754 = vsel %vm3010, %v2787, 0
    %v3757 = vsel %vm3010, %v2788, 0
    %v3760 = vsel %vm3010, %v2789, 0
    %v3763 = vsel %vm3010, %v2790, 0
    %v3766 = vsel %vm3010, %v2791, 0
    %v3769 = vsel %vm3010, %v2792, 0
    %v3772 = vsel %vm3010, %v2793, 0
    %v3775 = vsel %vm3010, %v2794, 0
    %v3778 = vsel %vm3010, %v2795, 0
    %v3781 = vsel %vm3010, %v2796, 0
    %v3784 = vsel %vm3010, %v2797, 0
    %v3787 = vsel %vm3010, %v2798, 0
    %v3790 = vsel %vm3010, %v2799, 0
    %v3793 = vsel %vm3010, %v2800, 0
    %3795 = vmatpush.xpose.msra.mxu0 %v3793
    %3796 = vmatpush.xpose.msra.mxu0 %v3790
    %3797 = vmatpush.xpose.msra.mxu0 %v3787
    %3798 = vmatpush.xpose.msra.mxu0 %v3784
    %3799 = vmatpush.xpose.msra.mxu0 %v3781
    %3800 = vmatpush.xpose.msra.mxu0 %v3778
    %3801 = vmatpush.xpose.msra.mxu0 %v3775
    %3802 = vmatpush.xpose.msra.mxu0 %v3772
    %3803 = vmatpush.xpose.msra.mxu0 %v3769
    %3804 = vmatpush.xpose.msra.mxu0 %v3766
    %3805 = vmatpush.xpose.msra.mxu0 %v3763
    %3806 = vmatpush.xpose.msra.mxu0 %v3760
    %3807 = vmatpush.xpose.msra.mxu0 %v3757
    %3808 = vmatpush.xpose.msra.mxu0 %v3754
    %3809 = vmatpush.xpose.msra.mxu0 %v3751
    %3810 = vmatpush.xpose.msra.mxu0 %v3748
    %3811 = vmatmul.f32.gmra.mxu0 %v3745
    %v3812 = vpop.f32.mrf.mxu0
    %v3813 = vadd.f32 0.0, %v3812
    %3814 = vdwg.mxu0
    %v3815 = vsel %vm3010, %v3393, 0
    %v3818 = vsel %vm3010, %v2801, 0
    %v3821 = vsel %vm3010, %v2802, 0
    %v3824 = vsel %vm3010, %v2803, 0
    %v3827 = vsel %vm3010, %v2804, 0
    %v3830 = vsel %vm3010, %v2805, 0
    %v3833 = vsel %vm3010, %v2806, 0
    %v3836 = vsel %vm3010, %v2807, 0
    %v3839 = vsel %vm3010, %v2808, 0
    %v3842 = vsel %vm3010, %v2809, 0
    %v3845 = vsel %vm3010, %v2810, 0
    %v3848 = vsel %vm3010, %v2811, 0
    %v3851 = vsel %vm3010, %v2812, 0
    %v3854 = vsel %vm3010, %v2813, 0
    %v3857 = vsel %vm3010, %v2814, 0
    %v3860 = vsel %vm3010, %v2815, 0
    %v3863 = vsel %vm3010, %v2816, 0
    %3865 = vmatpush.xpose.msra.mxu0 %v3863
    %3866 = vmatpush.xpose.msra.mxu0 %v3860
    %3867 = vmatpush.xpose.msra.mxu0 %v3857
    %3868 = vmatpush.xpose.msra.mxu0 %v3854
    %3869 = vmatpush.xpose.msra.mxu0 %v3851
    %3870 = vmatpush.xpose.msra.mxu0 %v3848
    %3871 = vmatpush.xpose.msra.mxu0 %v3845
    %3872 = vmatpush.xpose.msra.mxu0 %v3842
    %3873 = vmatpush.xpose.msra.mxu0 %v3839
    %3874 = vmatpush.xpose.msra.mxu0 %v3836
    %3875 = vmatpush.xpose.msra.mxu0 %v3833
    %3876 = vmatpush.xpose.msra.mxu0 %v3830
    %3877 = vmatpush.xpose.msra.mxu0 %v3827
    %3878 = vmatpush.xpose.msra.mxu0 %v3824
    %3879 = vmatpush.xpose.msra.mxu0 %v3821
    %3880 = vmatpush.xpose.msra.mxu0 %v3818
    %3881 = vmatmul.f32.gmra.mxu0 %v3815
    %v3882 = vpop.f32.mrf.mxu0
    %v3883 = vadd.f32 0.0, %v3882
    %3884 = vdwg.mxu0
    %v3885 = vsel %vm3010, %v3394, 0
    %v3888 = vsel %vm3010, %v2817, 0
    %v3891 = vsel %vm3010, %v2818, 0
    %v3894 = vsel %vm3010, %v2819, 0
    %v3897 = vsel %vm3010, %v2820, 0
    %v3900 = vsel %vm3010, %v2821, 0
    %v3903 = vsel %vm3010, %v2822, 0
    %v3906 = vsel %vm3010, %v2823, 0
    %v3909 = vsel %vm3010, %v2824, 0
    %v3912 = vsel %vm3010, %v2825, 0
    %v3915 = vsel %vm3010, %v2826, 0
    %v3918 = vsel %vm3010, %v2827, 0
    %v3921 = vsel %vm3010, %v2828, 0
    %v3924 = vsel %vm3010, %v2829, 0
    %v3927 = vsel %vm3010, %v2830, 0
    %v3930 = vsel %vm3010, %v2831, 0
    %v3933 = vsel %vm3010, %v2832, 0
    %3935 = vmatpush.xpose.msra.mxu0 %v3933
    %3936 = vmatpush.xpose.msra.mxu0 %v3930
    %3937 = vmatpush.xpose.msra.mxu0 %v3927
    %3938 = vmatpush.xpose.msra.mxu0 %v3924
    %3939 = vmatpush.xpose.msra.mxu0 %v3921
    %3940 = vmatpush.xpose.msra.mxu0 %v3918
    %3941 = vmatpush.xpose.msra.mxu0 %v3915
    %3942 = vmatpush.xpose.msra.mxu0 %v3912
    %3943 = vmatpush.xpose.msra.mxu0 %v3909
    %3944 = vmatpush.xpose.msra.mxu0 %v3906
    %3945 = vmatpush.xpose.msra.mxu0 %v3903
    %3946 = vmatpush.xpose.msra.mxu0 %v3900
    %3947 = vmatpush.xpose.msra.mxu0 %v3897
    %3948 = vmatpush.xpose.msra.mxu0 %v3894
    %3949 = vmatpush.xpose.msra.mxu0 %v3891
    %3950 = vmatpush.xpose.msra.mxu0 %v3888
    %3951 = vmatmul.f32.gmra.mxu0 %v3885
    %v3952 = vpop.f32.mrf.mxu0
    %v3953 = vadd.f32 0.0, %v3952
    %3954 = vdwg.mxu0
    %v3963 = vrot.slane %v3533, 7
    %vm3964 = vcmask 1041409
    %v3965 = vsel %vm3964, %v3963, %v3463
    %v3966 = vrot.slane %v3603, 6
    %vm3967 = vcmask 1042434
    %v3968 = vsel %vm3967, %v3966, %v3965
    %v3969 = vrot.slane %v3673, 5
    %vm3970 = vcmask 1043459
    %v3971 = vsel %vm3970, %v3969, %v3968
    %v3972 = vrot.slane %v3743, 4
    %vm3973 = vcmask 1044484
    %v3974 = vsel %vm3973, %v3972, %v3971
    %v3975 = vrot.slane %v3813, 3
    %vm3976 = vcmask 1045509
    %v3977 = vsel %vm3976, %v3975, %v3974
    %v3978 = vrot.slane %v3883, 2
    %vm3979 = vcmask 1046534
    %v3980 = vsel %vm3979, %v3978, %v3977
    %v3981 = vrot.slane %v3953, 1
    %vm3982 = vcmask 1047559
    %v3983 = vsel %vm3982, %v3981, %v3980
    %3985 = vmax.xlane.f32.xlu0 %v3983
    %v3986 = vpop.xlane.xlu0 %3985
    %v3988 = vrot.slane %v3986, 1
    %v3989 = vrot.slane %v3986, 2
    %v3990 = vrot.slane %v3986, 3
    %v3991 = vrot.slane %v3986, 4
    %v3992 = vrot.slane %v3986, 5
    %v3993 = vrot.slane %v3986, 6
    %v3994 = vrot.slane %v3986, 7
    %v4003 = vsub.f32 %v3463, %v3986
    %v4004 = vsub.f32 %v3533, %v3988
    %v4005 = vsub.f32 %v3603, %v3989
    %v4006 = vsub.f32 %v3673, %v3990
    %v4007 = vsub.f32 %v3743, %v3991
    %v4008 = vsub.f32 %v3813, %v3992
    %v4009 = vsub.f32 %v3883, %v3993
    %v4010 = vsub.f32 %v3953, %v3994
    %v4011 = vmul.f32 %v4003, 1.442695
    %v4012 = vpow.pop %v4011
    %v4013 = vmul.f32 %v4004, 1.442695
    %v4014 = vpow.pop %v4013
    %v4015 = vmul.f32 %v4005, 1.442695
    %v4016 = vpow.pop %v4015
    %v4017 = vmul.f32 %v4006, 1.442695
    %v4018 = vpow.pop %v4017
    %v4019 = vmul.f32 %v4007, 1.442695
    %v4020 = vpow.pop %v4019
    %v4021 = vmul.f32 %v4008, 1.442695
    %v4022 = vpow.pop %v4021
    %v4023 = vmul.f32 %v4009, 1.442695
    %v4024 = vpow.pop %v4023
    %v4025 = vmul.f32 %v4010, 1.442695
    %v4026 = vpow.pop %v4025
    %v4028 = vrot.slane %v78, 1
    %v4029 = vrot.slane %v78, 2
    %v4030 = vrot.slane %v78, 3
    %v4031 = vrot.slane %v78, 4
    %v4032 = vrot.slane %v78, 5
    %v4033 = vrot.slane %v78, 6
    %v4034 = vrot.slane %v78, 7
    %v4043 = vmul.f32 %v4012, %v78
    %v4044 = vmul.f32 %v4014, %v4028
    %v4045 = vmul.f32 %v4016, %v4029
    %v4046 = vmul.f32 %v4018, %v4030
    %v4047 = vmul.f32 %v4020, %v4031
    %v4048 = vmul.f32 %v4022, %v4032
    %v4049 = vmul.f32 %v4024, %v4033
    %v4050 = vmul.f32 %v4026, %v4034
    %v4059 = vrot.slane %v4044, 7
    %v4060 = vsel %vm3964, %v4059, %v4043
    %v4061 = vrot.slane %v4045, 6
    %v4062 = vsel %vm3967, %v4061, %v4060
    %v4063 = vrot.slane %v4046, 5
    %v4064 = vsel %vm3970, %v4063, %v4062
    %v4065 = vrot.slane %v4047, 4
    %v4066 = vsel %vm3973, %v4065, %v4064
    %v4067 = vrot.slane %v4048, 3
    %v4068 = vsel %vm3976, %v4067, %v4066
    %v4069 = vrot.slane %v4049, 2
    %v4070 = vsel %vm3979, %v4069, %v4068
    %v4071 = vrot.slane %v4050, 1
    %v4072 = vsel %vm3982, %v4071, %v4070
    %4074 = vadd.xlane.f32.xlu0 %v4072
    %v4075 = vpop.xlane.xlu0 %4074
    %v4076 = vmax.f32 %v4075, 1e-12
    %v4078 = vrot.slane %v4076, 1
    %v4079 = vrot.slane %v4076, 2
    %v4080 = vrot.slane %v4076, 3
    %v4081 = vrot.slane %v4076, 4
    %v4082 = vrot.slane %v4076, 5
    %v4083 = vrot.slane %v4076, 6
    %v4084 = vrot.slane %v4076, 7
    %v4093 = vrcp.pop %v4076
    %v4094 = vmul.f32 %v4076, %v4093
    %v4095 = vsub.f32 1.0, %v4094
    %v4096 = vmul.f32 %v4093, %v4095
    %v4097 = vadd.f32 %v4093, %v4096
    %vm4098 = vweird.f32 %v4076
    %vm4099 = vweird.f32 %v4093
    %vm4100 = vmor %vm4098, %vm4099
    %v4101 = vsel %vm4100, %v4093, %v4097
    %v4102 = vand.u32 2147483647, %v4076
    %vm4103 = vcmp.eq.f32.partialorder %v4102, 8.507059e+37
    %v4104 = vand.u32 %v4076, 2147483648
    %v4105 = vor.u32 1.1754944e-38, %v4104
    %v4106 = vsel %vm4103, %v4105, %v4101
    %v4107 = vmul.f32 %v4043, %v4106
    %v4108 = vrcp.pop %v4078
    %v4109 = vmul.f32 %v4078, %v4108
    %v4110 = vsub.f32 1.0, %v4109
    %v4111 = vmul.f32 %v4108, %v4110
    %v4112 = vadd.f32 %v4108, %v4111
    %vm4113 = vweird.f32 %v4078
    %vm4114 = vweird.f32 %v4108
    %vm4115 = vmor %vm4113, %vm4114
    %v4116 = vsel %vm4115, %v4108, %v4112
    %v4117 = vand.u32 2147483647, %v4078
    %vm4118 = vcmp.eq.f32.partialorder %v4117, 8.507059e+37
    %v4119 = vand.u32 %v4078, 2147483648
    %v4120 = vor.u32 1.1754944e-38, %v4119
    %v4121 = vsel %vm4118, %v4120, %v4116
    %v4122 = vmul.f32 %v4044, %v4121
    %v4123 = vrcp.pop %v4079
    %v4124 = vmul.f32 %v4079, %v4123
    %v4125 = vsub.f32 1.0, %v4124
    %v4126 = vmul.f32 %v4123, %v4125
    %v4127 = vadd.f32 %v4123, %v4126
    %vm4128 = vweird.f32 %v4079
    %vm4129 = vweird.f32 %v4123
    %vm4130 = vmor %vm4128, %vm4129
    %v4131 = vsel %vm4130, %v4123, %v4127
    %v4132 = vand.u32 2147483647, %v4079
    %vm4133 = vcmp.eq.f32.partialorder %v4132, 8.507059e+37
    %v4134 = vand.u32 %v4079, 2147483648
    %v4135 = vor.u32 1.1754944e-38, %v4134
    %v4136 = vsel %vm4133, %v4135, %v4131
    %v4137 = vmul.f32 %v4045, %v4136
    %v4138 = vrcp.pop %v4080
    %v4139 = vmul.f32 %v4080, %v4138
    %v4140 = vsub.f32 1.0, %v4139
    %v4141 = vmul.f32 %v4138, %v4140
    %v4142 = vadd.f32 %v4138, %v4141
    %vm4143 = vweird.f32 %v4080
    %vm4144 = vweird.f32 %v4138
    %vm4145 = vmor %vm4143, %vm4144
    %v4146 = vsel %vm4145, %v4138, %v4142
    %v4147 = vand.u32 2147483647, %v4080
    %vm4148 = vcmp.eq.f32.partialorder %v4147, 8.507059e+37
    %v4149 = vand.u32 %v4080, 2147483648
    %v4150 = vor.u32 1.1754944e-38, %v4149
    %v4151 = vsel %vm4148, %v4150, %v4146
    %v4152 = vmul.f32 %v4046, %v4151
    %v4153 = vrcp.pop %v4081
    %v4154 = vmul.f32 %v4081, %v4153
    %v4155 = vsub.f32 1.0, %v4154
    %v4156 = vmul.f32 %v4153, %v4155
    %v4157 = vadd.f32 %v4153, %v4156
    %vm4158 = vweird.f32 %v4081
    %vm4159 = vweird.f32 %v4153
    %vm4160 = vmor %vm4158, %vm4159
    %v4161 = vsel %vm4160, %v4153, %v4157
    %v4162 = vand.u32 2147483647, %v4081
    %vm4163 = vcmp.eq.f32.partialorder %v4162, 8.507059e+37
    %v4164 = vand.u32 %v4081, 2147483648
    %v4165 = vor.u32 1.1754944e-38, %v4164
    %v4166 = vsel %vm4163, %v4165, %v4161
    %v4167 = vmul.f32 %v4047, %v4166
    %v4168 = vrcp.pop %v4082
    %v4169 = vmul.f32 %v4082, %v4168
    %v4170 = vsub.f32 1.0, %v4169
    %v4171 = vmul.f32 %v4168, %v4170
    %v4172 = vadd.f32 %v4168, %v4171
    %vm4173 = vweird.f32 %v4082
    %vm4174 = vweird.f32 %v4168
    %vm4175 = vmor %vm4173, %vm4174
    %v4176 = vsel %vm4175, %v4168, %v4172
    %v4177 = vand.u32 2147483647, %v4082
    %vm4178 = vcmp.eq.f32.partialorder %v4177, 8.507059e+37
    %v4179 = vand.u32 %v4082, 2147483648
    %v4180 = vor.u32 1.1754944e-38, %v4179
    %v4181 = vsel %vm4178, %v4180, %v4176
    %v4182 = vmul.f32 %v4048, %v4181
    %v4183 = vrcp.pop %v4083
    %v4184 = vmul.f32 %v4083, %v4183
    %v4185 = vsub.f32 1.0, %v4184
    %v4186 = vmul.f32 %v4183, %v4185
    %v4187 = vadd.f32 %v4183, %v4186
    %vm4188 = vweird.f32 %v4083
    %vm4189 = vweird.f32 %v4183
    %vm4190 = vmor %vm4188, %vm4189
    %v4191 = vsel %vm4190, %v4183, %v4187
    %v4192 = vand.u32 2147483647, %v4083
    %vm4193 = vcmp.eq.f32.partialorder %v4192, 8.507059e+37
    %v4194 = vand.u32 %v4083, 2147483648
    %v4195 = vor.u32 1.1754944e-38, %v4194
    %v4196 = vsel %vm4193, %v4195, %v4191
    %v4197 = vmul.f32 %v4049, %v4196
    %v4198 = vrcp.pop %v4084
    %v4199 = vmul.f32 %v4084, %v4198
    %v4200 = vsub.f32 1.0, %v4199
    %v4201 = vmul.f32 %v4198, %v4200
    %v4202 = vadd.f32 %v4198, %v4201
    %vm4203 = vweird.f32 %v4084
    %vm4204 = vweird.f32 %v4198
    %vm4205 = vmor %vm4203, %vm4204
    %v4206 = vsel %vm4205, %v4198, %v4202
    %v4207 = vand.u32 2147483647, %v4084
    %vm4208 = vcmp.eq.f32.partialorder %v4207, 8.507059e+37
    %v4209 = vand.u32 %v4084, 2147483648
    %v4210 = vor.u32 1.1754944e-38, %v4209
    %v4211 = vsel %vm4208, %v4210, %v4206
    %v4212 = vmul.f32 %v4050, %v4211
    %4213 = vmatpush.msra.mxu0 %v2848
    %4214 = vmatpush.msra.mxu0 %v2847
    %4215 = vmatpush.msra.mxu0 %v2846
    %4216 = vmatpush.msra.mxu0 %v2845
    %4217 = vmatpush.msra.mxu0 %v2844
    %4218 = vmatpush.msra.mxu0 %v2843
    %4219 = vmatpush.msra.mxu0 %v2842
    %4220 = vmatpush.msra.mxu0 %v2841
    %4221 = vmatpush.msra.mxu0 %v2840
    %4222 = vmatpush.msra.mxu0 %v2839
    %4223 = vmatpush.msra.mxu0 %v2838
    %4224 = vmatpush.msra.mxu0 %v2837
    %4225 = vmatpush.msra.mxu0 %v2836
    %4226 = vmatpush.msra.mxu0 %v2835
    %4227 = vmatpush.msra.mxu0 %v2834
    %4228 = vmatpush.msra.mxu0 %v2833
    %4229 = vmatmul.f32.gmra.mxu0 %v4107
    %v4230 = vpop.f32.mrf.mxu0
    %v4231 = vadd.f32 0.0, %v4230
    %4232 = vdwg.mxu0
    %4233 = vmatpush.msra.mxu0 %v2864
    %4234 = vmatpush.msra.mxu0 %v2863
    %4235 = vmatpush.msra.mxu0 %v2862
    %4236 = vmatpush.msra.mxu0 %v2861
    %4237 = vmatpush.msra.mxu0 %v2860
    %4238 = vmatpush.msra.mxu0 %v2859
    %4239 = vmatpush.msra.mxu0 %v2858
    %4240 = vmatpush.msra.mxu0 %v2857
    %4241 = vmatpush.msra.mxu0 %v2856
    %4242 = vmatpush.msra.mxu0 %v2855
    %4243 = vmatpush.msra.mxu0 %v2854
    %4244 = vmatpush.msra.mxu0 %v2853
    %4245 = vmatpush.msra.mxu0 %v2852
    %4246 = vmatpush.msra.mxu0 %v2851
    %4247 = vmatpush.msra.mxu0 %v2850
    %4248 = vmatpush.msra.mxu0 %v2849
    %4249 = vmatmul.f32.gmra.mxu0 %v4122
    %v4250 = vpop.f32.mrf.mxu0
    %v4251 = vadd.f32 0.0, %v4250
    %4252 = vdwg.mxu0
    %4253 = vmatpush.msra.mxu0 %v2880
    %4254 = vmatpush.msra.mxu0 %v2879
    %4255 = vmatpush.msra.mxu0 %v2878
    %4256 = vmatpush.msra.mxu0 %v2877
    %4257 = vmatpush.msra.mxu0 %v2876
    %4258 = vmatpush.msra.mxu0 %v2875
    %4259 = vmatpush.msra.mxu0 %v2874
    %4260 = vmatpush.msra.mxu0 %v2873
    %4261 = vmatpush.msra.mxu0 %v2872
    %4262 = vmatpush.msra.mxu0 %v2871
    %4263 = vmatpush.msra.mxu0 %v2870
    %4264 = vmatpush.msra.mxu0 %v2869
    %4265 = vmatpush.msra.mxu0 %v2868
    %4266 = vmatpush.msra.mxu0 %v2867
    %4267 = vmatpush.msra.mxu0 %v2866
    %4268 = vmatpush.msra.mxu0 %v2865
    %4269 = vmatmul.f32.gmra.mxu0 %v4137
    %v4270 = vpop.f32.mrf.mxu0
    %v4271 = vadd.f32 0.0, %v4270
    %4272 = vdwg.mxu0
    %4273 = vmatpush.msra.mxu0 %v2896
    %4274 = vmatpush.msra.mxu0 %v2895
    %4275 = vmatpush.msra.mxu0 %v2894
    %4276 = vmatpush.msra.mxu0 %v2893
    %4277 = vmatpush.msra.mxu0 %v2892
    %4278 = vmatpush.msra.mxu0 %v2891
    %4279 = vmatpush.msra.mxu0 %v2890
    %4280 = vmatpush.msra.mxu0 %v2889
    %4281 = vmatpush.msra.mxu0 %v2888
    %4282 = vmatpush.msra.mxu0 %v2887
    %4283 = vmatpush.msra.mxu0 %v2886
    %4284 = vmatpush.msra.mxu0 %v2885
    %4285 = vmatpush.msra.mxu0 %v2884
    %4286 = vmatpush.msra.mxu0 %v2883
    %4287 = vmatpush.msra.mxu0 %v2882
    %4288 = vmatpush.msra.mxu0 %v2881
    %4289 = vmatmul.f32.gmra.mxu0 %v4152
    %v4290 = vpop.f32.mrf.mxu0
    %v4291 = vadd.f32 0.0, %v4290
    %4292 = vdwg.mxu0
    %4293 = vmatpush.msra.mxu0 %v2912
    %4294 = vmatpush.msra.mxu0 %v2911
    %4295 = vmatpush.msra.mxu0 %v2910
    %4296 = vmatpush.msra.mxu0 %v2909
    %4297 = vmatpush.msra.mxu0 %v2908
    %4298 = vmatpush.msra.mxu0 %v2907
    %4299 = vmatpush.msra.mxu0 %v2906
    %4300 = vmatpush.msra.mxu0 %v2905
    %4301 = vmatpush.msra.mxu0 %v2904
    %4302 = vmatpush.msra.mxu0 %v2903
    %4303 = vmatpush.msra.mxu0 %v2902
    %4304 = vmatpush.msra.mxu0 %v2901
    %4305 = vmatpush.msra.mxu0 %v2900
    %4306 = vmatpush.msra.mxu0 %v2899
    %4307 = vmatpush.msra.mxu0 %v2898
    %4308 = vmatpush.msra.mxu0 %v2897
    %4309 = vmatmul.f32.gmra.mxu0 %v4167
    %v4310 = vpop.f32.mrf.mxu0
    %v4311 = vadd.f32 0.0, %v4310
    %4312 = vdwg.mxu0
    %4313 = vmatpush.msra.mxu0 %v2928
    %4314 = vmatpush.msra.mxu0 %v2927
    %4315 = vmatpush.msra.mxu0 %v2926
    %4316 = vmatpush.msra.mxu0 %v2925
    %4317 = vmatpush.msra.mxu0 %v2924
    %4318 = vmatpush.msra.mxu0 %v2923
    %4319 = vmatpush.msra.mxu0 %v2922
    %4320 = vmatpush.msra.mxu0 %v2921
    %4321 = vmatpush.msra.mxu0 %v2920
    %4322 = vmatpush.msra.mxu0 %v2919
    %4323 = vmatpush.msra.mxu0 %v2918
    %4324 = vmatpush.msra.mxu0 %v2917
    %4325 = vmatpush.msra.mxu0 %v2916
    %4326 = vmatpush.msra.mxu0 %v2915
    %4327 = vmatpush.msra.mxu0 %v2914
    %4328 = vmatpush.msra.mxu0 %v2913
    %4329 = vmatmul.f32.gmra.mxu0 %v4182
    %v4330 = vpop.f32.mrf.mxu0
    %v4331 = vadd.f32 0.0, %v4330
    %4332 = vdwg.mxu0
    %4333 = vmatpush.msra.mxu0 %v2944
    %4334 = vmatpush.msra.mxu0 %v2943
    %4335 = vmatpush.msra.mxu0 %v2942
    %4336 = vmatpush.msra.mxu0 %v2941
    %4337 = vmatpush.msra.mxu0 %v2940
    %4338 = vmatpush.msra.mxu0 %v2939
    %4339 = vmatpush.msra.mxu0 %v2938
    %4340 = vmatpush.msra.mxu0 %v2937
    %4341 = vmatpush.msra.mxu0 %v2936
    %4342 = vmatpush.msra.mxu0 %v2935
    %4343 = vmatpush.msra.mxu0 %v2934
    %4344 = vmatpush.msra.mxu0 %v2933
    %4345 = vmatpush.msra.mxu0 %v2932
    %4346 = vmatpush.msra.mxu0 %v2931
    %4347 = vmatpush.msra.mxu0 %v2930
    %4348 = vmatpush.msra.mxu0 %v2929
    %4349 = vmatmul.f32.gmra.mxu0 %v4197
    %v4350 = vpop.f32.mrf.mxu0
    %v4351 = vadd.f32 0.0, %v4350
    %4352 = vdwg.mxu0
    %4353 = vmatpush.msra.mxu0 %v2960
    %4354 = vmatpush.msra.mxu0 %v2959
    %4355 = vmatpush.msra.mxu0 %v2958
    %4356 = vmatpush.msra.mxu0 %v2957
    %4357 = vmatpush.msra.mxu0 %v2956
    %4358 = vmatpush.msra.mxu0 %v2955
    %4359 = vmatpush.msra.mxu0 %v2954
    %4360 = vmatpush.msra.mxu0 %v2953
    %4361 = vmatpush.msra.mxu0 %v2952
    %4362 = vmatpush.msra.mxu0 %v2951
    %4363 = vmatpush.msra.mxu0 %v2950
    %4364 = vmatpush.msra.mxu0 %v2949
    %4365 = vmatpush.msra.mxu0 %v2948
    %4366 = vmatpush.msra.mxu0 %v2947
    %4367 = vmatpush.msra.mxu0 %v2946
    %4368 = vmatpush.msra.mxu0 %v2945
    %4369 = vmatmul.f32.gmra.mxu0 %v4212
    %v4370 = vpop.f32.mrf.mxu0
    %v4371 = vadd.f32 0.0, %v4370
    %4372 = vdwg.mxu0
    %v4373 = vmax.f32 %v3358, 0.0
    %v4374 = vmax.f32 %v4231, 0.0
    %v4375 = vmax.f32 %v4251, 0.0
    %v4376 = vmax.f32 %v4271, 0.0
    %v4377 = vmax.f32 %v4291, 0.0
    %v4378 = vmax.f32 %v4311, 0.0
    %v4379 = vmax.f32 %v4331, 0.0
    %v4380 = vmax.f32 %v4351, 0.0
    %v4381 = vmax.f32 %v4371, 0.0
    %v4390 = vrot.slane %v4375, 7
    %v4391 = vsel %vm3964, %v4390, %v4374
    %v4392 = vrot.slane %v4376, 6
    %v4393 = vsel %vm3967, %v4392, %v4391
    %v4394 = vrot.slane %v4377, 5
    %v4395 = vsel %vm3970, %v4394, %v4393
    %v4396 = vrot.slane %v4378, 4
    %v4397 = vsel %vm3973, %v4396, %v4395
    %v4398 = vrot.slane %v4379, 3
    %v4399 = vsel %vm3976, %v4398, %v4397
    %v4400 = vrot.slane %v4380, 2
    %v4401 = vsel %vm3979, %v4400, %v4399
    %v4402 = vrot.slane %v4381, 1
    %v4403 = vsel %vm3982, %v4402, %v4401
    %v4404 = vsel %vm3010, %v4403, 0
    %4406 = vmatpush.msra.mxu0 0.0
    %4407 = vmatpush.msra.mxu0 0.0
    %4408 = vmatpush.msra.mxu0 0.0
    %4409 = vmatpush.msra.mxu0 0.0
    %4410 = vmatpush.msra.mxu0 0.0
    %4411 = vmatpush.msra.mxu0 0.0
    %4412 = vmatpush.msra.mxu0 0.0
    %4413 = vmatpush.msra.mxu0 0.0
    %4414 = vmatpush.msra.mxu0 0.0
    %4415 = vmatpush.msra.mxu0 0.0
    %4416 = vmatpush.msra.mxu0 0.0
    %4417 = vmatpush.msra.mxu0 0.0
    %4418 = vmatpush.msra.mxu0 0.0
    %4419 = vmatpush.msra.mxu0 0.0
    %4420 = vmatpush.msra.mxu0 %v2995
    %4421 = vmatpush.msra.mxu0 %v2993
    %4422 = vmatmul.f32.gmra.mxu0 %v4404
    %v4423 = vpop.f32.mrf.mxu0
    %v4424 = vadd.f32 0.0, %v4423
    %4425 = vdwg.mxu0
    %4426 = vmatpush.msra.mxu0 0.0
    %4427 = vmatpush.msra.mxu0 0.0
    %4428 = vmatpush.msra.mxu0 0.0
    %4429 = vmatpush.msra.mxu0 0.0
    %4430 = vmatpush.msra.mxu0 0.0
    %4431 = vmatpush.msra.mxu0 0.0
    %4432 = vmatpush.msra.mxu0 0.0
    %4433 = vmatpush.msra.mxu0 0.0
    %4434 = vmatpush.msra.mxu0 0.0
    %4435 = vmatpush.msra.mxu0 0.0
    %4436 = vmatpush.msra.mxu0 0.0
    %4437 = vmatpush.msra.mxu0 0.0
    %4438 = vmatpush.msra.mxu0 0.0
    %4439 = vmatpush.msra.mxu0 0.0
    %4440 = vmatpush.msra.mxu0 %v2996
    %4441 = vmatpush.msra.mxu0 %v2994
    %4442 = vmatmul.f32.gmra.mxu0 %v4404
    %v4443 = vpop.f32.mrf.mxu0
    %v4444 = vadd.f32 0.0, %v4443
    %4445 = vdwg.mxu0
    %4447 = vrot.lane.b32.xlu0 %v4373, 32
    %v4448 = vpop.permute.xlu0 %4447
    %v4449 = vsel %vm3107, %v4448, 0
    %4451 = vmatpush.msra.mxu0 0.0
    %4452 = vmatpush.msra.mxu0 0.0
    %4453 = vmatpush.msra.mxu0 0.0
    %4454 = vmatpush.msra.mxu0 0.0
    %4455 = vmatpush.msra.mxu0 0.0
    %4456 = vmatpush.msra.mxu0 0.0
    %4457 = vmatpush.msra.mxu0 0.0
    %4458 = vmatpush.msra.mxu0 0.0
    %4459 = vmatpush.msra.mxu0 0.0
    %4460 = vmatpush.msra.mxu0 0.0
    %4461 = vmatpush.msra.mxu0 0.0
    %4462 = vmatpush.msra.mxu0 0.0
    %4463 = vmatpush.msra.mxu0 %v2991
    %4464 = vmatpush.msra.mxu0 %v2989
    %4465 = vmatpush.msra.mxu0 %v2987
    %4466 = vmatpush.msra.mxu0 %v2985
    %4467 = vmatmul.f32.gmra.mxu0 %v4449
    %v4468 = vpop.f32.mrf.mxu0
    %v4469 = vadd.f32 %v4424, %v4468
    %4470 = vdwg.mxu0
    %4471 = vmatpush.msra.mxu0 0.0
    %4472 = vmatpush.msra.mxu0 0.0
    %4473 = vmatpush.msra.mxu0 0.0
    %4474 = vmatpush.msra.mxu0 0.0
    %4475 = vmatpush.msra.mxu0 0.0
    %4476 = vmatpush.msra.mxu0 0.0
    %4477 = vmatpush.msra.mxu0 0.0
    %4478 = vmatpush.msra.mxu0 0.0
    %4479 = vmatpush.msra.mxu0 0.0
    %4480 = vmatpush.msra.mxu0 0.0
    %4481 = vmatpush.msra.mxu0 0.0
    %4482 = vmatpush.msra.mxu0 0.0
    %4483 = vmatpush.msra.mxu0 %v2992
    %4484 = vmatpush.msra.mxu0 %v2990
    %4485 = vmatpush.msra.mxu0 %v2988
    %4486 = vmatpush.msra.mxu0 %v2986
    %4487 = vmatmul.f32.gmra.mxu0 %v4449
    %v4488 = vpop.f32.mrf.mxu0
    %v4489 = vadd.f32 %v4444, %v4488
    %4490 = vdwg.mxu0
    %v4492 = vperm.slane %v2997, 0
    %v4493 = vperm.slane %v2997, 1
    %v4496 = vadd.f32 %v4469, %v4492
    %v4497 = vadd.f32 %v4489, %v4493
    %4498 = vst [vmem:[#allocation7] sm:$0xff] %v4496
    %4499 = vst [vmem:[#allocation7 + $0x8] sm:$0xff] %v4497
    %v4508 = vrot.slane %v4122, 7
    %v4509 = vsel %vm3964, %v4508, %v4107
    %v4510 = vrot.slane %v4137, 6
    %v4511 = vsel %vm3967, %v4510, %v4509
    %v4512 = vrot.slane %v4152, 5
    %v4513 = vsel %vm3970, %v4512, %v4511
    %v4514 = vrot.slane %v4167, 4
    %v4515 = vsel %vm3973, %v4514, %v4513
    %v4516 = vrot.slane %v4182, 3
    %v4517 = vsel %vm3976, %v4516, %v4515
    %v4518 = vrot.slane %v4197, 2
    %v4519 = vsel %vm3979, %v4518, %v4517
    %v4520 = vrot.slane %v4212, 1
    %v4521 = vsel %vm3982, %v4520, %v4519
    %4523 = vst [vmem:[#allocation10] sm:$0xff] %v4521
    %s4524 = scalar_lea.vmem [#allocation6], 8
    %v4525 = vld [vmem:[%s4524] sm:$0xff]
    %v4534 = vrot.slane %v4251, 7
    %v4535 = vsel %vm3964, %v4534, %v4231
    %v4536 = vrot.slane %v4271, 6
    %v4537 = vsel %vm3967, %v4536, %v4535
    %v4538 = vrot.slane %v4291, 5
    %v4539 = vsel %vm3970, %v4538, %v4537
    %v4540 = vrot.slane %v4311, 4
    %v4541 = vsel %vm3973, %v4540, %v4539
    %v4542 = vrot.slane %v4331, 3
    %v4543 = vsel %vm3976, %v4542, %v4541
    %v4544 = vrot.slane %v4351, 2
    %v4545 = vsel %vm3979, %v4544, %v4543
    %v4546 = vrot.slane %v4371, 1
    %v4547 = vsel %vm3982, %v4546, %v4545
    %v4548 = vsel %vm3010, %v4547, 0
    %4550 = vmatpush.msra.mxu0 0.0
    %4551 = vmatpush.msra.mxu0 0.0
    %4552 = vmatpush.msra.mxu0 0.0
    %4553 = vmatpush.msra.mxu0 0.0
    %4554 = vmatpush.msra.mxu0 0.0
    %4555 = vmatpush.msra.mxu0 0.0
    %4556 = vmatpush.msra.mxu0 0.0
    %4557 = vmatpush.msra.mxu0 0.0
    %4558 = vmatpush.msra.mxu0 0.0
    %4559 = vmatpush.msra.mxu0 0.0
    %4560 = vmatpush.msra.mxu0 0.0
    %4561 = vmatpush.msra.mxu0 0.0
    %4562 = vmatpush.msra.mxu0 0.0
    %4563 = vmatpush.msra.mxu0 0.0
    %4564 = vmatpush.msra.mxu0 %v2962
    %4565 = vmatpush.msra.mxu0 %v2961
    %4566 = vmatmul.f32.gmra.mxu0 %v4548
    %v4567 = vpop.f32.mrf.mxu0
    %v4568 = vadd.f32 0.0, %v4567
    %4569 = vdwg.mxu0
    %v4570 = vadd.f32 %v4525, %v4568
    %4571 = vmatpush.msra.mxu0 0.0
    %4572 = vmatpush.msra.mxu0 0.0
    %4573 = vmatpush.msra.mxu0 0.0
    %4574 = vmatpush.msra.mxu0 0.0
    %4575 = vmatpush.msra.mxu0 0.0
    %4576 = vmatpush.msra.mxu0 0.0
    %4577 = vmatpush.msra.mxu0 0.0
    %4578 = vmatpush.msra.mxu0 0.0
    %4579 = vmatpush.msra.mxu0 0.0
    %4580 = vmatpush.msra.mxu0 0.0
    %4581 = vmatpush.msra.mxu0 0.0
    %4582 = vmatpush.msra.mxu0 0.0
    %4583 = vmatpush.msra.mxu0 %v2966
    %4584 = vmatpush.msra.mxu0 %v2965
    %4585 = vmatpush.msra.mxu0 %v2964
    %4586 = vmatpush.msra.mxu0 %v2963
    %4587 = vmatmul.f32.gmra.mxu0 %v3199
    %v4588 = vpop.f32.mrf.mxu0
    %v4589 = vadd.f32 0.0, %v4588
    %4590 = vdwg.mxu0
    %v4591 = vadd.f32 %v4570, %v4589
    %v4592 = vxor.u32 %v4591, 2147483648
    %v4593 = vmul.f32 %v4592, 1.442695
    %v4594 = vpow.pop %v4593
    %v4595 = vadd.f32 %v4594, 1.0
    %v4596 = vrcp.pop %v4595
    %v4597 = vmul.f32 %v4595, %v4596
    %v4598 = vsub.f32 1.0, %v4597
    %v4599 = vmul.f32 %v4596, %v4598
    %v4600 = vadd.f32 %v4596, %v4599
    %vm4601 = vweird.f32 %v4595
    %vm4602 = vweird.f32 %v4596
    %vm4603 = vmor %vm4601, %vm4602
    %v4604 = vsel %vm4603, %v4596, %v4600
    %v4605 = vand.u32 2147483647, %v4595
    %vm4606 = vcmp.eq.f32.partialorder %v4605, 8.507059e+37
    %v4607 = vand.u32 %v4595, 2147483648
    %v4608 = vor.u32 1.1754944e-38, %v4607
    %v4609 = vsel %vm4606, %v4608, %v4604
    %v4610 = vmul.f32 1.0, %v4609
    %v4611 = vtanh.pop %v4591
    %v4612 = vmul.f32 %v4610, %v3166
    %4614 = vrot.lane.b32.xlu0 %v4611, 64
    %v4615 = vpop.permute.xlu0 %4614
    %v4617 = vmul.f32 %v4610, %v4615
    %4619 = vrot.lane.b32.xlu0 %v4617, 32
    %v4620 = vpop.permute.xlu0 %4619
    %v4622 = vadd.f32 %v4612, %v4620
    %v4623 = vtanh.pop %v4622
    %4625 = vrot.lane.b32.xlu0 %v4623, 64
    %v4626 = vpop.permute.xlu0 %4625
    %v4628 = vmul.f32 %v4610, %v4626
    %4629 = vmatpush.msra.mxu0 0.0
    %4630 = vmatpush.msra.mxu0 0.0
    %4631 = vmatpush.msra.mxu0 0.0
    %4632 = vmatpush.msra.mxu0 0.0
    %4633 = vmatpush.msra.mxu0 0.0
    %4634 = vmatpush.msra.mxu0 0.0
    %4635 = vmatpush.msra.mxu0 0.0
    %4636 = vmatpush.msra.mxu0 0.0
    %4637 = vmatpush.msra.mxu0 0.0
    %4638 = vmatpush.msra.mxu0 0.0
    %4639 = vmatpush.msra.mxu0 0.0
    %4640 = vmatpush.msra.mxu0 0.0
    %4641 = vmatpush.msra.mxu0 %v2974
    %4642 = vmatpush.msra.mxu0 %v2973
    %4643 = vmatpush.msra.mxu0 %v2972
    %4644 = vmatpush.msra.mxu0 %v2971
    %4645 = vmatmul.f32.gmra.mxu0 %v3292
    %v4646 = vpop.f32.mrf.mxu0
    %v4647 = vadd.f32 0.0, %v4646
    %4648 = vdwg.mxu0
    %4650 = vrot.lane.b32.xlu0 %v4628, 32
    %v4651 = vpop.permute.xlu0 %4650
    %v4652 = vsel %vm3107, %v4651, 0
    %4654 = vmatpush.msra.mxu0 0.0
    %4655 = vmatpush.msra.mxu0 0.0
    %4656 = vmatpush.msra.mxu0 0.0
    %4657 = vmatpush.msra.mxu0 0.0
    %4658 = vmatpush.msra.mxu0 0.0
    %4659 = vmatpush.msra.mxu0 0.0
    %4660 = vmatpush.msra.mxu0 0.0
    %4661 = vmatpush.msra.mxu0 0.0
    %4662 = vmatpush.msra.mxu0 0.0
    %4663 = vmatpush.msra.mxu0 0.0
    %4664 = vmatpush.msra.mxu0 0.0
    %4665 = vmatpush.msra.mxu0 0.0
    %4666 = vmatpush.msra.mxu0 %v2970
    %4667 = vmatpush.msra.mxu0 %v2969
    %4668 = vmatpush.msra.mxu0 %v2968
    %4669 = vmatpush.msra.mxu0 %v2967
    %4670 = vmatmul.f32.gmra.mxu0 %v4652
    %v4671 = vpop.f32.mrf.mxu0
    %v4672 = vadd.f32 %v4647, %v4671
    %4673 = vdwg.mxu0
    %v4674 = vadd.f32 %v4672, %v3222
    %v4675 = vxor.u32 %v4674, 2147483648
    %v4676 = vmul.f32 %v4675, 1.442695
    %v4677 = vpow.pop %v4676
    %v4678 = vadd.f32 %v4677, 1.0
    %v4679 = vrcp.pop %v4678
    %v4680 = vmul.f32 %v4678, %v4679
    %v4681 = vsub.f32 1.0, %v4680
    %v4682 = vmul.f32 %v4679, %v4681
    %v4683 = vadd.f32 %v4679, %v4682
    %vm4684 = vweird.f32 %v4678
    %vm4685 = vweird.f32 %v4679
    %vm4686 = vmor %vm4684, %vm4685
    %v4687 = vsel %vm4686, %v4679, %v4683
    %v4688 = vand.u32 2147483647, %v4678
    %vm4689 = vcmp.eq.f32.partialorder %v4688, 8.507059e+37
    %v4690 = vand.u32 %v4678, 2147483648
    %v4691 = vor.u32 1.1754944e-38, %v4690
    %v4692 = vsel %vm4689, %v4691, %v4687
    %v4693 = vmul.f32 1.0, %v4692
    %v4694 = vtanh.pop %v4674
    %v4695 = vmul.f32 %v4693, %v3259
    %4697 = vrot.lane.b32.xlu0 %v4694, 64
    %v4698 = vpop.permute.xlu0 %4697
    %v4700 = vmul.f32 %v4693, %v4698
    %4702 = vrot.lane.b32.xlu0 %v4700, 32
    %v4703 = vpop.permute.xlu0 %4702
    %v4705 = vadd.f32 %v4695, %v4703
    %v4706 = vtanh.pop %v4705
    %4708 = vrot.lane.b32.xlu0 %v4706, 64
    %v4709 = vpop.permute.xlu0 %4708
    %v4711 = vmul.f32 %v4693, %v4709
    %4712 = vmatpush.msra.mxu0 0.0
    %4713 = vmatpush.msra.mxu0 0.0
    %4714 = vmatpush.msra.mxu0 0.0
    %4715 = vmatpush.msra.mxu0 0.0
    %4716 = vmatpush.msra.mxu0 0.0
    %4717 = vmatpush.msra.mxu0 0.0
    %4718 = vmatpush.msra.mxu0 0.0
    %4719 = vmatpush.msra.mxu0 0.0
    %4720 = vmatpush.msra.mxu0 0.0
    %4721 = vmatpush.msra.mxu0 0.0
    %4722 = vmatpush.msra.mxu0 0.0
    %4723 = vmatpush.msra.mxu0 0.0
    %4724 = vmatpush.msra.mxu0 %v2983
    %4725 = vmatpush.msra.mxu0 %v2982
    %4726 = vmatpush.msra.mxu0 %v2981
    %4727 = vmatpush.msra.mxu0 %v2980
    %4728 = vmatmul.f32.gmra.mxu0 %v3365
    %v4729 = vpop.f32.mrf.mxu0
    %v4730 = vadd.f32 0.0, %v4729
    %4731 = vdwg.mxu0
    %4733 = vrot.lane.b32.xlu0 %v4711, 32
    %v4734 = vpop.permute.xlu0 %4733
    %v4735 = vsel %vm3107, %v4734, 0
    %4737 = vmatpush.msra.mxu0 0.0
    %4738 = vmatpush.msra.mxu0 0.0
    %4739 = vmatpush.msra.mxu0 0.0
    %4740 = vmatpush.msra.mxu0 0.0
    %4741 = vmatpush.msra.mxu0 0.0
    %4742 = vmatpush.msra.mxu0 0.0
    %4743 = vmatpush.msra.mxu0 0.0
    %4744 = vmatpush.msra.mxu0 0.0
    %4745 = vmatpush.msra.mxu0 0.0
    %4746 = vmatpush.msra.mxu0 0.0
    %4747 = vmatpush.msra.mxu0 0.0
    %4748 = vmatpush.msra.mxu0 0.0
    %4749 = vmatpush.msra.mxu0 %v2979
    %4750 = vmatpush.msra.mxu0 %v2978
    %4751 = vmatpush.msra.mxu0 %v2977
    %4752 = vmatpush.msra.mxu0 %v2976
    %4753 = vmatmul.f32.gmra.mxu0 %v4735
    %v4754 = vpop.f32.mrf.mxu0
    %v4755 = vadd.f32 %v4730, %v4754
    %4756 = vdwg.mxu0
    %v4757 = vadd.f32 %v4755, %v3315
    %v4758 = vxor.u32 %v4757, 2147483648
    %v4759 = vmul.f32 %v4758, 1.442695
    %v4760 = vpow.pop %v4759
    %v4761 = vadd.f32 %v4760, 1.0
    %v4762 = vrcp.pop %v4761
    %v4763 = vmul.f32 %v4761, %v4762
    %v4764 = vsub.f32 1.0, %v4763
    %v4765 = vmul.f32 %v4762, %v4764
    %v4766 = vadd.f32 %v4762, %v4765
    %vm4767 = vweird.f32 %v4761
    %vm4768 = vweird.f32 %v4762
    %vm4769 = vmor %vm4767, %vm4768
    %v4770 = vsel %vm4769, %v4762, %v4766
    %v4771 = vand.u32 2147483647, %v4761
    %vm4772 = vcmp.eq.f32.partialorder %v4771, 8.507059e+37
    %v4773 = vand.u32 %v4761, 2147483648
    %v4774 = vor.u32 1.1754944e-38, %v4773
    %v4775 = vsel %vm4772, %v4774, %v4770
    %v4776 = vmul.f32 1.0, %v4775
    %v4777 = vtanh.pop %v4757
    %v4778 = vmul.f32 %v4776, %v3352
    %4780 = vrot.lane.b32.xlu0 %v4777, 64
    %v4781 = vpop.permute.xlu0 %4780
    %v4783 = vmul.f32 %v4776, %v4781
    %4785 = vrot.lane.b32.xlu0 %v4783, 32
    %v4786 = vpop.permute.xlu0 %4785
    %v4788 = vadd.f32 %v4778, %v4786
    %v4789 = vtanh.pop %v4788
    %4791 = vrot.lane.b32.xlu0 %v4789, 64
    %v4792 = vpop.permute.xlu0 %4791
    %v4794 = vmul.f32 %v4776, %v4792
    %4796 = vrot.lane.b32.xlu0 %v4794, 32
    %v4797 = vpop.permute.xlu0 %4796
    %v4798 = vsel %vm3107, %v4797, 0
    %4800 = vmatpush.msra.mxu0 0.0
    %4801 = vmatpush.msra.mxu0 0.0
    %4802 = vmatpush.msra.mxu0 0.0
    %4803 = vmatpush.msra.mxu0 0.0
    %4804 = vmatpush.msra.mxu0 0.0
    %4805 = vmatpush.msra.mxu0 0.0
    %4806 = vmatpush.msra.mxu0 0.0
    %4807 = vmatpush.msra.mxu0 0.0
    %4808 = vmatpush.msra.mxu0 0.0
    %4809 = vmatpush.msra.mxu0 0.0
    %4810 = vmatpush.msra.mxu0 0.0
    %4811 = vmatpush.msra.mxu0 0.0
    %4812 = vmatpush.msra.mxu0 %v82
    %4813 = vmatpush.msra.mxu0 %v81
    %4814 = vmatpush.msra.mxu0 %v80
    %4815 = vmatpush.msra.mxu0 %v79
    %4816 = vmatmul.f32.gmra.mxu0 %v4798
    %v4817 = vpop.f32.mrf.mxu0
    %v4818 = vadd.f32 %v3360, %v4817
    %4819 = vdwg.mxu0
    %v4821 = vrot.slane %v4818, 1
    %v4822 = vrot.slane %v4818, 2
    %v4823 = vrot.slane %v4818, 3
    %v4824 = vrot.slane %v4818, 4
    %v4825 = vrot.slane %v4818, 5
    %v4826 = vrot.slane %v4818, 6
    %v4827 = vrot.slane %v4818, 7
    %v4828 = vsel %vm3010, %v4818, 0
    %4830 = vmatpush.xpose.msra.mxu0 %v3443
    %4831 = vmatpush.xpose.msra.mxu0 %v3440
    %4832 = vmatpush.xpose.msra.mxu0 %v3437
    %4833 = vmatpush.xpose.msra.mxu0 %v3434
    %4834 = vmatpush.xpose.msra.mxu0 %v3431
    %4835 = vmatpush.xpose.msra.mxu0 %v3428
    %4836 = vmatpush.xpose.msra.mxu0 %v3425
    %4837 = vmatpush.xpose.msra.mxu0 %v3422
    %4838 = vmatpush.xpose.msra.mxu0 %v3419
    %4839 = vmatpush.xpose.msra.mxu0 %v3416
    %4840 = vmatpush.xpose.msra.mxu0 %v3413
    %4841 = vmatpush.xpose.msra.mxu0 %v3410
    %4842 = vmatpush.xpose.msra.mxu0 %v3407
    %4843 = vmatpush.xpose.msra.mxu0 %v3404
    %4844 = vmatpush.xpose.msra.mxu0 %v3401
    %4845 = vmatpush.xpose.msra.mxu0 %v3398
    %4846 = vmatmul.f32.gmra.mxu0 %v4828
    %v4847 = vpop.f32.mrf.mxu0
    %v4848 = vadd.f32 0.0, %v4847
    %4849 = vdwg.mxu0
    %v4850 = vsel %vm3010, %v4821, 0
    %4852 = vmatpush.xpose.msra.mxu0 %v3513
    %4853 = vmatpush.xpose.msra.mxu0 %v3510
    %4854 = vmatpush.xpose.msra.mxu0 %v3507
    %4855 = vmatpush.xpose.msra.mxu0 %v3504
    %4856 = vmatpush.xpose.msra.mxu0 %v3501
    %4857 = vmatpush.xpose.msra.mxu0 %v3498
    %4858 = vmatpush.xpose.msra.mxu0 %v3495
    %4859 = vmatpush.xpose.msra.mxu0 %v3492
    %4860 = vmatpush.xpose.msra.mxu0 %v3489
    %4861 = vmatpush.xpose.msra.mxu0 %v3486
    %4862 = vmatpush.xpose.msra.mxu0 %v3483
    %4863 = vmatpush.xpose.msra.mxu0 %v3480
    %4864 = vmatpush.xpose.msra.mxu0 %v3477
    %4865 = vmatpush.xpose.msra.mxu0 %v3474
    %4866 = vmatpush.xpose.msra.mxu0 %v3471
    %4867 = vmatpush.xpose.msra.mxu0 %v3468
    %4868 = vmatmul.f32.gmra.mxu0 %v4850
    %v4869 = vpop.f32.mrf.mxu0
    %v4870 = vadd.f32 0.0, %v4869
    %4871 = vdwg.mxu0
    %v4872 = vsel %vm3010, %v4822, 0
    %4874 = vmatpush.xpose.msra.mxu0 %v3583
    %4875 = vmatpush.xpose.msra.mxu0 %v3580
    %4876 = vmatpush.xpose.msra.mxu0 %v3577
    %4877 = vmatpush.xpose.msra.mxu0 %v3574
    %4878 = vmatpush.xpose.msra.mxu0 %v3571
    %4879 = vmatpush.xpose.msra.mxu0 %v3568
    %4880 = vmatpush.xpose.msra.mxu0 %v3565
    %4881 = vmatpush.xpose.msra.mxu0 %v3562
    %4882 = vmatpush.xpose.msra.mxu0 %v3559
    %4883 = vmatpush.xpose.msra.mxu0 %v3556
    %4884 = vmatpush.xpose.msra.mxu0 %v3553
    %4885 = vmatpush.xpose.msra.mxu0 %v3550
    %4886 = vmatpush.xpose.msra.mxu0 %v3547
    %4887 = vmatpush.xpose.msra.mxu0 %v3544
    %4888 = vmatpush.xpose.msra.mxu0 %v3541
    %4889 = vmatpush.xpose.msra.mxu0 %v3538
    %4890 = vmatmul.f32.gmra.mxu0 %v4872
    %v4891 = vpop.f32.mrf.mxu0
    %v4892 = vadd.f32 0.0, %v4891
    %4893 = vdwg.mxu0
    %v4894 = vsel %vm3010, %v4823, 0
    %4896 = vmatpush.xpose.msra.mxu0 %v3653
    %4897 = vmatpush.xpose.msra.mxu0 %v3650
    %4898 = vmatpush.xpose.msra.mxu0 %v3647
    %4899 = vmatpush.xpose.msra.mxu0 %v3644
    %4900 = vmatpush.xpose.msra.mxu0 %v3641
    %4901 = vmatpush.xpose.msra.mxu0 %v3638
    %4902 = vmatpush.xpose.msra.mxu0 %v3635
    %4903 = vmatpush.xpose.msra.mxu0 %v3632
    %4904 = vmatpush.xpose.msra.mxu0 %v3629
    %4905 = vmatpush.xpose.msra.mxu0 %v3626
    %4906 = vmatpush.xpose.msra.mxu0 %v3623
    %4907 = vmatpush.xpose.msra.mxu0 %v3620
    %4908 = vmatpush.xpose.msra.mxu0 %v3617
    %4909 = vmatpush.xpose.msra.mxu0 %v3614
    %4910 = vmatpush.xpose.msra.mxu0 %v3611
    %4911 = vmatpush.xpose.msra.mxu0 %v3608
    %4912 = vmatmul.f32.gmra.mxu0 %v4894
    %v4913 = vpop.f32.mrf.mxu0
    %v4914 = vadd.f32 0.0, %v4913
    %4915 = vdwg.mxu0
    %v4916 = vsel %vm3010, %v4824, 0
    %4918 = vmatpush.xpose.msra.mxu0 %v3723
    %4919 = vmatpush.xpose.msra.mxu0 %v3720
    %4920 = vmatpush.xpose.msra.mxu0 %v3717
    %4921 = vmatpush.xpose.msra.mxu0 %v3714
    %4922 = vmatpush.xpose.msra.mxu0 %v3711
    %4923 = vmatpush.xpose.msra.mxu0 %v3708
    %4924 = vmatpush.xpose.msra.mxu0 %v3705
    %4925 = vmatpush.xpose.msra.mxu0 %v3702
    %4926 = vmatpush.xpose.msra.mxu0 %v3699
    %4927 = vmatpush.xpose.msra.mxu0 %v3696
    %4928 = vmatpush.xpose.msra.mxu0 %v3693
    %4929 = vmatpush.xpose.msra.mxu0 %v3690
    %4930 = vmatpush.xpose.msra.mxu0 %v3687
    %4931 = vmatpush.xpose.msra.mxu0 %v3684
    %4932 = vmatpush.xpose.msra.mxu0 %v3681
    %4933 = vmatpush.xpose.msra.mxu0 %v3678
    %4934 = vmatmul.f32.gmra.mxu0 %v4916
    %v4935 = vpop.f32.mrf.mxu0
    %v4936 = vadd.f32 0.0, %v4935
    %4937 = vdwg.mxu0
    %v4938 = vsel %vm3010, %v4825, 0
    %4940 = vmatpush.xpose.msra.mxu0 %v3793
    %4941 = vmatpush.xpose.msra.mxu0 %v3790
    %4942 = vmatpush.xpose.msra.mxu0 %v3787
    %4943 = vmatpush.xpose.msra.mxu0 %v3784
    %4944 = vmatpush.xpose.msra.mxu0 %v3781
    %4945 = vmatpush.xpose.msra.mxu0 %v3778
    %4946 = vmatpush.xpose.msra.mxu0 %v3775
    %4947 = vmatpush.xpose.msra.mxu0 %v3772
    %4948 = vmatpush.xpose.msra.mxu0 %v3769
    %4949 = vmatpush.xpose.msra.mxu0 %v3766
    %4950 = vmatpush.xpose.msra.mxu0 %v3763
    %4951 = vmatpush.xpose.msra.mxu0 %v3760
    %4952 = vmatpush.xpose.msra.mxu0 %v3757
    %4953 = vmatpush.xpose.msra.mxu0 %v3754
    %4954 = vmatpush.xpose.msra.mxu0 %v3751
    %4955 = vmatpush.xpose.msra.mxu0 %v3748
    %4956 = vmatmul.f32.gmra.mxu0 %v4938
    %v4957 = vpop.f32.mrf.mxu0
    %v4958 = vadd.f32 0.0, %v4957
    %4959 = vdwg.mxu0
    %v4960 = vsel %vm3010, %v4826, 0
    %4962 = vmatpush.xpose.msra.mxu0 %v3863
    %4963 = vmatpush.xpose.msra.mxu0 %v3860
    %4964 = vmatpush.xpose.msra.mxu0 %v3857
    %4965 = vmatpush.xpose.msra.mxu0 %v3854
    %4966 = vmatpush.xpose.msra.mxu0 %v3851
    %4967 = vmatpush.xpose.msra.mxu0 %v3848
    %4968 = vmatpush.xpose.msra.mxu0 %v3845
    %4969 = vmatpush.xpose.msra.mxu0 %v3842
    %4970 = vmatpush.xpose.msra.mxu0 %v3839
    %4971 = vmatpush.xpose.msra.mxu0 %v3836
    %4972 = vmatpush.xpose.msra.mxu0 %v3833
    %4973 = vmatpush.xpose.msra.mxu0 %v3830
    %4974 = vmatpush.xpose.msra.mxu0 %v3827
    %4975 = vmatpush.xpose.msra.mxu0 %v3824
    %4976 = vmatpush.xpose.msra.mxu0 %v3821
    %4977 = vmatpush.xpose.msra.mxu0 %v3818
    %4978 = vmatmul.f32.gmra.mxu0 %v4960
    %v4979 = vpop.f32.mrf.mxu0
    %v4980 = vadd.f32 0.0, %v4979
    %4981 = vdwg.mxu0
    %v4982 = vsel %vm3010, %v4827, 0
    %4984 = vmatpush.xpose.msra.mxu0 %v3933
    %4985 = vmatpush.xpose.msra.mxu0 %v3930
    %4986 = vmatpush.xpose.msra.mxu0 %v3927
    %4987 = vmatpush.xpose.msra.mxu0 %v3924
    %4988 = vmatpush.xpose.msra.mxu0 %v3921
    %4989 = vmatpush.xpose.msra.mxu0 %v3918
    %4990 = vmatpush.xpose.msra.mxu0 %v3915
    %4991 = vmatpush.xpose.msra.mxu0 %v3912
    %4992 = vmatpush.xpose.msra.mxu0 %v3909
    %4993 = vmatpush.xpose.msra.mxu0 %v3906
    %4994 = vmatpush.xpose.msra.mxu0 %v3903
    %4995 = vmatpush.xpose.msra.mxu0 %v3900
    %4996 = vmatpush.xpose.msra.mxu0 %v3897
    %4997 = vmatpush.xpose.msra.mxu0 %v3894
    %4998 = vmatpush.xpose.msra.mxu0 %v3891
    %4999 = vmatpush.xpose.msra.mxu0 %v3888
    %5000 = vmatmul.f32.gmra.mxu0 %v4982
    %v5001 = vpop.f32.mrf.mxu0
    %v5002 = vadd.f32 0.0, %v5001
    %5003 = vdwg.mxu0
    %v5012 = vrot.slane %v4870, 7
    %v5013 = vsel %vm3964, %v5012, %v4848
    %v5014 = vrot.slane %v4892, 6
    %v5015 = vsel %vm3967, %v5014, %v5013
    %v5016 = vrot.slane %v4914, 5
    %v5017 = vsel %vm3970, %v5016, %v5015
    %v5018 = vrot.slane %v4936, 4
    %v5019 = vsel %vm3973, %v5018, %v5017
    %v5020 = vrot.slane %v4958, 3
    %v5021 = vsel %vm3976, %v5020, %v5019
    %v5022 = vrot.slane %v4980, 2
    %v5023 = vsel %vm3979, %v5022, %v5021
    %v5024 = vrot.slane %v5002, 1
    %v5025 = vsel %vm3982, %v5024, %v5023
    %5027 = vmax.xlane.f32.xlu0 %v5025
    %v5028 = vpop.xlane.xlu0 %5027
    %v5030 = vrot.slane %v5028, 1
    %v5031 = vrot.slane %v5028, 2
    %v5032 = vrot.slane %v5028, 3
    %v5033 = vrot.slane %v5028, 4
    %v5034 = vrot.slane %v5028, 5
    %v5035 = vrot.slane %v5028, 6
    %v5036 = vrot.slane %v5028, 7
    %v5045 = vsub.f32 %v4848, %v5028
    %v5046 = vsub.f32 %v4870, %v5030
    %v5047 = vsub.f32 %v4892, %v5031
    %v5048 = vsub.f32 %v4914, %v5032
    %v5049 = vsub.f32 %v4936, %v5033
    %v5050 = vsub.f32 %v4958, %v5034
    %v5051 = vsub.f32 %v4980, %v5035
    %v5052 = vsub.f32 %v5002, %v5036
    %v5053 = vmul.f32 %v5045, 1.442695
    %v5054 = vpow.pop %v5053
    %v5055 = vmul.f32 %v5046, 1.442695
    %v5056 = vpow.pop %v5055
    %v5057 = vmul.f32 %v5047, 1.442695
    %v5058 = vpow.pop %v5057
    %v5059 = vmul.f32 %v5048, 1.442695
    %v5060 = vpow.pop %v5059
    %v5061 = vmul.f32 %v5049, 1.442695
    %v5062 = vpow.pop %v5061
    %v5063 = vmul.f32 %v5050, 1.442695
    %v5064 = vpow.pop %v5063
    %v5065 = vmul.f32 %v5051, 1.442695
    %v5066 = vpow.pop %v5065
    %v5067 = vmul.f32 %v5052, 1.442695
    %v5068 = vpow.pop %v5067
    %v5069 = vmul.f32 %v5054, %v78
    %v5070 = vmul.f32 %v5056, %v4028
    %v5071 = vmul.f32 %v5058, %v4029
    %v5072 = vmul.f32 %v5060, %v4030
    %v5073 = vmul.f32 %v5062, %v4031
    %v5074 = vmul.f32 %v5064, %v4032
    %v5075 = vmul.f32 %v5066, %v4033
    %v5076 = vmul.f32 %v5068, %v4034
    %v5085 = vrot.slane %v5070, 7
    %v5086 = vsel %vm3964, %v5085, %v5069
    %v5087 = vrot.slane %v5071, 6
    %v5088 = vsel %vm3967, %v5087, %v5086
    %v5089 = vrot.slane %v5072, 5
    %v5090 = vsel %vm3970, %v5089, %v5088
    %v5091 = vrot.slane %v5073, 4
    %v5092 = vsel %vm3973, %v5091, %v5090
    %v5093 = vrot.slane %v5074, 3
    %v5094 = vsel %vm3976, %v5093, %v5092
    %v5095 = vrot.slane %v5075, 2
    %v5096 = vsel %vm3979, %v5095, %v5094
    %v5097 = vrot.slane %v5076, 1
    %v5098 = vsel %vm3982, %v5097, %v5096
    %5100 = vadd.xlane.f32.xlu0 %v5098
    %v5101 = vpop.xlane.xlu0 %5100
    %v5102 = vmax.f32 %v5101, 1e-12
    %v5104 = vrot.slane %v5102, 1
    %v5105 = vrot.slane %v5102, 2
    %v5106 = vrot.slane %v5102, 3
    %v5107 = vrot.slane %v5102, 4
    %v5108 = vrot.slane %v5102, 5
    %v5109 = vrot.slane %v5102, 6
    %v5110 = vrot.slane %v5102, 7
    %v5119 = vrcp.pop %v5102
    %v5120 = vmul.f32 %v5102, %v5119
    %v5121 = vsub.f32 1.0, %v5120
    %v5122 = vmul.f32 %v5119, %v5121
    %v5123 = vadd.f32 %v5119, %v5122
    %vm5124 = vweird.f32 %v5102
    %vm5125 = vweird.f32 %v5119
    %vm5126 = vmor %vm5124, %vm5125
    %v5127 = vsel %vm5126, %v5119, %v5123
    %v5128 = vand.u32 2147483647, %v5102
    %vm5129 = vcmp.eq.f32.partialorder %v5128, 8.507059e+37
    %v5130 = vand.u32 %v5102, 2147483648
    %v5131 = vor.u32 1.1754944e-38, %v5130
    %v5132 = vsel %vm5129, %v5131, %v5127
    %v5133 = vmul.f32 %v5069, %v5132
    %v5134 = vrcp.pop %v5104
    %v5135 = vmul.f32 %v5104, %v5134
    %v5136 = vsub.f32 1.0, %v5135
    %v5137 = vmul.f32 %v5134, %v5136
    %v5138 = vadd.f32 %v5134, %v5137
    %vm5139 = vweird.f32 %v5104
    %vm5140 = vweird.f32 %v5134
    %vm5141 = vmor %vm5139, %vm5140
    %v5142 = vsel %vm5141, %v5134, %v5138
    %v5143 = vand.u32 2147483647, %v5104
    %vm5144 = vcmp.eq.f32.partialorder %v5143, 8.507059e+37
    %v5145 = vand.u32 %v5104, 2147483648
    %v5146 = vor.u32 1.1754944e-38, %v5145
    %v5147 = vsel %vm5144, %v5146, %v5142
    %v5148 = vmul.f32 %v5070, %v5147
    %v5149 = vrcp.pop %v5105
    %v5150 = vmul.f32 %v5105, %v5149
    %v5151 = vsub.f32 1.0, %v5150
    %v5152 = vmul.f32 %v5149, %v5151
    %v5153 = vadd.f32 %v5149, %v5152
    %vm5154 = vweird.f32 %v5105
    %vm5155 = vweird.f32 %v5149
    %vm5156 = vmor %vm5154, %vm5155
    %v5157 = vsel %vm5156, %v5149, %v5153
    %v5158 = vand.u32 2147483647, %v5105
    %vm5159 = vcmp.eq.f32.partialorder %v5158, 8.507059e+37
    %v5160 = vand.u32 %v5105, 2147483648
    %v5161 = vor.u32 1.1754944e-38, %v5160
    %v5162 = vsel %vm5159, %v5161, %v5157
    %v5163 = vmul.f32 %v5071, %v5162
    %v5164 = vrcp.pop %v5106
    %v5165 = vmul.f32 %v5106, %v5164
    %v5166 = vsub.f32 1.0, %v5165
    %v5167 = vmul.f32 %v5164, %v5166
    %v5168 = vadd.f32 %v5164, %v5167
    %vm5169 = vweird.f32 %v5106
    %vm5170 = vweird.f32 %v5164
    %vm5171 = vmor %vm5169, %vm5170
    %v5172 = vsel %vm5171, %v5164, %v5168
    %v5173 = vand.u32 2147483647, %v5106
    %vm5174 = vcmp.eq.f32.partialorder %v5173, 8.507059e+37
    %v5175 = vand.u32 %v5106, 2147483648
    %v5176 = vor.u32 1.1754944e-38, %v5175
    %v5177 = vsel %vm5174, %v5176, %v5172
    %v5178 = vmul.f32 %v5072, %v5177
    %v5179 = vrcp.pop %v5107
    %v5180 = vmul.f32 %v5107, %v5179
    %v5181 = vsub.f32 1.0, %v5180
    %v5182 = vmul.f32 %v5179, %v5181
    %v5183 = vadd.f32 %v5179, %v5182
    %vm5184 = vweird.f32 %v5107
    %vm5185 = vweird.f32 %v5179
    %vm5186 = vmor %vm5184, %vm5185
    %v5187 = vsel %vm5186, %v5179, %v5183
    %v5188 = vand.u32 2147483647, %v5107
    %vm5189 = vcmp.eq.f32.partialorder %v5188, 8.507059e+37
    %v5190 = vand.u32 %v5107, 2147483648
    %v5191 = vor.u32 1.1754944e-38, %v5190
    %v5192 = vsel %vm5189, %v5191, %v5187
    %v5193 = vmul.f32 %v5073, %v5192
    %v5194 = vrcp.pop %v5108
    %v5195 = vmul.f32 %v5108, %v5194
    %v5196 = vsub.f32 1.0, %v5195
    %v5197 = vmul.f32 %v5194, %v5196
    %v5198 = vadd.f32 %v5194, %v5197
    %vm5199 = vweird.f32 %v5108
    %vm5200 = vweird.f32 %v5194
    %vm5201 = vmor %vm5199, %vm5200
    %v5202 = vsel %vm5201, %v5194, %v5198
    %v5203 = vand.u32 2147483647, %v5108
    %vm5204 = vcmp.eq.f32.partialorder %v5203, 8.507059e+37
    %v5205 = vand.u32 %v5108, 2147483648
    %v5206 = vor.u32 1.1754944e-38, %v5205
    %v5207 = vsel %vm5204, %v5206, %v5202
    %v5208 = vmul.f32 %v5074, %v5207
    %v5209 = vrcp.pop %v5109
    %v5210 = vmul.f32 %v5109, %v5209
    %v5211 = vsub.f32 1.0, %v5210
    %v5212 = vmul.f32 %v5209, %v5211
    %v5213 = vadd.f32 %v5209, %v5212
    %vm5214 = vweird.f32 %v5109
    %vm5215 = vweird.f32 %v5209
    %vm5216 = vmor %vm5214, %vm5215
    %v5217 = vsel %vm5216, %v5209, %v5213
    %v5218 = vand.u32 2147483647, %v5109
    %vm5219 = vcmp.eq.f32.partialorder %v5218, 8.507059e+37
    %v5220 = vand.u32 %v5109, 2147483648
    %v5221 = vor.u32 1.1754944e-38, %v5220
    %v5222 = vsel %vm5219, %v5221, %v5217
    %v5223 = vmul.f32 %v5075, %v5222
    %v5224 = vrcp.pop %v5110
    %v5225 = vmul.f32 %v5110, %v5224
    %v5226 = vsub.f32 1.0, %v5225
    %v5227 = vmul.f32 %v5224, %v5226
    %v5228 = vadd.f32 %v5224, %v5227
    %vm5229 = vweird.f32 %v5110
    %vm5230 = vweird.f32 %v5224
    %vm5231 = vmor %vm5229, %vm5230
    %v5232 = vsel %vm5231, %v5224, %v5228
    %v5233 = vand.u32 2147483647, %v5110
    %vm5234 = vcmp.eq.f32.partialorder %v5233, 8.507059e+37
    %v5235 = vand.u32 %v5110, 2147483648
    %v5236 = vor.u32 1.1754944e-38, %v5235
    %v5237 = vsel %vm5234, %v5236, %v5232
    %v5238 = vmul.f32 %v5076, %v5237
    %5239 = vmatpush.msra.mxu0 %v2848
    %5240 = vmatpush.msra.mxu0 %v2847
    %5241 = vmatpush.msra.mxu0 %v2846
    %5242 = vmatpush.msra.mxu0 %v2845
    %5243 = vmatpush.msra.mxu0 %v2844
    %5244 = vmatpush.msra.mxu0 %v2843
    %5245 = vmatpush.msra.mxu0 %v2842
    %5246 = vmatpush.msra.mxu0 %v2841
    %5247 = vmatpush.msra.mxu0 %v2840
    %5248 = vmatpush.msra.mxu0 %v2839
    %5249 = vmatpush.msra.mxu0 %v2838
    %5250 = vmatpush.msra.mxu0 %v2837
    %5251 = vmatpush.msra.mxu0 %v2836
    %5252 = vmatpush.msra.mxu0 %v2835
    %5253 = vmatpush.msra.mxu0 %v2834
    %5254 = vmatpush.msra.mxu0 %v2833
    %5255 = vmatmul.f32.gmra.mxu0 %v5133
    %v5256 = vpop.f32.mrf.mxu0
    %v5257 = vadd.f32 0.0, %v5256
    %5258 = vdwg.mxu0
    %5259 = vmatpush.msra.mxu0 %v2864
    %5260 = vmatpush.msra.mxu0 %v2863
    %5261 = vmatpush.msra.mxu0 %v2862
    %5262 = vmatpush.msra.mxu0 %v2861
    %5263 = vmatpush.msra.mxu0 %v2860
    %5264 = vmatpush.msra.mxu0 %v2859
    %5265 = vmatpush.msra.mxu0 %v2858
    %5266 = vmatpush.msra.mxu0 %v2857
    %5267 = vmatpush.msra.mxu0 %v2856
    %5268 = vmatpush.msra.mxu0 %v2855
    %5269 = vmatpush.msra.mxu0 %v2854
    %5270 = vmatpush.msra.mxu0 %v2853
    %5271 = vmatpush.msra.mxu0 %v2852
    %5272 = vmatpush.msra.mxu0 %v2851
    %5273 = vmatpush.msra.mxu0 %v2850
    %5274 = vmatpush.msra.mxu0 %v2849
    %5275 = vmatmul.f32.gmra.mxu0 %v5148
    %v5276 = vpop.f32.mrf.mxu0
    %v5277 = vadd.f32 0.0, %v5276
    %5278 = vdwg.mxu0
    %5279 = vmatpush.msra.mxu0 %v2880
    %5280 = vmatpush.msra.mxu0 %v2879
    %5281 = vmatpush.msra.mxu0 %v2878
    %5282 = vmatpush.msra.mxu0 %v2877
    %5283 = vmatpush.msra.mxu0 %v2876
    %5284 = vmatpush.msra.mxu0 %v2875
    %5285 = vmatpush.msra.mxu0 %v2874
    %5286 = vmatpush.msra.mxu0 %v2873
    %5287 = vmatpush.msra.mxu0 %v2872
    %5288 = vmatpush.msra.mxu0 %v2871
    %5289 = vmatpush.msra.mxu0 %v2870
    %5290 = vmatpush.msra.mxu0 %v2869
    %5291 = vmatpush.msra.mxu0 %v2868
    %5292 = vmatpush.msra.mxu0 %v2867
    %5293 = vmatpush.msra.mxu0 %v2866
    %5294 = vmatpush.msra.mxu0 %v2865
    %5295 = vmatmul.f32.gmra.mxu0 %v5163
    %v5296 = vpop.f32.mrf.mxu0
    %v5297 = vadd.f32 0.0, %v5296
    %5298 = vdwg.mxu0
    %5299 = vmatpush.msra.mxu0 %v2896
    %5300 = vmatpush.msra.mxu0 %v2895
    %5301 = vmatpush.msra.mxu0 %v2894
    %5302 = vmatpush.msra.mxu0 %v2893
    %5303 = vmatpush.msra.mxu0 %v2892
    %5304 = vmatpush.msra.mxu0 %v2891
    %5305 = vmatpush.msra.mxu0 %v2890
    %5306 = vmatpush.msra.mxu0 %v2889
    %5307 = vmatpush.msra.mxu0 %v2888
    %5308 = vmatpush.msra.mxu0 %v2887
    %5309 = vmatpush.msra.mxu0 %v2886
    %5310 = vmatpush.msra.mxu0 %v2885
    %5311 = vmatpush.msra.mxu0 %v2884
    %5312 = vmatpush.msra.mxu0 %v2883
    %5313 = vmatpush.msra.mxu0 %v2882
    %5314 = vmatpush.msra.mxu0 %v2881
    %5315 = vmatmul.f32.gmra.mxu0 %v5178
    %v5316 = vpop.f32.mrf.mxu0
    %v5317 = vadd.f32 0.0, %v5316
    %5318 = vdwg.mxu0
    %5319 = vmatpush.msra.mxu0 %v2912
    %5320 = vmatpush.msra.mxu0 %v2911
    %5321 = vmatpush.msra.mxu0 %v2910
    %5322 = vmatpush.msra.mxu0 %v2909
    %5323 = vmatpush.msra.mxu0 %v2908
    %5324 = vmatpush.msra.mxu0 %v2907
    %5325 = vmatpush.msra.mxu0 %v2906
    %5326 = vmatpush.msra.mxu0 %v2905
    %5327 = vmatpush.msra.mxu0 %v2904
    %5328 = vmatpush.msra.mxu0 %v2903
    %5329 = vmatpush.msra.mxu0 %v2902
    %5330 = vmatpush.msra.mxu0 %v2901
    %5331 = vmatpush.msra.mxu0 %v2900
    %5332 = vmatpush.msra.mxu0 %v2899
    %5333 = vmatpush.msra.mxu0 %v2898
    %5334 = vmatpush.msra.mxu0 %v2897
    %5335 = vmatmul.f32.gmra.mxu0 %v5193
    %v5336 = vpop.f32.mrf.mxu0
    %v5337 = vadd.f32 0.0, %v5336
    %5338 = vdwg.mxu0
    %5339 = vmatpush.msra.mxu0 %v2928
    %5340 = vmatpush.msra.mxu0 %v2927
    %5341 = vmatpush.msra.mxu0 %v2926
    %5342 = vmatpush.msra.mxu0 %v2925
    %5343 = vmatpush.msra.mxu0 %v2924
    %5344 = vmatpush.msra.mxu0 %v2923
    %5345 = vmatpush.msra.mxu0 %v2922
    %5346 = vmatpush.msra.mxu0 %v2921
    %5347 = vmatpush.msra.mxu0 %v2920
    %5348 = vmatpush.msra.mxu0 %v2919
    %5349 = vmatpush.msra.mxu0 %v2918
    %5350 = vmatpush.msra.mxu0 %v2917
    %5351 = vmatpush.msra.mxu0 %v2916
    %5352 = vmatpush.msra.mxu0 %v2915
    %5353 = vmatpush.msra.mxu0 %v2914
    %5354 = vmatpush.msra.mxu0 %v2913
    %5355 = vmatmul.f32.gmra.mxu0 %v5208
    %v5356 = vpop.f32.mrf.mxu0
    %v5357 = vadd.f32 0.0, %v5356
    %5358 = vdwg.mxu0
    %5359 = vmatpush.msra.mxu0 %v2944
    %5360 = vmatpush.msra.mxu0 %v2943
    %5361 = vmatpush.msra.mxu0 %v2942
    %5362 = vmatpush.msra.mxu0 %v2941
    %5363 = vmatpush.msra.mxu0 %v2940
    %5364 = vmatpush.msra.mxu0 %v2939
    %5365 = vmatpush.msra.mxu0 %v2938
    %5366 = vmatpush.msra.mxu0 %v2937
    %5367 = vmatpush.msra.mxu0 %v2936
    %5368 = vmatpush.msra.mxu0 %v2935
    %5369 = vmatpush.msra.mxu0 %v2934
    %5370 = vmatpush.msra.mxu0 %v2933
    %5371 = vmatpush.msra.mxu0 %v2932
    %5372 = vmatpush.msra.mxu0 %v2931
    %5373 = vmatpush.msra.mxu0 %v2930
    %5374 = vmatpush.msra.mxu0 %v2929
    %5375 = vmatmul.f32.gmra.mxu0 %v5223
    %v5376 = vpop.f32.mrf.mxu0
    %v5377 = vadd.f32 0.0, %v5376
    %5378 = vdwg.mxu0
    %5379 = vmatpush.msra.mxu0 %v2960
    %5380 = vmatpush.msra.mxu0 %v2959
    %5381 = vmatpush.msra.mxu0 %v2958
    %5382 = vmatpush.msra.mxu0 %v2957
    %5383 = vmatpush.msra.mxu0 %v2956
    %5384 = vmatpush.msra.mxu0 %v2955
    %5385 = vmatpush.msra.mxu0 %v2954
    %5386 = vmatpush.msra.mxu0 %v2953
    %5387 = vmatpush.msra.mxu0 %v2952
    %5388 = vmatpush.msra.mxu0 %v2951
    %5389 = vmatpush.msra.mxu0 %v2950
    %5390 = vmatpush.msra.mxu0 %v2949
    %5391 = vmatpush.msra.mxu0 %v2948
    %5392 = vmatpush.msra.mxu0 %v2947
    %5393 = vmatpush.msra.mxu0 %v2946
    %5394 = vmatpush.msra.mxu0 %v2945
    %5395 = vmatmul.f32.gmra.mxu0 %v5238
    %v5396 = vpop.f32.mrf.mxu0
    %v5397 = vadd.f32 0.0, %v5396
    %5398 = vdwg.mxu0
    %v5399 = vmax.f32 %v4794, 0.0
    %v5400 = vmax.f32 %v5257, 0.0
    %v5401 = vmax.f32 %v5277, 0.0
    %v5402 = vmax.f32 %v5297, 0.0
    %v5403 = vmax.f32 %v5317, 0.0
    %v5404 = vmax.f32 %v5337, 0.0
    %v5405 = vmax.f32 %v5357, 0.0
    %v5406 = vmax.f32 %v5377, 0.0
    %v5407 = vmax.f32 %v5397, 0.0
    %v5416 = vrot.slane %v5401, 7
    %v5417 = vsel %vm3964, %v5416, %v5400
    %v5418 = vrot.slane %v5402, 6
    %v5419 = vsel %vm3967, %v5418, %v5417
    %v5420 = vrot.slane %v5403, 5
    %v5421 = vsel %vm3970, %v5420, %v5419
    %v5422 = vrot.slane %v5404, 4
    %v5423 = vsel %vm3973, %v5422, %v5421
    %v5424 = vrot.slane %v5405, 3
    %v5425 = vsel %vm3976, %v5424, %v5423
    %v5426 = vrot.slane %v5406, 2
    %v5427 = vsel %vm3979, %v5426, %v5425
    %v5428 = vrot.slane %v5407, 1
    %v5429 = vsel %vm3982, %v5428, %v5427
    %v5430 = vsel %vm3010, %v5429, 0
    %5432 = vmatpush.msra.mxu0 0.0
    %5433 = vmatpush.msra.mxu0 0.0
    %5434 = vmatpush.msra.mxu0 0.0
    %5435 = vmatpush.msra.mxu0 0.0
    %5436 = vmatpush.msra.mxu0 0.0
    %5437 = vmatpush.msra.mxu0 0.0
    %5438 = vmatpush.msra.mxu0 0.0
    %5439 = vmatpush.msra.mxu0 0.0
    %5440 = vmatpush.msra.mxu0 0.0
    %5441 = vmatpush.msra.mxu0 0.0
    %5442 = vmatpush.msra.mxu0 0.0
    %5443 = vmatpush.msra.mxu0 0.0
    %5444 = vmatpush.msra.mxu0 0.0
    %5445 = vmatpush.msra.mxu0 0.0
    %5446 = vmatpush.msra.mxu0 %v2995
    %5447 = vmatpush.msra.mxu0 %v2993
    %5448 = vmatmul.f32.gmra.mxu0 %v5430
    %v5449 = vpop.f32.mrf.mxu0
    %v5450 = vadd.f32 0.0, %v5449
    %5451 = vdwg.mxu0
    %5452 = vmatpush.msra.mxu0 0.0
    %5453 = vmatpush.msra.mxu0 0.0
    %5454 = vmatpush.msra.mxu0 0.0
    %5455 = vmatpush.msra.mxu0 0.0
    %5456 = vmatpush.msra.mxu0 0.0
    %5457 = vmatpush.msra.mxu0 0.0
    %5458 = vmatpush.msra.mxu0 0.0
    %5459 = vmatpush.msra.mxu0 0.0
    %5460 = vmatpush.msra.mxu0 0.0
    %5461 = vmatpush.msra.mxu0 0.0
    %5462 = vmatpush.msra.mxu0 0.0
    %5463 = vmatpush.msra.mxu0 0.0
    %5464 = vmatpush.msra.mxu0 0.0
    %5465 = vmatpush.msra.mxu0 0.0
    %5466 = vmatpush.msra.mxu0 %v2996
    %5467 = vmatpush.msra.mxu0 %v2994
    %5468 = vmatmul.f32.gmra.mxu0 %v5430
    %v5469 = vpop.f32.mrf.mxu0
    %v5470 = vadd.f32 0.0, %v5469
    %5471 = vdwg.mxu0
    %5473 = vrot.lane.b32.xlu0 %v5399, 32
    %v5474 = vpop.permute.xlu0 %5473
    %v5475 = vsel %vm3107, %v5474, 0
    %5477 = vmatpush.msra.mxu0 0.0
    %5478 = vmatpush.msra.mxu0 0.0
    %5479 = vmatpush.msra.mxu0 0.0
    %5480 = vmatpush.msra.mxu0 0.0
    %5481 = vmatpush.msra.mxu0 0.0
    %5482 = vmatpush.msra.mxu0 0.0
    %5483 = vmatpush.msra.mxu0 0.0
    %5484 = vmatpush.msra.mxu0 0.0
    %5485 = vmatpush.msra.mxu0 0.0
    %5486 = vmatpush.msra.mxu0 0.0
    %5487 = vmatpush.msra.mxu0 0.0
    %5488 = vmatpush.msra.mxu0 0.0
    %5489 = vmatpush.msra.mxu0 %v2991
    %5490 = vmatpush.msra.mxu0 %v2989
    %5491 = vmatpush.msra.mxu0 %v2987
    %5492 = vmatpush.msra.mxu0 %v2985
    %5493 = vmatmul.f32.gmra.mxu0 %v5475
    %v5494 = vpop.f32.mrf.mxu0
    %v5495 = vadd.f32 %v5450, %v5494
    %5496 = vdwg.mxu0
    %5497 = vmatpush.msra.mxu0 0.0
    %5498 = vmatpush.msra.mxu0 0.0
    %5499 = vmatpush.msra.mxu0 0.0
    %5500 = vmatpush.msra.mxu0 0.0
    %5501 = vmatpush.msra.mxu0 0.0
    %5502 = vmatpush.msra.mxu0 0.0
    %5503 = vmatpush.msra.mxu0 0.0
    %5504 = vmatpush.msra.mxu0 0.0
    %5505 = vmatpush.msra.mxu0 0.0
    %5506 = vmatpush.msra.mxu0 0.0
    %5507 = vmatpush.msra.mxu0 0.0
    %5508 = vmatpush.msra.mxu0 0.0
    %5509 = vmatpush.msra.mxu0 %v2992
    %5510 = vmatpush.msra.mxu0 %v2990
    %5511 = vmatpush.msra.mxu0 %v2988
    %5512 = vmatpush.msra.mxu0 %v2986
    %5513 = vmatmul.f32.gmra.mxu0 %v5475
    %v5514 = vpop.f32.mrf.mxu0
    %v5515 = vadd.f32 %v5470, %v5514
    %5516 = vdwg.mxu0
    %v5517 = vadd.f32 %v5495, %v4492
    %v5518 = vadd.f32 %v5515, %v4493
    %s5519 = scalar_lea.vmem [#allocation7], 16
    %5520 = vst [vmem:[%s5519] sm:$0xff] %v5517
    %5521 = vst [vmem:[%s5519 + $0x8] sm:$0xff] %v5518
    %v5530 = vrot.slane %v5148, 7
    %v5531 = vsel %vm3964, %v5530, %v5133
    %v5532 = vrot.slane %v5163, 6
    %v5533 = vsel %vm3967, %v5532, %v5531
    %v5534 = vrot.slane %v5178, 5
    %v5535 = vsel %vm3970, %v5534, %v5533
    %v5536 = vrot.slane %v5193, 4
    %v5537 = vsel %vm3973, %v5536, %v5535
    %v5538 = vrot.slane %v5208, 3
    %v5539 = vsel %vm3976, %v5538, %v5537
    %v5540 = vrot.slane %v5223, 2
    %v5541 = vsel %vm3979, %v5540, %v5539
    %v5542 = vrot.slane %v5238, 1
    %v5543 = vsel %vm3982, %v5542, %v5541
    %s5545 = scalar_lea.vmem [#allocation10], 8
    %5546 = vst [vmem:[%s5545] sm:$0xff] %v5543
    %s5547 = scalar_lea.vmem [#allocation6], 16
    %v5548 = vld [vmem:[%s5547] sm:$0xff]
    %v5557 = vrot.slane %v5277, 7
    %v5558 = vsel %vm3964, %v5557, %v5257
    %v5559 = vrot.slane %v5297, 6
    %v5560 = vsel %vm3967, %v5559, %v5558
    %v5561 = vrot.slane %v5317, 5
    %v5562 = vsel %vm3970, %v5561, %v5560
    %v5563 = vrot.slane %v5337, 4
    %v5564 = vsel %vm3973, %v5563, %v5562
    %v5565 = vrot.slane %v5357, 3
    %v5566 = vsel %vm3976, %v5565, %v5564
    %v5567 = vrot.slane %v5377, 2
    %v5568 = vsel %vm3979, %v5567, %v5566
    %v5569 = vrot.slane %v5397, 1
    %v5570 = vsel %vm3982, %v5569, %v5568
    %v5571 = vsel %vm3010, %v5570, 0
    %5573 = vmatpush.msra.mxu0 0.0
    %5574 = vmatpush.msra.mxu0 0.0
    %5575 = vmatpush.msra.mxu0 0.0
    %5576 = vmatpush.msra.mxu0 0.0
    %5577 = vmatpush.msra.mxu0 0.0
    %5578 = vmatpush.msra.mxu0 0.0
    %5579 = vmatpush.msra.mxu0 0.0
    %5580 = vmatpush.msra.mxu0 0.0
    %5581 = vmatpush.msra.mxu0 0.0
    %5582 = vmatpush.msra.mxu0 0.0
    %5583 = vmatpush.msra.mxu0 0.0
    %5584 = vmatpush.msra.mxu0 0.0
    %5585 = vmatpush.msra.mxu0 0.0
    %5586 = vmatpush.msra.mxu0 0.0
    %5587 = vmatpush.msra.mxu0 %v2962
    %5588 = vmatpush.msra.mxu0 %v2961
    %5589 = vmatmul.f32.gmra.mxu0 %v5571
    %v5590 = vpop.f32.mrf.mxu0
    %v5591 = vadd.f32 0.0, %v5590
    %5592 = vdwg.mxu0
    %v5593 = vadd.f32 %v5548, %v5591
    %5594 = vmatpush.msra.mxu0 0.0
    %5595 = vmatpush.msra.mxu0 0.0
    %5596 = vmatpush.msra.mxu0 0.0
    %5597 = vmatpush.msra.mxu0 0.0
    %5598 = vmatpush.msra.mxu0 0.0
    %5599 = vmatpush.msra.mxu0 0.0
    %5600 = vmatpush.msra.mxu0 0.0
    %5601 = vmatpush.msra.mxu0 0.0
    %5602 = vmatpush.msra.mxu0 0.0
    %5603 = vmatpush.msra.mxu0 0.0
    %5604 = vmatpush.msra.mxu0 0.0
    %5605 = vmatpush.msra.mxu0 0.0
    %5606 = vmatpush.msra.mxu0 %v2966
    %5607 = vmatpush.msra.mxu0 %v2965
    %5608 = vmatpush.msra.mxu0 %v2964
    %5609 = vmatpush.msra.mxu0 %v2963
    %5610 = vmatmul.f32.gmra.mxu0 %v4652
    %v5611 = vpop.f32.mrf.mxu0
    %v5612 = vadd.f32 0.0, %v5611
    %5613 = vdwg.mxu0
    %v5614 = vadd.f32 %v5593, %v5612
    %v5615 = vxor.u32 %v5614, 2147483648
    %v5616 = vmul.f32 %v5615, 1.442695
    %v5617 = vpow.pop %v5616
    %v5618 = vadd.f32 %v5617, 1.0
    %v5619 = vrcp.pop %v5618
    %v5620 = vmul.f32 %v5618, %v5619
    %v5621 = vsub.f32 1.0, %v5620
    %v5622 = vmul.f32 %v5619, %v5621
    %v5623 = vadd.f32 %v5619, %v5622
    %vm5624 = vweird.f32 %v5618
    %vm5625 = vweird.f32 %v5619
    %vm5626 = vmor %vm5624, %vm5625
    %v5627 = vsel %vm5626, %v5619, %v5623
    %v5628 = vand.u32 2147483647, %v5618
    %vm5629 = vcmp.eq.f32.partialorder %v5628, 8.507059e+37
    %v5630 = vand.u32 %v5618, 2147483648
    %v5631 = vor.u32 1.1754944e-38, %v5630
    %v5632 = vsel %vm5629, %v5631, %v5627
    %v5633 = vmul.f32 1.0, %v5632
    %v5634 = vtanh.pop %v5614
    %v5635 = vmul.f32 %v5633, %v4622
    %5637 = vrot.lane.b32.xlu0 %v5634, 64
    %v5638 = vpop.permute.xlu0 %5637
    %v5640 = vmul.f32 %v5633, %v5638
    %5642 = vrot.lane.b32.xlu0 %v5640, 32
    %v5643 = vpop.permute.xlu0 %5642
    %v5645 = vadd.f32 %v5635, %v5643
    %v5646 = vtanh.pop %v5645
    %5648 = vrot.lane.b32.xlu0 %v5646, 64
    %v5649 = vpop.permute.xlu0 %5648
    %v5651 = vmul.f32 %v5633, %v5649
    %5652 = vmatpush.msra.mxu0 0.0
    %5653 = vmatpush.msra.mxu0 0.0
    %5654 = vmatpush.msra.mxu0 0.0
    %5655 = vmatpush.msra.mxu0 0.0
    %5656 = vmatpush.msra.mxu0 0.0
    %5657 = vmatpush.msra.mxu0 0.0
    %5658 = vmatpush.msra.mxu0 0.0
    %5659 = vmatpush.msra.mxu0 0.0
    %5660 = vmatpush.msra.mxu0 0.0
    %5661 = vmatpush.msra.mxu0 0.0
    %5662 = vmatpush.msra.mxu0 0.0
    %5663 = vmatpush.msra.mxu0 0.0
    %5664 = vmatpush.msra.mxu0 %v2974
    %5665 = vmatpush.msra.mxu0 %v2973
    %5666 = vmatpush.msra.mxu0 %v2972
    %5667 = vmatpush.msra.mxu0 %v2971
    %5668 = vmatmul.f32.gmra.mxu0 %v4735
    %v5669 = vpop.f32.mrf.mxu0
    %v5670 = vadd.f32 0.0, %v5669
    %5671 = vdwg.mxu0
    %5673 = vrot.lane.b32.xlu0 %v5651, 32
    %v5674 = vpop.permute.xlu0 %5673
    %v5675 = vsel %vm3107, %v5674, 0
    %5677 = vmatpush.msra.mxu0 0.0
    %5678 = vmatpush.msra.mxu0 0.0
    %5679 = vmatpush.msra.mxu0 0.0
    %5680 = vmatpush.msra.mxu0 0.0
    %5681 = vmatpush.msra.mxu0 0.0
    %5682 = vmatpush.msra.mxu0 0.0
    %5683 = vmatpush.msra.mxu0 0.0
    %5684 = vmatpush.msra.mxu0 0.0
    %5685 = vmatpush.msra.mxu0 0.0
    %5686 = vmatpush.msra.mxu0 0.0
    %5687 = vmatpush.msra.mxu0 0.0
    %5688 = vmatpush.msra.mxu0 0.0
    %5689 = vmatpush.msra.mxu0 %v2970
    %5690 = vmatpush.msra.mxu0 %v2969
    %5691 = vmatpush.msra.mxu0 %v2968
    %5692 = vmatpush.msra.mxu0 %v2967
    %5693 = vmatmul.f32.gmra.mxu0 %v5675
    %v5694 = vpop.f32.mrf.mxu0
    %v5695 = vadd.f32 %v5670, %v5694
    %5696 = vdwg.mxu0
    %v5697 = vadd.f32 %v5695, %v3222
    %v5698 = vxor.u32 %v5697, 2147483648
    %v5699 = vmul.f32 %v5698, 1.442695
    %v5700 = vpow.pop %v5699
    %v5701 = vadd.f32 %v5700, 1.0
    %v5702 = vrcp.pop %v5701
    %v5703 = vmul.f32 %v5701, %v5702
    %v5704 = vsub.f32 1.0, %v5703
    %v5705 = vmul.f32 %v5702, %v5704
    %v5706 = vadd.f32 %v5702, %v5705
    %vm5707 = vweird.f32 %v5701
    %vm5708 = vweird.f32 %v5702
    %vm5709 = vmor %vm5707, %vm5708
    %v5710 = vsel %vm5709, %v5702, %v5706
    %v5711 = vand.u32 2147483647, %v5701
    %vm5712 = vcmp.eq.f32.partialorder %v5711, 8.507059e+37
    %v5713 = vand.u32 %v5701, 2147483648
    %v5714 = vor.u32 1.1754944e-38, %v5713
    %v5715 = vsel %vm5712, %v5714, %v5710
    %v5716 = vmul.f32 1.0, %v5715
    %v5717 = vtanh.pop %v5697
    %v5718 = vmul.f32 %v5716, %v4705
    %5720 = vrot.lane.b32.xlu0 %v5717, 64
    %v5721 = vpop.permute.xlu0 %5720
    %v5723 = vmul.f32 %v5716, %v5721
    %5725 = vrot.lane.b32.xlu0 %v5723, 32
    %v5726 = vpop.permute.xlu0 %5725
    %v5728 = vadd.f32 %v5718, %v5726
    %v5729 = vtanh.pop %v5728
    %5731 = vrot.lane.b32.xlu0 %v5729, 64
    %v5732 = vpop.permute.xlu0 %5731
    %v5734 = vmul.f32 %v5716, %v5732
    %5735 = vmatpush.msra.mxu0 0.0
    %5736 = vmatpush.msra.mxu0 0.0
    %5737 = vmatpush.msra.mxu0 0.0
    %5738 = vmatpush.msra.mxu0 0.0
    %5739 = vmatpush.msra.mxu0 0.0
    %5740 = vmatpush.msra.mxu0 0.0
    %5741 = vmatpush.msra.mxu0 0.0
    %5742 = vmatpush.msra.mxu0 0.0
    %5743 = vmatpush.msra.mxu0 0.0
    %5744 = vmatpush.msra.mxu0 0.0
    %5745 = vmatpush.msra.mxu0 0.0
    %5746 = vmatpush.msra.mxu0 0.0
    %5747 = vmatpush.msra.mxu0 %v2983
    %5748 = vmatpush.msra.mxu0 %v2982
    %5749 = vmatpush.msra.mxu0 %v2981
    %5750 = vmatpush.msra.mxu0 %v2980
    %5751 = vmatmul.f32.gmra.mxu0 %v4798
    %v5752 = vpop.f32.mrf.mxu0
    %v5753 = vadd.f32 0.0, %v5752
    %5754 = vdwg.mxu0
    %5756 = vrot.lane.b32.xlu0 %v5734, 32
    %v5757 = vpop.permute.xlu0 %5756
    %v5758 = vsel %vm3107, %v5757, 0
    %5760 = vmatpush.msra.mxu0 0.0
    %5761 = vmatpush.msra.mxu0 0.0
    %5762 = vmatpush.msra.mxu0 0.0
    %5763 = vmatpush.msra.mxu0 0.0
    %5764 = vmatpush.msra.mxu0 0.0
    %5765 = vmatpush.msra.mxu0 0.0
    %5766 = vmatpush.msra.mxu0 0.0
    %5767 = vmatpush.msra.mxu0 0.0
    %5768 = vmatpush.msra.mxu0 0.0
    %5769 = vmatpush.msra.mxu0 0.0
    %5770 = vmatpush.msra.mxu0 0.0
    %5771 = vmatpush.msra.mxu0 0.0
    %5772 = vmatpush.msra.mxu0 %v2979
    %5773 = vmatpush.msra.mxu0 %v2978
    %5774 = vmatpush.msra.mxu0 %v2977
    %5775 = vmatpush.msra.mxu0 %v2976
    %5776 = vmatmul.f32.gmra.mxu0 %v5758
    %v5777 = vpop.f32.mrf.mxu0
    %v5778 = vadd.f32 %v5753, %v5777
    %5779 = vdwg.mxu0
    %v5780 = vadd.f32 %v5778, %v3315
    %v5781 = vxor.u32 %v5780, 2147483648
    %v5782 = vmul.f32 %v5781, 1.442695
    %v5783 = vpow.pop %v5782
    %v5784 = vadd.f32 %v5783, 1.0
    %v5785 = vrcp.pop %v5784
    %v5786 = vmul.f32 %v5784, %v5785
    %v5787 = vsub.f32 1.0, %v5786
    %v5788 = vmul.f32 %v5785, %v5787
    %v5789 = vadd.f32 %v5785, %v5788
    %vm5790 = vweird.f32 %v5784
    %vm5791 = vweird.f32 %v5785
    %vm5792 = vmor %vm5790, %vm5791
    %v5793 = vsel %vm5792, %v5785, %v5789
    %v5794 = vand.u32 2147483647, %v5784
    %vm5795 = vcmp.eq.f32.partialorder %v5794, 8.507059e+37
    %v5796 = vand.u32 %v5784, 2147483648
    %v5797 = vor.u32 1.1754944e-38, %v5796
    %v5798 = vsel %vm5795, %v5797, %v5793
    %v5799 = vmul.f32 1.0, %v5798
    %v5800 = vtanh.pop %v5780
    %v5801 = vmul.f32 %v5799, %v4788
    %5803 = vrot.lane.b32.xlu0 %v5800, 64
    %v5804 = vpop.permute.xlu0 %5803
    %v5806 = vmul.f32 %v5799, %v5804
    %5808 = vrot.lane.b32.xlu0 %v5806, 32
    %v5809 = vpop.permute.xlu0 %5808
    %v5811 = vadd.f32 %v5801, %v5809
    %v5812 = vtanh.pop %v5811
    %5814 = vrot.lane.b32.xlu0 %v5812, 64
    %v5815 = vpop.permute.xlu0 %5814
    %v5817 = vmul.f32 %v5799, %v5815
    %5819 = vrot.lane.b32.xlu0 %v5817, 32
    %v5820 = vpop.permute.xlu0 %5819
    %v5821 = vsel %vm3107, %v5820, 0
    %5823 = vmatpush.msra.mxu0 0.0
    %5824 = vmatpush.msra.mxu0 0.0
    %5825 = vmatpush.msra.mxu0 0.0
    %5826 = vmatpush.msra.mxu0 0.0
    %5827 = vmatpush.msra.mxu0 0.0
    %5828 = vmatpush.msra.mxu0 0.0
    %5829 = vmatpush.msra.mxu0 0.0
    %5830 = vmatpush.msra.mxu0 0.0
    %5831 = vmatpush.msra.mxu0 0.0
    %5832 = vmatpush.msra.mxu0 0.0
    %5833 = vmatpush.msra.mxu0 0.0
    %5834 = vmatpush.msra.mxu0 0.0
    %5835 = vmatpush.msra.mxu0 %v82
    %5836 = vmatpush.msra.mxu0 %v81
    %5837 = vmatpush.msra.mxu0 %v80
    %5838 = vmatpush.msra.mxu0 %v79
    %5839 = vmatmul.f32.gmra.mxu0 %v5821
    %v5840 = vpop.f32.mrf.mxu0
    %v5841 = vadd.f32 %v3360, %v5840
    %5842 = vdwg.mxu0
    %v5844 = vrot.slane %v5841, 1
    %v5845 = vrot.slane %v5841, 2
    %v5846 = vrot.slane %v5841, 3
    %v5847 = vrot.slane %v5841, 4
    %v5848 = vrot.slane %v5841, 5
    %v5849 = vrot.slane %v5841, 6
    %v5850 = vrot.slane %v5841, 7
    %v5851 = vsel %vm3010, %v5841, 0
    %5853 = vmatpush.xpose.msra.mxu0 %v3443
    %5854 = vmatpush.xpose.msra.mxu0 %v3440
    %5855 = vmatpush.xpose.msra.mxu0 %v3437
    %5856 = vmatpush.xpose.msra.mxu0 %v3434
    %5857 = vmatpush.xpose.msra.mxu0 %v3431
    %5858 = vmatpush.xpose.msra.mxu0 %v3428
    %5859 = vmatpush.xpose.msra.mxu0 %v3425
    %5860 = vmatpush.xpose.msra.mxu0 %v3422
    %5861 = vmatpush.xpose.msra.mxu0 %v3419
    %5862 = vmatpush.xpose.msra.mxu0 %v3416
    %5863 = vmatpush.xpose.msra.mxu0 %v3413
    %5864 = vmatpush.xpose.msra.mxu0 %v3410
    %5865 = vmatpush.xpose.msra.mxu0 %v3407
    %5866 = vmatpush.xpose.msra.mxu0 %v3404
    %5867 = vmatpush.xpose.msra.mxu0 %v3401
    %5868 = vmatpush.xpose.msra.mxu0 %v3398
    %5869 = vmatmul.f32.gmra.mxu0 %v5851
    %v5870 = vpop.f32.mrf.mxu0
    %v5871 = vadd.f32 0.0, %v5870
    %5872 = vdwg.mxu0
    %v5873 = vsel %vm3010, %v5844, 0
    %5875 = vmatpush.xpose.msra.mxu0 %v3513
    %5876 = vmatpush.xpose.msra.mxu0 %v3510
    %5877 = vmatpush.xpose.msra.mxu0 %v3507
    %5878 = vmatpush.xpose.msra.mxu0 %v3504
    %5879 = vmatpush.xpose.msra.mxu0 %v3501
    %5880 = vmatpush.xpose.msra.mxu0 %v3498
    %5881 = vmatpush.xpose.msra.mxu0 %v3495
    %5882 = vmatpush.xpose.msra.mxu0 %v3492
    %5883 = vmatpush.xpose.msra.mxu0 %v3489
    %5884 = vmatpush.xpose.msra.mxu0 %v3486
    %5885 = vmatpush.xpose.msra.mxu0 %v3483
    %5886 = vmatpush.xpose.msra.mxu0 %v3480
    %5887 = vmatpush.xpose.msra.mxu0 %v3477
    %5888 = vmatpush.xpose.msra.mxu0 %v3474
    %5889 = vmatpush.xpose.msra.mxu0 %v3471
    %5890 = vmatpush.xpose.msra.mxu0 %v3468
    %5891 = vmatmul.f32.gmra.mxu0 %v5873
    %v5892 = vpop.f32.mrf.mxu0
    %v5893 = vadd.f32 0.0, %v5892
    %5894 = vdwg.mxu0
    %v5895 = vsel %vm3010, %v5845, 0
    %5897 = vmatpush.xpose.msra.mxu0 %v3583
    %5898 = vmatpush.xpose.msra.mxu0 %v3580
    %5899 = vmatpush.xpose.msra.mxu0 %v3577
    %5900 = vmatpush.xpose.msra.mxu0 %v3574
    %5901 = vmatpush.xpose.msra.mxu0 %v3571
    %5902 = vmatpush.xpose.msra.mxu0 %v3568
    %5903 = vmatpush.xpose.msra.mxu0 %v3565
    %5904 = vmatpush.xpose.msra.mxu0 %v3562
    %5905 = vmatpush.xpose.msra.mxu0 %v3559
    %5906 = vmatpush.xpose.msra.mxu0 %v3556
    %5907 = vmatpush.xpose.msra.mxu0 %v3553
    %5908 = vmatpush.xpose.msra.mxu0 %v3550
    %5909 = vmatpush.xpose.msra.mxu0 %v3547
    %5910 = vmatpush.xpose.msra.mxu0 %v3544
    %5911 = vmatpush.xpose.msra.mxu0 %v3541
    %5912 = vmatpush.xpose.msra.mxu0 %v3538
    %5913 = vmatmul.f32.gmra.mxu0 %v5895
    %v5914 = vpop.f32.mrf.mxu0
    %v5915 = vadd.f32 0.0, %v5914
    %5916 = vdwg.mxu0
    %v5917 = vsel %vm3010, %v5846, 0
    %5919 = vmatpush.xpose.msra.mxu0 %v3653
    %5920 = vmatpush.xpose.msra.mxu0 %v3650
    %5921 = vmatpush.xpose.msra.mxu0 %v3647
    %5922 = vmatpush.xpose.msra.mxu0 %v3644
    %5923 = vmatpush.xpose.msra.mxu0 %v3641
    %5924 = vmatpush.xpose.msra.mxu0 %v3638
    %5925 = vmatpush.xpose.msra.mxu0 %v3635
    %5926 = vmatpush.xpose.msra.mxu0 %v3632
    %5927 = vmatpush.xpose.msra.mxu0 %v3629
    %5928 = vmatpush.xpose.msra.mxu0 %v3626
    %5929 = vmatpush.xpose.msra.mxu0 %v3623
    %5930 = vmatpush.xpose.msra.mxu0 %v3620
    %5931 = vmatpush.xpose.msra.mxu0 %v3617
    %5932 = vmatpush.xpose.msra.mxu0 %v3614
    %5933 = vmatpush.xpose.msra.mxu0 %v3611
    %5934 = vmatpush.xpose.msra.mxu0 %v3608
    %5935 = vmatmul.f32.gmra.mxu0 %v5917
    %v5936 = vpop.f32.mrf.mxu0
    %v5937 = vadd.f32 0.0, %v5936
    %5938 = vdwg.mxu0
    %v5939 = vsel %vm3010, %v5847, 0
    %5941 = vmatpush.xpose.msra.mxu0 %v3723
    %5942 = vmatpush.xpose.msra.mxu0 %v3720
    %5943 = vmatpush.xpose.msra.mxu0 %v3717
    %5944 = vmatpush.xpose.msra.mxu0 %v3714
    %5945 = vmatpush.xpose.msra.mxu0 %v3711
    %5946 = vmatpush.xpose.msra.mxu0 %v3708
    %5947 = vmatpush.xpose.msra.mxu0 %v3705
    %5948 = vmatpush.xpose.msra.mxu0 %v3702
    %5949 = vmatpush.xpose.msra.mxu0 %v3699
    %5950 = vmatpush.xpose.msra.mxu0 %v3696
    %5951 = vmatpush.xpose.msra.mxu0 %v3693
    %5952 = vmatpush.xpose.msra.mxu0 %v3690
    %5953 = vmatpush.xpose.msra.mxu0 %v3687
    %5954 = vmatpush.xpose.msra.mxu0 %v3684
    %5955 = vmatpush.xpose.msra.mxu0 %v3681
    %5956 = vmatpush.xpose.msra.mxu0 %v3678
    %5957 = vmatmul.f32.gmra.mxu0 %v5939
    %v5958 = vpop.f32.mrf.mxu0
    %v5959 = vadd.f32 0.0, %v5958
    %5960 = vdwg.mxu0
    %v5961 = vsel %vm3010, %v5848, 0
    %5963 = vmatpush.xpose.msra.mxu0 %v3793
    %5964 = vmatpush.xpose.msra.mxu0 %v3790
    %5965 = vmatpush.xpose.msra.mxu0 %v3787
    %5966 = vmatpush.xpose.msra.mxu0 %v3784
    %5967 = vmatpush.xpose.msra.mxu0 %v3781
    %5968 = vmatpush.xpose.msra.mxu0 %v3778
    %5969 = vmatpush.xpose.msra.mxu0 %v3775
    %5970 = vmatpush.xpose.msra.mxu0 %v3772
    %5971 = vmatpush.xpose.msra.mxu0 %v3769
    %5972 = vmatpush.xpose.msra.mxu0 %v3766
    %5973 = vmatpush.xpose.msra.mxu0 %v3763
    %5974 = vmatpush.xpose.msra.mxu0 %v3760
    %5975 = vmatpush.xpose.msra.mxu0 %v3757
    %5976 = vmatpush.xpose.msra.mxu0 %v3754
    %5977 = vmatpush.xpose.msra.mxu0 %v3751
    %5978 = vmatpush.xpose.msra.mxu0 %v3748
    %5979 = vmatmul.f32.gmra.mxu0 %v5961
    %v5980 = vpop.f32.mrf.mxu0
    %v5981 = vadd.f32 0.0, %v5980
    %5982 = vdwg.mxu0
    %v5983 = vsel %vm3010, %v5849, 0
    %5985 = vmatpush.xpose.msra.mxu0 %v3863
    %5986 = vmatpush.xpose.msra.mxu0 %v3860
    %5987 = vmatpush.xpose.msra.mxu0 %v3857
    %5988 = vmatpush.xpose.msra.mxu0 %v3854
    %5989 = vmatpush.xpose.msra.mxu0 %v3851
    %5990 = vmatpush.xpose.msra.mxu0 %v3848
    %5991 = vmatpush.xpose.msra.mxu0 %v3845
    %5992 = vmatpush.xpose.msra.mxu0 %v3842
    %5993 = vmatpush.xpose.msra.mxu0 %v3839
    %5994 = vmatpush.xpose.msra.mxu0 %v3836
    %5995 = vmatpush.xpose.msra.mxu0 %v3833
    %5996 = vmatpush.xpose.msra.mxu0 %v3830
    %5997 = vmatpush.xpose.msra.mxu0 %v3827
    %5998 = vmatpush.xpose.msra.mxu0 %v3824
    %5999 = vmatpush.xpose.msra.mxu0 %v3821
    %6000 = vmatpush.xpose.msra.mxu0 %v3818
    %6001 = vmatmul.f32.gmra.mxu0 %v5983
    %v6002 = vpop.f32.mrf.mxu0
    %v6003 = vadd.f32 0.0, %v6002
    %6004 = vdwg.mxu0
    %v6005 = vsel %vm3010, %v5850, 0
    %6007 = vmatpush.xpose.msra.mxu0 %v3933
    %6008 = vmatpush.xpose.msra.mxu0 %v3930
    %6009 = vmatpush.xpose.msra.mxu0 %v3927
    %6010 = vmatpush.xpose.msra.mxu0 %v3924
    %6011 = vmatpush.xpose.msra.mxu0 %v3921
    %6012 = vmatpush.xpose.msra.mxu0 %v3918
    %6013 = vmatpush.xpose.msra.mxu0 %v3915
    %6014 = vmatpush.xpose.msra.mxu0 %v3912
    %6015 = vmatpush.xpose.msra.mxu0 %v3909
    %6016 = vmatpush.xpose.msra.mxu0 %v3906
    %6017 = vmatpush.xpose.msra.mxu0 %v3903
    %6018 = vmatpush.xpose.msra.mxu0 %v3900
    %6019 = vmatpush.xpose.msra.mxu0 %v3897
    %6020 = vmatpush.xpose.msra.mxu0 %v3894
    %6021 = vmatpush.xpose.msra.mxu0 %v3891
    %6022 = vmatpush.xpose.msra.mxu0 %v3888
    %6023 = vmatmul.f32.gmra.mxu0 %v6005
    %v6024 = vpop.f32.mrf.mxu0
    %v6025 = vadd.f32 0.0, %v6024
    %6026 = vdwg.mxu0
    %v6035 = vrot.slane %v5893, 7
    %v6036 = vsel %vm3964, %v6035, %v5871
    %v6037 = vrot.slane %v5915, 6
    %v6038 = vsel %vm3967, %v6037, %v6036
    %v6039 = vrot.slane %v5937, 5
    %v6040 = vsel %vm3970, %v6039, %v6038
    %v6041 = vrot.slane %v5959, 4
    %v6042 = vsel %vm3973, %v6041, %v6040
    %v6043 = vrot.slane %v5981, 3
    %v6044 = vsel %vm3976, %v6043, %v6042
    %v6045 = vrot.slane %v6003, 2
    %v6046 = vsel %vm3979, %v6045, %v6044
    %v6047 = vrot.slane %v6025, 1
    %v6048 = vsel %vm3982, %v6047, %v6046
    %6050 = vmax.xlane.f32.xlu0 %v6048
    %v6051 = vpop.xlane.xlu0 %6050
    %v6053 = vrot.slane %v6051, 1
    %v6054 = vrot.slane %v6051, 2
    %v6055 = vrot.slane %v6051, 3
    %v6056 = vrot.slane %v6051, 4
    %v6057 = vrot.slane %v6051, 5
    %v6058 = vrot.slane %v6051, 6
    %v6059 = vrot.slane %v6051, 7
    %v6068 = vsub.f32 %v5871, %v6051
    %v6069 = vsub.f32 %v5893, %v6053
    %v6070 = vsub.f32 %v5915, %v6054
    %v6071 = vsub.f32 %v5937, %v6055
    %v6072 = vsub.f32 %v5959, %v6056
    %v6073 = vsub.f32 %v5981, %v6057
    %v6074 = vsub.f32 %v6003, %v6058
    %v6075 = vsub.f32 %v6025, %v6059
    %v6076 = vmul.f32 %v6068, 1.442695
    %v6077 = vpow.pop %v6076
    %v6078 = vmul.f32 %v6069, 1.442695
    %v6079 = vpow.pop %v6078
    %v6080 = vmul.f32 %v6070, 1.442695
    %v6081 = vpow.pop %v6080
    %v6082 = vmul.f32 %v6071, 1.442695
    %v6083 = vpow.pop %v6082
    %v6084 = vmul.f32 %v6072, 1.442695
    %v6085 = vpow.pop %v6084
    %v6086 = vmul.f32 %v6073, 1.442695
    %v6087 = vpow.pop %v6086
    %v6088 = vmul.f32 %v6074, 1.442695
    %v6089 = vpow.pop %v6088
    %v6090 = vmul.f32 %v6075, 1.442695
    %v6091 = vpow.pop %v6090
    %v6092 = vmul.f32 %v6077, %v78
    %v6093 = vmul.f32 %v6079, %v4028
    %v6094 = vmul.f32 %v6081, %v4029
    %v6095 = vmul.f32 %v6083, %v4030
    %v6096 = vmul.f32 %v6085, %v4031
    %v6097 = vmul.f32 %v6087, %v4032
    %v6098 = vmul.f32 %v6089, %v4033
    %v6099 = vmul.f32 %v6091, %v4034
    %v6108 = vrot.slane %v6093, 7
    %v6109 = vsel %vm3964, %v6108, %v6092
    %v6110 = vrot.slane %v6094, 6
    %v6111 = vsel %vm3967, %v6110, %v6109
    %v6112 = vrot.slane %v6095, 5
    %v6113 = vsel %vm3970, %v6112, %v6111
    %v6114 = vrot.slane %v6096, 4
    %v6115 = vsel %vm3973, %v6114, %v6113
    %v6116 = vrot.slane %v6097, 3
    %v6117 = vsel %vm3976, %v6116, %v6115
    %v6118 = vrot.slane %v6098, 2
    %v6119 = vsel %vm3979, %v6118, %v6117
    %v6120 = vrot.slane %v6099, 1
    %v6121 = vsel %vm3982, %v6120, %v6119
    %6123 = vadd.xlane.f32.xlu0 %v6121
    %v6124 = vpop.xlane.xlu0 %6123
    %v6125 = vmax.f32 %v6124, 1e-12
    %v6127 = vrot.slane %v6125, 1
    %v6128 = vrot.slane %v6125, 2
    %v6129 = vrot.slane %v6125, 3
    %v6130 = vrot.slane %v6125, 4
    %v6131 = vrot.slane %v6125, 5
    %v6132 = vrot.slane %v6125, 6
    %v6133 = vrot.slane %v6125, 7
    %v6142 = vrcp.pop %v6125
    %v6143 = vmul.f32 %v6125, %v6142
    %v6144 = vsub.f32 1.0, %v6143
    %v6145 = vmul.f32 %v6142, %v6144
    %v6146 = vadd.f32 %v6142, %v6145
    %vm6147 = vweird.f32 %v6125
    %vm6148 = vweird.f32 %v6142
    %vm6149 = vmor %vm6147, %vm6148
    %v6150 = vsel %vm6149, %v6142, %v6146
    %v6151 = vand.u32 2147483647, %v6125
    %vm6152 = vcmp.eq.f32.partialorder %v6151, 8.507059e+37
    %v6153 = vand.u32 %v6125, 2147483648
    %v6154 = vor.u32 1.1754944e-38, %v6153
    %v6155 = vsel %vm6152, %v6154, %v6150
    %v6156 = vmul.f32 %v6092, %v6155
    %v6157 = vrcp.pop %v6127
    %v6158 = vmul.f32 %v6127, %v6157
    %v6159 = vsub.f32 1.0, %v6158
    %v6160 = vmul.f32 %v6157, %v6159
    %v6161 = vadd.f32 %v6157, %v6160
    %vm6162 = vweird.f32 %v6127
    %vm6163 = vweird.f32 %v6157
    %vm6164 = vmor %vm6162, %vm6163
    %v6165 = vsel %vm6164, %v6157, %v6161
    %v6166 = vand.u32 2147483647, %v6127
    %vm6167 = vcmp.eq.f32.partialorder %v6166, 8.507059e+37
    %v6168 = vand.u32 %v6127, 2147483648
    %v6169 = vor.u32 1.1754944e-38, %v6168
    %v6170 = vsel %vm6167, %v6169, %v6165
    %v6171 = vmul.f32 %v6093, %v6170
    %v6172 = vrcp.pop %v6128
    %v6173 = vmul.f32 %v6128, %v6172
    %v6174 = vsub.f32 1.0, %v6173
    %v6175 = vmul.f32 %v6172, %v6174
    %v6176 = vadd.f32 %v6172, %v6175
    %vm6177 = vweird.f32 %v6128
    %vm6178 = vweird.f32 %v6172
    %vm6179 = vmor %vm6177, %vm6178
    %v6180 = vsel %vm6179, %v6172, %v6176
    %v6181 = vand.u32 2147483647, %v6128
    %vm6182 = vcmp.eq.f32.partialorder %v6181, 8.507059e+37
    %v6183 = vand.u32 %v6128, 2147483648
    %v6184 = vor.u32 1.1754944e-38, %v6183
    %v6185 = vsel %vm6182, %v6184, %v6180
    %v6186 = vmul.f32 %v6094, %v6185
    %v6187 = vrcp.pop %v6129
    %v6188 = vmul.f32 %v6129, %v6187
    %v6189 = vsub.f32 1.0, %v6188
    %v6190 = vmul.f32 %v6187, %v6189
    %v6191 = vadd.f32 %v6187, %v6190
    %vm6192 = vweird.f32 %v6129
    %vm6193 = vweird.f32 %v6187
    %vm6194 = vmor %vm6192, %vm6193
    %v6195 = vsel %vm6194, %v6187, %v6191
    %v6196 = vand.u32 2147483647, %v6129
    %vm6197 = vcmp.eq.f32.partialorder %v6196, 8.507059e+37
    %v6198 = vand.u32 %v6129, 2147483648
    %v6199 = vor.u32 1.1754944e-38, %v6198
    %v6200 = vsel %vm6197, %v6199, %v6195
    %v6201 = vmul.f32 %v6095, %v6200
    %v6202 = vrcp.pop %v6130
    %v6203 = vmul.f32 %v6130, %v6202
    %v6204 = vsub.f32 1.0, %v6203
    %v6205 = vmul.f32 %v6202, %v6204
    %v6206 = vadd.f32 %v6202, %v6205
    %vm6207 = vweird.f32 %v6130
    %vm6208 = vweird.f32 %v6202
    %vm6209 = vmor %vm6207, %vm6208
    %v6210 = vsel %vm6209, %v6202, %v6206
    %v6211 = vand.u32 2147483647, %v6130
    %vm6212 = vcmp.eq.f32.partialorder %v6211, 8.507059e+37
    %v6213 = vand.u32 %v6130, 2147483648
    %v6214 = vor.u32 1.1754944e-38, %v6213
    %v6215 = vsel %vm6212, %v6214, %v6210
    %v6216 = vmul.f32 %v6096, %v6215
    %v6217 = vrcp.pop %v6131
    %v6218 = vmul.f32 %v6131, %v6217
    %v6219 = vsub.f32 1.0, %v6218
    %v6220 = vmul.f32 %v6217, %v6219
    %v6221 = vadd.f32 %v6217, %v6220
    %vm6222 = vweird.f32 %v6131
    %vm6223 = vweird.f32 %v6217
    %vm6224 = vmor %vm6222, %vm6223
    %v6225 = vsel %vm6224, %v6217, %v6221
    %v6226 = vand.u32 2147483647, %v6131
    %vm6227 = vcmp.eq.f32.partialorder %v6226, 8.507059e+37
    %v6228 = vand.u32 %v6131, 2147483648
    %v6229 = vor.u32 1.1754944e-38, %v6228
    %v6230 = vsel %vm6227, %v6229, %v6225
    %v6231 = vmul.f32 %v6097, %v6230
    %v6232 = vrcp.pop %v6132
    %v6233 = vmul.f32 %v6132, %v6232
    %v6234 = vsub.f32 1.0, %v6233
    %v6235 = vmul.f32 %v6232, %v6234
    %v6236 = vadd.f32 %v6232, %v6235
    %vm6237 = vweird.f32 %v6132
    %vm6238 = vweird.f32 %v6232
    %vm6239 = vmor %vm6237, %vm6238
    %v6240 = vsel %vm6239, %v6232, %v6236
    %v6241 = vand.u32 2147483647, %v6132
    %vm6242 = vcmp.eq.f32.partialorder %v6241, 8.507059e+37
    %v6243 = vand.u32 %v6132, 2147483648
    %v6244 = vor.u32 1.1754944e-38, %v6243
    %v6245 = vsel %vm6242, %v6244, %v6240
    %v6246 = vmul.f32 %v6098, %v6245
    %v6247 = vrcp.pop %v6133
    %v6248 = vmul.f32 %v6133, %v6247
    %v6249 = vsub.f32 1.0, %v6248
    %v6250 = vmul.f32 %v6247, %v6249
    %v6251 = vadd.f32 %v6247, %v6250
    %vm6252 = vweird.f32 %v6133
    %vm6253 = vweird.f32 %v6247
    %vm6254 = vmor %vm6252, %vm6253
    %v6255 = vsel %vm6254, %v6247, %v6251
    %v6256 = vand.u32 2147483647, %v6133
    %vm6257 = vcmp.eq.f32.partialorder %v6256, 8.507059e+37
    %v6258 = vand.u32 %v6133, 2147483648
    %v6259 = vor.u32 1.1754944e-38, %v6258
    %v6260 = vsel %vm6257, %v6259, %v6255
    %v6261 = vmul.f32 %v6099, %v6260
    %6262 = vmatpush.msra.mxu0 %v2848
    %6263 = vmatpush.msra.mxu0 %v2847
    %6264 = vmatpush.msra.mxu0 %v2846
    %6265 = vmatpush.msra.mxu0 %v2845
    %6266 = vmatpush.msra.mxu0 %v2844
    %6267 = vmatpush.msra.mxu0 %v2843
    %6268 = vmatpush.msra.mxu0 %v2842
    %6269 = vmatpush.msra.mxu0 %v2841
    %6270 = vmatpush.msra.mxu0 %v2840
    %6271 = vmatpush.msra.mxu0 %v2839
    %6272 = vmatpush.msra.mxu0 %v2838
    %6273 = vmatpush.msra.mxu0 %v2837
    %6274 = vmatpush.msra.mxu0 %v2836
    %6275 = vmatpush.msra.mxu0 %v2835
    %6276 = vmatpush.msra.mxu0 %v2834
    %6277 = vmatpush.msra.mxu0 %v2833
    %6278 = vmatmul.f32.gmra.mxu0 %v6156
    %v6279 = vpop.f32.mrf.mxu0
    %v6280 = vadd.f32 0.0, %v6279
    %6281 = vdwg.mxu0
    %6282 = vmatpush.msra.mxu0 %v2864
    %6283 = vmatpush.msra.mxu0 %v2863
    %6284 = vmatpush.msra.mxu0 %v2862
    %6285 = vmatpush.msra.mxu0 %v2861
    %6286 = vmatpush.msra.mxu0 %v2860
    %6287 = vmatpush.msra.mxu0 %v2859
    %6288 = vmatpush.msra.mxu0 %v2858
    %6289 = vmatpush.msra.mxu0 %v2857
    %6290 = vmatpush.msra.mxu0 %v2856
    %6291 = vmatpush.msra.mxu0 %v2855
    %6292 = vmatpush.msra.mxu0 %v2854
    %6293 = vmatpush.msra.mxu0 %v2853
    %6294 = vmatpush.msra.mxu0 %v2852
    %6295 = vmatpush.msra.mxu0 %v2851
    %6296 = vmatpush.msra.mxu0 %v2850
    %6297 = vmatpush.msra.mxu0 %v2849
    %6298 = vmatmul.f32.gmra.mxu0 %v6171
    %v6299 = vpop.f32.mrf.mxu0
    %v6300 = vadd.f32 0.0, %v6299
    %6301 = vdwg.mxu0
    %6302 = vmatpush.msra.mxu0 %v2880
    %6303 = vmatpush.msra.mxu0 %v2879
    %6304 = vmatpush.msra.mxu0 %v2878
    %6305 = vmatpush.msra.mxu0 %v2877
    %6306 = vmatpush.msra.mxu0 %v2876
    %6307 = vmatpush.msra.mxu0 %v2875
    %6308 = vmatpush.msra.mxu0 %v2874
    %6309 = vmatpush.msra.mxu0 %v2873
    %6310 = vmatpush.msra.mxu0 %v2872
    %6311 = vmatpush.msra.mxu0 %v2871
    %6312 = vmatpush.msra.mxu0 %v2870
    %6313 = vmatpush.msra.mxu0 %v2869
    %6314 = vmatpush.msra.mxu0 %v2868
    %6315 = vmatpush.msra.mxu0 %v2867
    %6316 = vmatpush.msra.mxu0 %v2866
    %6317 = vmatpush.msra.mxu0 %v2865
    %6318 = vmatmul.f32.gmra.mxu0 %v6186
    %v6319 = vpop.f32.mrf.mxu0
    %v6320 = vadd.f32 0.0, %v6319
    %6321 = vdwg.mxu0
    %6322 = vmatpush.msra.mxu0 %v2896
    %6323 = vmatpush.msra.mxu0 %v2895
    %6324 = vmatpush.msra.mxu0 %v2894
    %6325 = vmatpush.msra.mxu0 %v2893
    %6326 = vmatpush.msra.mxu0 %v2892
    %6327 = vmatpush.msra.mxu0 %v2891
    %6328 = vmatpush.msra.mxu0 %v2890
    %6329 = vmatpush.msra.mxu0 %v2889
    %6330 = vmatpush.msra.mxu0 %v2888
    %6331 = vmatpush.msra.mxu0 %v2887
    %6332 = vmatpush.msra.mxu0 %v2886
    %6333 = vmatpush.msra.mxu0 %v2885
    %6334 = vmatpush.msra.mxu0 %v2884
    %6335 = vmatpush.msra.mxu0 %v2883
    %6336 = vmatpush.msra.mxu0 %v2882
    %6337 = vmatpush.msra.mxu0 %v2881
    %6338 = vmatmul.f32.gmra.mxu0 %v6201
    %v6339 = vpop.f32.mrf.mxu0
    %v6340 = vadd.f32 0.0, %v6339
    %6341 = vdwg.mxu0
    %6342 = vmatpush.msra.mxu0 %v2912
    %6343 = vmatpush.msra.mxu0 %v2911
    %6344 = vmatpush.msra.mxu0 %v2910
    %6345 = vmatpush.msra.mxu0 %v2909
    %6346 = vmatpush.msra.mxu0 %v2908
    %6347 = vmatpush.msra.mxu0 %v2907
    %6348 = vmatpush.msra.mxu0 %v2906
    %6349 = vmatpush.msra.mxu0 %v2905
    %6350 = vmatpush.msra.mxu0 %v2904
    %6351 = vmatpush.msra.mxu0 %v2903
    %6352 = vmatpush.msra.mxu0 %v2902
    %6353 = vmatpush.msra.mxu0 %v2901
    %6354 = vmatpush.msra.mxu0 %v2900
    %6355 = vmatpush.msra.mxu0 %v2899
    %6356 = vmatpush.msra.mxu0 %v2898
    %6357 = vmatpush.msra.mxu0 %v2897
    %6358 = vmatmul.f32.gmra.mxu0 %v6216
    %v6359 = vpop.f32.mrf.mxu0
    %v6360 = vadd.f32 0.0, %v6359
    %6361 = vdwg.mxu0
    %6362 = vmatpush.msra.mxu0 %v2928
    %6363 = vmatpush.msra.mxu0 %v2927
    %6364 = vmatpush.msra.mxu0 %v2926
    %6365 = vmatpush.msra.mxu0 %v2925
    %6366 = vmatpush.msra.mxu0 %v2924
    %6367 = vmatpush.msra.mxu0 %v2923
    %6368 = vmatpush.msra.mxu0 %v2922
    %6369 = vmatpush.msra.mxu0 %v2921
    %6370 = vmatpush.msra.mxu0 %v2920
    %6371 = vmatpush.msra.mxu0 %v2919
    %6372 = vmatpush.msra.mxu0 %v2918
    %6373 = vmatpush.msra.mxu0 %v2917
    %6374 = vmatpush.msra.mxu0 %v2916
    %6375 = vmatpush.msra.mxu0 %v2915
    %6376 = vmatpush.msra.mxu0 %v2914
    %6377 = vmatpush.msra.mxu0 %v2913
    %6378 = vmatmul.f32.gmra.mxu0 %v6231
    %v6379 = vpop.f32.mrf.mxu0
    %v6380 = vadd.f32 0.0, %v6379
    %6381 = vdwg.mxu0
    %6382 = vmatpush.msra.mxu0 %v2944
    %6383 = vmatpush.msra.mxu0 %v2943
    %6384 = vmatpush.msra.mxu0 %v2942
    %6385 = vmatpush.msra.mxu0 %v2941
    %6386 = vmatpush.msra.mxu0 %v2940
    %6387 = vmatpush.msra.mxu0 %v2939
    %6388 = vmatpush.msra.mxu0 %v2938
    %6389 = vmatpush.msra.mxu0 %v2937
    %6390 = vmatpush.msra.mxu0 %v2936
    %6391 = vmatpush.msra.mxu0 %v2935
    %6392 = vmatpush.msra.mxu0 %v2934
    %6393 = vmatpush.msra.mxu0 %v2933
    %6394 = vmatpush.msra.mxu0 %v2932
    %6395 = vmatpush.msra.mxu0 %v2931
    %6396 = vmatpush.msra.mxu0 %v2930
    %6397 = vmatpush.msra.mxu0 %v2929
    %6398 = vmatmul.f32.gmra.mxu0 %v6246
    %v6399 = vpop.f32.mrf.mxu0
    %v6400 = vadd.f32 0.0, %v6399
    %6401 = vdwg.mxu0
    %6402 = vmatpush.msra.mxu0 %v2960
    %6403 = vmatpush.msra.mxu0 %v2959
    %6404 = vmatpush.msra.mxu0 %v2958
    %6405 = vmatpush.msra.mxu0 %v2957
    %6406 = vmatpush.msra.mxu0 %v2956
    %6407 = vmatpush.msra.mxu0 %v2955
    %6408 = vmatpush.msra.mxu0 %v2954
    %6409 = vmatpush.msra.mxu0 %v2953
    %6410 = vmatpush.msra.mxu0 %v2952
    %6411 = vmatpush.msra.mxu0 %v2951
    %6412 = vmatpush.msra.mxu0 %v2950
    %6413 = vmatpush.msra.mxu0 %v2949
    %6414 = vmatpush.msra.mxu0 %v2948
    %6415 = vmatpush.msra.mxu0 %v2947
    %6416 = vmatpush.msra.mxu0 %v2946
    %6417 = vmatpush.msra.mxu0 %v2945
    %6418 = vmatmul.f32.gmra.mxu0 %v6261
    %v6419 = vpop.f32.mrf.mxu0
    %v6420 = vadd.f32 0.0, %v6419
    %6421 = vdwg.mxu0
    %v6422 = vmax.f32 %v5817, 0.0
    %v6423 = vmax.f32 %v6280, 0.0
    %v6424 = vmax.f32 %v6300, 0.0
    %v6425 = vmax.f32 %v6320, 0.0
    %v6426 = vmax.f32 %v6340, 0.0
    %v6427 = vmax.f32 %v6360, 0.0
    %v6428 = vmax.f32 %v6380, 0.0
    %v6429 = vmax.f32 %v6400, 0.0
    %v6430 = vmax.f32 %v6420, 0.0
    %v6439 = vrot.slane %v6424, 7
    %v6440 = vsel %vm3964, %v6439, %v6423
    %v6441 = vrot.slane %v6425, 6
    %v6442 = vsel %vm3967, %v6441, %v6440
    %v6443 = vrot.slane %v6426, 5
    %v6444 = vsel %vm3970, %v6443, %v6442
    %v6445 = vrot.slane %v6427, 4
    %v6446 = vsel %vm3973, %v6445, %v6444
    %v6447 = vrot.slane %v6428, 3
    %v6448 = vsel %vm3976, %v6447, %v6446
    %v6449 = vrot.slane %v6429, 2
    %v6450 = vsel %vm3979, %v6449, %v6448
    %v6451 = vrot.slane %v6430, 1
    %v6452 = vsel %vm3982, %v6451, %v6450
    %v6453 = vsel %vm3010, %v6452, 0
    %6455 = vmatpush.msra.mxu0 0.0
    %6456 = vmatpush.msra.mxu0 0.0
    %6457 = vmatpush.msra.mxu0 0.0
    %6458 = vmatpush.msra.mxu0 0.0
    %6459 = vmatpush.msra.mxu0 0.0
    %6460 = vmatpush.msra.mxu0 0.0
    %6461 = vmatpush.msra.mxu0 0.0
    %6462 = vmatpush.msra.mxu0 0.0
    %6463 = vmatpush.msra.mxu0 0.0
    %6464 = vmatpush.msra.mxu0 0.0
    %6465 = vmatpush.msra.mxu0 0.0
    %6466 = vmatpush.msra.mxu0 0.0
    %6467 = vmatpush.msra.mxu0 0.0
    %6468 = vmatpush.msra.mxu0 0.0
    %6469 = vmatpush.msra.mxu0 %v2995
    %6470 = vmatpush.msra.mxu0 %v2993
    %6471 = vmatmul.f32.gmra.mxu0 %v6453
    %v6472 = vpop.f32.mrf.mxu0
    %v6473 = vadd.f32 0.0, %v6472
    %6474 = vdwg.mxu0
    %6475 = vmatpush.msra.mxu0 0.0
    %6476 = vmatpush.msra.mxu0 0.0
    %6477 = vmatpush.msra.mxu0 0.0
    %6478 = vmatpush.msra.mxu0 0.0
    %6479 = vmatpush.msra.mxu0 0.0
    %6480 = vmatpush.msra.mxu0 0.0
    %6481 = vmatpush.msra.mxu0 0.0
    %6482 = vmatpush.msra.mxu0 0.0
    %6483 = vmatpush.msra.mxu0 0.0
    %6484 = vmatpush.msra.mxu0 0.0
    %6485 = vmatpush.msra.mxu0 0.0
    %6486 = vmatpush.msra.mxu0 0.0
    %6487 = vmatpush.msra.mxu0 0.0
    %6488 = vmatpush.msra.mxu0 0.0
    %6489 = vmatpush.msra.mxu0 %v2996
    %6490 = vmatpush.msra.mxu0 %v2994
    %6491 = vmatmul.f32.gmra.mxu0 %v6453
    %v6492 = vpop.f32.mrf.mxu0
    %v6493 = vadd.f32 0.0, %v6492
    %6494 = vdwg.mxu0
    %6496 = vrot.lane.b32.xlu0 %v6422, 32
    %v6497 = vpop.permute.xlu0 %6496
    %v6498 = vsel %vm3107, %v6497, 0
    %6500 = vmatpush.msra.mxu0 0.0
    %6501 = vmatpush.msra.mxu0 0.0
    %6502 = vmatpush.msra.mxu0 0.0
    %6503 = vmatpush.msra.mxu0 0.0
    %6504 = vmatpush.msra.mxu0 0.0
    %6505 = vmatpush.msra.mxu0 0.0
    %6506 = vmatpush.msra.mxu0 0.0
    %6507 = vmatpush.msra.mxu0 0.0
    %6508 = vmatpush.msra.mxu0 0.0
    %6509 = vmatpush.msra.mxu0 0.0
    %6510 = vmatpush.msra.mxu0 0.0
    %6511 = vmatpush.msra.mxu0 0.0
    %6512 = vmatpush.msra.mxu0 %v2991
    %6513 = vmatpush.msra.mxu0 %v2989
    %6514 = vmatpush.msra.mxu0 %v2987
    %6515 = vmatpush.msra.mxu0 %v2985
    %6516 = vmatmul.f32.gmra.mxu0 %v6498
    %v6517 = vpop.f32.mrf.mxu0
    %v6518 = vadd.f32 %v6473, %v6517
    %6519 = vdwg.mxu0
    %6520 = vmatpush.msra.mxu0 0.0
    %6521 = vmatpush.msra.mxu0 0.0
    %6522 = vmatpush.msra.mxu0 0.0
    %6523 = vmatpush.msra.mxu0 0.0
    %6524 = vmatpush.msra.mxu0 0.0
    %6525 = vmatpush.msra.mxu0 0.0
    %6526 = vmatpush.msra.mxu0 0.0
    %6527 = vmatpush.msra.mxu0 0.0
    %6528 = vmatpush.msra.mxu0 0.0
    %6529 = vmatpush.msra.mxu0 0.0
    %6530 = vmatpush.msra.mxu0 0.0
    %6531 = vmatpush.msra.mxu0 0.0
    %6532 = vmatpush.msra.mxu0 %v2992
    %6533 = vmatpush.msra.mxu0 %v2990
    %6534 = vmatpush.msra.mxu0 %v2988
    %6535 = vmatpush.msra.mxu0 %v2986
    %6536 = vmatmul.f32.gmra.mxu0 %v6498
    %v6537 = vpop.f32.mrf.mxu0
    %v6538 = vadd.f32 %v6493, %v6537
    %6539 = vdwg.mxu0
    %v6540 = vadd.f32 %v6518, %v4492
    %v6541 = vadd.f32 %v6538, %v4493
    %s6542 = scalar_lea.vmem [#allocation7], 32
    %6543 = vst [vmem:[%s6542] sm:$0xff] %v6540
    %6544 = vst [vmem:[%s6542 + $0x8] sm:$0xff] %v6541
    %v6553 = vrot.slane %v6171, 7
    %v6554 = vsel %vm3964, %v6553, %v6156
    %v6555 = vrot.slane %v6186, 6
    %v6556 = vsel %vm3967, %v6555, %v6554
    %v6557 = vrot.slane %v6201, 5
    %v6558 = vsel %vm3970, %v6557, %v6556
    %v6559 = vrot.slane %v6216, 4
    %v6560 = vsel %vm3973, %v6559, %v6558
    %v6561 = vrot.slane %v6231, 3
    %v6562 = vsel %vm3976, %v6561, %v6560
    %v6563 = vrot.slane %v6246, 2
    %v6564 = vsel %vm3979, %v6563, %v6562
    %v6565 = vrot.slane %v6261, 1
    %v6566 = vsel %vm3982, %v6565, %v6564
    %s6568 = scalar_lea.vmem [#allocation10], 16
    %6569 = vst [vmem:[%s6568] sm:$0xff] %v6566
    %s6570 = scalar_lea.vmem [#allocation6], 24
    %v6571 = vld [vmem:[%s6570] sm:$0xff]
    %v6580 = vrot.slane %v6300, 7
    %v6581 = vsel %vm3964, %v6580, %v6280
    %v6582 = vrot.slane %v6320, 6
    %v6583 = vsel %vm3967, %v6582, %v6581
    %v6584 = vrot.slane %v6340, 5
    %v6585 = vsel %vm3970, %v6584, %v6583
    %v6586 = vrot.slane %v6360, 4
    %v6587 = vsel %vm3973, %v6586, %v6585
    %v6588 = vrot.slane %v6380, 3
    %v6589 = vsel %vm3976, %v6588, %v6587
    %v6590 = vrot.slane %v6400, 2
    %v6591 = vsel %vm3979, %v6590, %v6589
    %v6592 = vrot.slane %v6420, 1
    %v6593 = vsel %vm3982, %v6592, %v6591
    %v6594 = vsel %vm3010, %v6593, 0
    %6596 = vmatpush.msra.mxu0 0.0
    %6597 = vmatpush.msra.mxu0 0.0
    %6598 = vmatpush.msra.mxu0 0.0
    %6599 = vmatpush.msra.mxu0 0.0
    %6600 = vmatpush.msra.mxu0 0.0
    %6601 = vmatpush.msra.mxu0 0.0
    %6602 = vmatpush.msra.mxu0 0.0
    %6603 = vmatpush.msra.mxu0 0.0
    %6604 = vmatpush.msra.mxu0 0.0
    %6605 = vmatpush.msra.mxu0 0.0
    %6606 = vmatpush.msra.mxu0 0.0
    %6607 = vmatpush.msra.mxu0 0.0
    %6608 = vmatpush.msra.mxu0 0.0
    %6609 = vmatpush.msra.mxu0 0.0
    %6610 = vmatpush.msra.mxu0 %v2962
    %6611 = vmatpush.msra.mxu0 %v2961
    %6612 = vmatmul.f32.gmra.mxu0 %v6594
    %v6613 = vpop.f32.mrf.mxu0
    %v6614 = vadd.f32 0.0, %v6613
    %6615 = vdwg.mxu0
    %v6616 = vadd.f32 %v6571, %v6614
    %6617 = vmatpush.msra.mxu0 0.0
    %6618 = vmatpush.msra.mxu0 0.0
    %6619 = vmatpush.msra.mxu0 0.0
    %6620 = vmatpush.msra.mxu0 0.0
    %6621 = vmatpush.msra.mxu0 0.0
    %6622 = vmatpush.msra.mxu0 0.0
    %6623 = vmatpush.msra.mxu0 0.0
    %6624 = vmatpush.msra.mxu0 0.0
    %6625 = vmatpush.msra.mxu0 0.0
    %6626 = vmatpush.msra.mxu0 0.0
    %6627 = vmatpush.msra.mxu0 0.0
    %6628 = vmatpush.msra.mxu0 0.0
    %6629 = vmatpush.msra.mxu0 %v2966
    %6630 = vmatpush.msra.mxu0 %v2965
    %6631 = vmatpush.msra.mxu0 %v2964
    %6632 = vmatpush.msra.mxu0 %v2963
    %6633 = vmatmul.f32.gmra.mxu0 %v5675
    %v6634 = vpop.f32.mrf.mxu0
    %v6635 = vadd.f32 0.0, %v6634
    %6636 = vdwg.mxu0
    %v6637 = vadd.f32 %v6616, %v6635
    %v6638 = vxor.u32 %v6637, 2147483648
    %v6639 = vmul.f32 %v6638, 1.442695
    %v6640 = vpow.pop %v6639
    %v6641 = vadd.f32 %v6640, 1.0
    %v6642 = vrcp.pop %v6641
    %v6643 = vmul.f32 %v6641, %v6642
    %v6644 = vsub.f32 1.0, %v6643
    %v6645 = vmul.f32 %v6642, %v6644
    %v6646 = vadd.f32 %v6642, %v6645
    %vm6647 = vweird.f32 %v6641
    %vm6648 = vweird.f32 %v6642
    %vm6649 = vmor %vm6647, %vm6648
    %v6650 = vsel %vm6649, %v6642, %v6646
    %v6651 = vand.u32 2147483647, %v6641
    %vm6652 = vcmp.eq.f32.partialorder %v6651, 8.507059e+37
    %v6653 = vand.u32 %v6641, 2147483648
    %v6654 = vor.u32 1.1754944e-38, %v6653
    %v6655 = vsel %vm6652, %v6654, %v6650
    %v6656 = vmul.f32 1.0, %v6655
    %v6657 = vtanh.pop %v6637
    %v6658 = vmul.f32 %v6656, %v5645
    %6660 = vrot.lane.b32.xlu0 %v6657, 64
    %v6661 = vpop.permute.xlu0 %6660
    %v6663 = vmul.f32 %v6656, %v6661
    %6665 = vrot.lane.b32.xlu0 %v6663, 32
    %v6666 = vpop.permute.xlu0 %6665
    %v6668 = vadd.f32 %v6658, %v6666
    %v6669 = vtanh.pop %v6668
    %6671 = vrot.lane.b32.xlu0 %v6669, 64
    %v6672 = vpop.permute.xlu0 %6671
    %v6674 = vmul.f32 %v6656, %v6672
    %6675 = vmatpush.msra.mxu0 0.0
    %6676 = vmatpush.msra.mxu0 0.0
    %6677 = vmatpush.msra.mxu0 0.0
    %6678 = vmatpush.msra.mxu0 0.0
    %6679 = vmatpush.msra.mxu0 0.0
    %6680 = vmatpush.msra.mxu0 0.0
    %6681 = vmatpush.msra.mxu0 0.0
    %6682 = vmatpush.msra.mxu0 0.0
    %6683 = vmatpush.msra.mxu0 0.0
    %6684 = vmatpush.msra.mxu0 0.0
    %6685 = vmatpush.msra.mxu0 0.0
    %6686 = vmatpush.msra.mxu0 0.0
    %6687 = vmatpush.msra.mxu0 %v2974
    %6688 = vmatpush.msra.mxu0 %v2973
    %6689 = vmatpush.msra.mxu0 %v2972
    %6690 = vmatpush.msra.mxu0 %v2971
    %6691 = vmatmul.f32.gmra.mxu0 %v5758
    %v6692 = vpop.f32.mrf.mxu0
    %v6693 = vadd.f32 0.0, %v6692
    %6694 = vdwg.mxu0
    %6696 = vrot.lane.b32.xlu0 %v6674, 32
    %v6697 = vpop.permute.xlu0 %6696
    %v6698 = vsel %vm3107, %v6697, 0
    %6700 = vmatpush.msra.mxu0 0.0
    %6701 = vmatpush.msra.mxu0 0.0
    %6702 = vmatpush.msra.mxu0 0.0
    %6703 = vmatpush.msra.mxu0 0.0
    %6704 = vmatpush.msra.mxu0 0.0
    %6705 = vmatpush.msra.mxu0 0.0
    %6706 = vmatpush.msra.mxu0 0.0
    %6707 = vmatpush.msra.mxu0 0.0
    %6708 = vmatpush.msra.mxu0 0.0
    %6709 = vmatpush.msra.mxu0 0.0
    %6710 = vmatpush.msra.mxu0 0.0
    %6711 = vmatpush.msra.mxu0 0.0
    %6712 = vmatpush.msra.mxu0 %v2970
    %6713 = vmatpush.msra.mxu0 %v2969
    %6714 = vmatpush.msra.mxu0 %v2968
    %6715 = vmatpush.msra.mxu0 %v2967
    %6716 = vmatmul.f32.gmra.mxu0 %v6698
    %v6717 = vpop.f32.mrf.mxu0
    %v6718 = vadd.f32 %v6693, %v6717
    %6719 = vdwg.mxu0
    %v6720 = vadd.f32 %v6718, %v3222
    %v6721 = vxor.u32 %v6720, 2147483648
    %v6722 = vmul.f32 %v6721, 1.442695
    %v6723 = vpow.pop %v6722
    %v6724 = vadd.f32 %v6723, 1.0
    %v6725 = vrcp.pop %v6724
    %v6726 = vmul.f32 %v6724, %v6725
    %v6727 = vsub.f32 1.0, %v6726
    %v6728 = vmul.f32 %v6725, %v6727
    %v6729 = vadd.f32 %v6725, %v6728
    %vm6730 = vweird.f32 %v6724
    %vm6731 = vweird.f32 %v6725
    %vm6732 = vmor %vm6730, %vm6731
    %v6733 = vsel %vm6732, %v6725, %v6729
    %v6734 = vand.u32 2147483647, %v6724
    %vm6735 = vcmp.eq.f32.partialorder %v6734, 8.507059e+37
    %v6736 = vand.u32 %v6724, 2147483648
    %v6737 = vor.u32 1.1754944e-38, %v6736
    %v6738 = vsel %vm6735, %v6737, %v6733
    %v6739 = vmul.f32 1.0, %v6738
    %v6740 = vtanh.pop %v6720
    %v6741 = vmul.f32 %v6739, %v5728
    %6743 = vrot.lane.b32.xlu0 %v6740, 64
    %v6744 = vpop.permute.xlu0 %6743
    %v6746 = vmul.f32 %v6739, %v6744
    %6748 = vrot.lane.b32.xlu0 %v6746, 32
    %v6749 = vpop.permute.xlu0 %6748
    %v6751 = vadd.f32 %v6741, %v6749
    %v6752 = vtanh.pop %v6751
    %6754 = vrot.lane.b32.xlu0 %v6752, 64
    %v6755 = vpop.permute.xlu0 %6754
    %v6757 = vmul.f32 %v6739, %v6755
    %6758 = vmatpush.msra.mxu0 0.0
    %6759 = vmatpush.msra.mxu0 0.0
    %6760 = vmatpush.msra.mxu0 0.0
    %6761 = vmatpush.msra.mxu0 0.0
    %6762 = vmatpush.msra.mxu0 0.0
    %6763 = vmatpush.msra.mxu0 0.0
    %6764 = vmatpush.msra.mxu0 0.0
    %6765 = vmatpush.msra.mxu0 0.0
    %6766 = vmatpush.msra.mxu0 0.0
    %6767 = vmatpush.msra.mxu0 0.0
    %6768 = vmatpush.msra.mxu0 0.0
    %6769 = vmatpush.msra.mxu0 0.0
    %6770 = vmatpush.msra.mxu0 %v2983
    %6771 = vmatpush.msra.mxu0 %v2982
    %6772 = vmatpush.msra.mxu0 %v2981
    %6773 = vmatpush.msra.mxu0 %v2980
    %6774 = vmatmul.f32.gmra.mxu0 %v5821
    %v6775 = vpop.f32.mrf.mxu0
    %v6776 = vadd.f32 0.0, %v6775
    %6777 = vdwg.mxu0
    %6779 = vrot.lane.b32.xlu0 %v6757, 32
    %v6780 = vpop.permute.xlu0 %6779
    %v6781 = vsel %vm3107, %v6780, 0
    %6783 = vmatpush.msra.mxu0 0.0
    %6784 = vmatpush.msra.mxu0 0.0
    %6785 = vmatpush.msra.mxu0 0.0
    %6786 = vmatpush.msra.mxu0 0.0
    %6787 = vmatpush.msra.mxu0 0.0
    %6788 = vmatpush.msra.mxu0 0.0
    %6789 = vmatpush.msra.mxu0 0.0
    %6790 = vmatpush.msra.mxu0 0.0
    %6791 = vmatpush.msra.mxu0 0.0
    %6792 = vmatpush.msra.mxu0 0.0
    %6793 = vmatpush.msra.mxu0 0.0
    %6794 = vmatpush.msra.mxu0 0.0
    %6795 = vmatpush.msra.mxu0 %v2979
    %6796 = vmatpush.msra.mxu0 %v2978
    %6797 = vmatpush.msra.mxu0 %v2977
    %6798 = vmatpush.msra.mxu0 %v2976
    %6799 = vmatmul.f32.gmra.mxu0 %v6781
    %v6800 = vpop.f32.mrf.mxu0
    %v6801 = vadd.f32 %v6776, %v6800
    %6802 = vdwg.mxu0
    %v6803 = vadd.f32 %v6801, %v3315
    %v6804 = vxor.u32 %v6803, 2147483648
    %v6805 = vmul.f32 %v6804, 1.442695
    %v6806 = vpow.pop %v6805
    %v6807 = vadd.f32 %v6806, 1.0
    %v6808 = vrcp.pop %v6807
    %v6809 = vmul.f32 %v6807, %v6808
    %v6810 = vsub.f32 1.0, %v6809
    %v6811 = vmul.f32 %v6808, %v6810
    %v6812 = vadd.f32 %v6808, %v6811
    %vm6813 = vweird.f32 %v6807
    %vm6814 = vweird.f32 %v6808
    %vm6815 = vmor %vm6813, %vm6814
    %v6816 = vsel %vm6815, %v6808, %v6812
    %v6817 = vand.u32 2147483647, %v6807
    %vm6818 = vcmp.eq.f32.partialorder %v6817, 8.507059e+37
    %v6819 = vand.u32 %v6807, 2147483648
    %v6820 = vor.u32 1.1754944e-38, %v6819
    %v6821 = vsel %vm6818, %v6820, %v6816
    %v6822 = vmul.f32 1.0, %v6821
    %v6823 = vtanh.pop %v6803
    %v6824 = vmul.f32 %v6822, %v5811
    %6826 = vrot.lane.b32.xlu0 %v6823, 64
    %v6827 = vpop.permute.xlu0 %6826
    %v6829 = vmul.f32 %v6822, %v6827
    %6831 = vrot.lane.b32.xlu0 %v6829, 32
    %v6832 = vpop.permute.xlu0 %6831
    %v6834 = vadd.f32 %v6824, %v6832
    %v6835 = vtanh.pop %v6834
    %6837 = vrot.lane.b32.xlu0 %v6835, 64
    %v6838 = vpop.permute.xlu0 %6837
    %v6840 = vmul.f32 %v6822, %v6838
    %6842 = vrot.lane.b32.xlu0 %v6840, 32
    %v6843 = vpop.permute.xlu0 %6842
    %v6844 = vsel %vm3107, %v6843, 0
    %6846 = vmatpush.msra.mxu0 0.0
    %6847 = vmatpush.msra.mxu0 0.0
    %6848 = vmatpush.msra.mxu0 0.0
    %6849 = vmatpush.msra.mxu0 0.0
    %6850 = vmatpush.msra.mxu0 0.0
    %6851 = vmatpush.msra.mxu0 0.0
    %6852 = vmatpush.msra.mxu0 0.0
    %6853 = vmatpush.msra.mxu0 0.0
    %6854 = vmatpush.msra.mxu0 0.0
    %6855 = vmatpush.msra.mxu0 0.0
    %6856 = vmatpush.msra.mxu0 0.0
    %6857 = vmatpush.msra.mxu0 0.0
    %6858 = vmatpush.msra.mxu0 %v82
    %6859 = vmatpush.msra.mxu0 %v81
    %6860 = vmatpush.msra.mxu0 %v80
    %6861 = vmatpush.msra.mxu0 %v79
    %6862 = vmatmul.f32.gmra.mxu0 %v6844
    %v6863 = vpop.f32.mrf.mxu0
    %v6864 = vadd.f32 %v3360, %v6863
    %6865 = vdwg.mxu0
    %v6867 = vrot.slane %v6864, 1
    %v6868 = vrot.slane %v6864, 2
    %v6869 = vrot.slane %v6864, 3
    %v6870 = vrot.slane %v6864, 4
    %v6871 = vrot.slane %v6864, 5
    %v6872 = vrot.slane %v6864, 6
    %v6873 = vrot.slane %v6864, 7
    %v6874 = vsel %vm3010, %v6864, 0
    %6876 = vmatpush.xpose.msra.mxu0 %v3443
    %6877 = vmatpush.xpose.msra.mxu0 %v3440
    %6878 = vmatpush.xpose.msra.mxu0 %v3437
    %6879 = vmatpush.xpose.msra.mxu0 %v3434
    %6880 = vmatpush.xpose.msra.mxu0 %v3431
    %6881 = vmatpush.xpose.msra.mxu0 %v3428
    %6882 = vmatpush.xpose.msra.mxu0 %v3425
    %6883 = vmatpush.xpose.msra.mxu0 %v3422
    %6884 = vmatpush.xpose.msra.mxu0 %v3419
    %6885 = vmatpush.xpose.msra.mxu0 %v3416
    %6886 = vmatpush.xpose.msra.mxu0 %v3413
    %6887 = vmatpush.xpose.msra.mxu0 %v3410
    %6888 = vmatpush.xpose.msra.mxu0 %v3407
    %6889 = vmatpush.xpose.msra.mxu0 %v3404
    %6890 = vmatpush.xpose.msra.mxu0 %v3401
    %6891 = vmatpush.xpose.msra.mxu0 %v3398
    %6892 = vmatmul.f32.gmra.mxu0 %v6874
    %v6893 = vpop.f32.mrf.mxu0
    %v6894 = vadd.f32 0.0, %v6893
    %6895 = vdwg.mxu0
    %v6896 = vsel %vm3010, %v6867, 0
    %6898 = vmatpush.xpose.msra.mxu0 %v3513
    %6899 = vmatpush.xpose.msra.mxu0 %v3510
    %6900 = vmatpush.xpose.msra.mxu0 %v3507
    %6901 = vmatpush.xpose.msra.mxu0 %v3504
    %6902 = vmatpush.xpose.msra.mxu0 %v3501
    %6903 = vmatpush.xpose.msra.mxu0 %v3498
    %6904 = vmatpush.xpose.msra.mxu0 %v3495
    %6905 = vmatpush.xpose.msra.mxu0 %v3492
    %6906 = vmatpush.xpose.msra.mxu0 %v3489
    %6907 = vmatpush.xpose.msra.mxu0 %v3486
    %6908 = vmatpush.xpose.msra.mxu0 %v3483
    %6909 = vmatpush.xpose.msra.mxu0 %v3480
    %6910 = vmatpush.xpose.msra.mxu0 %v3477
    %6911 = vmatpush.xpose.msra.mxu0 %v3474
    %6912 = vmatpush.xpose.msra.mxu0 %v3471
    %6913 = vmatpush.xpose.msra.mxu0 %v3468
    %6914 = vmatmul.f32.gmra.mxu0 %v6896
    %v6915 = vpop.f32.mrf.mxu0
    %v6916 = vadd.f32 0.0, %v6915
    %6917 = vdwg.mxu0
    %v6918 = vsel %vm3010, %v6868, 0
    %6920 = vmatpush.xpose.msra.mxu0 %v3583
    %6921 = vmatpush.xpose.msra.mxu0 %v3580
    %6922 = vmatpush.xpose.msra.mxu0 %v3577
    %6923 = vmatpush.xpose.msra.mxu0 %v3574
    %6924 = vmatpush.xpose.msra.mxu0 %v3571
    %6925 = vmatpush.xpose.msra.mxu0 %v3568
    %6926 = vmatpush.xpose.msra.mxu0 %v3565
    %6927 = vmatpush.xpose.msra.mxu0 %v3562
    %6928 = vmatpush.xpose.msra.mxu0 %v3559
    %6929 = vmatpush.xpose.msra.mxu0 %v3556
    %6930 = vmatpush.xpose.msra.mxu0 %v3553
    %6931 = vmatpush.xpose.msra.mxu0 %v3550
    %6932 = vmatpush.xpose.msra.mxu0 %v3547
    %6933 = vmatpush.xpose.msra.mxu0 %v3544
    %6934 = vmatpush.xpose.msra.mxu0 %v3541
    %6935 = vmatpush.xpose.msra.mxu0 %v3538
    %6936 = vmatmul.f32.gmra.mxu0 %v6918
    %v6937 = vpop.f32.mrf.mxu0
    %v6938 = vadd.f32 0.0, %v6937
    %6939 = vdwg.mxu0
    %v6940 = vsel %vm3010, %v6869, 0
    %6942 = vmatpush.xpose.msra.mxu0 %v3653
    %6943 = vmatpush.xpose.msra.mxu0 %v3650
    %6944 = vmatpush.xpose.msra.mxu0 %v3647
    %6945 = vmatpush.xpose.msra.mxu0 %v3644
    %6946 = vmatpush.xpose.msra.mxu0 %v3641
    %6947 = vmatpush.xpose.msra.mxu0 %v3638
    %6948 = vmatpush.xpose.msra.mxu0 %v3635
    %6949 = vmatpush.xpose.msra.mxu0 %v3632
    %6950 = vmatpush.xpose.msra.mxu0 %v3629
    %6951 = vmatpush.xpose.msra.mxu0 %v3626
    %6952 = vmatpush.xpose.msra.mxu0 %v3623
    %6953 = vmatpush.xpose.msra.mxu0 %v3620
    %6954 = vmatpush.xpose.msra.mxu0 %v3617
    %6955 = vmatpush.xpose.msra.mxu0 %v3614
    %6956 = vmatpush.xpose.msra.mxu0 %v3611
    %6957 = vmatpush.xpose.msra.mxu0 %v3608
    %6958 = vmatmul.f32.gmra.mxu0 %v6940
    %v6959 = vpop.f32.mrf.mxu0
    %v6960 = vadd.f32 0.0, %v6959
    %6961 = vdwg.mxu0
    %v6962 = vsel %vm3010, %v6870, 0
    %6964 = vmatpush.xpose.msra.mxu0 %v3723
    %6965 = vmatpush.xpose.msra.mxu0 %v3720
    %6966 = vmatpush.xpose.msra.mxu0 %v3717
    %6967 = vmatpush.xpose.msra.mxu0 %v3714
    %6968 = vmatpush.xpose.msra.mxu0 %v3711
    %6969 = vmatpush.xpose.msra.mxu0 %v3708
    %6970 = vmatpush.xpose.msra.mxu0 %v3705
    %6971 = vmatpush.xpose.msra.mxu0 %v3702
    %6972 = vmatpush.xpose.msra.mxu0 %v3699
    %6973 = vmatpush.xpose.msra.mxu0 %v3696
    %6974 = vmatpush.xpose.msra.mxu0 %v3693
    %6975 = vmatpush.xpose.msra.mxu0 %v3690
    %6976 = vmatpush.xpose.msra.mxu0 %v3687
    %6977 = vmatpush.xpose.msra.mxu0 %v3684
    %6978 = vmatpush.xpose.msra.mxu0 %v3681
    %6979 = vmatpush.xpose.msra.mxu0 %v3678
    %6980 = vmatmul.f32.gmra.mxu0 %v6962
    %v6981 = vpop.f32.mrf.mxu0
    %v6982 = vadd.f32 0.0, %v6981
    %6983 = vdwg.mxu0
    %v6984 = vsel %vm3010, %v6871, 0
    %6986 = vmatpush.xpose.msra.mxu0 %v3793
    %6987 = vmatpush.xpose.msra.mxu0 %v3790
    %6988 = vmatpush.xpose.msra.mxu0 %v3787
    %6989 = vmatpush.xpose.msra.mxu0 %v3784
    %6990 = vmatpush.xpose.msra.mxu0 %v3781
    %6991 = vmatpush.xpose.msra.mxu0 %v3778
    %6992 = vmatpush.xpose.msra.mxu0 %v3775
    %6993 = vmatpush.xpose.msra.mxu0 %v3772
    %6994 = vmatpush.xpose.msra.mxu0 %v3769
    %6995 = vmatpush.xpose.msra.mxu0 %v3766
    %6996 = vmatpush.xpose.msra.mxu0 %v3763
    %6997 = vmatpush.xpose.msra.mxu0 %v3760
    %6998 = vmatpush.xpose.msra.mxu0 %v3757
    %6999 = vmatpush.xpose.msra.mxu0 %v3754
    %7000 = vmatpush.xpose.msra.mxu0 %v3751
    %7001 = vmatpush.xpose.msra.mxu0 %v3748
    %7002 = vmatmul.f32.gmra.mxu0 %v6984
    %v7003 = vpop.f32.mrf.mxu0
    %v7004 = vadd.f32 0.0, %v7003
    %7005 = vdwg.mxu0
    %v7006 = vsel %vm3010, %v6872, 0
    %7008 = vmatpush.xpose.msra.mxu0 %v3863
    %7009 = vmatpush.xpose.msra.mxu0 %v3860
    %7010 = vmatpush.xpose.msra.mxu0 %v3857
    %7011 = vmatpush.xpose.msra.mxu0 %v3854
    %7012 = vmatpush.xpose.msra.mxu0 %v3851
    %7013 = vmatpush.xpose.msra.mxu0 %v3848
    %7014 = vmatpush.xpose.msra.mxu0 %v3845
    %7015 = vmatpush.xpose.msra.mxu0 %v3842
    %7016 = vmatpush.xpose.msra.mxu0 %v3839
    %7017 = vmatpush.xpose.msra.mxu0 %v3836
    %7018 = vmatpush.xpose.msra.mxu0 %v3833
    %7019 = vmatpush.xpose.msra.mxu0 %v3830
    %7020 = vmatpush.xpose.msra.mxu0 %v3827
    %7021 = vmatpush.xpose.msra.mxu0 %v3824
    %7022 = vmatpush.xpose.msra.mxu0 %v3821
    %7023 = vmatpush.xpose.msra.mxu0 %v3818
    %7024 = vmatmul.f32.gmra.mxu0 %v7006
    %v7025 = vpop.f32.mrf.mxu0
    %v7026 = vadd.f32 0.0, %v7025
    %7027 = vdwg.mxu0
    %v7028 = vsel %vm3010, %v6873, 0
    %7030 = vmatpush.xpose.msra.mxu0 %v3933
    %7031 = vmatpush.xpose.msra.mxu0 %v3930
    %7032 = vmatpush.xpose.msra.mxu0 %v3927
    %7033 = vmatpush.xpose.msra.mxu0 %v3924
    %7034 = vmatpush.xpose.msra.mxu0 %v3921
    %7035 = vmatpush.xpose.msra.mxu0 %v3918
    %7036 = vmatpush.xpose.msra.mxu0 %v3915
    %7037 = vmatpush.xpose.msra.mxu0 %v3912
    %7038 = vmatpush.xpose.msra.mxu0 %v3909
    %7039 = vmatpush.xpose.msra.mxu0 %v3906
    %7040 = vmatpush.xpose.msra.mxu0 %v3903
    %7041 = vmatpush.xpose.msra.mxu0 %v3900
    %7042 = vmatpush.xpose.msra.mxu0 %v3897
    %7043 = vmatpush.xpose.msra.mxu0 %v3894
    %7044 = vmatpush.xpose.msra.mxu0 %v3891
    %7045 = vmatpush.xpose.msra.mxu0 %v3888
    %7046 = vmatmul.f32.gmra.mxu0 %v7028
    %v7047 = vpop.f32.mrf.mxu0
    %v7048 = vadd.f32 0.0, %v7047
    %7049 = vdwg.mxu0
    %v7058 = vrot.slane %v6916, 7
    %v7059 = vsel %vm3964, %v7058, %v6894
    %v7060 = vrot.slane %v6938, 6
    %v7061 = vsel %vm3967, %v7060, %v7059
    %v7062 = vrot.slane %v6960, 5
    %v7063 = vsel %vm3970, %v7062, %v7061
    %v7064 = vrot.slane %v6982, 4
    %v7065 = vsel %vm3973, %v7064, %v7063
    %v7066 = vrot.slane %v7004, 3
    %v7067 = vsel %vm3976, %v7066, %v7065
    %v7068 = vrot.slane %v7026, 2
    %v7069 = vsel %vm3979, %v7068, %v7067
    %v7070 = vrot.slane %v7048, 1
    %v7071 = vsel %vm3982, %v7070, %v7069
    %7073 = vmax.xlane.f32.xlu0 %v7071
    %v7074 = vpop.xlane.xlu0 %7073
    %v7076 = vrot.slane %v7074, 1
    %v7077 = vrot.slane %v7074, 2
    %v7078 = vrot.slane %v7074, 3
    %v7079 = vrot.slane %v7074, 4
    %v7080 = vrot.slane %v7074, 5
    %v7081 = vrot.slane %v7074, 6
    %v7082 = vrot.slane %v7074, 7
    %v7091 = vsub.f32 %v6894, %v7074
    %v7092 = vsub.f32 %v6916, %v7076
    %v7093 = vsub.f32 %v6938, %v7077
    %v7094 = vsub.f32 %v6960, %v7078
    %v7095 = vsub.f32 %v6982, %v7079
    %v7096 = vsub.f32 %v7004, %v7080
    %v7097 = vsub.f32 %v7026, %v7081
    %v7098 = vsub.f32 %v7048, %v7082
    %v7099 = vmul.f32 %v7091, 1.442695
    %v7100 = vpow.pop %v7099
    %v7101 = vmul.f32 %v7092, 1.442695
    %v7102 = vpow.pop %v7101
    %v7103 = vmul.f32 %v7093, 1.442695
    %v7104 = vpow.pop %v7103
    %v7105 = vmul.f32 %v7094, 1.442695
    %v7106 = vpow.pop %v7105
    %v7107 = vmul.f32 %v7095, 1.442695
    %v7108 = vpow.pop %v7107
    %v7109 = vmul.f32 %v7096, 1.442695
    %v7110 = vpow.pop %v7109
    %v7111 = vmul.f32 %v7097, 1.442695
    %v7112 = vpow.pop %v7111
    %v7113 = vmul.f32 %v7098, 1.442695
    %v7114 = vpow.pop %v7113
    %v7115 = vmul.f32 %v7100, %v78
    %v7116 = vmul.f32 %v7102, %v4028
    %v7117 = vmul.f32 %v7104, %v4029
    %v7118 = vmul.f32 %v7106, %v4030
    %v7119 = vmul.f32 %v7108, %v4031
    %v7120 = vmul.f32 %v7110, %v4032
    %v7121 = vmul.f32 %v7112, %v4033
    %v7122 = vmul.f32 %v7114, %v4034
    %v7131 = vrot.slane %v7116, 7
    %v7132 = vsel %vm3964, %v7131, %v7115
    %v7133 = vrot.slane %v7117, 6
    %v7134 = vsel %vm3967, %v7133, %v7132
    %v7135 = vrot.slane %v7118, 5
    %v7136 = vsel %vm3970, %v7135, %v7134
    %v7137 = vrot.slane %v7119, 4
    %v7138 = vsel %vm3973, %v7137, %v7136
    %v7139 = vrot.slane %v7120, 3
    %v7140 = vsel %vm3976, %v7139, %v7138
    %v7141 = vrot.slane %v7121, 2
    %v7142 = vsel %vm3979, %v7141, %v7140
    %v7143 = vrot.slane %v7122, 1
    %v7144 = vsel %vm3982, %v7143, %v7142
    %7146 = vadd.xlane.f32.xlu0 %v7144
    %v7147 = vpop.xlane.xlu0 %7146
    %v7148 = vmax.f32 %v7147, 1e-12
    %v7150 = vrot.slane %v7148, 1
    %v7151 = vrot.slane %v7148, 2
    %v7152 = vrot.slane %v7148, 3
    %v7153 = vrot.slane %v7148, 4
    %v7154 = vrot.slane %v7148, 5
    %v7155 = vrot.slane %v7148, 6
    %v7156 = vrot.slane %v7148, 7
    %v7165 = vrcp.pop %v7148
    %v7166 = vmul.f32 %v7148, %v7165
    %v7167 = vsub.f32 1.0, %v7166
    %v7168 = vmul.f32 %v7165, %v7167
    %v7169 = vadd.f32 %v7165, %v7168
    %vm7170 = vweird.f32 %v7148
    %vm7171 = vweird.f32 %v7165
    %vm7172 = vmor %vm7170, %vm7171
    %v7173 = vsel %vm7172, %v7165, %v7169
    %v7174 = vand.u32 2147483647, %v7148
    %vm7175 = vcmp.eq.f32.partialorder %v7174, 8.507059e+37
    %v7176 = vand.u32 %v7148, 2147483648
    %v7177 = vor.u32 1.1754944e-38, %v7176
    %v7178 = vsel %vm7175, %v7177, %v7173
    %v7179 = vmul.f32 %v7115, %v7178
    %v7180 = vrcp.pop %v7150
    %v7181 = vmul.f32 %v7150, %v7180
    %v7182 = vsub.f32 1.0, %v7181
    %v7183 = vmul.f32 %v7180, %v7182
    %v7184 = vadd.f32 %v7180, %v7183
    %vm7185 = vweird.f32 %v7150
    %vm7186 = vweird.f32 %v7180
    %vm7187 = vmor %vm7185, %vm7186
    %v7188 = vsel %vm7187, %v7180, %v7184
    %v7189 = vand.u32 2147483647, %v7150
    %vm7190 = vcmp.eq.f32.partialorder %v7189, 8.507059e+37
    %v7191 = vand.u32 %v7150, 2147483648
    %v7192 = vor.u32 1.1754944e-38, %v7191
    %v7193 = vsel %vm7190, %v7192, %v7188
    %v7194 = vmul.f32 %v7116, %v7193
    %v7195 = vrcp.pop %v7151
    %v7196 = vmul.f32 %v7151, %v7195
    %v7197 = vsub.f32 1.0, %v7196
    %v7198 = vmul.f32 %v7195, %v7197
    %v7199 = vadd.f32 %v7195, %v7198
    %vm7200 = vweird.f32 %v7151
    %vm7201 = vweird.f32 %v7195
    %vm7202 = vmor %vm7200, %vm7201
    %v7203 = vsel %vm7202, %v7195, %v7199
    %v7204 = vand.u32 2147483647, %v7151
    %vm7205 = vcmp.eq.f32.partialorder %v7204, 8.507059e+37
    %v7206 = vand.u32 %v7151, 2147483648
    %v7207 = vor.u32 1.1754944e-38, %v7206
    %v7208 = vsel %vm7205, %v7207, %v7203
    %v7209 = vmul.f32 %v7117, %v7208
    %v7210 = vrcp.pop %v7152
    %v7211 = vmul.f32 %v7152, %v7210
    %v7212 = vsub.f32 1.0, %v7211
    %v7213 = vmul.f32 %v7210, %v7212
    %v7214 = vadd.f32 %v7210, %v7213
    %vm7215 = vweird.f32 %v7152
    %vm7216 = vweird.f32 %v7210
    %vm7217 = vmor %vm7215, %vm7216
    %v7218 = vsel %vm7217, %v7210, %v7214
    %v7219 = vand.u32 2147483647, %v7152
    %vm7220 = vcmp.eq.f32.partialorder %v7219, 8.507059e+37
    %v7221 = vand.u32 %v7152, 2147483648
    %v7222 = vor.u32 1.1754944e-38, %v7221
    %v7223 = vsel %vm7220, %v7222, %v7218
    %v7224 = vmul.f32 %v7118, %v7223
    %v7225 = vrcp.pop %v7153
    %v7226 = vmul.f32 %v7153, %v7225
    %v7227 = vsub.f32 1.0, %v7226
    %v7228 = vmul.f32 %v7225, %v7227
    %v7229 = vadd.f32 %v7225, %v7228
    %vm7230 = vweird.f32 %v7153
    %vm7231 = vweird.f32 %v7225
    %vm7232 = vmor %vm7230, %vm7231
    %v7233 = vsel %vm7232, %v7225, %v7229
    %v7234 = vand.u32 2147483647, %v7153
    %vm7235 = vcmp.eq.f32.partialorder %v7234, 8.507059e+37
    %v7236 = vand.u32 %v7153, 2147483648
    %v7237 = vor.u32 1.1754944e-38, %v7236
    %v7238 = vsel %vm7235, %v7237, %v7233
    %v7239 = vmul.f32 %v7119, %v7238
    %v7240 = vrcp.pop %v7154
    %v7241 = vmul.f32 %v7154, %v7240
    %v7242 = vsub.f32 1.0, %v7241
    %v7243 = vmul.f32 %v7240, %v7242
    %v7244 = vadd.f32 %v7240, %v7243
    %vm7245 = vweird.f32 %v7154
    %vm7246 = vweird.f32 %v7240
    %vm7247 = vmor %vm7245, %vm7246
    %v7248 = vsel %vm7247, %v7240, %v7244
    %v7249 = vand.u32 2147483647, %v7154
    %vm7250 = vcmp.eq.f32.partialorder %v7249, 8.507059e+37
    %v7251 = vand.u32 %v7154, 2147483648
    %v7252 = vor.u32 1.1754944e-38, %v7251
    %v7253 = vsel %vm7250, %v7252, %v7248
    %v7254 = vmul.f32 %v7120, %v7253
    %v7255 = vrcp.pop %v7155
    %v7256 = vmul.f32 %v7155, %v7255
    %v7257 = vsub.f32 1.0, %v7256
    %v7258 = vmul.f32 %v7255, %v7257
    %v7259 = vadd.f32 %v7255, %v7258
    %vm7260 = vweird.f32 %v7155
    %vm7261 = vweird.f32 %v7255
    %vm7262 = vmor %vm7260, %vm7261
    %v7263 = vsel %vm7262, %v7255, %v7259
    %v7264 = vand.u32 2147483647, %v7155
    %vm7265 = vcmp.eq.f32.partialorder %v7264, 8.507059e+37
    %v7266 = vand.u32 %v7155, 2147483648
    %v7267 = vor.u32 1.1754944e-38, %v7266
    %v7268 = vsel %vm7265, %v7267, %v7263
    %v7269 = vmul.f32 %v7121, %v7268
    %v7270 = vrcp.pop %v7156
    %v7271 = vmul.f32 %v7156, %v7270
    %v7272 = vsub.f32 1.0, %v7271
    %v7273 = vmul.f32 %v7270, %v7272
    %v7274 = vadd.f32 %v7270, %v7273
    %vm7275 = vweird.f32 %v7156
    %vm7276 = vweird.f32 %v7270
    %vm7277 = vmor %vm7275, %vm7276
    %v7278 = vsel %vm7277, %v7270, %v7274
    %v7279 = vand.u32 2147483647, %v7156
    %vm7280 = vcmp.eq.f32.partialorder %v7279, 8.507059e+37
    %v7281 = vand.u32 %v7156, 2147483648
    %v7282 = vor.u32 1.1754944e-38, %v7281
    %v7283 = vsel %vm7280, %v7282, %v7278
    %v7284 = vmul.f32 %v7122, %v7283
    %7285 = vmatpush.msra.mxu0 %v2848
    %7286 = vmatpush.msra.mxu0 %v2847
    %7287 = vmatpush.msra.mxu0 %v2846
    %7288 = vmatpush.msra.mxu0 %v2845
    %7289 = vmatpush.msra.mxu0 %v2844
    %7290 = vmatpush.msra.mxu0 %v2843
    %7291 = vmatpush.msra.mxu0 %v2842
    %7292 = vmatpush.msra.mxu0 %v2841
    %7293 = vmatpush.msra.mxu0 %v2840
    %7294 = vmatpush.msra.mxu0 %v2839
    %7295 = vmatpush.msra.mxu0 %v2838
    %7296 = vmatpush.msra.mxu0 %v2837
    %7297 = vmatpush.msra.mxu0 %v2836
    %7298 = vmatpush.msra.mxu0 %v2835
    %7299 = vmatpush.msra.mxu0 %v2834
    %7300 = vmatpush.msra.mxu0 %v2833
    %7301 = vmatmul.f32.gmra.mxu0 %v7179
    %v7302 = vpop.f32.mrf.mxu0
    %v7303 = vadd.f32 0.0, %v7302
    %7304 = vdwg.mxu0
    %7305 = vmatpush.msra.mxu0 %v2864
    %7306 = vmatpush.msra.mxu0 %v2863
    %7307 = vmatpush.msra.mxu0 %v2862
    %7308 = vmatpush.msra.mxu0 %v2861
    %7309 = vmatpush.msra.mxu0 %v2860
    %7310 = vmatpush.msra.mxu0 %v2859
    %7311 = vmatpush.msra.mxu0 %v2858
    %7312 = vmatpush.msra.mxu0 %v2857
    %7313 = vmatpush.msra.mxu0 %v2856
    %7314 = vmatpush.msra.mxu0 %v2855
    %7315 = vmatpush.msra.mxu0 %v2854
    %7316 = vmatpush.msra.mxu0 %v2853
    %7317 = vmatpush.msra.mxu0 %v2852
    %7318 = vmatpush.msra.mxu0 %v2851
    %7319 = vmatpush.msra.mxu0 %v2850
    %7320 = vmatpush.msra.mxu0 %v2849
    %7321 = vmatmul.f32.gmra.mxu0 %v7194
    %v7322 = vpop.f32.mrf.mxu0
    %v7323 = vadd.f32 0.0, %v7322
    %7324 = vdwg.mxu0
    %7325 = vmatpush.msra.mxu0 %v2880
    %7326 = vmatpush.msra.mxu0 %v2879
    %7327 = vmatpush.msra.mxu0 %v2878
    %7328 = vmatpush.msra.mxu0 %v2877
    %7329 = vmatpush.msra.mxu0 %v2876
    %7330 = vmatpush.msra.mxu0 %v2875
    %7331 = vmatpush.msra.mxu0 %v2874
    %7332 = vmatpush.msra.mxu0 %v2873
    %7333 = vmatpush.msra.mxu0 %v2872
    %7334 = vmatpush.msra.mxu0 %v2871
    %7335 = vmatpush.msra.mxu0 %v2870
    %7336 = vmatpush.msra.mxu0 %v2869
    %7337 = vmatpush.msra.mxu0 %v2868
    %7338 = vmatpush.msra.mxu0 %v2867
    %7339 = vmatpush.msra.mxu0 %v2866
    %7340 = vmatpush.msra.mxu0 %v2865
    %7341 = vmatmul.f32.gmra.mxu0 %v7209
    %v7342 = vpop.f32.mrf.mxu0
    %v7343 = vadd.f32 0.0, %v7342
    %7344 = vdwg.mxu0
    %7345 = vmatpush.msra.mxu0 %v2896
    %7346 = vmatpush.msra.mxu0 %v2895
    %7347 = vmatpush.msra.mxu0 %v2894
    %7348 = vmatpush.msra.mxu0 %v2893
    %7349 = vmatpush.msra.mxu0 %v2892
    %7350 = vmatpush.msra.mxu0 %v2891
    %7351 = vmatpush.msra.mxu0 %v2890
    %7352 = vmatpush.msra.mxu0 %v2889
    %7353 = vmatpush.msra.mxu0 %v2888
    %7354 = vmatpush.msra.mxu0 %v2887
    %7355 = vmatpush.msra.mxu0 %v2886
    %7356 = vmatpush.msra.mxu0 %v2885
    %7357 = vmatpush.msra.mxu0 %v2884
    %7358 = vmatpush.msra.mxu0 %v2883
    %7359 = vmatpush.msra.mxu0 %v2882
    %7360 = vmatpush.msra.mxu0 %v2881
    %7361 = vmatmul.f32.gmra.mxu0 %v7224
    %v7362 = vpop.f32.mrf.mxu0
    %v7363 = vadd.f32 0.0, %v7362
    %7364 = vdwg.mxu0
    %7365 = vmatpush.msra.mxu0 %v2912
    %7366 = vmatpush.msra.mxu0 %v2911
    %7367 = vmatpush.msra.mxu0 %v2910
    %7368 = vmatpush.msra.mxu0 %v2909
    %7369 = vmatpush.msra.mxu0 %v2908
    %7370 = vmatpush.msra.mxu0 %v2907
    %7371 = vmatpush.msra.mxu0 %v2906
    %7372 = vmatpush.msra.mxu0 %v2905
    %7373 = vmatpush.msra.mxu0 %v2904
    %7374 = vmatpush.msra.mxu0 %v2903
    %7375 = vmatpush.msra.mxu0 %v2902
    %7376 = vmatpush.msra.mxu0 %v2901
    %7377 = vmatpush.msra.mxu0 %v2900
    %7378 = vmatpush.msra.mxu0 %v2899
    %7379 = vmatpush.msra.mxu0 %v2898
    %7380 = vmatpush.msra.mxu0 %v2897
    %7381 = vmatmul.f32.gmra.mxu0 %v7239
    %v7382 = vpop.f32.mrf.mxu0
    %v7383 = vadd.f32 0.0, %v7382
    %7384 = vdwg.mxu0
    %7385 = vmatpush.msra.mxu0 %v2928
    %7386 = vmatpush.msra.mxu0 %v2927
    %7387 = vmatpush.msra.mxu0 %v2926
    %7388 = vmatpush.msra.mxu0 %v2925
    %7389 = vmatpush.msra.mxu0 %v2924
    %7390 = vmatpush.msra.mxu0 %v2923
    %7391 = vmatpush.msra.mxu0 %v2922
    %7392 = vmatpush.msra.mxu0 %v2921
    %7393 = vmatpush.msra.mxu0 %v2920
    %7394 = vmatpush.msra.mxu0 %v2919
    %7395 = vmatpush.msra.mxu0 %v2918
    %7396 = vmatpush.msra.mxu0 %v2917
    %7397 = vmatpush.msra.mxu0 %v2916
    %7398 = vmatpush.msra.mxu0 %v2915
    %7399 = vmatpush.msra.mxu0 %v2914
    %7400 = vmatpush.msra.mxu0 %v2913
    %7401 = vmatmul.f32.gmra.mxu0 %v7254
    %v7402 = vpop.f32.mrf.mxu0
    %v7403 = vadd.f32 0.0, %v7402
    %7404 = vdwg.mxu0
    %7405 = vmatpush.msra.mxu0 %v2944
    %7406 = vmatpush.msra.mxu0 %v2943
    %7407 = vmatpush.msra.mxu0 %v2942
    %7408 = vmatpush.msra.mxu0 %v2941
    %7409 = vmatpush.msra.mxu0 %v2940
    %7410 = vmatpush.msra.mxu0 %v2939
    %7411 = vmatpush.msra.mxu0 %v2938
    %7412 = vmatpush.msra.mxu0 %v2937
    %7413 = vmatpush.msra.mxu0 %v2936
    %7414 = vmatpush.msra.mxu0 %v2935
    %7415 = vmatpush.msra.mxu0 %v2934
    %7416 = vmatpush.msra.mxu0 %v2933
    %7417 = vmatpush.msra.mxu0 %v2932
    %7418 = vmatpush.msra.mxu0 %v2931
    %7419 = vmatpush.msra.mxu0 %v2930
    %7420 = vmatpush.msra.mxu0 %v2929
    %7421 = vmatmul.f32.gmra.mxu0 %v7269
    %v7422 = vpop.f32.mrf.mxu0
    %v7423 = vadd.f32 0.0, %v7422
    %7424 = vdwg.mxu0
    %7425 = vmatpush.msra.mxu0 %v2960
    %7426 = vmatpush.msra.mxu0 %v2959
    %7427 = vmatpush.msra.mxu0 %v2958
    %7428 = vmatpush.msra.mxu0 %v2957
    %7429 = vmatpush.msra.mxu0 %v2956
    %7430 = vmatpush.msra.mxu0 %v2955
    %7431 = vmatpush.msra.mxu0 %v2954
    %7432 = vmatpush.msra.mxu0 %v2953
    %7433 = vmatpush.msra.mxu0 %v2952
    %7434 = vmatpush.msra.mxu0 %v2951
    %7435 = vmatpush.msra.mxu0 %v2950
    %7436 = vmatpush.msra.mxu0 %v2949
    %7437 = vmatpush.msra.mxu0 %v2948
    %7438 = vmatpush.msra.mxu0 %v2947
    %7439 = vmatpush.msra.mxu0 %v2946
    %7440 = vmatpush.msra.mxu0 %v2945
    %7441 = vmatmul.f32.gmra.mxu0 %v7284
    %v7442 = vpop.f32.mrf.mxu0
    %v7443 = vadd.f32 0.0, %v7442
    %7444 = vdwg.mxu0
    %v7445 = vmax.f32 %v6840, 0.0
    %v7446 = vmax.f32 %v7303, 0.0
    %v7447 = vmax.f32 %v7323, 0.0
    %v7448 = vmax.f32 %v7343, 0.0
    %v7449 = vmax.f32 %v7363, 0.0
    %v7450 = vmax.f32 %v7383, 0.0
    %v7451 = vmax.f32 %v7403, 0.0
    %v7452 = vmax.f32 %v7423, 0.0
    %v7453 = vmax.f32 %v7443, 0.0
    %v7462 = vrot.slane %v7447, 7
    %v7463 = vsel %vm3964, %v7462, %v7446
    %v7464 = vrot.slane %v7448, 6
    %v7465 = vsel %vm3967, %v7464, %v7463
    %v7466 = vrot.slane %v7449, 5
    %v7467 = vsel %vm3970, %v7466, %v7465
    %v7468 = vrot.slane %v7450, 4
    %v7469 = vsel %vm3973, %v7468, %v7467
    %v7470 = vrot.slane %v7451, 3
    %v7471 = vsel %vm3976, %v7470, %v7469
    %v7472 = vrot.slane %v7452, 2
    %v7473 = vsel %vm3979, %v7472, %v7471
    %v7474 = vrot.slane %v7453, 1
    %v7475 = vsel %vm3982, %v7474, %v7473
    %v7476 = vsel %vm3010, %v7475, 0
    %7478 = vmatpush.msra.mxu0 0.0
    %7479 = vmatpush.msra.mxu0 0.0
    %7480 = vmatpush.msra.mxu0 0.0
    %7481 = vmatpush.msra.mxu0 0.0
    %7482 = vmatpush.msra.mxu0 0.0
    %7483 = vmatpush.msra.mxu0 0.0
    %7484 = vmatpush.msra.mxu0 0.0
    %7485 = vmatpush.msra.mxu0 0.0
    %7486 = vmatpush.msra.mxu0 0.0
    %7487 = vmatpush.msra.mxu0 0.0
    %7488 = vmatpush.msra.mxu0 0.0
    %7489 = vmatpush.msra.mxu0 0.0
    %7490 = vmatpush.msra.mxu0 0.0
    %7491 = vmatpush.msra.mxu0 0.0
    %7492 = vmatpush.msra.mxu0 %v2995
    %7493 = vmatpush.msra.mxu0 %v2993
    %7494 = vmatmul.f32.gmra.mxu0 %v7476
    %v7495 = vpop.f32.mrf.mxu0
    %v7496 = vadd.f32 0.0, %v7495
    %7497 = vdwg.mxu0
    %7498 = vmatpush.msra.mxu0 0.0
    %7499 = vmatpush.msra.mxu0 0.0
    %7500 = vmatpush.msra.mxu0 0.0
    %7501 = vmatpush.msra.mxu0 0.0
    %7502 = vmatpush.msra.mxu0 0.0
    %7503 = vmatpush.msra.mxu0 0.0
    %7504 = vmatpush.msra.mxu0 0.0
    %7505 = vmatpush.msra.mxu0 0.0
    %7506 = vmatpush.msra.mxu0 0.0
    %7507 = vmatpush.msra.mxu0 0.0
    %7508 = vmatpush.msra.mxu0 0.0
    %7509 = vmatpush.msra.mxu0 0.0
    %7510 = vmatpush.msra.mxu0 0.0
    %7511 = vmatpush.msra.mxu0 0.0
    %7512 = vmatpush.msra.mxu0 %v2996
    %7513 = vmatpush.msra.mxu0 %v2994
    %7514 = vmatmul.f32.gmra.mxu0 %v7476
    %v7515 = vpop.f32.mrf.mxu0
    %v7516 = vadd.f32 0.0, %v7515
    %7517 = vdwg.mxu0
    %7519 = vrot.lane.b32.xlu0 %v7445, 32
    %v7520 = vpop.permute.xlu0 %7519
    %v7521 = vsel %vm3107, %v7520, 0
    %7523 = vmatpush.msra.mxu0 0.0
    %7524 = vmatpush.msra.mxu0 0.0
    %7525 = vmatpush.msra.mxu0 0.0
    %7526 = vmatpush.msra.mxu0 0.0
    %7527 = vmatpush.msra.mxu0 0.0
    %7528 = vmatpush.msra.mxu0 0.0
    %7529 = vmatpush.msra.mxu0 0.0
    %7530 = vmatpush.msra.mxu0 0.0
    %7531 = vmatpush.msra.mxu0 0.0
    %7532 = vmatpush.msra.mxu0 0.0
    %7533 = vmatpush.msra.mxu0 0.0
    %7534 = vmatpush.msra.mxu0 0.0
    %7535 = vmatpush.msra.mxu0 %v2991
    %7536 = vmatpush.msra.mxu0 %v2989
    %7537 = vmatpush.msra.mxu0 %v2987
    %7538 = vmatpush.msra.mxu0 %v2985
    %7539 = vmatmul.f32.gmra.mxu0 %v7521
    %v7540 = vpop.f32.mrf.mxu0
    %v7541 = vadd.f32 %v7496, %v7540
    %7542 = vdwg.mxu0
    %7543 = vmatpush.msra.mxu0 0.0
    %7544 = vmatpush.msra.mxu0 0.0
    %7545 = vmatpush.msra.mxu0 0.0
    %7546 = vmatpush.msra.mxu0 0.0
    %7547 = vmatpush.msra.mxu0 0.0
    %7548 = vmatpush.msra.mxu0 0.0
    %7549 = vmatpush.msra.mxu0 0.0
    %7550 = vmatpush.msra.mxu0 0.0
    %7551 = vmatpush.msra.mxu0 0.0
    %7552 = vmatpush.msra.mxu0 0.0
    %7553 = vmatpush.msra.mxu0 0.0
    %7554 = vmatpush.msra.mxu0 0.0
    %7555 = vmatpush.msra.mxu0 %v2992
    %7556 = vmatpush.msra.mxu0 %v2990
    %7557 = vmatpush.msra.mxu0 %v2988
    %7558 = vmatpush.msra.mxu0 %v2986
    %7559 = vmatmul.f32.gmra.mxu0 %v7521
    %v7560 = vpop.f32.mrf.mxu0
    %v7561 = vadd.f32 %v7516, %v7560
    %7562 = vdwg.mxu0
    %v7563 = vadd.f32 %v7541, %v4492
    %v7564 = vadd.f32 %v7561, %v4493
    %s7565 = scalar_lea.vmem [#allocation7], 48
    %7566 = vst [vmem:[%s7565] sm:$0xff] %v7563
    %7567 = vst [vmem:[%s7565 + $0x8] sm:$0xff] %v7564
    %v7576 = vrot.slane %v7194, 7
    %v7577 = vsel %vm3964, %v7576, %v7179
    %v7578 = vrot.slane %v7209, 6
    %v7579 = vsel %vm3967, %v7578, %v7577
    %v7580 = vrot.slane %v7224, 5
    %v7581 = vsel %vm3970, %v7580, %v7579
    %v7582 = vrot.slane %v7239, 4
    %v7583 = vsel %vm3973, %v7582, %v7581
    %v7584 = vrot.slane %v7254, 3
    %v7585 = vsel %vm3976, %v7584, %v7583
    %v7586 = vrot.slane %v7269, 2
    %v7587 = vsel %vm3979, %v7586, %v7585
    %v7588 = vrot.slane %v7284, 1
    %v7589 = vsel %vm3982, %v7588, %v7587
    %s7591 = scalar_lea.vmem [#allocation10], 24
    %7592 = vst [vmem:[%s7591] sm:$0xff] %v7589
    %s7593 = scalar_lea.vmem [#allocation6], 32
    %v7594 = vld [vmem:[%s7593] sm:$0xff]
    %v7603 = vrot.slane %v7323, 7
    %v7604 = vsel %vm3964, %v7603, %v7303
    %v7605 = vrot.slane %v7343, 6
    %v7606 = vsel %vm3967, %v7605, %v7604
    %v7607 = vrot.slane %v7363, 5
    %v7608 = vsel %vm3970, %v7607, %v7606
    %v7609 = vrot.slane %v7383, 4
    %v7610 = vsel %vm3973, %v7609, %v7608
    %v7611 = vrot.slane %v7403, 3
    %v7612 = vsel %vm3976, %v7611, %v7610
    %v7613 = vrot.slane %v7423, 2
    %v7614 = vsel %vm3979, %v7613, %v7612
    %v7615 = vrot.slane %v7443, 1
    %v7616 = vsel %vm3982, %v7615, %v7614
    %v7617 = vsel %vm3010, %v7616, 0
    %7619 = vmatpush.msra.mxu0 0.0
    %7620 = vmatpush.msra.mxu0 0.0
    %7621 = vmatpush.msra.mxu0 0.0
    %7622 = vmatpush.msra.mxu0 0.0
    %7623 = vmatpush.msra.mxu0 0.0
    %7624 = vmatpush.msra.mxu0 0.0
    %7625 = vmatpush.msra.mxu0 0.0
    %7626 = vmatpush.msra.mxu0 0.0
    %7627 = vmatpush.msra.mxu0 0.0
    %7628 = vmatpush.msra.mxu0 0.0
    %7629 = vmatpush.msra.mxu0 0.0
    %7630 = vmatpush.msra.mxu0 0.0
    %7631 = vmatpush.msra.mxu0 0.0
    %7632 = vmatpush.msra.mxu0 0.0
    %7633 = vmatpush.msra.mxu0 %v2962
    %7634 = vmatpush.msra.mxu0 %v2961
    %7635 = vmatmul.f32.gmra.mxu0 %v7617
    %v7636 = vpop.f32.mrf.mxu0
    %v7637 = vadd.f32 0.0, %v7636
    %7638 = vdwg.mxu0
    %v7639 = vadd.f32 %v7594, %v7637
    %7640 = vmatpush.msra.mxu0 0.0
    %7641 = vmatpush.msra.mxu0 0.0
    %7642 = vmatpush.msra.mxu0 0.0
    %7643 = vmatpush.msra.mxu0 0.0
    %7644 = vmatpush.msra.mxu0 0.0
    %7645 = vmatpush.msra.mxu0 0.0
    %7646 = vmatpush.msra.mxu0 0.0
    %7647 = vmatpush.msra.mxu0 0.0
    %7648 = vmatpush.msra.mxu0 0.0
    %7649 = vmatpush.msra.mxu0 0.0
    %7650 = vmatpush.msra.mxu0 0.0
    %7651 = vmatpush.msra.mxu0 0.0
    %7652 = vmatpush.msra.mxu0 %v2966
    %7653 = vmatpush.msra.mxu0 %v2965
    %7654 = vmatpush.msra.mxu0 %v2964
    %7655 = vmatpush.msra.mxu0 %v2963
    %7656 = vmatmul.f32.gmra.mxu0 %v6698
    %v7657 = vpop.f32.mrf.mxu0
    %v7658 = vadd.f32 0.0, %v7657
    %7659 = vdwg.mxu0
    %v7660 = vadd.f32 %v7639, %v7658
    %v7661 = vxor.u32 %v7660, 2147483648
    %v7662 = vmul.f32 %v7661, 1.442695
    %v7663 = vpow.pop %v7662
    %v7664 = vadd.f32 %v7663, 1.0
    %v7665 = vrcp.pop %v7664
    %v7666 = vmul.f32 %v7664, %v7665
    %v7667 = vsub.f32 1.0, %v7666
    %v7668 = vmul.f32 %v7665, %v7667
    %v7669 = vadd.f32 %v7665, %v7668
    %vm7670 = vweird.f32 %v7664
    %vm7671 = vweird.f32 %v7665
    %vm7672 = vmor %vm7670, %vm7671
    %v7673 = vsel %vm7672, %v7665, %v7669
    %v7674 = vand.u32 2147483647, %v7664
    %vm7675 = vcmp.eq.f32.partialorder %v7674, 8.507059e+37
    %v7676 = vand.u32 %v7664, 2147483648
    %v7677 = vor.u32 1.1754944e-38, %v7676
    %v7678 = vsel %vm7675, %v7677, %v7673
    %v7679 = vmul.f32 1.0, %v7678
    %v7680 = vtanh.pop %v7660
    %v7681 = vmul.f32 %v7679, %v6668
    %7683 = vrot.lane.b32.xlu0 %v7680, 64
    %v7684 = vpop.permute.xlu0 %7683
    %v7686 = vmul.f32 %v7679, %v7684
    %7688 = vrot.lane.b32.xlu0 %v7686, 32
    %v7689 = vpop.permute.xlu0 %7688
    %v7691 = vadd.f32 %v7681, %v7689
    %v7692 = vtanh.pop %v7691
    %7694 = vrot.lane.b32.xlu0 %v7692, 64
    %v7695 = vpop.permute.xlu0 %7694
    %v7697 = vmul.f32 %v7679, %v7695
    %7698 = vmatpush.msra.mxu0 0.0
    %7699 = vmatpush.msra.mxu0 0.0
    %7700 = vmatpush.msra.mxu0 0.0
    %7701 = vmatpush.msra.mxu0 0.0
    %7702 = vmatpush.msra.mxu0 0.0
    %7703 = vmatpush.msra.mxu0 0.0
    %7704 = vmatpush.msra.mxu0 0.0
    %7705 = vmatpush.msra.mxu0 0.0
    %7706 = vmatpush.msra.mxu0 0.0
    %7707 = vmatpush.msra.mxu0 0.0
    %7708 = vmatpush.msra.mxu0 0.0
    %7709 = vmatpush.msra.mxu0 0.0
    %7710 = vmatpush.msra.mxu0 %v2974
    %7711 = vmatpush.msra.mxu0 %v2973
    %7712 = vmatpush.msra.mxu0 %v2972
    %7713 = vmatpush.msra.mxu0 %v2971
    %7714 = vmatmul.f32.gmra.mxu0 %v6781
    %v7715 = vpop.f32.mrf.mxu0
    %v7716 = vadd.f32 0.0, %v7715
    %7717 = vdwg.mxu0
    %7719 = vrot.lane.b32.xlu0 %v7697, 32
    %v7720 = vpop.permute.xlu0 %7719
    %v7721 = vsel %vm3107, %v7720, 0
    %7723 = vmatpush.msra.mxu0 0.0
    %7724 = vmatpush.msra.mxu0 0.0
    %7725 = vmatpush.msra.mxu0 0.0
    %7726 = vmatpush.msra.mxu0 0.0
    %7727 = vmatpush.msra.mxu0 0.0
    %7728 = vmatpush.msra.mxu0 0.0
    %7729 = vmatpush.msra.mxu0 0.0
    %7730 = vmatpush.msra.mxu0 0.0
    %7731 = vmatpush.msra.mxu0 0.0
    %7732 = vmatpush.msra.mxu0 0.0
    %7733 = vmatpush.msra.mxu0 0.0
    %7734 = vmatpush.msra.mxu0 0.0
    %7735 = vmatpush.msra.mxu0 %v2970
    %7736 = vmatpush.msra.mxu0 %v2969
    %7737 = vmatpush.msra.mxu0 %v2968
    %7738 = vmatpush.msra.mxu0 %v2967
    %7739 = vmatmul.f32.gmra.mxu0 %v7721
    %v7740 = vpop.f32.mrf.mxu0
    %v7741 = vadd.f32 %v7716, %v7740
    %7742 = vdwg.mxu0
    %v7743 = vadd.f32 %v7741, %v3222
    %v7744 = vxor.u32 %v7743, 2147483648
    %v7745 = vmul.f32 %v7744, 1.442695
    %v7746 = vpow.pop %v7745
    %v7747 = vadd.f32 %v7746, 1.0
    %v7748 = vrcp.pop %v7747
    %v7749 = vmul.f32 %v7747, %v7748
    %v7750 = vsub.f32 1.0, %v7749
    %v7751 = vmul.f32 %v7748, %v7750
    %v7752 = vadd.f32 %v7748, %v7751
    %vm7753 = vweird.f32 %v7747
    %vm7754 = vweird.f32 %v7748
    %vm7755 = vmor %vm7753, %vm7754
    %v7756 = vsel %vm7755, %v7748, %v7752
    %v7757 = vand.u32 2147483647, %v7747
    %vm7758 = vcmp.eq.f32.partialorder %v7757, 8.507059e+37
    %v7759 = vand.u32 %v7747, 2147483648
    %v7760 = vor.u32 1.1754944e-38, %v7759
    %v7761 = vsel %vm7758, %v7760, %v7756
    %v7762 = vmul.f32 1.0, %v7761
    %v7763 = vtanh.pop %v7743
    %v7764 = vmul.f32 %v7762, %v6751
    %7766 = vrot.lane.b32.xlu0 %v7763, 64
    %v7767 = vpop.permute.xlu0 %7766
    %v7769 = vmul.f32 %v7762, %v7767
    %7771 = vrot.lane.b32.xlu0 %v7769, 32
    %v7772 = vpop.permute.xlu0 %7771
    %v7774 = vadd.f32 %v7764, %v7772
    %v7775 = vtanh.pop %v7774
    %7777 = vrot.lane.b32.xlu0 %v7775, 64
    %v7778 = vpop.permute.xlu0 %7777
    %v7780 = vmul.f32 %v7762, %v7778
    %7781 = vmatpush.msra.mxu0 0.0
    %7782 = vmatpush.msra.mxu0 0.0
    %7783 = vmatpush.msra.mxu0 0.0
    %7784 = vmatpush.msra.mxu0 0.0
    %7785 = vmatpush.msra.mxu0 0.0
    %7786 = vmatpush.msra.mxu0 0.0
    %7787 = vmatpush.msra.mxu0 0.0
    %7788 = vmatpush.msra.mxu0 0.0
    %7789 = vmatpush.msra.mxu0 0.0
    %7790 = vmatpush.msra.mxu0 0.0
    %7791 = vmatpush.msra.mxu0 0.0
    %7792 = vmatpush.msra.mxu0 0.0
    %7793 = vmatpush.msra.mxu0 %v2983
    %7794 = vmatpush.msra.mxu0 %v2982
    %7795 = vmatpush.msra.mxu0 %v2981
    %7796 = vmatpush.msra.mxu0 %v2980
    %7797 = vmatmul.f32.gmra.mxu0 %v6844
    %v7798 = vpop.f32.mrf.mxu0
    %v7799 = vadd.f32 0.0, %v7798
    %7800 = vdwg.mxu0
    %7802 = vrot.lane.b32.xlu0 %v7780, 32
    %v7803 = vpop.permute.xlu0 %7802
    %v7804 = vsel %vm3107, %v7803, 0
    %7806 = vmatpush.msra.mxu0 0.0
    %7807 = vmatpush.msra.mxu0 0.0
    %7808 = vmatpush.msra.mxu0 0.0
    %7809 = vmatpush.msra.mxu0 0.0
    %7810 = vmatpush.msra.mxu0 0.0
    %7811 = vmatpush.msra.mxu0 0.0
    %7812 = vmatpush.msra.mxu0 0.0
    %7813 = vmatpush.msra.mxu0 0.0
    %7814 = vmatpush.msra.mxu0 0.0
    %7815 = vmatpush.msra.mxu0 0.0
    %7816 = vmatpush.msra.mxu0 0.0
    %7817 = vmatpush.msra.mxu0 0.0
    %7818 = vmatpush.msra.mxu0 %v2979
    %7819 = vmatpush.msra.mxu0 %v2978
    %7820 = vmatpush.msra.mxu0 %v2977
    %7821 = vmatpush.msra.mxu0 %v2976
    %7822 = vmatmul.f32.gmra.mxu0 %v7804
    %v7823 = vpop.f32.mrf.mxu0
    %v7824 = vadd.f32 %v7799, %v7823
    %7825 = vdwg.mxu0
    %v7826 = vadd.f32 %v7824, %v3315
    %v7827 = vxor.u32 %v7826, 2147483648
    %v7828 = vmul.f32 %v7827, 1.442695
    %v7829 = vpow.pop %v7828
    %v7830 = vadd.f32 %v7829, 1.0
    %v7831 = vrcp.pop %v7830
    %v7832 = vmul.f32 %v7830, %v7831
    %v7833 = vsub.f32 1.0, %v7832
    %v7834 = vmul.f32 %v7831, %v7833
    %v7835 = vadd.f32 %v7831, %v7834
    %vm7836 = vweird.f32 %v7830
    %vm7837 = vweird.f32 %v7831
    %vm7838 = vmor %vm7836, %vm7837
    %v7839 = vsel %vm7838, %v7831, %v7835
    %v7840 = vand.u32 2147483647, %v7830
    %vm7841 = vcmp.eq.f32.partialorder %v7840, 8.507059e+37
    %v7842 = vand.u32 %v7830, 2147483648
    %v7843 = vor.u32 1.1754944e-38, %v7842
    %v7844 = vsel %vm7841, %v7843, %v7839
    %v7845 = vmul.f32 1.0, %v7844
    %v7846 = vtanh.pop %v7826
    %v7847 = vmul.f32 %v7845, %v6834
    %7849 = vrot.lane.b32.xlu0 %v7846, 64
    %v7850 = vpop.permute.xlu0 %7849
    %v7852 = vmul.f32 %v7845, %v7850
    %7854 = vrot.lane.b32.xlu0 %v7852, 32
    %v7855 = vpop.permute.xlu0 %7854
    %v7857 = vadd.f32 %v7847, %v7855
    %v7858 = vtanh.pop %v7857
    %7860 = vrot.lane.b32.xlu0 %v7858, 64
    %v7861 = vpop.permute.xlu0 %7860
    %v7863 = vmul.f32 %v7845, %v7861
    %7865 = vrot.lane.b32.xlu0 %v7863, 32
    %v7866 = vpop.permute.xlu0 %7865
    %v7867 = vsel %vm3107, %v7866, 0
    %7869 = vmatpush.msra.mxu0 0.0
    %7870 = vmatpush.msra.mxu0 0.0
    %7871 = vmatpush.msra.mxu0 0.0
    %7872 = vmatpush.msra.mxu0 0.0
    %7873 = vmatpush.msra.mxu0 0.0
    %7874 = vmatpush.msra.mxu0 0.0
    %7875 = vmatpush.msra.mxu0 0.0
    %7876 = vmatpush.msra.mxu0 0.0
    %7877 = vmatpush.msra.mxu0 0.0
    %7878 = vmatpush.msra.mxu0 0.0
    %7879 = vmatpush.msra.mxu0 0.0
    %7880 = vmatpush.msra.mxu0 0.0
    %7881 = vmatpush.msra.mxu0 %v82
    %7882 = vmatpush.msra.mxu0 %v81
    %7883 = vmatpush.msra.mxu0 %v80
    %7884 = vmatpush.msra.mxu0 %v79
    %7885 = vmatmul.f32.gmra.mxu0 %v7867
    %v7886 = vpop.f32.mrf.mxu0
    %v7887 = vadd.f32 %v3360, %v7886
    %7888 = vdwg.mxu0
    %v7890 = vrot.slane %v7887, 1
    %v7891 = vrot.slane %v7887, 2
    %v7892 = vrot.slane %v7887, 3
    %v7893 = vrot.slane %v7887, 4
    %v7894 = vrot.slane %v7887, 5
    %v7895 = vrot.slane %v7887, 6
    %v7896 = vrot.slane %v7887, 7
    %v7897 = vsel %vm3010, %v7887, 0
    %7899 = vmatpush.xpose.msra.mxu0 %v3443
    %7900 = vmatpush.xpose.msra.mxu0 %v3440
    %7901 = vmatpush.xpose.msra.mxu0 %v3437
    %7902 = vmatpush.xpose.msra.mxu0 %v3434
    %7903 = vmatpush.xpose.msra.mxu0 %v3431
    %7904 = vmatpush.xpose.msra.mxu0 %v3428
    %7905 = vmatpush.xpose.msra.mxu0 %v3425
    %7906 = vmatpush.xpose.msra.mxu0 %v3422
    %7907 = vmatpush.xpose.msra.mxu0 %v3419
    %7908 = vmatpush.xpose.msra.mxu0 %v3416
    %7909 = vmatpush.xpose.msra.mxu0 %v3413
    %7910 = vmatpush.xpose.msra.mxu0 %v3410
    %7911 = vmatpush.xpose.msra.mxu0 %v3407
    %7912 = vmatpush.xpose.msra.mxu0 %v3404
    %7913 = vmatpush.xpose.msra.mxu0 %v3401
    %7914 = vmatpush.xpose.msra.mxu0 %v3398
    %7915 = vmatmul.f32.gmra.mxu0 %v7897
    %v7916 = vpop.f32.mrf.mxu0
    %v7917 = vadd.f32 0.0, %v7916
    %7918 = vdwg.mxu0
    %v7919 = vsel %vm3010, %v7890, 0
    %7921 = vmatpush.xpose.msra.mxu0 %v3513
    %7922 = vmatpush.xpose.msra.mxu0 %v3510
    %7923 = vmatpush.xpose.msra.mxu0 %v3507
    %7924 = vmatpush.xpose.msra.mxu0 %v3504
    %7925 = vmatpush.xpose.msra.mxu0 %v3501
    %7926 = vmatpush.xpose.msra.mxu0 %v3498
    %7927 = vmatpush.xpose.msra.mxu0 %v3495
    %7928 = vmatpush.xpose.msra.mxu0 %v3492
    %7929 = vmatpush.xpose.msra.mxu0 %v3489
    %7930 = vmatpush.xpose.msra.mxu0 %v3486
    %7931 = vmatpush.xpose.msra.mxu0 %v3483
    %7932 = vmatpush.xpose.msra.mxu0 %v3480
    %7933 = vmatpush.xpose.msra.mxu0 %v3477
    %7934 = vmatpush.xpose.msra.mxu0 %v3474
    %7935 = vmatpush.xpose.msra.mxu0 %v3471
    %7936 = vmatpush.xpose.msra.mxu0 %v3468
    %7937 = vmatmul.f32.gmra.mxu0 %v7919
    %v7938 = vpop.f32.mrf.mxu0
    %v7939 = vadd.f32 0.0, %v7938
    %7940 = vdwg.mxu0
    %v7941 = vsel %vm3010, %v7891, 0
    %7943 = vmatpush.xpose.msra.mxu0 %v3583
    %7944 = vmatpush.xpose.msra.mxu0 %v3580
    %7945 = vmatpush.xpose.msra.mxu0 %v3577
    %7946 = vmatpush.xpose.msra.mxu0 %v3574
    %7947 = vmatpush.xpose.msra.mxu0 %v3571
    %7948 = vmatpush.xpose.msra.mxu0 %v3568
    %7949 = vmatpush.xpose.msra.mxu0 %v3565
    %7950 = vmatpush.xpose.msra.mxu0 %v3562
    %7951 = vmatpush.xpose.msra.mxu0 %v3559
    %7952 = vmatpush.xpose.msra.mxu0 %v3556
    %7953 = vmatpush.xpose.msra.mxu0 %v3553
    %7954 = vmatpush.xpose.msra.mxu0 %v3550
    %7955 = vmatpush.xpose.msra.mxu0 %v3547
    %7956 = vmatpush.xpose.msra.mxu0 %v3544
    %7957 = vmatpush.xpose.msra.mxu0 %v3541
    %7958 = vmatpush.xpose.msra.mxu0 %v3538
    %7959 = vmatmul.f32.gmra.mxu0 %v7941
    %v7960 = vpop.f32.mrf.mxu0
    %v7961 = vadd.f32 0.0, %v7960
    %7962 = vdwg.mxu0
    %v7963 = vsel %vm3010, %v7892, 0
    %7965 = vmatpush.xpose.msra.mxu0 %v3653
    %7966 = vmatpush.xpose.msra.mxu0 %v3650
    %7967 = vmatpush.xpose.msra.mxu0 %v3647
    %7968 = vmatpush.xpose.msra.mxu0 %v3644
    %7969 = vmatpush.xpose.msra.mxu0 %v3641
    %7970 = vmatpush.xpose.msra.mxu0 %v3638
    %7971 = vmatpush.xpose.msra.mxu0 %v3635
    %7972 = vmatpush.xpose.msra.mxu0 %v3632
    %7973 = vmatpush.xpose.msra.mxu0 %v3629
    %7974 = vmatpush.xpose.msra.mxu0 %v3626
    %7975 = vmatpush.xpose.msra.mxu0 %v3623
    %7976 = vmatpush.xpose.msra.mxu0 %v3620
    %7977 = vmatpush.xpose.msra.mxu0 %v3617
    %7978 = vmatpush.xpose.msra.mxu0 %v3614
    %7979 = vmatpush.xpose.msra.mxu0 %v3611
    %7980 = vmatpush.xpose.msra.mxu0 %v3608
    %7981 = vmatmul.f32.gmra.mxu0 %v7963
    %v7982 = vpop.f32.mrf.mxu0
    %v7983 = vadd.f32 0.0, %v7982
    %7984 = vdwg.mxu0
    %v7985 = vsel %vm3010, %v7893, 0
    %7987 = vmatpush.xpose.msra.mxu0 %v3723
    %7988 = vmatpush.xpose.msra.mxu0 %v3720
    %7989 = vmatpush.xpose.msra.mxu0 %v3717
    %7990 = vmatpush.xpose.msra.mxu0 %v3714
    %7991 = vmatpush.xpose.msra.mxu0 %v3711
    %7992 = vmatpush.xpose.msra.mxu0 %v3708
    %7993 = vmatpush.xpose.msra.mxu0 %v3705
    %7994 = vmatpush.xpose.msra.mxu0 %v3702
    %7995 = vmatpush.xpose.msra.mxu0 %v3699
    %7996 = vmatpush.xpose.msra.mxu0 %v3696
    %7997 = vmatpush.xpose.msra.mxu0 %v3693
    %7998 = vmatpush.xpose.msra.mxu0 %v3690
    %7999 = vmatpush.xpose.msra.mxu0 %v3687
    %8000 = vmatpush.xpose.msra.mxu0 %v3684
    %8001 = vmatpush.xpose.msra.mxu0 %v3681
    %8002 = vmatpush.xpose.msra.mxu0 %v3678
    %8003 = vmatmul.f32.gmra.mxu0 %v7985
    %v8004 = vpop.f32.mrf.mxu0
    %v8005 = vadd.f32 0.0, %v8004
    %8006 = vdwg.mxu0
    %v8007 = vsel %vm3010, %v7894, 0
    %8009 = vmatpush.xpose.msra.mxu0 %v3793
    %8010 = vmatpush.xpose.msra.mxu0 %v3790
    %8011 = vmatpush.xpose.msra.mxu0 %v3787
    %8012 = vmatpush.xpose.msra.mxu0 %v3784
    %8013 = vmatpush.xpose.msra.mxu0 %v3781
    %8014 = vmatpush.xpose.msra.mxu0 %v3778
    %8015 = vmatpush.xpose.msra.mxu0 %v3775
    %8016 = vmatpush.xpose.msra.mxu0 %v3772
    %8017 = vmatpush.xpose.msra.mxu0 %v3769
    %8018 = vmatpush.xpose.msra.mxu0 %v3766
    %8019 = vmatpush.xpose.msra.mxu0 %v3763
    %8020 = vmatpush.xpose.msra.mxu0 %v3760
    %8021 = vmatpush.xpose.msra.mxu0 %v3757
    %8022 = vmatpush.xpose.msra.mxu0 %v3754
    %8023 = vmatpush.xpose.msra.mxu0 %v3751
    %8024 = vmatpush.xpose.msra.mxu0 %v3748
    %8025 = vmatmul.f32.gmra.mxu0 %v8007
    %v8026 = vpop.f32.mrf.mxu0
    %v8027 = vadd.f32 0.0, %v8026
    %8028 = vdwg.mxu0
    %v8029 = vsel %vm3010, %v7895, 0
    %8031 = vmatpush.xpose.msra.mxu0 %v3863
    %8032 = vmatpush.xpose.msra.mxu0 %v3860
    %8033 = vmatpush.xpose.msra.mxu0 %v3857
    %8034 = vmatpush.xpose.msra.mxu0 %v3854
    %8035 = vmatpush.xpose.msra.mxu0 %v3851
    %8036 = vmatpush.xpose.msra.mxu0 %v3848
    %8037 = vmatpush.xpose.msra.mxu0 %v3845
    %8038 = vmatpush.xpose.msra.mxu0 %v3842
    %8039 = vmatpush.xpose.msra.mxu0 %v3839
    %8040 = vmatpush.xpose.msra.mxu0 %v3836
    %8041 = vmatpush.xpose.msra.mxu0 %v3833
    %8042 = vmatpush.xpose.msra.mxu0 %v3830
    %8043 = vmatpush.xpose.msra.mxu0 %v3827
    %8044 = vmatpush.xpose.msra.mxu0 %v3824
    %8045 = vmatpush.xpose.msra.mxu0 %v3821
    %8046 = vmatpush.xpose.msra.mxu0 %v3818
    %8047 = vmatmul.f32.gmra.mxu0 %v8029
    %v8048 = vpop.f32.mrf.mxu0
    %v8049 = vadd.f32 0.0, %v8048
    %8050 = vdwg.mxu0
    %v8051 = vsel %vm3010, %v7896, 0
    %8053 = vmatpush.xpose.msra.mxu0 %v3933
    %8054 = vmatpush.xpose.msra.mxu0 %v3930
    %8055 = vmatpush.xpose.msra.mxu0 %v3927
    %8056 = vmatpush.xpose.msra.mxu0 %v3924
    %8057 = vmatpush.xpose.msra.mxu0 %v3921
    %8058 = vmatpush.xpose.msra.mxu0 %v3918
    %8059 = vmatpush.xpose.msra.mxu0 %v3915
    %8060 = vmatpush.xpose.msra.mxu0 %v3912
    %8061 = vmatpush.xpose.msra.mxu0 %v3909
    %8062 = vmatpush.xpose.msra.mxu0 %v3906
    %8063 = vmatpush.xpose.msra.mxu0 %v3903
    %8064 = vmatpush.xpose.msra.mxu0 %v3900
    %8065 = vmatpush.xpose.msra.mxu0 %v3897
    %8066 = vmatpush.xpose.msra.mxu0 %v3894
    %8067 = vmatpush.xpose.msra.mxu0 %v3891
    %8068 = vmatpush.xpose.msra.mxu0 %v3888
    %8069 = vmatmul.f32.gmra.mxu0 %v8051
    %v8070 = vpop.f32.mrf.mxu0
    %v8071 = vadd.f32 0.0, %v8070
    %8072 = vdwg.mxu0
    %v8081 = vrot.slane %v7939, 7
    %v8082 = vsel %vm3964, %v8081, %v7917
    %v8083 = vrot.slane %v7961, 6
    %v8084 = vsel %vm3967, %v8083, %v8082
    %v8085 = vrot.slane %v7983, 5
    %v8086 = vsel %vm3970, %v8085, %v8084
    %v8087 = vrot.slane %v8005, 4
    %v8088 = vsel %vm3973, %v8087, %v8086
    %v8089 = vrot.slane %v8027, 3
    %v8090 = vsel %vm3976, %v8089, %v8088
    %v8091 = vrot.slane %v8049, 2
    %v8092 = vsel %vm3979, %v8091, %v8090
    %v8093 = vrot.slane %v8071, 1
    %v8094 = vsel %vm3982, %v8093, %v8092
    %8096 = vmax.xlane.f32.xlu0 %v8094
    %v8097 = vpop.xlane.xlu0 %8096
    %v8099 = vrot.slane %v8097, 1
    %v8100 = vrot.slane %v8097, 2
    %v8101 = vrot.slane %v8097, 3
    %v8102 = vrot.slane %v8097, 4
    %v8103 = vrot.slane %v8097, 5
    %v8104 = vrot.slane %v8097, 6
    %v8105 = vrot.slane %v8097, 7
    %v8114 = vsub.f32 %v7917, %v8097
    %v8115 = vsub.f32 %v7939, %v8099
    %v8116 = vsub.f32 %v7961, %v8100
    %v8117 = vsub.f32 %v7983, %v8101
    %v8118 = vsub.f32 %v8005, %v8102
    %v8119 = vsub.f32 %v8027, %v8103
    %v8120 = vsub.f32 %v8049, %v8104
    %v8121 = vsub.f32 %v8071, %v8105
    %v8122 = vmul.f32 %v8114, 1.442695
    %v8123 = vpow.pop %v8122
    %v8124 = vmul.f32 %v8115, 1.442695
    %v8125 = vpow.pop %v8124
    %v8126 = vmul.f32 %v8116, 1.442695
    %v8127 = vpow.pop %v8126
    %v8128 = vmul.f32 %v8117, 1.442695
    %v8129 = vpow.pop %v8128
    %v8130 = vmul.f32 %v8118, 1.442695
    %v8131 = vpow.pop %v8130
    %v8132 = vmul.f32 %v8119, 1.442695
    %v8133 = vpow.pop %v8132
    %v8134 = vmul.f32 %v8120, 1.442695
    %v8135 = vpow.pop %v8134
    %v8136 = vmul.f32 %v8121, 1.442695
    %v8137 = vpow.pop %v8136
    %v8138 = vmul.f32 %v8123, %v78
    %v8139 = vmul.f32 %v8125, %v4028
    %v8140 = vmul.f32 %v8127, %v4029
    %v8141 = vmul.f32 %v8129, %v4030
    %v8142 = vmul.f32 %v8131, %v4031
    %v8143 = vmul.f32 %v8133, %v4032
    %v8144 = vmul.f32 %v8135, %v4033
    %v8145 = vmul.f32 %v8137, %v4034
    %v8154 = vrot.slane %v8139, 7
    %v8155 = vsel %vm3964, %v8154, %v8138
    %v8156 = vrot.slane %v8140, 6
    %v8157 = vsel %vm3967, %v8156, %v8155
    %v8158 = vrot.slane %v8141, 5
    %v8159 = vsel %vm3970, %v8158, %v8157
    %v8160 = vrot.slane %v8142, 4
    %v8161 = vsel %vm3973, %v8160, %v8159
    %v8162 = vrot.slane %v8143, 3
    %v8163 = vsel %vm3976, %v8162, %v8161
    %v8164 = vrot.slane %v8144, 2
    %v8165 = vsel %vm3979, %v8164, %v8163
    %v8166 = vrot.slane %v8145, 1
    %v8167 = vsel %vm3982, %v8166, %v8165
    %8169 = vadd.xlane.f32.xlu0 %v8167
    %v8170 = vpop.xlane.xlu0 %8169
    %v8171 = vmax.f32 %v8170, 1e-12
    %v8173 = vrot.slane %v8171, 1
    %v8174 = vrot.slane %v8171, 2
    %v8175 = vrot.slane %v8171, 3
    %v8176 = vrot.slane %v8171, 4
    %v8177 = vrot.slane %v8171, 5
    %v8178 = vrot.slane %v8171, 6
    %v8179 = vrot.slane %v8171, 7
    %v8188 = vrcp.pop %v8171
    %v8189 = vmul.f32 %v8171, %v8188
    %v8190 = vsub.f32 1.0, %v8189
    %v8191 = vmul.f32 %v8188, %v8190
    %v8192 = vadd.f32 %v8188, %v8191
    %vm8193 = vweird.f32 %v8171
    %vm8194 = vweird.f32 %v8188
    %vm8195 = vmor %vm8193, %vm8194
    %v8196 = vsel %vm8195, %v8188, %v8192
    %v8197 = vand.u32 2147483647, %v8171
    %vm8198 = vcmp.eq.f32.partialorder %v8197, 8.507059e+37
    %v8199 = vand.u32 %v8171, 2147483648
    %v8200 = vor.u32 1.1754944e-38, %v8199
    %v8201 = vsel %vm8198, %v8200, %v8196
    %v8202 = vmul.f32 %v8138, %v8201
    %v8203 = vrcp.pop %v8173
    %v8204 = vmul.f32 %v8173, %v8203
    %v8205 = vsub.f32 1.0, %v8204
    %v8206 = vmul.f32 %v8203, %v8205
    %v8207 = vadd.f32 %v8203, %v8206
    %vm8208 = vweird.f32 %v8173
    %vm8209 = vweird.f32 %v8203
    %vm8210 = vmor %vm8208, %vm8209
    %v8211 = vsel %vm8210, %v8203, %v8207
    %v8212 = vand.u32 2147483647, %v8173
    %vm8213 = vcmp.eq.f32.partialorder %v8212, 8.507059e+37
    %v8214 = vand.u32 %v8173, 2147483648
    %v8215 = vor.u32 1.1754944e-38, %v8214
    %v8216 = vsel %vm8213, %v8215, %v8211
    %v8217 = vmul.f32 %v8139, %v8216
    %v8218 = vrcp.pop %v8174
    %v8219 = vmul.f32 %v8174, %v8218
    %v8220 = vsub.f32 1.0, %v8219
    %v8221 = vmul.f32 %v8218, %v8220
    %v8222 = vadd.f32 %v8218, %v8221
    %vm8223 = vweird.f32 %v8174
    %vm8224 = vweird.f32 %v8218
    %vm8225 = vmor %vm8223, %vm8224
    %v8226 = vsel %vm8225, %v8218, %v8222
    %v8227 = vand.u32 2147483647, %v8174
    %vm8228 = vcmp.eq.f32.partialorder %v8227, 8.507059e+37
    %v8229 = vand.u32 %v8174, 2147483648
    %v8230 = vor.u32 1.1754944e-38, %v8229
    %v8231 = vsel %vm8228, %v8230, %v8226
    %v8232 = vmul.f32 %v8140, %v8231
    %v8233 = vrcp.pop %v8175
    %v8234 = vmul.f32 %v8175, %v8233
    %v8235 = vsub.f32 1.0, %v8234
    %v8236 = vmul.f32 %v8233, %v8235
    %v8237 = vadd.f32 %v8233, %v8236
    %vm8238 = vweird.f32 %v8175
    %vm8239 = vweird.f32 %v8233
    %vm8240 = vmor %vm8238, %vm8239
    %v8241 = vsel %vm8240, %v8233, %v8237
    %v8242 = vand.u32 2147483647, %v8175
    %vm8243 = vcmp.eq.f32.partialorder %v8242, 8.507059e+37
    %v8244 = vand.u32 %v8175, 2147483648
    %v8245 = vor.u32 1.1754944e-38, %v8244
    %v8246 = vsel %vm8243, %v8245, %v8241
    %v8247 = vmul.f32 %v8141, %v8246
    %v8248 = vrcp.pop %v8176
    %v8249 = vmul.f32 %v8176, %v8248
    %v8250 = vsub.f32 1.0, %v8249
    %v8251 = vmul.f32 %v8248, %v8250
    %v8252 = vadd.f32 %v8248, %v8251
    %vm8253 = vweird.f32 %v8176
    %vm8254 = vweird.f32 %v8248
    %vm8255 = vmor %vm8253, %vm8254
    %v8256 = vsel %vm8255, %v8248, %v8252
    %v8257 = vand.u32 2147483647, %v8176
    %vm8258 = vcmp.eq.f32.partialorder %v8257, 8.507059e+37
    %v8259 = vand.u32 %v8176, 2147483648
    %v8260 = vor.u32 1.1754944e-38, %v8259
    %v8261 = vsel %vm8258, %v8260, %v8256
    %v8262 = vmul.f32 %v8142, %v8261
    %v8263 = vrcp.pop %v8177
    %v8264 = vmul.f32 %v8177, %v8263
    %v8265 = vsub.f32 1.0, %v8264
    %v8266 = vmul.f32 %v8263, %v8265
    %v8267 = vadd.f32 %v8263, %v8266
    %vm8268 = vweird.f32 %v8177
    %vm8269 = vweird.f32 %v8263
    %vm8270 = vmor %vm8268, %vm8269
    %v8271 = vsel %vm8270, %v8263, %v8267
    %v8272 = vand.u32 2147483647, %v8177
    %vm8273 = vcmp.eq.f32.partialorder %v8272, 8.507059e+37
    %v8274 = vand.u32 %v8177, 2147483648
    %v8275 = vor.u32 1.1754944e-38, %v8274
    %v8276 = vsel %vm8273, %v8275, %v8271
    %v8277 = vmul.f32 %v8143, %v8276
    %v8278 = vrcp.pop %v8178
    %v8279 = vmul.f32 %v8178, %v8278
    %v8280 = vsub.f32 1.0, %v8279
    %v8281 = vmul.f32 %v8278, %v8280
    %v8282 = vadd.f32 %v8278, %v8281
    %vm8283 = vweird.f32 %v8178
    %vm8284 = vweird.f32 %v8278
    %vm8285 = vmor %vm8283, %vm8284
    %v8286 = vsel %vm8285, %v8278, %v8282
    %v8287 = vand.u32 2147483647, %v8178
    %vm8288 = vcmp.eq.f32.partialorder %v8287, 8.507059e+37
    %v8289 = vand.u32 %v8178, 2147483648
    %v8290 = vor.u32 1.1754944e-38, %v8289
    %v8291 = vsel %vm8288, %v8290, %v8286
    %v8292 = vmul.f32 %v8144, %v8291
    %v8293 = vrcp.pop %v8179
    %v8294 = vmul.f32 %v8179, %v8293
    %v8295 = vsub.f32 1.0, %v8294
    %v8296 = vmul.f32 %v8293, %v8295
    %v8297 = vadd.f32 %v8293, %v8296
    %vm8298 = vweird.f32 %v8179
    %vm8299 = vweird.f32 %v8293
    %vm8300 = vmor %vm8298, %vm8299
    %v8301 = vsel %vm8300, %v8293, %v8297
    %v8302 = vand.u32 2147483647, %v8179
    %vm8303 = vcmp.eq.f32.partialorder %v8302, 8.507059e+37
    %v8304 = vand.u32 %v8179, 2147483648
    %v8305 = vor.u32 1.1754944e-38, %v8304
    %v8306 = vsel %vm8303, %v8305, %v8301
    %v8307 = vmul.f32 %v8145, %v8306
    %8308 = vmatpush.msra.mxu0 %v2848
    %8309 = vmatpush.msra.mxu0 %v2847
    %8310 = vmatpush.msra.mxu0 %v2846
    %8311 = vmatpush.msra.mxu0 %v2845
    %8312 = vmatpush.msra.mxu0 %v2844
    %8313 = vmatpush.msra.mxu0 %v2843
    %8314 = vmatpush.msra.mxu0 %v2842
    %8315 = vmatpush.msra.mxu0 %v2841
    %8316 = vmatpush.msra.mxu0 %v2840
    %8317 = vmatpush.msra.mxu0 %v2839
    %8318 = vmatpush.msra.mxu0 %v2838
    %8319 = vmatpush.msra.mxu0 %v2837
    %8320 = vmatpush.msra.mxu0 %v2836
    %8321 = vmatpush.msra.mxu0 %v2835
    %8322 = vmatpush.msra.mxu0 %v2834
    %8323 = vmatpush.msra.mxu0 %v2833
    %8324 = vmatmul.f32.gmra.mxu0 %v8202
    %v8325 = vpop.f32.mrf.mxu0
    %v8326 = vadd.f32 0.0, %v8325
    %8327 = vdwg.mxu0
    %8328 = vmatpush.msra.mxu0 %v2864
    %8329 = vmatpush.msra.mxu0 %v2863
    %8330 = vmatpush.msra.mxu0 %v2862
    %8331 = vmatpush.msra.mxu0 %v2861
    %8332 = vmatpush.msra.mxu0 %v2860
    %8333 = vmatpush.msra.mxu0 %v2859
    %8334 = vmatpush.msra.mxu0 %v2858
    %8335 = vmatpush.msra.mxu0 %v2857
    %8336 = vmatpush.msra.mxu0 %v2856
    %8337 = vmatpush.msra.mxu0 %v2855
    %8338 = vmatpush.msra.mxu0 %v2854
    %8339 = vmatpush.msra.mxu0 %v2853
    %8340 = vmatpush.msra.mxu0 %v2852
    %8341 = vmatpush.msra.mxu0 %v2851
    %8342 = vmatpush.msra.mxu0 %v2850
    %8343 = vmatpush.msra.mxu0 %v2849
    %8344 = vmatmul.f32.gmra.mxu0 %v8217
    %v8345 = vpop.f32.mrf.mxu0
    %v8346 = vadd.f32 0.0, %v8345
    %8347 = vdwg.mxu0
    %8348 = vmatpush.msra.mxu0 %v2880
    %8349 = vmatpush.msra.mxu0 %v2879
    %8350 = vmatpush.msra.mxu0 %v2878
    %8351 = vmatpush.msra.mxu0 %v2877
    %8352 = vmatpush.msra.mxu0 %v2876
    %8353 = vmatpush.msra.mxu0 %v2875
    %8354 = vmatpush.msra.mxu0 %v2874
    %8355 = vmatpush.msra.mxu0 %v2873
    %8356 = vmatpush.msra.mxu0 %v2872
    %8357 = vmatpush.msra.mxu0 %v2871
    %8358 = vmatpush.msra.mxu0 %v2870
    %8359 = vmatpush.msra.mxu0 %v2869
    %8360 = vmatpush.msra.mxu0 %v2868
    %8361 = vmatpush.msra.mxu0 %v2867
    %8362 = vmatpush.msra.mxu0 %v2866
    %8363 = vmatpush.msra.mxu0 %v2865
    %8364 = vmatmul.f32.gmra.mxu0 %v8232
    %v8365 = vpop.f32.mrf.mxu0
    %v8366 = vadd.f32 0.0, %v8365
    %8367 = vdwg.mxu0
    %8368 = vmatpush.msra.mxu0 %v2896
    %8369 = vmatpush.msra.mxu0 %v2895
    %8370 = vmatpush.msra.mxu0 %v2894
    %8371 = vmatpush.msra.mxu0 %v2893
    %8372 = vmatpush.msra.mxu0 %v2892
    %8373 = vmatpush.msra.mxu0 %v2891
    %8374 = vmatpush.msra.mxu0 %v2890
    %8375 = vmatpush.msra.mxu0 %v2889
    %8376 = vmatpush.msra.mxu0 %v2888
    %8377 = vmatpush.msra.mxu0 %v2887
    %8378 = vmatpush.msra.mxu0 %v2886
    %8379 = vmatpush.msra.mxu0 %v2885
    %8380 = vmatpush.msra.mxu0 %v2884
    %8381 = vmatpush.msra.mxu0 %v2883
    %8382 = vmatpush.msra.mxu0 %v2882
    %8383 = vmatpush.msra.mxu0 %v2881
    %8384 = vmatmul.f32.gmra.mxu0 %v8247
    %v8385 = vpop.f32.mrf.mxu0
    %v8386 = vadd.f32 0.0, %v8385
    %8387 = vdwg.mxu0
    %8388 = vmatpush.msra.mxu0 %v2912
    %8389 = vmatpush.msra.mxu0 %v2911
    %8390 = vmatpush.msra.mxu0 %v2910
    %8391 = vmatpush.msra.mxu0 %v2909
    %8392 = vmatpush.msra.mxu0 %v2908
    %8393 = vmatpush.msra.mxu0 %v2907
    %8394 = vmatpush.msra.mxu0 %v2906
    %8395 = vmatpush.msra.mxu0 %v2905
    %8396 = vmatpush.msra.mxu0 %v2904
    %8397 = vmatpush.msra.mxu0 %v2903
    %8398 = vmatpush.msra.mxu0 %v2902
    %8399 = vmatpush.msra.mxu0 %v2901
    %8400 = vmatpush.msra.mxu0 %v2900
    %8401 = vmatpush.msra.mxu0 %v2899
    %8402 = vmatpush.msra.mxu0 %v2898
    %8403 = vmatpush.msra.mxu0 %v2897
    %8404 = vmatmul.f32.gmra.mxu0 %v8262
    %v8405 = vpop.f32.mrf.mxu0
    %v8406 = vadd.f32 0.0, %v8405
    %8407 = vdwg.mxu0
    %8408 = vmatpush.msra.mxu0 %v2928
    %8409 = vmatpush.msra.mxu0 %v2927
    %8410 = vmatpush.msra.mxu0 %v2926
    %8411 = vmatpush.msra.mxu0 %v2925
    %8412 = vmatpush.msra.mxu0 %v2924
    %8413 = vmatpush.msra.mxu0 %v2923
    %8414 = vmatpush.msra.mxu0 %v2922
    %8415 = vmatpush.msra.mxu0 %v2921
    %8416 = vmatpush.msra.mxu0 %v2920
    %8417 = vmatpush.msra.mxu0 %v2919
    %8418 = vmatpush.msra.mxu0 %v2918
    %8419 = vmatpush.msra.mxu0 %v2917
    %8420 = vmatpush.msra.mxu0 %v2916
    %8421 = vmatpush.msra.mxu0 %v2915
    %8422 = vmatpush.msra.mxu0 %v2914
    %8423 = vmatpush.msra.mxu0 %v2913
    %8424 = vmatmul.f32.gmra.mxu0 %v8277
    %v8425 = vpop.f32.mrf.mxu0
    %v8426 = vadd.f32 0.0, %v8425
    %8427 = vdwg.mxu0
    %8428 = vmatpush.msra.mxu0 %v2944
    %8429 = vmatpush.msra.mxu0 %v2943
    %8430 = vmatpush.msra.mxu0 %v2942
    %8431 = vmatpush.msra.mxu0 %v2941
    %8432 = vmatpush.msra.mxu0 %v2940
    %8433 = vmatpush.msra.mxu0 %v2939
    %8434 = vmatpush.msra.mxu0 %v2938
    %8435 = vmatpush.msra.mxu0 %v2937
    %8436 = vmatpush.msra.mxu0 %v2936
    %8437 = vmatpush.msra.mxu0 %v2935
    %8438 = vmatpush.msra.mxu0 %v2934
    %8439 = vmatpush.msra.mxu0 %v2933
    %8440 = vmatpush.msra.mxu0 %v2932
    %8441 = vmatpush.msra.mxu0 %v2931
    %8442 = vmatpush.msra.mxu0 %v2930
    %8443 = vmatpush.msra.mxu0 %v2929
    %8444 = vmatmul.f32.gmra.mxu0 %v8292
    %v8445 = vpop.f32.mrf.mxu0
    %v8446 = vadd.f32 0.0, %v8445
    %8447 = vdwg.mxu0
    %8448 = vmatpush.msra.mxu0 %v2960
    %8449 = vmatpush.msra.mxu0 %v2959
    %8450 = vmatpush.msra.mxu0 %v2958
    %8451 = vmatpush.msra.mxu0 %v2957
    %8452 = vmatpush.msra.mxu0 %v2956
    %8453 = vmatpush.msra.mxu0 %v2955
    %8454 = vmatpush.msra.mxu0 %v2954
    %8455 = vmatpush.msra.mxu0 %v2953
    %8456 = vmatpush.msra.mxu0 %v2952
    %8457 = vmatpush.msra.mxu0 %v2951
    %8458 = vmatpush.msra.mxu0 %v2950
    %8459 = vmatpush.msra.mxu0 %v2949
    %8460 = vmatpush.msra.mxu0 %v2948
    %8461 = vmatpush.msra.mxu0 %v2947
    %8462 = vmatpush.msra.mxu0 %v2946
    %8463 = vmatpush.msra.mxu0 %v2945
    %8464 = vmatmul.f32.gmra.mxu0 %v8307
    %v8465 = vpop.f32.mrf.mxu0
    %v8466 = vadd.f32 0.0, %v8465
    %8467 = vdwg.mxu0
    %v8468 = vmax.f32 %v7863, 0.0
    %v8469 = vmax.f32 %v8326, 0.0
    %v8470 = vmax.f32 %v8346, 0.0
    %v8471 = vmax.f32 %v8366, 0.0
    %v8472 = vmax.f32 %v8386, 0.0
    %v8473 = vmax.f32 %v8406, 0.0
    %v8474 = vmax.f32 %v8426, 0.0
    %v8475 = vmax.f32 %v8446, 0.0
    %v8476 = vmax.f32 %v8466, 0.0
    %v8485 = vrot.slane %v8470, 7
    %v8486 = vsel %vm3964, %v8485, %v8469
    %v8487 = vrot.slane %v8471, 6
    %v8488 = vsel %vm3967, %v8487, %v8486
    %v8489 = vrot.slane %v8472, 5
    %v8490 = vsel %vm3970, %v8489, %v8488
    %v8491 = vrot.slane %v8473, 4
    %v8492 = vsel %vm3973, %v8491, %v8490
    %v8493 = vrot.slane %v8474, 3
    %v8494 = vsel %vm3976, %v8493, %v8492
    %v8495 = vrot.slane %v8475, 2
    %v8496 = vsel %vm3979, %v8495, %v8494
    %v8497 = vrot.slane %v8476, 1
    %v8498 = vsel %vm3982, %v8497, %v8496
    %v8499 = vsel %vm3010, %v8498, 0
    %8501 = vmatpush.msra.mxu0 0.0
    %8502 = vmatpush.msra.mxu0 0.0
    %8503 = vmatpush.msra.mxu0 0.0
    %8504 = vmatpush.msra.mxu0 0.0
    %8505 = vmatpush.msra.mxu0 0.0
    %8506 = vmatpush.msra.mxu0 0.0
    %8507 = vmatpush.msra.mxu0 0.0
    %8508 = vmatpush.msra.mxu0 0.0
    %8509 = vmatpush.msra.mxu0 0.0
    %8510 = vmatpush.msra.mxu0 0.0
    %8511 = vmatpush.msra.mxu0 0.0
    %8512 = vmatpush.msra.mxu0 0.0
    %8513 = vmatpush.msra.mxu0 0.0
    %8514 = vmatpush.msra.mxu0 0.0
    %8515 = vmatpush.msra.mxu0 %v2995
    %8516 = vmatpush.msra.mxu0 %v2993
    %8517 = vmatmul.f32.gmra.mxu0 %v8499
    %v8518 = vpop.f32.mrf.mxu0
    %v8519 = vadd.f32 0.0, %v8518
    %8520 = vdwg.mxu0
    %8521 = vmatpush.msra.mxu0 0.0
    %8522 = vmatpush.msra.mxu0 0.0
    %8523 = vmatpush.msra.mxu0 0.0
    %8524 = vmatpush.msra.mxu0 0.0
    %8525 = vmatpush.msra.mxu0 0.0
    %8526 = vmatpush.msra.mxu0 0.0
    %8527 = vmatpush.msra.mxu0 0.0
    %8528 = vmatpush.msra.mxu0 0.0
    %8529 = vmatpush.msra.mxu0 0.0
    %8530 = vmatpush.msra.mxu0 0.0
    %8531 = vmatpush.msra.mxu0 0.0
    %8532 = vmatpush.msra.mxu0 0.0
    %8533 = vmatpush.msra.mxu0 0.0
    %8534 = vmatpush.msra.mxu0 0.0
    %8535 = vmatpush.msra.mxu0 %v2996
    %8536 = vmatpush.msra.mxu0 %v2994
    %8537 = vmatmul.f32.gmra.mxu0 %v8499
    %v8538 = vpop.f32.mrf.mxu0
    %v8539 = vadd.f32 0.0, %v8538
    %8540 = vdwg.mxu0
    %8542 = vrot.lane.b32.xlu0 %v8468, 32
    %v8543 = vpop.permute.xlu0 %8542
    %v8544 = vsel %vm3107, %v8543, 0
    %8546 = vmatpush.msra.mxu0 0.0
    %8547 = vmatpush.msra.mxu0 0.0
    %8548 = vmatpush.msra.mxu0 0.0
    %8549 = vmatpush.msra.mxu0 0.0
    %8550 = vmatpush.msra.mxu0 0.0
    %8551 = vmatpush.msra.mxu0 0.0
    %8552 = vmatpush.msra.mxu0 0.0
    %8553 = vmatpush.msra.mxu0 0.0
    %8554 = vmatpush.msra.mxu0 0.0
    %8555 = vmatpush.msra.mxu0 0.0
    %8556 = vmatpush.msra.mxu0 0.0
    %8557 = vmatpush.msra.mxu0 0.0
    %8558 = vmatpush.msra.mxu0 %v2991
    %8559 = vmatpush.msra.mxu0 %v2989
    %8560 = vmatpush.msra.mxu0 %v2987
    %8561 = vmatpush.msra.mxu0 %v2985
    %8562 = vmatmul.f32.gmra.mxu0 %v8544
    %v8563 = vpop.f32.mrf.mxu0
    %v8564 = vadd.f32 %v8519, %v8563
    %8565 = vdwg.mxu0
    %8566 = vmatpush.msra.mxu0 0.0
    %8567 = vmatpush.msra.mxu0 0.0
    %8568 = vmatpush.msra.mxu0 0.0
    %8569 = vmatpush.msra.mxu0 0.0
    %8570 = vmatpush.msra.mxu0 0.0
    %8571 = vmatpush.msra.mxu0 0.0
    %8572 = vmatpush.msra.mxu0 0.0
    %8573 = vmatpush.msra.mxu0 0.0
    %8574 = vmatpush.msra.mxu0 0.0
    %8575 = vmatpush.msra.mxu0 0.0
    %8576 = vmatpush.msra.mxu0 0.0
    %8577 = vmatpush.msra.mxu0 0.0
    %8578 = vmatpush.msra.mxu0 %v2992
    %8579 = vmatpush.msra.mxu0 %v2990
    %8580 = vmatpush.msra.mxu0 %v2988
    %8581 = vmatpush.msra.mxu0 %v2986
    %8582 = vmatmul.f32.gmra.mxu0 %v8544
    %v8583 = vpop.f32.mrf.mxu0
    %v8584 = vadd.f32 %v8539, %v8583
    %8585 = vdwg.mxu0
    %v8586 = vadd.f32 %v8564, %v4492
    %v8587 = vadd.f32 %v8584, %v4493
    %s8588 = scalar_lea.vmem [#allocation7], 64
    %8589 = vst [vmem:[%s8588] sm:$0xff] %v8586
    %8590 = vst [vmem:[%s8588 + $0x8] sm:$0xff] %v8587
    %v8599 = vrot.slane %v8217, 7
    %v8600 = vsel %vm3964, %v8599, %v8202
    %v8601 = vrot.slane %v8232, 6
    %v8602 = vsel %vm3967, %v8601, %v8600
    %v8603 = vrot.slane %v8247, 5
    %v8604 = vsel %vm3970, %v8603, %v8602
    %v8605 = vrot.slane %v8262, 4
    %v8606 = vsel %vm3973, %v8605, %v8604
    %v8607 = vrot.slane %v8277, 3
    %v8608 = vsel %vm3976, %v8607, %v8606
    %v8609 = vrot.slane %v8292, 2
    %v8610 = vsel %vm3979, %v8609, %v8608
    %v8611 = vrot.slane %v8307, 1
    %v8612 = vsel %vm3982, %v8611, %v8610
    %s8614 = scalar_lea.vmem [#allocation10], 32
    %8615 = vst [vmem:[%s8614] sm:$0xff] %v8612
    %s8616 = scalar_lea.vmem [#allocation6], 40
    %v8617 = vld [vmem:[%s8616] sm:$0xff]
    %v8626 = vrot.slane %v8346, 7
    %v8627 = vsel %vm3964, %v8626, %v8326
    %v8628 = vrot.slane %v8366, 6
    %v8629 = vsel %vm3967, %v8628, %v8627
    %v8630 = vrot.slane %v8386, 5
    %v8631 = vsel %vm3970, %v8630, %v8629
    %v8632 = vrot.slane %v8406, 4
    %v8633 = vsel %vm3973, %v8632, %v8631
    %v8634 = vrot.slane %v8426, 3
    %v8635 = vsel %vm3976, %v8634, %v8633
    %v8636 = vrot.slane %v8446, 2
    %v8637 = vsel %vm3979, %v8636, %v8635
    %v8638 = vrot.slane %v8466, 1
    %v8639 = vsel %vm3982, %v8638, %v8637
    %v8640 = vsel %vm3010, %v8639, 0
    %8642 = vmatpush.msra.mxu0 0.0
    %8643 = vmatpush.msra.mxu0 0.0
    %8644 = vmatpush.msra.mxu0 0.0
    %8645 = vmatpush.msra.mxu0 0.0
    %8646 = vmatpush.msra.mxu0 0.0
    %8647 = vmatpush.msra.mxu0 0.0
    %8648 = vmatpush.msra.mxu0 0.0
    %8649 = vmatpush.msra.mxu0 0.0
    %8650 = vmatpush.msra.mxu0 0.0
    %8651 = vmatpush.msra.mxu0 0.0
    %8652 = vmatpush.msra.mxu0 0.0
    %8653 = vmatpush.msra.mxu0 0.0
    %8654 = vmatpush.msra.mxu0 0.0
    %8655 = vmatpush.msra.mxu0 0.0
    %8656 = vmatpush.msra.mxu0 %v2962
    %8657 = vmatpush.msra.mxu0 %v2961
    %8658 = vmatmul.f32.gmra.mxu0 %v8640
    %v8659 = vpop.f32.mrf.mxu0
    %v8660 = vadd.f32 0.0, %v8659
    %8661 = vdwg.mxu0
    %v8662 = vadd.f32 %v8617, %v8660
    %8663 = vmatpush.msra.mxu0 0.0
    %8664 = vmatpush.msra.mxu0 0.0
    %8665 = vmatpush.msra.mxu0 0.0
    %8666 = vmatpush.msra.mxu0 0.0
    %8667 = vmatpush.msra.mxu0 0.0
    %8668 = vmatpush.msra.mxu0 0.0
    %8669 = vmatpush.msra.mxu0 0.0
    %8670 = vmatpush.msra.mxu0 0.0
    %8671 = vmatpush.msra.mxu0 0.0
    %8672 = vmatpush.msra.mxu0 0.0
    %8673 = vmatpush.msra.mxu0 0.0
    %8674 = vmatpush.msra.mxu0 0.0
    %8675 = vmatpush.msra.mxu0 %v2966
    %8676 = vmatpush.msra.mxu0 %v2965
    %8677 = vmatpush.msra.mxu0 %v2964
    %8678 = vmatpush.msra.mxu0 %v2963
    %8679 = vmatmul.f32.gmra.mxu0 %v7721
    %v8680 = vpop.f32.mrf.mxu0
    %v8681 = vadd.f32 0.0, %v8680
    %8682 = vdwg.mxu0
    %v8683 = vadd.f32 %v8662, %v8681
    %v8684 = vxor.u32 %v8683, 2147483648
    %v8685 = vmul.f32 %v8684, 1.442695
    %v8686 = vpow.pop %v8685
    %v8687 = vadd.f32 %v8686, 1.0
    %v8688 = vrcp.pop %v8687
    %v8689 = vmul.f32 %v8687, %v8688
    %v8690 = vsub.f32 1.0, %v8689
    %v8691 = vmul.f32 %v8688, %v8690
    %v8692 = vadd.f32 %v8688, %v8691
    %vm8693 = vweird.f32 %v8687
    %vm8694 = vweird.f32 %v8688
    %vm8695 = vmor %vm8693, %vm8694
    %v8696 = vsel %vm8695, %v8688, %v8692
    %v8697 = vand.u32 2147483647, %v8687
    %vm8698 = vcmp.eq.f32.partialorder %v8697, 8.507059e+37
    %v8699 = vand.u32 %v8687, 2147483648
    %v8700 = vor.u32 1.1754944e-38, %v8699
    %v8701 = vsel %vm8698, %v8700, %v8696
    %v8702 = vmul.f32 1.0, %v8701
    %v8703 = vtanh.pop %v8683
    %v8704 = vmul.f32 %v8702, %v7691
    %8706 = vrot.lane.b32.xlu0 %v8703, 64
    %v8707 = vpop.permute.xlu0 %8706
    %v8709 = vmul.f32 %v8702, %v8707
    %8711 = vrot.lane.b32.xlu0 %v8709, 32
    %v8712 = vpop.permute.xlu0 %8711
    %v8714 = vadd.f32 %v8704, %v8712
    %v8715 = vtanh.pop %v8714
    %8717 = vrot.lane.b32.xlu0 %v8715, 64
    %v8718 = vpop.permute.xlu0 %8717
    %v8720 = vmul.f32 %v8702, %v8718
    %8721 = vmatpush.msra.mxu0 0.0
    %8722 = vmatpush.msra.mxu0 0.0
    %8723 = vmatpush.msra.mxu0 0.0
    %8724 = vmatpush.msra.mxu0 0.0
    %8725 = vmatpush.msra.mxu0 0.0
    %8726 = vmatpush.msra.mxu0 0.0
    %8727 = vmatpush.msra.mxu0 0.0
    %8728 = vmatpush.msra.mxu0 0.0
    %8729 = vmatpush.msra.mxu0 0.0
    %8730 = vmatpush.msra.mxu0 0.0
    %8731 = vmatpush.msra.mxu0 0.0
    %8732 = vmatpush.msra.mxu0 0.0
    %8733 = vmatpush.msra.mxu0 %v2974
    %8734 = vmatpush.msra.mxu0 %v2973
    %8735 = vmatpush.msra.mxu0 %v2972
    %8736 = vmatpush.msra.mxu0 %v2971
    %8737 = vmatmul.f32.gmra.mxu0 %v7804
    %v8738 = vpop.f32.mrf.mxu0
    %v8739 = vadd.f32 0.0, %v8738
    %8740 = vdwg.mxu0
    %8742 = vrot.lane.b32.xlu0 %v8720, 32
    %v8743 = vpop.permute.xlu0 %8742
    %v8744 = vsel %vm3107, %v8743, 0
    %8746 = vmatpush.msra.mxu0 0.0
    %8747 = vmatpush.msra.mxu0 0.0
    %8748 = vmatpush.msra.mxu0 0.0
    %8749 = vmatpush.msra.mxu0 0.0
    %8750 = vmatpush.msra.mxu0 0.0
    %8751 = vmatpush.msra.mxu0 0.0
    %8752 = vmatpush.msra.mxu0 0.0
    %8753 = vmatpush.msra.mxu0 0.0
    %8754 = vmatpush.msra.mxu0 0.0
    %8755 = vmatpush.msra.mxu0 0.0
    %8756 = vmatpush.msra.mxu0 0.0
    %8757 = vmatpush.msra.mxu0 0.0
    %8758 = vmatpush.msra.mxu0 %v2970
    %8759 = vmatpush.msra.mxu0 %v2969
    %8760 = vmatpush.msra.mxu0 %v2968
    %8761 = vmatpush.msra.mxu0 %v2967
    %8762 = vmatmul.f32.gmra.mxu0 %v8744
    %v8763 = vpop.f32.mrf.mxu0
    %v8764 = vadd.f32 %v8739, %v8763
    %8765 = vdwg.mxu0
    %v8766 = vadd.f32 %v8764, %v3222
    %v8767 = vxor.u32 %v8766, 2147483648
    %v8768 = vmul.f32 %v8767, 1.442695
    %v8769 = vpow.pop %v8768
    %v8770 = vadd.f32 %v8769, 1.0
    %v8771 = vrcp.pop %v8770
    %v8772 = vmul.f32 %v8770, %v8771
    %v8773 = vsub.f32 1.0, %v8772
    %v8774 = vmul.f32 %v8771, %v8773
    %v8775 = vadd.f32 %v8771, %v8774
    %vm8776 = vweird.f32 %v8770
    %vm8777 = vweird.f32 %v8771
    %vm8778 = vmor %vm8776, %vm8777
    %v8779 = vsel %vm8778, %v8771, %v8775
    %v8780 = vand.u32 2147483647, %v8770
    %vm8781 = vcmp.eq.f32.partialorder %v8780, 8.507059e+37
    %v8782 = vand.u32 %v8770, 2147483648
    %v8783 = vor.u32 1.1754944e-38, %v8782
    %v8784 = vsel %vm8781, %v8783, %v8779
    %v8785 = vmul.f32 1.0, %v8784
    %v8786 = vtanh.pop %v8766
    %v8787 = vmul.f32 %v8785, %v7774
    %8789 = vrot.lane.b32.xlu0 %v8786, 64
    %v8790 = vpop.permute.xlu0 %8789
    %v8792 = vmul.f32 %v8785, %v8790
    %8794 = vrot.lane.b32.xlu0 %v8792, 32
    %v8795 = vpop.permute.xlu0 %8794
    %v8797 = vadd.f32 %v8787, %v8795
    %v8798 = vtanh.pop %v8797
    %8800 = vrot.lane.b32.xlu0 %v8798, 64
    %v8801 = vpop.permute.xlu0 %8800
    %v8803 = vmul.f32 %v8785, %v8801
    %8804 = vmatpush.msra.mxu0 0.0
    %8805 = vmatpush.msra.mxu0 0.0
    %8806 = vmatpush.msra.mxu0 0.0
    %8807 = vmatpush.msra.mxu0 0.0
    %8808 = vmatpush.msra.mxu0 0.0
    %8809 = vmatpush.msra.mxu0 0.0
    %8810 = vmatpush.msra.mxu0 0.0
    %8811 = vmatpush.msra.mxu0 0.0
    %8812 = vmatpush.msra.mxu0 0.0
    %8813 = vmatpush.msra.mxu0 0.0
    %8814 = vmatpush.msra.mxu0 0.0
    %8815 = vmatpush.msra.mxu0 0.0
    %8816 = vmatpush.msra.mxu0 %v2983
    %8817 = vmatpush.msra.mxu0 %v2982
    %8818 = vmatpush.msra.mxu0 %v2981
    %8819 = vmatpush.msra.mxu0 %v2980
    %8820 = vmatmul.f32.gmra.mxu0 %v7867
    %v8821 = vpop.f32.mrf.mxu0
    %v8822 = vadd.f32 0.0, %v8821
    %8823 = vdwg.mxu0
    %8825 = vrot.lane.b32.xlu0 %v8803, 32
    %v8826 = vpop.permute.xlu0 %8825
    %v8827 = vsel %vm3107, %v8826, 0
    %8829 = vmatpush.msra.mxu0 0.0
    %8830 = vmatpush.msra.mxu0 0.0
    %8831 = vmatpush.msra.mxu0 0.0
    %8832 = vmatpush.msra.mxu0 0.0
    %8833 = vmatpush.msra.mxu0 0.0
    %8834 = vmatpush.msra.mxu0 0.0
    %8835 = vmatpush.msra.mxu0 0.0
    %8836 = vmatpush.msra.mxu0 0.0
    %8837 = vmatpush.msra.mxu0 0.0
    %8838 = vmatpush.msra.mxu0 0.0
    %8839 = vmatpush.msra.mxu0 0.0
    %8840 = vmatpush.msra.mxu0 0.0
    %8841 = vmatpush.msra.mxu0 %v2979
    %8842 = vmatpush.msra.mxu0 %v2978
    %8843 = vmatpush.msra.mxu0 %v2977
    %8844 = vmatpush.msra.mxu0 %v2976
    %8845 = vmatmul.f32.gmra.mxu0 %v8827
    %v8846 = vpop.f32.mrf.mxu0
    %v8847 = vadd.f32 %v8822, %v8846
    %8848 = vdwg.mxu0
    %v8849 = vadd.f32 %v8847, %v3315
    %v8850 = vxor.u32 %v8849, 2147483648
    %v8851 = vmul.f32 %v8850, 1.442695
    %v8852 = vpow.pop %v8851
    %v8853 = vadd.f32 %v8852, 1.0
    %v8854 = vrcp.pop %v8853
    %v8855 = vmul.f32 %v8853, %v8854
    %v8856 = vsub.f32 1.0, %v8855
    %v8857 = vmul.f32 %v8854, %v8856
    %v8858 = vadd.f32 %v8854, %v8857
    %vm8859 = vweird.f32 %v8853
    %vm8860 = vweird.f32 %v8854
    %vm8861 = vmor %vm8859, %vm8860
    %v8862 = vsel %vm8861, %v8854, %v8858
    %v8863 = vand.u32 2147483647, %v8853
    %vm8864 = vcmp.eq.f32.partialorder %v8863, 8.507059e+37
    %v8865 = vand.u32 %v8853, 2147483648
    %v8866 = vor.u32 1.1754944e-38, %v8865
    %v8867 = vsel %vm8864, %v8866, %v8862
    %v8868 = vmul.f32 1.0, %v8867
    %v8869 = vtanh.pop %v8849
    %v8870 = vmul.f32 %v8868, %v7857
    %8872 = vrot.lane.b32.xlu0 %v8869, 64
    %v8873 = vpop.permute.xlu0 %8872
    %v8875 = vmul.f32 %v8868, %v8873
    %8877 = vrot.lane.b32.xlu0 %v8875, 32
    %v8878 = vpop.permute.xlu0 %8877
    %v8880 = vadd.f32 %v8870, %v8878
    %v8881 = vtanh.pop %v8880
    %8883 = vrot.lane.b32.xlu0 %v8881, 64
    %v8884 = vpop.permute.xlu0 %8883
    %v8886 = vmul.f32 %v8868, %v8884
    %8888 = vrot.lane.b32.xlu0 %v8886, 32
    %v8889 = vpop.permute.xlu0 %8888
    %v8890 = vsel %vm3107, %v8889, 0
    %8892 = vmatpush.msra.mxu0 0.0
    %8893 = vmatpush.msra.mxu0 0.0
    %8894 = vmatpush.msra.mxu0 0.0
    %8895 = vmatpush.msra.mxu0 0.0
    %8896 = vmatpush.msra.mxu0 0.0
    %8897 = vmatpush.msra.mxu0 0.0
    %8898 = vmatpush.msra.mxu0 0.0
    %8899 = vmatpush.msra.mxu0 0.0
    %8900 = vmatpush.msra.mxu0 0.0
    %8901 = vmatpush.msra.mxu0 0.0
    %8902 = vmatpush.msra.mxu0 0.0
    %8903 = vmatpush.msra.mxu0 0.0
    %8904 = vmatpush.msra.mxu0 %v82
    %8905 = vmatpush.msra.mxu0 %v81
    %8906 = vmatpush.msra.mxu0 %v80
    %8907 = vmatpush.msra.mxu0 %v79
    %8908 = vmatmul.f32.gmra.mxu0 %v8890
    %v8909 = vpop.f32.mrf.mxu0
    %v8910 = vadd.f32 %v3360, %v8909
    %8911 = vdwg.mxu0
    %v8913 = vrot.slane %v8910, 1
    %v8914 = vrot.slane %v8910, 2
    %v8915 = vrot.slane %v8910, 3
    %v8916 = vrot.slane %v8910, 4
    %v8917 = vrot.slane %v8910, 5
    %v8918 = vrot.slane %v8910, 6
    %v8919 = vrot.slane %v8910, 7
    %v8920 = vsel %vm3010, %v8910, 0
    %8922 = vmatpush.xpose.msra.mxu0 %v3443
    %8923 = vmatpush.xpose.msra.mxu0 %v3440
    %8924 = vmatpush.xpose.msra.mxu0 %v3437
    %8925 = vmatpush.xpose.msra.mxu0 %v3434
    %8926 = vmatpush.xpose.msra.mxu0 %v3431
    %8927 = vmatpush.xpose.msra.mxu0 %v3428
    %8928 = vmatpush.xpose.msra.mxu0 %v3425
    %8929 = vmatpush.xpose.msra.mxu0 %v3422
    %8930 = vmatpush.xpose.msra.mxu0 %v3419
    %8931 = vmatpush.xpose.msra.mxu0 %v3416
    %8932 = vmatpush.xpose.msra.mxu0 %v3413
    %8933 = vmatpush.xpose.msra.mxu0 %v3410
    %8934 = vmatpush.xpose.msra.mxu0 %v3407
    %8935 = vmatpush.xpose.msra.mxu0 %v3404
    %8936 = vmatpush.xpose.msra.mxu0 %v3401
    %8937 = vmatpush.xpose.msra.mxu0 %v3398
    %8938 = vmatmul.f32.gmra.mxu0 %v8920
    %v8939 = vpop.f32.mrf.mxu0
    %v8940 = vadd.f32 0.0, %v8939
    %8941 = vdwg.mxu0
    %v8942 = vsel %vm3010, %v8913, 0
    %8944 = vmatpush.xpose.msra.mxu0 %v3513
    %8945 = vmatpush.xpose.msra.mxu0 %v3510
    %8946 = vmatpush.xpose.msra.mxu0 %v3507
    %8947 = vmatpush.xpose.msra.mxu0 %v3504
    %8948 = vmatpush.xpose.msra.mxu0 %v3501
    %8949 = vmatpush.xpose.msra.mxu0 %v3498
    %8950 = vmatpush.xpose.msra.mxu0 %v3495
    %8951 = vmatpush.xpose.msra.mxu0 %v3492
    %8952 = vmatpush.xpose.msra.mxu0 %v3489
    %8953 = vmatpush.xpose.msra.mxu0 %v3486
    %8954 = vmatpush.xpose.msra.mxu0 %v3483
    %8955 = vmatpush.xpose.msra.mxu0 %v3480
    %8956 = vmatpush.xpose.msra.mxu0 %v3477
    %8957 = vmatpush.xpose.msra.mxu0 %v3474
    %8958 = vmatpush.xpose.msra.mxu0 %v3471
    %8959 = vmatpush.xpose.msra.mxu0 %v3468
    %8960 = vmatmul.f32.gmra.mxu0 %v8942
    %v8961 = vpop.f32.mrf.mxu0
    %v8962 = vadd.f32 0.0, %v8961
    %8963 = vdwg.mxu0
    %v8964 = vsel %vm3010, %v8914, 0
    %8966 = vmatpush.xpose.msra.mxu0 %v3583
    %8967 = vmatpush.xpose.msra.mxu0 %v3580
    %8968 = vmatpush.xpose.msra.mxu0 %v3577
    %8969 = vmatpush.xpose.msra.mxu0 %v3574
    %8970 = vmatpush.xpose.msra.mxu0 %v3571
    %8971 = vmatpush.xpose.msra.mxu0 %v3568
    %8972 = vmatpush.xpose.msra.mxu0 %v3565
    %8973 = vmatpush.xpose.msra.mxu0 %v3562
    %8974 = vmatpush.xpose.msra.mxu0 %v3559
    %8975 = vmatpush.xpose.msra.mxu0 %v3556
    %8976 = vmatpush.xpose.msra.mxu0 %v3553
    %8977 = vmatpush.xpose.msra.mxu0 %v3550
    %8978 = vmatpush.xpose.msra.mxu0 %v3547
    %8979 = vmatpush.xpose.msra.mxu0 %v3544
    %8980 = vmatpush.xpose.msra.mxu0 %v3541
    %8981 = vmatpush.xpose.msra.mxu0 %v3538
    %8982 = vmatmul.f32.gmra.mxu0 %v8964
    %v8983 = vpop.f32.mrf.mxu0
    %v8984 = vadd.f32 0.0, %v8983
    %8985 = vdwg.mxu0
    %v8986 = vsel %vm3010, %v8915, 0
    %8988 = vmatpush.xpose.msra.mxu0 %v3653
    %8989 = vmatpush.xpose.msra.mxu0 %v3650
    %8990 = vmatpush.xpose.msra.mxu0 %v3647
    %8991 = vmatpush.xpose.msra.mxu0 %v3644
    %8992 = vmatpush.xpose.msra.mxu0 %v3641
    %8993 = vmatpush.xpose.msra.mxu0 %v3638
    %8994 = vmatpush.xpose.msra.mxu0 %v3635
    %8995 = vmatpush.xpose.msra.mxu0 %v3632
    %8996 = vmatpush.xpose.msra.mxu0 %v3629
    %8997 = vmatpush.xpose.msra.mxu0 %v3626
    %8998 = vmatpush.xpose.msra.mxu0 %v3623
    %8999 = vmatpush.xpose.msra.mxu0 %v3620
    %9000 = vmatpush.xpose.msra.mxu0 %v3617
    %9001 = vmatpush.xpose.msra.mxu0 %v3614
    %9002 = vmatpush.xpose.msra.mxu0 %v3611
    %9003 = vmatpush.xpose.msra.mxu0 %v3608
    %9004 = vmatmul.f32.gmra.mxu0 %v8986
    %v9005 = vpop.f32.mrf.mxu0
    %v9006 = vadd.f32 0.0, %v9005
    %9007 = vdwg.mxu0
    %v9008 = vsel %vm3010, %v8916, 0
    %9010 = vmatpush.xpose.msra.mxu0 %v3723
    %9011 = vmatpush.xpose.msra.mxu0 %v3720
    %9012 = vmatpush.xpose.msra.mxu0 %v3717
    %9013 = vmatpush.xpose.msra.mxu0 %v3714
    %9014 = vmatpush.xpose.msra.mxu0 %v3711
    %9015 = vmatpush.xpose.msra.mxu0 %v3708
    %9016 = vmatpush.xpose.msra.mxu0 %v3705
    %9017 = vmatpush.xpose.msra.mxu0 %v3702
    %9018 = vmatpush.xpose.msra.mxu0 %v3699
    %9019 = vmatpush.xpose.msra.mxu0 %v3696
    %9020 = vmatpush.xpose.msra.mxu0 %v3693
    %9021 = vmatpush.xpose.msra.mxu0 %v3690
    %9022 = vmatpush.xpose.msra.mxu0 %v3687
    %9023 = vmatpush.xpose.msra.mxu0 %v3684
    %9024 = vmatpush.xpose.msra.mxu0 %v3681
    %9025 = vmatpush.xpose.msra.mxu0 %v3678
    %9026 = vmatmul.f32.gmra.mxu0 %v9008
    %v9027 = vpop.f32.mrf.mxu0
    %v9028 = vadd.f32 0.0, %v9027
    %9029 = vdwg.mxu0
    %v9030 = vsel %vm3010, %v8917, 0
    %9032 = vmatpush.xpose.msra.mxu0 %v3793
    %9033 = vmatpush.xpose.msra.mxu0 %v3790
    %9034 = vmatpush.xpose.msra.mxu0 %v3787
    %9035 = vmatpush.xpose.msra.mxu0 %v3784
    %9036 = vmatpush.xpose.msra.mxu0 %v3781
    %9037 = vmatpush.xpose.msra.mxu0 %v3778
    %9038 = vmatpush.xpose.msra.mxu0 %v3775
    %9039 = vmatpush.xpose.msra.mxu0 %v3772
    %9040 = vmatpush.xpose.msra.mxu0 %v3769
    %9041 = vmatpush.xpose.msra.mxu0 %v3766
    %9042 = vmatpush.xpose.msra.mxu0 %v3763
    %9043 = vmatpush.xpose.msra.mxu0 %v3760
    %9044 = vmatpush.xpose.msra.mxu0 %v3757
    %9045 = vmatpush.xpose.msra.mxu0 %v3754
    %9046 = vmatpush.xpose.msra.mxu0 %v3751
    %9047 = vmatpush.xpose.msra.mxu0 %v3748
    %9048 = vmatmul.f32.gmra.mxu0 %v9030
    %v9049 = vpop.f32.mrf.mxu0
    %v9050 = vadd.f32 0.0, %v9049
    %9051 = vdwg.mxu0
    %v9052 = vsel %vm3010, %v8918, 0
    %9054 = vmatpush.xpose.msra.mxu0 %v3863
    %9055 = vmatpush.xpose.msra.mxu0 %v3860
    %9056 = vmatpush.xpose.msra.mxu0 %v3857
    %9057 = vmatpush.xpose.msra.mxu0 %v3854
    %9058 = vmatpush.xpose.msra.mxu0 %v3851
    %9059 = vmatpush.xpose.msra.mxu0 %v3848
    %9060 = vmatpush.xpose.msra.mxu0 %v3845
    %9061 = vmatpush.xpose.msra.mxu0 %v3842
    %9062 = vmatpush.xpose.msra.mxu0 %v3839
    %9063 = vmatpush.xpose.msra.mxu0 %v3836
    %9064 = vmatpush.xpose.msra.mxu0 %v3833
    %9065 = vmatpush.xpose.msra.mxu0 %v3830
    %9066 = vmatpush.xpose.msra.mxu0 %v3827
    %9067 = vmatpush.xpose.msra.mxu0 %v3824
    %9068 = vmatpush.xpose.msra.mxu0 %v3821
    %9069 = vmatpush.xpose.msra.mxu0 %v3818
    %9070 = vmatmul.f32.gmra.mxu0 %v9052
    %v9071 = vpop.f32.mrf.mxu0
    %v9072 = vadd.f32 0.0, %v9071
    %9073 = vdwg.mxu0
    %v9074 = vsel %vm3010, %v8919, 0
    %9076 = vmatpush.xpose.msra.mxu0 %v3933
    %9077 = vmatpush.xpose.msra.mxu0 %v3930
    %9078 = vmatpush.xpose.msra.mxu0 %v3927
    %9079 = vmatpush.xpose.msra.mxu0 %v3924
    %9080 = vmatpush.xpose.msra.mxu0 %v3921
    %9081 = vmatpush.xpose.msra.mxu0 %v3918
    %9082 = vmatpush.xpose.msra.mxu0 %v3915
    %9083 = vmatpush.xpose.msra.mxu0 %v3912
    %9084 = vmatpush.xpose.msra.mxu0 %v3909
    %9085 = vmatpush.xpose.msra.mxu0 %v3906
    %9086 = vmatpush.xpose.msra.mxu0 %v3903
    %9087 = vmatpush.xpose.msra.mxu0 %v3900
    %9088 = vmatpush.xpose.msra.mxu0 %v3897
    %9089 = vmatpush.xpose.msra.mxu0 %v3894
    %9090 = vmatpush.xpose.msra.mxu0 %v3891
    %9091 = vmatpush.xpose.msra.mxu0 %v3888
    %9092 = vmatmul.f32.gmra.mxu0 %v9074
    %v9093 = vpop.f32.mrf.mxu0
    %v9094 = vadd.f32 0.0, %v9093
    %9095 = vdwg.mxu0
    %v9104 = vrot.slane %v8962, 7
    %v9105 = vsel %vm3964, %v9104, %v8940
    %v9106 = vrot.slane %v8984, 6
    %v9107 = vsel %vm3967, %v9106, %v9105
    %v9108 = vrot.slane %v9006, 5
    %v9109 = vsel %vm3970, %v9108, %v9107
    %v9110 = vrot.slane %v9028, 4
    %v9111 = vsel %vm3973, %v9110, %v9109
    %v9112 = vrot.slane %v9050, 3
    %v9113 = vsel %vm3976, %v9112, %v9111
    %v9114 = vrot.slane %v9072, 2
    %v9115 = vsel %vm3979, %v9114, %v9113
    %v9116 = vrot.slane %v9094, 1
    %v9117 = vsel %vm3982, %v9116, %v9115
    %9119 = vmax.xlane.f32.xlu0 %v9117
    %v9120 = vpop.xlane.xlu0 %9119
    %v9122 = vrot.slane %v9120, 1
    %v9123 = vrot.slane %v9120, 2
    %v9124 = vrot.slane %v9120, 3
    %v9125 = vrot.slane %v9120, 4
    %v9126 = vrot.slane %v9120, 5
    %v9127 = vrot.slane %v9120, 6
    %v9128 = vrot.slane %v9120, 7
    %v9137 = vsub.f32 %v8940, %v9120
    %v9138 = vsub.f32 %v8962, %v9122
    %v9139 = vsub.f32 %v8984, %v9123
    %v9140 = vsub.f32 %v9006, %v9124
    %v9141 = vsub.f32 %v9028, %v9125
    %v9142 = vsub.f32 %v9050, %v9126
    %v9143 = vsub.f32 %v9072, %v9127
    %v9144 = vsub.f32 %v9094, %v9128
    %v9145 = vmul.f32 %v9137, 1.442695
    %v9146 = vpow.pop %v9145
    %v9147 = vmul.f32 %v9138, 1.442695
    %v9148 = vpow.pop %v9147
    %v9149 = vmul.f32 %v9139, 1.442695
    %v9150 = vpow.pop %v9149
    %v9151 = vmul.f32 %v9140, 1.442695
    %v9152 = vpow.pop %v9151
    %v9153 = vmul.f32 %v9141, 1.442695
    %v9154 = vpow.pop %v9153
    %v9155 = vmul.f32 %v9142, 1.442695
    %v9156 = vpow.pop %v9155
    %v9157 = vmul.f32 %v9143, 1.442695
    %v9158 = vpow.pop %v9157
    %v9159 = vmul.f32 %v9144, 1.442695
    %v9160 = vpow.pop %v9159
    %v9161 = vmul.f32 %v9146, %v78
    %v9162 = vmul.f32 %v9148, %v4028
    %v9163 = vmul.f32 %v9150, %v4029
    %v9164 = vmul.f32 %v9152, %v4030
    %v9165 = vmul.f32 %v9154, %v4031
    %v9166 = vmul.f32 %v9156, %v4032
    %v9167 = vmul.f32 %v9158, %v4033
    %v9168 = vmul.f32 %v9160, %v4034
    %v9177 = vrot.slane %v9162, 7
    %v9178 = vsel %vm3964, %v9177, %v9161
    %v9179 = vrot.slane %v9163, 6
    %v9180 = vsel %vm3967, %v9179, %v9178
    %v9181 = vrot.slane %v9164, 5
    %v9182 = vsel %vm3970, %v9181, %v9180
    %v9183 = vrot.slane %v9165, 4
    %v9184 = vsel %vm3973, %v9183, %v9182
    %v9185 = vrot.slane %v9166, 3
    %v9186 = vsel %vm3976, %v9185, %v9184
    %v9187 = vrot.slane %v9167, 2
    %v9188 = vsel %vm3979, %v9187, %v9186
    %v9189 = vrot.slane %v9168, 1
    %v9190 = vsel %vm3982, %v9189, %v9188
    %9192 = vadd.xlane.f32.xlu0 %v9190
    %v9193 = vpop.xlane.xlu0 %9192
    %v9194 = vmax.f32 %v9193, 1e-12
    %v9196 = vrot.slane %v9194, 1
    %v9197 = vrot.slane %v9194, 2
    %v9198 = vrot.slane %v9194, 3
    %v9199 = vrot.slane %v9194, 4
    %v9200 = vrot.slane %v9194, 5
    %v9201 = vrot.slane %v9194, 6
    %v9202 = vrot.slane %v9194, 7
    %v9211 = vrcp.pop %v9194
    %v9212 = vmul.f32 %v9194, %v9211
    %v9213 = vsub.f32 1.0, %v9212
    %v9214 = vmul.f32 %v9211, %v9213
    %v9215 = vadd.f32 %v9211, %v9214
    %vm9216 = vweird.f32 %v9194
    %vm9217 = vweird.f32 %v9211
    %vm9218 = vmor %vm9216, %vm9217
    %v9219 = vsel %vm9218, %v9211, %v9215
    %v9220 = vand.u32 2147483647, %v9194
    %vm9221 = vcmp.eq.f32.partialorder %v9220, 8.507059e+37
    %v9222 = vand.u32 %v9194, 2147483648
    %v9223 = vor.u32 1.1754944e-38, %v9222
    %v9224 = vsel %vm9221, %v9223, %v9219
    %v9225 = vmul.f32 %v9161, %v9224
    %v9226 = vrcp.pop %v9196
    %v9227 = vmul.f32 %v9196, %v9226
    %v9228 = vsub.f32 1.0, %v9227
    %v9229 = vmul.f32 %v9226, %v9228
    %v9230 = vadd.f32 %v9226, %v9229
    %vm9231 = vweird.f32 %v9196
    %vm9232 = vweird.f32 %v9226
    %vm9233 = vmor %vm9231, %vm9232
    %v9234 = vsel %vm9233, %v9226, %v9230
    %v9235 = vand.u32 2147483647, %v9196
    %vm9236 = vcmp.eq.f32.partialorder %v9235, 8.507059e+37
    %v9237 = vand.u32 %v9196, 2147483648
    %v9238 = vor.u32 1.1754944e-38, %v9237
    %v9239 = vsel %vm9236, %v9238, %v9234
    %v9240 = vmul.f32 %v9162, %v9239
    %v9241 = vrcp.pop %v9197
    %v9242 = vmul.f32 %v9197, %v9241
    %v9243 = vsub.f32 1.0, %v9242
    %v9244 = vmul.f32 %v9241, %v9243
    %v9245 = vadd.f32 %v9241, %v9244
    %vm9246 = vweird.f32 %v9197
    %vm9247 = vweird.f32 %v9241
    %vm9248 = vmor %vm9246, %vm9247
    %v9249 = vsel %vm9248, %v9241, %v9245
    %v9250 = vand.u32 2147483647, %v9197
    %vm9251 = vcmp.eq.f32.partialorder %v9250, 8.507059e+37
    %v9252 = vand.u32 %v9197, 2147483648
    %v9253 = vor.u32 1.1754944e-38, %v9252
    %v9254 = vsel %vm9251, %v9253, %v9249
    %v9255 = vmul.f32 %v9163, %v9254
    %v9256 = vrcp.pop %v9198
    %v9257 = vmul.f32 %v9198, %v9256
    %v9258 = vsub.f32 1.0, %v9257
    %v9259 = vmul.f32 %v9256, %v9258
    %v9260 = vadd.f32 %v9256, %v9259
    %vm9261 = vweird.f32 %v9198
    %vm9262 = vweird.f32 %v9256
    %vm9263 = vmor %vm9261, %vm9262
    %v9264 = vsel %vm9263, %v9256, %v9260
    %v9265 = vand.u32 2147483647, %v9198
    %vm9266 = vcmp.eq.f32.partialorder %v9265, 8.507059e+37
    %v9267 = vand.u32 %v9198, 2147483648
    %v9268 = vor.u32 1.1754944e-38, %v9267
    %v9269 = vsel %vm9266, %v9268, %v9264
    %v9270 = vmul.f32 %v9164, %v9269
    %v9271 = vrcp.pop %v9199
    %v9272 = vmul.f32 %v9199, %v9271
    %v9273 = vsub.f32 1.0, %v9272
    %v9274 = vmul.f32 %v9271, %v9273
    %v9275 = vadd.f32 %v9271, %v9274
    %vm9276 = vweird.f32 %v9199
    %vm9277 = vweird.f32 %v9271
    %vm9278 = vmor %vm9276, %vm9277
    %v9279 = vsel %vm9278, %v9271, %v9275
    %v9280 = vand.u32 2147483647, %v9199
    %vm9281 = vcmp.eq.f32.partialorder %v9280, 8.507059e+37
    %v9282 = vand.u32 %v9199, 2147483648
    %v9283 = vor.u32 1.1754944e-38, %v9282
    %v9284 = vsel %vm9281, %v9283, %v9279
    %v9285 = vmul.f32 %v9165, %v9284
    %v9286 = vrcp.pop %v9200
    %v9287 = vmul.f32 %v9200, %v9286
    %v9288 = vsub.f32 1.0, %v9287
    %v9289 = vmul.f32 %v9286, %v9288
    %v9290 = vadd.f32 %v9286, %v9289
    %vm9291 = vweird.f32 %v9200
    %vm9292 = vweird.f32 %v9286
    %vm9293 = vmor %vm9291, %vm9292
    %v9294 = vsel %vm9293, %v9286, %v9290
    %v9295 = vand.u32 2147483647, %v9200
    %vm9296 = vcmp.eq.f32.partialorder %v9295, 8.507059e+37
    %v9297 = vand.u32 %v9200, 2147483648
    %v9298 = vor.u32 1.1754944e-38, %v9297
    %v9299 = vsel %vm9296, %v9298, %v9294
    %v9300 = vmul.f32 %v9166, %v9299
    %v9301 = vrcp.pop %v9201
    %v9302 = vmul.f32 %v9201, %v9301
    %v9303 = vsub.f32 1.0, %v9302
    %v9304 = vmul.f32 %v9301, %v9303
    %v9305 = vadd.f32 %v9301, %v9304
    %vm9306 = vweird.f32 %v9201
    %vm9307 = vweird.f32 %v9301
    %vm9308 = vmor %vm9306, %vm9307
    %v9309 = vsel %vm9308, %v9301, %v9305
    %v9310 = vand.u32 2147483647, %v9201
    %vm9311 = vcmp.eq.f32.partialorder %v9310, 8.507059e+37
    %v9312 = vand.u32 %v9201, 2147483648
    %v9313 = vor.u32 1.1754944e-38, %v9312
    %v9314 = vsel %vm9311, %v9313, %v9309
    %v9315 = vmul.f32 %v9167, %v9314
    %v9316 = vrcp.pop %v9202
    %v9317 = vmul.f32 %v9202, %v9316
    %v9318 = vsub.f32 1.0, %v9317
    %v9319 = vmul.f32 %v9316, %v9318
    %v9320 = vadd.f32 %v9316, %v9319
    %vm9321 = vweird.f32 %v9202
    %vm9322 = vweird.f32 %v9316
    %vm9323 = vmor %vm9321, %vm9322
    %v9324 = vsel %vm9323, %v9316, %v9320
    %v9325 = vand.u32 2147483647, %v9202
    %vm9326 = vcmp.eq.f32.partialorder %v9325, 8.507059e+37
    %v9327 = vand.u32 %v9202, 2147483648
    %v9328 = vor.u32 1.1754944e-38, %v9327
    %v9329 = vsel %vm9326, %v9328, %v9324
    %v9330 = vmul.f32 %v9168, %v9329
    %9331 = vmatpush.msra.mxu0 %v2848
    %9332 = vmatpush.msra.mxu0 %v2847
    %9333 = vmatpush.msra.mxu0 %v2846
    %9334 = vmatpush.msra.mxu0 %v2845
    %9335 = vmatpush.msra.mxu0 %v2844
    %9336 = vmatpush.msra.mxu0 %v2843
    %9337 = vmatpush.msra.mxu0 %v2842
    %9338 = vmatpush.msra.mxu0 %v2841
    %9339 = vmatpush.msra.mxu0 %v2840
    %9340 = vmatpush.msra.mxu0 %v2839
    %9341 = vmatpush.msra.mxu0 %v2838
    %9342 = vmatpush.msra.mxu0 %v2837
    %9343 = vmatpush.msra.mxu0 %v2836
    %9344 = vmatpush.msra.mxu0 %v2835
    %9345 = vmatpush.msra.mxu0 %v2834
    %9346 = vmatpush.msra.mxu0 %v2833
    %9347 = vmatmul.f32.gmra.mxu0 %v9225
    %v9348 = vpop.f32.mrf.mxu0
    %v9349 = vadd.f32 0.0, %v9348
    %9350 = vdwg.mxu0
    %9351 = vmatpush.msra.mxu0 %v2864
    %9352 = vmatpush.msra.mxu0 %v2863
    %9353 = vmatpush.msra.mxu0 %v2862
    %9354 = vmatpush.msra.mxu0 %v2861
    %9355 = vmatpush.msra.mxu0 %v2860
    %9356 = vmatpush.msra.mxu0 %v2859
    %9357 = vmatpush.msra.mxu0 %v2858
    %9358 = vmatpush.msra.mxu0 %v2857
    %9359 = vmatpush.msra.mxu0 %v2856
    %9360 = vmatpush.msra.mxu0 %v2855
    %9361 = vmatpush.msra.mxu0 %v2854
    %9362 = vmatpush.msra.mxu0 %v2853
    %9363 = vmatpush.msra.mxu0 %v2852
    %9364 = vmatpush.msra.mxu0 %v2851
    %9365 = vmatpush.msra.mxu0 %v2850
    %9366 = vmatpush.msra.mxu0 %v2849
    %9367 = vmatmul.f32.gmra.mxu0 %v9240
    %v9368 = vpop.f32.mrf.mxu0
    %v9369 = vadd.f32 0.0, %v9368
    %9370 = vdwg.mxu0
    %9371 = vmatpush.msra.mxu0 %v2880
    %9372 = vmatpush.msra.mxu0 %v2879
    %9373 = vmatpush.msra.mxu0 %v2878
    %9374 = vmatpush.msra.mxu0 %v2877
    %9375 = vmatpush.msra.mxu0 %v2876
    %9376 = vmatpush.msra.mxu0 %v2875
    %9377 = vmatpush.msra.mxu0 %v2874
    %9378 = vmatpush.msra.mxu0 %v2873
    %9379 = vmatpush.msra.mxu0 %v2872
    %9380 = vmatpush.msra.mxu0 %v2871
    %9381 = vmatpush.msra.mxu0 %v2870
    %9382 = vmatpush.msra.mxu0 %v2869
    %9383 = vmatpush.msra.mxu0 %v2868
    %9384 = vmatpush.msra.mxu0 %v2867
    %9385 = vmatpush.msra.mxu0 %v2866
    %9386 = vmatpush.msra.mxu0 %v2865
    %9387 = vmatmul.f32.gmra.mxu0 %v9255
    %v9388 = vpop.f32.mrf.mxu0
    %v9389 = vadd.f32 0.0, %v9388
    %9390 = vdwg.mxu0
    %9391 = vmatpush.msra.mxu0 %v2896
    %9392 = vmatpush.msra.mxu0 %v2895
    %9393 = vmatpush.msra.mxu0 %v2894
    %9394 = vmatpush.msra.mxu0 %v2893
    %9395 = vmatpush.msra.mxu0 %v2892
    %9396 = vmatpush.msra.mxu0 %v2891
    %9397 = vmatpush.msra.mxu0 %v2890
    %9398 = vmatpush.msra.mxu0 %v2889
    %9399 = vmatpush.msra.mxu0 %v2888
    %9400 = vmatpush.msra.mxu0 %v2887
    %9401 = vmatpush.msra.mxu0 %v2886
    %9402 = vmatpush.msra.mxu0 %v2885
    %9403 = vmatpush.msra.mxu0 %v2884
    %9404 = vmatpush.msra.mxu0 %v2883
    %9405 = vmatpush.msra.mxu0 %v2882
    %9406 = vmatpush.msra.mxu0 %v2881
    %9407 = vmatmul.f32.gmra.mxu0 %v9270
    %v9408 = vpop.f32.mrf.mxu0
    %v9409 = vadd.f32 0.0, %v9408
    %9410 = vdwg.mxu0
    %9411 = vmatpush.msra.mxu0 %v2912
    %9412 = vmatpush.msra.mxu0 %v2911
    %9413 = vmatpush.msra.mxu0 %v2910
    %9414 = vmatpush.msra.mxu0 %v2909
    %9415 = vmatpush.msra.mxu0 %v2908
    %9416 = vmatpush.msra.mxu0 %v2907
    %9417 = vmatpush.msra.mxu0 %v2906
    %9418 = vmatpush.msra.mxu0 %v2905
    %9419 = vmatpush.msra.mxu0 %v2904
    %9420 = vmatpush.msra.mxu0 %v2903
    %9421 = vmatpush.msra.mxu0 %v2902
    %9422 = vmatpush.msra.mxu0 %v2901
    %9423 = vmatpush.msra.mxu0 %v2900
    %9424 = vmatpush.msra.mxu0 %v2899
    %9425 = vmatpush.msra.mxu0 %v2898
    %9426 = vmatpush.msra.mxu0 %v2897
    %9427 = vmatmul.f32.gmra.mxu0 %v9285
    %v9428 = vpop.f32.mrf.mxu0
    %v9429 = vadd.f32 0.0, %v9428
    %9430 = vdwg.mxu0
    %9431 = vmatpush.msra.mxu0 %v2928
    %9432 = vmatpush.msra.mxu0 %v2927
    %9433 = vmatpush.msra.mxu0 %v2926
    %9434 = vmatpush.msra.mxu0 %v2925
    %9435 = vmatpush.msra.mxu0 %v2924
    %9436 = vmatpush.msra.mxu0 %v2923
    %9437 = vmatpush.msra.mxu0 %v2922
    %9438 = vmatpush.msra.mxu0 %v2921
    %9439 = vmatpush.msra.mxu0 %v2920
    %9440 = vmatpush.msra.mxu0 %v2919
    %9441 = vmatpush.msra.mxu0 %v2918
    %9442 = vmatpush.msra.mxu0 %v2917
    %9443 = vmatpush.msra.mxu0 %v2916
    %9444 = vmatpush.msra.mxu0 %v2915
    %9445 = vmatpush.msra.mxu0 %v2914
    %9446 = vmatpush.msra.mxu0 %v2913
    %9447 = vmatmul.f32.gmra.mxu0 %v9300
    %v9448 = vpop.f32.mrf.mxu0
    %v9449 = vadd.f32 0.0, %v9448
    %9450 = vdwg.mxu0
    %9451 = vmatpush.msra.mxu0 %v2944
    %9452 = vmatpush.msra.mxu0 %v2943
    %9453 = vmatpush.msra.mxu0 %v2942
    %9454 = vmatpush.msra.mxu0 %v2941
    %9455 = vmatpush.msra.mxu0 %v2940
    %9456 = vmatpush.msra.mxu0 %v2939
    %9457 = vmatpush.msra.mxu0 %v2938
    %9458 = vmatpush.msra.mxu0 %v2937
    %9459 = vmatpush.msra.mxu0 %v2936
    %9460 = vmatpush.msra.mxu0 %v2935
    %9461 = vmatpush.msra.mxu0 %v2934
    %9462 = vmatpush.msra.mxu0 %v2933
    %9463 = vmatpush.msra.mxu0 %v2932
    %9464 = vmatpush.msra.mxu0 %v2931
    %9465 = vmatpush.msra.mxu0 %v2930
    %9466 = vmatpush.msra.mxu0 %v2929
    %9467 = vmatmul.f32.gmra.mxu0 %v9315
    %v9468 = vpop.f32.mrf.mxu0
    %v9469 = vadd.f32 0.0, %v9468
    %9470 = vdwg.mxu0
    %9471 = vmatpush.msra.mxu0 %v2960
    %9472 = vmatpush.msra.mxu0 %v2959
    %9473 = vmatpush.msra.mxu0 %v2958
    %9474 = vmatpush.msra.mxu0 %v2957
    %9475 = vmatpush.msra.mxu0 %v2956
    %9476 = vmatpush.msra.mxu0 %v2955
    %9477 = vmatpush.msra.mxu0 %v2954
    %9478 = vmatpush.msra.mxu0 %v2953
    %9479 = vmatpush.msra.mxu0 %v2952
    %9480 = vmatpush.msra.mxu0 %v2951
    %9481 = vmatpush.msra.mxu0 %v2950
    %9482 = vmatpush.msra.mxu0 %v2949
    %9483 = vmatpush.msra.mxu0 %v2948
    %9484 = vmatpush.msra.mxu0 %v2947
    %9485 = vmatpush.msra.mxu0 %v2946
    %9486 = vmatpush.msra.mxu0 %v2945
    %9487 = vmatmul.f32.gmra.mxu0 %v9330
    %v9488 = vpop.f32.mrf.mxu0
    %v9489 = vadd.f32 0.0, %v9488
    %9490 = vdwg.mxu0
    %v9491 = vmax.f32 %v8886, 0.0
    %v9492 = vmax.f32 %v9349, 0.0
    %v9493 = vmax.f32 %v9369, 0.0
    %v9494 = vmax.f32 %v9389, 0.0
    %v9495 = vmax.f32 %v9409, 0.0
    %v9496 = vmax.f32 %v9429, 0.0
    %v9497 = vmax.f32 %v9449, 0.0
    %v9498 = vmax.f32 %v9469, 0.0
    %v9499 = vmax.f32 %v9489, 0.0
    %v9508 = vrot.slane %v9493, 7
    %v9509 = vsel %vm3964, %v9508, %v9492
    %v9510 = vrot.slane %v9494, 6
    %v9511 = vsel %vm3967, %v9510, %v9509
    %v9512 = vrot.slane %v9495, 5
    %v9513 = vsel %vm3970, %v9512, %v9511
    %v9514 = vrot.slane %v9496, 4
    %v9515 = vsel %vm3973, %v9514, %v9513
    %v9516 = vrot.slane %v9497, 3
    %v9517 = vsel %vm3976, %v9516, %v9515
    %v9518 = vrot.slane %v9498, 2
    %v9519 = vsel %vm3979, %v9518, %v9517
    %v9520 = vrot.slane %v9499, 1
    %v9521 = vsel %vm3982, %v9520, %v9519
    %v9522 = vsel %vm3010, %v9521, 0
    %9524 = vmatpush.msra.mxu0 0.0
    %9525 = vmatpush.msra.mxu0 0.0
    %9526 = vmatpush.msra.mxu0 0.0
    %9527 = vmatpush.msra.mxu0 0.0
    %9528 = vmatpush.msra.mxu0 0.0
    %9529 = vmatpush.msra.mxu0 0.0
    %9530 = vmatpush.msra.mxu0 0.0
    %9531 = vmatpush.msra.mxu0 0.0
    %9532 = vmatpush.msra.mxu0 0.0
    %9533 = vmatpush.msra.mxu0 0.0
    %9534 = vmatpush.msra.mxu0 0.0
    %9535 = vmatpush.msra.mxu0 0.0
    %9536 = vmatpush.msra.mxu0 0.0
    %9537 = vmatpush.msra.mxu0 0.0
    %9538 = vmatpush.msra.mxu0 %v2995
    %9539 = vmatpush.msra.mxu0 %v2993
    %9540 = vmatmul.f32.gmra.mxu0 %v9522
    %v9541 = vpop.f32.mrf.mxu0
    %v9542 = vadd.f32 0.0, %v9541
    %9543 = vdwg.mxu0
    %9544 = vmatpush.msra.mxu0 0.0
    %9545 = vmatpush.msra.mxu0 0.0
    %9546 = vmatpush.msra.mxu0 0.0
    %9547 = vmatpush.msra.mxu0 0.0
    %9548 = vmatpush.msra.mxu0 0.0
    %9549 = vmatpush.msra.mxu0 0.0
    %9550 = vmatpush.msra.mxu0 0.0
    %9551 = vmatpush.msra.mxu0 0.0
    %9552 = vmatpush.msra.mxu0 0.0
    %9553 = vmatpush.msra.mxu0 0.0
    %9554 = vmatpush.msra.mxu0 0.0
    %9555 = vmatpush.msra.mxu0 0.0
    %9556 = vmatpush.msra.mxu0 0.0
    %9557 = vmatpush.msra.mxu0 0.0
    %9558 = vmatpush.msra.mxu0 %v2996
    %9559 = vmatpush.msra.mxu0 %v2994
    %9560 = vmatmul.f32.gmra.mxu0 %v9522
    %v9561 = vpop.f32.mrf.mxu0
    %v9562 = vadd.f32 0.0, %v9561
    %9563 = vdwg.mxu0
    %9565 = vrot.lane.b32.xlu0 %v9491, 32
    %v9566 = vpop.permute.xlu0 %9565
    %v9567 = vsel %vm3107, %v9566, 0
    %9569 = vmatpush.msra.mxu0 0.0
    %9570 = vmatpush.msra.mxu0 0.0
    %9571 = vmatpush.msra.mxu0 0.0
    %9572 = vmatpush.msra.mxu0 0.0
    %9573 = vmatpush.msra.mxu0 0.0
    %9574 = vmatpush.msra.mxu0 0.0
    %9575 = vmatpush.msra.mxu0 0.0
    %9576 = vmatpush.msra.mxu0 0.0
    %9577 = vmatpush.msra.mxu0 0.0
    %9578 = vmatpush.msra.mxu0 0.0
    %9579 = vmatpush.msra.mxu0 0.0
    %9580 = vmatpush.msra.mxu0 0.0
    %9581 = vmatpush.msra.mxu0 %v2991
    %9582 = vmatpush.msra.mxu0 %v2989
    %9583 = vmatpush.msra.mxu0 %v2987
    %9584 = vmatpush.msra.mxu0 %v2985
    %9585 = vmatmul.f32.gmra.mxu0 %v9567
    %v9586 = vpop.f32.mrf.mxu0
    %v9587 = vadd.f32 %v9542, %v9586
    %9588 = vdwg.mxu0
    %9589 = vmatpush.msra.mxu0 0.0
    %9590 = vmatpush.msra.mxu0 0.0
    %9591 = vmatpush.msra.mxu0 0.0
    %9592 = vmatpush.msra.mxu0 0.0
    %9593 = vmatpush.msra.mxu0 0.0
    %9594 = vmatpush.msra.mxu0 0.0
    %9595 = vmatpush.msra.mxu0 0.0
    %9596 = vmatpush.msra.mxu0 0.0
    %9597 = vmatpush.msra.mxu0 0.0
    %9598 = vmatpush.msra.mxu0 0.0
    %9599 = vmatpush.msra.mxu0 0.0
    %9600 = vmatpush.msra.mxu0 0.0
    %9601 = vmatpush.msra.mxu0 %v2992
    %9602 = vmatpush.msra.mxu0 %v2990
    %9603 = vmatpush.msra.mxu0 %v2988
    %9604 = vmatpush.msra.mxu0 %v2986
    %9605 = vmatmul.f32.gmra.mxu0 %v9567
    %v9606 = vpop.f32.mrf.mxu0
    %v9607 = vadd.f32 %v9562, %v9606
    %9608 = vdwg.mxu0
    %v9609 = vadd.f32 %v9587, %v4492
    %v9610 = vadd.f32 %v9607, %v4493
    %s9611 = scalar_lea.vmem [#allocation7], 80
    %9612 = vst [vmem:[%s9611] sm:$0xff] %v9609
    %9613 = vst [vmem:[%s9611 + $0x8] sm:$0xff] %v9610
    %v9622 = vrot.slane %v9240, 7
    %v9623 = vsel %vm3964, %v9622, %v9225
    %v9624 = vrot.slane %v9255, 6
    %v9625 = vsel %vm3967, %v9624, %v9623
    %v9626 = vrot.slane %v9270, 5
    %v9627 = vsel %vm3970, %v9626, %v9625
    %v9628 = vrot.slane %v9285, 4
    %v9629 = vsel %vm3973, %v9628, %v9627
    %v9630 = vrot.slane %v9300, 3
    %v9631 = vsel %vm3976, %v9630, %v9629
    %v9632 = vrot.slane %v9315, 2
    %v9633 = vsel %vm3979, %v9632, %v9631
    %v9634 = vrot.slane %v9330, 1
    %v9635 = vsel %vm3982, %v9634, %v9633
    %s9637 = scalar_lea.vmem [#allocation10], 40
    %9638 = vst [vmem:[%s9637] sm:$0xff] %v9635
    %9640 = vst.msk [vmem:[#allocation4] sm:$0xff] %vm3107, %v8743
    %9642 = vrot.lane.b32.xlu0 %v8714, 96
    %v9643 = vpop.permute.xlu0 %9642
    %9645 = vst.msk [vmem:[%s3071] sm:$0xff] %vm3107, %v9643
    %9647 = vst.msk [vmem:[%s3073] sm:$0xff] %vm3107, %v8826
    %9649 = vrot.lane.b32.xlu0 %v8797, 96
    %v9650 = vpop.permute.xlu0 %9649
    %9652 = vst.msk [vmem:[%s3075] sm:$0xff] %vm3107, %v9650
    %9654 = vst.msk [vmem:[%s3077] sm:$0xff] %vm3107, %v8889
    %9656 = vrot.lane.b32.xlu0 %v8880, 96
    %v9657 = vpop.permute.xlu0 %9656
    %9659 = vst.msk [vmem:[%s3079] sm:$0xff] %vm3107, %v9657
    %v9668 = vrot.slane %v9369, 7
    %v9669 = vsel %vm3964, %v9668, %v9349
    %v9670 = vrot.slane %v9389, 6
    %v9671 = vsel %vm3967, %v9670, %v9669
    %v9672 = vrot.slane %v9409, 5
    %v9673 = vsel %vm3970, %v9672, %v9671
    %v9674 = vrot.slane %v9429, 4
    %v9675 = vsel %vm3973, %v9674, %v9673
    %v9676 = vrot.slane %v9449, 3
    %v9677 = vsel %vm3976, %v9676, %v9675
    %v9678 = vrot.slane %v9469, 2
    %v9679 = vsel %vm3979, %v9678, %v9677
    %v9680 = vrot.slane %v9489, 1
    %v9681 = vsel %vm3982, %v9680, %v9679
    %9683 = vst.msk [vmem:[#allocation5] sm:$0xff] %vm3010, %v9681
    %v9684 = vld [vmem:[#allocation7] sm:$0xff]
    %v9685 = vld [vmem:[#allocation7 + $0x8] sm:$0xff]
    %v9686 = vld [vmem:[#allocation7 + $0x10] sm:$0xff]
    %v9687 = vld [vmem:[#allocation7 + $0x18] sm:$0xff]
    %v9688 = vld [vmem:[#allocation7 + $0x20] sm:$0xff]
    %v9689 = vld [vmem:[#allocation7 + $0x28] sm:$0xff]
    %v9690 = vld [vmem:[#allocation7 + $0x30] sm:$0xff]
    %v9691 = vld [vmem:[#allocation7 + $0x38] sm:$0xff]
    %v9692 = vld [vmem:[#allocation7 + $0x40] sm:$0xff]
    %v9693 = vld [vmem:[#allocation7 + $0x48] sm:$0xff]
    %v9694 = vld [vmem:[#allocation7 + $0x50] sm:$0xff]
    %v9695 = vld [vmem:[#allocation7 + $0x58] sm:$0xff]
    %v9696 = vld [vmem:[%s21] sm:$0xff]
    %v9697 = vld [vmem:[%s21 + $0x8] sm:$0xff]
    %v9698 = vld [vmem:[%s21 + $0x10] sm:$0xff]
    %v9699 = vld [vmem:[%s21 + $0x18] sm:$0xff]
    %v9700 = vld [vmem:[%s21 + $0x20] sm:$0xff]
    %v9701 = vld [vmem:[%s21 + $0x28] sm:$0xff]
    %v9702 = vld [vmem:[%s21 + $0x30] sm:$0xff]
    %v9703 = vld [vmem:[%s21 + $0x38] sm:$0xff]
    %v9704 = vld [vmem:[%s21 + $0x40] sm:$0xff]
    %v9705 = vld [vmem:[%s21 + $0x48] sm:$0xff]
    %v9706 = vld [vmem:[%s21 + $0x50] sm:$0xff]
    %v9707 = vld [vmem:[%s21 + $0x58] sm:$0xff]
    %v9708 = vld [vmem:[%s21 + $0x60] sm:$0xff]
    %v9709 = vld [vmem:[%s21 + $0x68] sm:$0xff]
    %v9710 = vld [vmem:[%s21 + $0x70] sm:$0xff]
    %v9711 = vld [vmem:[%s21 + $0x78] sm:$0xff]
    %v9712 = vld [vmem:[%s21 + $0x80] sm:$0xff]
    %v9713 = vld [vmem:[%s21 + $0x88] sm:$0xff]
    %v9714 = vld [vmem:[%s21 + $0x90] sm:$0xff]
    %v9715 = vld [vmem:[%s21 + $0x98] sm:$0xff]
    %v9716 = vld [vmem:[%s21 + $0xa0] sm:$0xff]
    %v9717 = vld [vmem:[%s21 + $0xa8] sm:$0xff]
    %v9718 = vld [vmem:[%s21 + $0xb0] sm:$0xff]
    %v9719 = vld [vmem:[%s21 + $0xb8] sm:$0xff]
    %v9720 = vld [vmem:[%s21 + $0xc0] sm:$0xff]
    %v9721 = vld [vmem:[%s21 + $0xc8] sm:$0xff]
    %v9722 = vld [vmem:[%s21 + $0xd0] sm:$0xff]
    %v9723 = vld [vmem:[%s21 + $0xd8] sm:$0xff]
    %v9724 = vld [vmem:[%s21 + $0xe0] sm:$0xff]
    %v9725 = vld [vmem:[%s21 + $0xe8] sm:$0xff]
    %v9726 = vld [vmem:[%s21 + $0xf0] sm:$0xff]
    %v9727 = vld [vmem:[%s21 + $0xf8] sm:$0xff]
    %v9728 = vld [vmem:[%s22] sm:$0x1]
    %v9730 = vperm.slane %v9728, 0
    %9732 = vmatpush.msra.mxu0 %v9711
    %9733 = vmatpush.msra.mxu0 %v9710
    %9734 = vmatpush.msra.mxu0 %v9709
    %9735 = vmatpush.msra.mxu0 %v9708
    %9736 = vmatpush.msra.mxu0 %v9707
    %9737 = vmatpush.msra.mxu0 %v9706
    %9738 = vmatpush.msra.mxu0 %v9705
    %9739 = vmatpush.msra.mxu0 %v9704
    %9740 = vmatpush.msra.mxu0 %v9703
    %9741 = vmatpush.msra.mxu0 %v9702
    %9742 = vmatpush.msra.mxu0 %v9701
    %9743 = vmatpush.msra.mxu0 %v9700
    %9744 = vmatpush.msra.mxu0 %v9699
    %9745 = vmatpush.msra.mxu0 %v9698
    %9746 = vmatpush.msra.mxu0 %v9697
    %9747 = vmatpush.msra.mxu0 %v9696
    %9748 = vmatmul.f32.gmra.mxu0 %v9684
    %v9749 = vpop.f32.mrf.mxu0
    %v9750 = vadd.f32 %v9730, %v9749
    %9751 = vmatmul.f32.gmra.mxu0 %v9686
    %v9752 = vpop.f32.mrf.mxu0
    %v9753 = vadd.f32 %v9730, %v9752
    %9754 = vmatmul.f32.gmra.mxu0 %v9688
    %v9755 = vpop.f32.mrf.mxu0
    %v9756 = vadd.f32 %v9730, %v9755
    %9757 = vmatmul.f32.gmra.mxu0 %v9690
    %v9758 = vpop.f32.mrf.mxu0
    %v9759 = vadd.f32 %v9730, %v9758
    %9760 = vmatmul.f32.gmra.mxu0 %v9692
    %v9761 = vpop.f32.mrf.mxu0
    %v9762 = vadd.f32 %v9730, %v9761
    %9763 = vmatmul.f32.gmra.mxu0 %v9694
    %v9764 = vpop.f32.mrf.mxu0
    %v9765 = vadd.f32 %v9730, %v9764
    %9766 = vdwg.mxu0
    %9767 = vmatpush.msra.mxu0 %v9727
    %9768 = vmatpush.msra.mxu0 %v9726
    %9769 = vmatpush.msra.mxu0 %v9725
    %9770 = vmatpush.msra.mxu0 %v9724
    %9771 = vmatpush.msra.mxu0 %v9723
    %9772 = vmatpush.msra.mxu0 %v9722
    %9773 = vmatpush.msra.mxu0 %v9721
    %9774 = vmatpush.msra.mxu0 %v9720
    %9775 = vmatpush.msra.mxu0 %v9719
    %9776 = vmatpush.msra.mxu0 %v9718
    %9777 = vmatpush.msra.mxu0 %v9717
    %9778 = vmatpush.msra.mxu0 %v9716
    %9779 = vmatpush.msra.mxu0 %v9715
    %9780 = vmatpush.msra.mxu0 %v9714
    %9781 = vmatpush.msra.mxu0 %v9713
    %9782 = vmatpush.msra.mxu0 %v9712
    %9783 = vmatmul.f32.gmra.mxu0 %v9685
    %v9784 = vpop.f32.mrf.mxu0
    %v9785 = vadd.f32 %v9750, %v9784
    %9786 = vmatmul.f32.gmra.mxu0 %v9687
    %v9787 = vpop.f32.mrf.mxu0
    %v9788 = vadd.f32 %v9753, %v9787
    %9789 = vmatmul.f32.gmra.mxu0 %v9689
    %v9790 = vpop.f32.mrf.mxu0
    %v9791 = vadd.f32 %v9756, %v9790
    %9792 = vmatmul.f32.gmra.mxu0 %v9691
    %v9793 = vpop.f32.mrf.mxu0
    %v9794 = vadd.f32 %v9759, %v9793
    %9795 = vmatmul.f32.gmra.mxu0 %v9693
    %v9796 = vpop.f32.mrf.mxu0
    %v9797 = vadd.f32 %v9762, %v9796
    %9798 = vmatmul.f32.gmra.mxu0 %v9695
    %v9799 = vpop.f32.mrf.mxu0
    %v9800 = vadd.f32 %v9765, %v9799
    %9801 = vdwg.mxu0
    %9802 = vst [vmem:[#allocation8] sm:$0xff] %v9785
    %9803 = vst [vmem:[#allocation8 + $0x8] sm:$0xff] %v9788
    %9804 = vst [vmem:[#allocation8 + $0x10] sm:$0xff] %v9791
    %9805 = vst [vmem:[#allocation8 + $0x18] sm:$0xff] %v9794
    %9806 = vst [vmem:[#allocation8 + $0x20] sm:$0xff] %v9797
    %9807 = vst [vmem:[#allocation8 + $0x28] sm:$0xff] %v9800
    // Predicated region
    $region98: #{tpu_custom_call.1} parent=1 // pred_check
      _
    $region99: #{tpu_custom_call.1} parent=1 // pred_check_branch
      %9809 = sbr.rel (0) target = $region101
    $region100: #{tpu_custom_call.1} parent=1 // pred_region
      %9811 = vsyncadd [#allocation9], 0
      %s9812 = sshll.u32 [#allocation8], 4
      %s9813 = int_to_ptr.vmem [resolvable:$true] %s9812
      %s9814 = sshll.u32 %s23, 4
      %s9815 = int_to_ptr.hbm [resolvable:$true] %s9814
      %9820 = dma.vmem_to_hbm [thread:$0]  %s9813, 768, %s9815, [#allocation9], 128, 128, 8
    $region101: #{tpu_custom_call.1} parent=1 // pred_fallthru
      _
    // Predicated region
    $region102: #{tpu_custom_call.1} parent=1 // pred_check
      _
    $region103: #{tpu_custom_call.1} parent=1 // pred_check_branch
      %9822 = sbr.rel (0) target = $region105
    $region104: #{tpu_custom_call.1} parent=1 // pred_region
      %9824 = vsyncadd [#allocation11], 0
      %s9825 = sshll.u32 [#allocation10], 4
      %s9826 = int_to_ptr.vmem [resolvable:$true] %s9825
      %s9827 = sshll.u32 %s24, 4
      %s9828 = int_to_ptr.hbm [resolvable:$true] %s9827
      %9833 = dma.vmem_to_hbm [thread:$0]  %s9826, 768, %s9828, [#allocation11], 128, 128, 8
    $region105: #{tpu_custom_call.1} parent=1 // pred_fallthru
      _
    // Predicated region
    $region106: #{tpu_custom_call.1} parent=1 // pred_check
      _
    $region107: #{tpu_custom_call.1} parent=1 // pred_check_branch
      %9835 = sbr.rel (0) target = $region109
    $region108: #{tpu_custom_call.1} parent=1 // pred_region
      %9837 = dma.done [#allocation9], 768
    $region109: #{tpu_custom_call.1} parent=1 // pred_fallthru
      _
    // Predicated region
    $region110: #{tpu_custom_call.1} parent=1 // pred_check
      _
    $region111: #{tpu_custom_call.1} parent=1 // pred_check_branch
      %9839 = sbr.rel (0) target = $region113
    $region112: #{tpu_custom_call.1} parent=1 // pred_region
      %9841 = dma.done [#allocation11], 768
    $region113: #{tpu_custom_call.1} parent=1 // pred_fallthru
      _
    %9842 = vsyncpa [#allocation9], 1
    %9843 = vsyncpa [#allocation11], 1

</llo_original>
